<compile_context>
chip_gen: v7x
topology: tpu7x:2x2x1
jax: 0.10.0
libtpu: 0.0.40
codegen_flags: <defaults>
</compile_context>

<pallas_src>
import math

import numpy as np

import jax
import jax.numpy as jnp
from jax import lax
from jax.experimental import pallas as pl
from jax.experimental.pallas import tpu as pltpu

F32 = jnp.float32
BF16 = jnp.bfloat16
LANE = 128


# ----------------------------- parameters -----------------------------

def positional_encoding(seq_len, d_model):
    pos = jnp.arange(seq_len, dtype=F32)[:, None]
    div = jnp.exp(jnp.arange(0, d_model, 2, dtype=F32) * (-math.log(10000.0) / d_model))
    pe = jnp.zeros((seq_len, d_model), F32)
    pe = pe.at[:, 0::2].set(jnp.sin(pos * div))
    pe = pe.at[:, 1::2].set(jnp.cos(pos * div))
    return pe                                    # (S, d_model)


def init_params(key, in_features, hidden, n_enc, n_dec, ffdim):
    H, FF, Le, Ld = hidden, ffdim, n_enc, n_dec
    ks = iter(jax.random.split(key, 64))

    def w(shape, scale=0.05):
        return scale * jax.random.normal(next(ks), shape, dtype=F32)

    enc = dict(
        wqkv=w((Le, H, 3 * H)), bqkv=w((Le, 3 * H)),
        wo=w((Le, H, H)), bo=w((Le, H)),
        ln1g=jnp.ones((Le, H), F32), ln1b=jnp.zeros((Le, H), F32),
        w1=w((Le, H, FF)), b1=w((Le, FF)),
        w2=w((Le, FF, H)), b2=w((Le, H)),
        ln2g=jnp.ones((Le, H), F32), ln2b=jnp.zeros((Le, H), F32))
    dec = dict(
        wqkv=w((Ld, H, 3 * H)), bqkv=w((Ld, 3 * H)),
        wo1=w((Ld, H, H)), bo1=w((Ld, H)),
        ln1g=jnp.ones((Ld, H), F32), ln1b=jnp.zeros((Ld, H), F32),
        wq=w((Ld, H, H)), bq=w((Ld, H)),
        wkv=w((Ld, H, 2 * H)), bkv=w((Ld, 2 * H)),
        wo2=w((Ld, H, H)), bo2=w((Ld, H)),
        ln2g=jnp.ones((Ld, H), F32), ln2b=jnp.zeros((Ld, H), F32),
        w1=w((Ld, H, FF)), b1=w((Ld, FF)),
        w2=w((Ld, FF, H)), b2=w((Ld, H)),
        ln3g=jnp.ones((Ld, H), F32), ln3b=jnp.zeros((Ld, H), F32))
    return dict(
        lin_in_w=w((in_features, H)), lin_in_b=w((H,)),
        lin_out_w=w((H, in_features)), lin_out_b=w((in_features,)),
        enc=enc, dec=dec,
        enc_norm_g=jnp.ones((H,), F32), enc_norm_b=jnp.zeros((H,), F32),
        dec_norm_g=jnp.ones((H,), F32), dec_norm_b=jnp.zeros((H,), F32))


# ----------------------------- slab packing -----------------------------

class _Slab:
    """Host-side builder for one contiguous (rows, lane) parameter slab.

    Every entry starts at lane 0 (so in-kernel slices need no lane rotate) and
    at a row offset padded to `row_align` rows.  The index maps entry name ->
    (row_offset, true_rows, true_cols)."""

    def __init__(self, lane, row_align):
        self.lane, self.row_align = lane, row_align
        self.chunks, self.index, self.off = [], {}, 0

    def add(self, name, arr):
        a = np.asarray(arr, np.float32)
        if a.ndim == 1:
            a = a[None, :]
        r, c = a.shape
        assert c <= self.lane, (name, c, self.lane)
        rp = ((r + self.row_align - 1) // self.row_align) * self.row_align
        buf = np.zeros((rp, self.lane), np.float32)
        buf[:r, :c] = a
        self.index[name] = (self.off, r, c)
        self.chunks.append(buf)
        self.off += rp

    def build(self, dtype):
        return jnp.asarray(np.concatenate(self.chunks, axis=0), dtype=dtype)


def _prep_params(params, B, S, Fin, s_len, nhead):
    H = params['lin_in_w'].shape[1]
    FF = params['enc']['w1'].shape[2]
    Le = params['enc']['wqkv'].shape[0]
    Ld = params['dec']['wqkv'].shape[0]
    t_len = S - s_len
    NE, ND = B * s_len, B * t_len
    assert H <= LANE and Fin <= LANE and H % nhead == 0

    wl = -(-max(3 * H, FF, LANE) // LANE) * LANE
    vl = -(-max(3 * H, FF, LANE, NE, ND) // LANE) * LANE
    ws = _Slab(wl, 16)      # bf16 sublane packing -> 16-row-aligned entries
    vs = _Slab(vl, 1)       # multi-row f32 blocks added first stay 8-aligned
    e, d = params['enc'], params['dec']

    # ---------------- bf16 weight slab ----------------
    ws.add('w_in', np.pad(np.asarray(params['lin_in_w']), ((0, 0), (0, LANE - H))))
    ws.add('w_out', np.pad(np.asarray(params['lin_out_w']), ((0, 0), (0, LANE - Fin))))
    for l in range(Le):
        ws.add(f'enc{l}_wqkv', e['wqkv'][l]); ws.add(f'enc{l}_wo', e['wo'][l])
        ws.add(f'enc{l}_w1', e['w1'][l]);     ws.add(f'enc{l}_w2', e['w2'][l])
    for l in range(Ld):
        ws.add(f'dec{l}_wqkv', d['wqkv'][l]); ws.add(f'dec{l}_wo1', d['wo1'][l])
        ws.add(f'dec{l}_wq', d['wq'][l]);     ws.add(f'dec{l}_wkv', d['wkv'][l])
        ws.add(f'dec{l}_wo2', d['wo2'][l]);   ws.add(f'dec{l}_w1', d['w1'][l])
        ws.add(f'dec{l}_w2', d['w2'][l])

    # ---------------- f32 bias / LN / PE / mask slab ----------------
    # Positional encoding + input bias, hoisted and row-permuted to the kernel
    # row order (encoder half first, then decoder half, both batch-major).
    pe = np.asarray(positional_encoding(S, H))
    b_in = np.asarray(params['lin_in_b'])
    peb = np.concatenate([np.tile(pe[:s_len] + b_in, (B, 1)),
                          np.tile(pe[s_len:] + b_in, (B, 1))], axis=0)
    vs.add('peb', np.pad(peb, ((0, 0), (0, LANE - H))))

    def block_bias(q_len, k_len, causal):
        # Batch block-diagonal (+ optional causal within block) additive bias.
        qi = np.arange(B * q_len)
        ki = np.arange(B * k_len)
        ok = (qi[:, None] // q_len) == (ki[None, :] // k_len)
        if causal:
            ok &= (qi[:, None] % q_len) >= (ki[None, :] % k_len)
        return np.where(ok, 0.0, -1e9).astype(np.float32)

    vs.add('enc_bias', block_bias(s_len, s_len, False))
    vs.add('dec_bias', block_bias(t_len, t_len, True))
    vs.add('x_bias', block_bias(t_len, s_len, False))
    vs.add('b_out', np.pad(np.asarray(params['lin_out_b']), (0, LANE - Fin)))
    vs.add('enc_ng', params['enc_norm_g']); vs.add('enc_nb', params['enc_norm_b'])
    vs.add('dec_ng', params['dec_norm_g']); vs.add('dec_nb', params['dec_norm_b'])
    for l in range(Le):
        vs.add(f'enc{l}_bqkv', e['bqkv'][l]); vs.add(f'enc{l}_bo', e['bo'][l])
        vs.add(f'enc{l}_ln1g', e['ln1g'][l]); vs.add(f'enc{l}_ln1b', e['ln1b'][l])
        vs.add(f'enc{l}_b1', e['b1'][l]);     vs.add(f'enc{l}_b2', e['b2'][l])
        vs.add(f'enc{l}_ln2g', e['ln2g'][l]); vs.add(f'enc{l}_ln2b', e['ln2b'][l])
    for l in range(Ld):
        vs.add(f'dec{l}_bqkv', d['bqkv'][l]); vs.add(f'dec{l}_bo1', d['bo1'][l])
        vs.add(f'dec{l}_ln1g', d['ln1g'][l]); vs.add(f'dec{l}_ln1b', d['ln1b'][l])
        vs.add(f'dec{l}_bq', d['bq'][l]);     vs.add(f'dec{l}_bkv', d['bkv'][l])
        vs.add(f'dec{l}_bo2', d['bo2'][l]);   vs.add(f'dec{l}_ln2g', d['ln2g'][l])
        vs.add(f'dec{l}_ln2b', d['ln2b'][l]); vs.add(f'dec{l}_b1', d['b1'][l])
        vs.add(f'dec{l}_b2', d['b2'][l]);     vs.add(f'dec{l}_ln3g', d['ln3g'][l])
        vs.add(f'dec{l}_ln3b', d['ln3b'][l])

    dims = dict(H=H, FF=FF, Le=Le, Ld=Ld, NE=NE, ND=ND, Fin=Fin)
    return ws.build(BF16), ws.index, vs.build(F32), vs.index, dims


def _cost_estimate(dims, nhead, io_bytes):
    H, FF, Le, Ld = dims['H'], dims['FF'], dims['Le'], dims['Ld']
    NE, ND, Fin = dims['NE'], dims['ND'], dims['Fin']
    mm = lambda m, k, n: 2 * m * k * n
    fl = mm(NE + ND, Fin, LANE)
    fl += Le * (mm(NE, H, 3 * H) + nhead * (mm(NE, H, NE) + mm(NE, NE, H))
                + mm(NE, H, H) + mm(NE, H, FF) + mm(NE, FF, H))
    fl += Ld * (mm(ND, H, 3 * H) + nhead * (mm(ND, H, ND) + mm(ND, ND, H))
                + 2 * mm(ND, H, H) + mm(NE, H, 2 * H)
                + nhead * (mm(ND, H, NE) + mm(ND, NE, H)) + mm(ND, H, H)
                + mm(ND, H, FF) + mm(ND, FF, H))
    fl += mm(ND, H, LANE)
    trans = nhead * (Le * NE * NE + Ld * (ND * ND + ND * NE))
    return pl.CostEstimate(flops=int(fl), transcendentals=int(trans),
                           bytes_accessed=int(io_bytes))


# ----------------------------- fused kernel -----------------------------

def _make_kernel(w_index, v_index, dims, nhead):
    H, FF = dims['H'], dims['FF']
    Le, Ld = dims['Le'], dims['Ld']
    NE, ND = dims['NE'], dims['ND']
    hd = H // nhead
    scale = 1.0 / math.sqrt(hd)

    def kernel(x_ref, w_ref, v_ref, out_ref, src_ref):
        def W(name):                           # bf16 weight, static row offset
            off, r, c = w_index[name]
            return w_ref[off:off + r, :c]

        def V(name):                           # f32 bias/LN/mask, static offset
            off, r, c = v_index[name]
            return v_ref[off:off + r, :c]

        # Per-head 0/1 lane masks, f32 (single kernel invocation -> built once).
        lane = lax.broadcasted_iota(jnp.int32, (1, H), 1)
        head_masks = [((lane >= h * hd) & (lane < (h + 1) * hd)).astype(F32)
                      for h in range(nhead)]

        def layer_norm(z, g, b):
            mean = jnp.mean(z, axis=-1, keepdims=True)
            c = z - mean
            var = jnp.mean(c * c, axis=-1, keepdims=True)
            return c * lax.rsqrt(var + 1e-5) * g + b          # PyTorch eps=1e-5

        def attention(q, k, v, bias):
            # q:(Rq,H)  k,v:(Rk,H) f32.  Per-head scores via lane-masked
            # full-width dots (no reshape/transpose/concat relayout).  Masks
            # are applied in f32 before the bf16 cast; softmax uses an exact
            # divide.  `bias` carries batch block-diagonal (+causal) masking.
            kb = k.astype(BF16)
            out = jnp.zeros((q.shape[0], H), F32)
            for hm in head_masks:
                qh = (q * hm).astype(BF16)
                vh = (v * hm).astype(BF16)
                s = lax.dot_general(qh, kb, (((1,), (1,)), ((), ())),
                                    preferred_element_type=F32) * scale
                s = s + bias
                s = s - jnp.max(s, axis=-1, keepdims=True)
                p = jnp.exp(s)
                p = p / jnp.sum(p, axis=-1, keepdims=True)
                out = out + jnp.dot(p.astype(BF16), vh,
                                    preferred_element_type=F32)
            return out

        def self_attn(xin, wqkv, bqkv, wo, bo, bias):
            qkv = jnp.dot(xin.astype(BF16), wqkv,
                          preferred_element_type=F32) + bqkv
            a = attention(qkv[:, :H], qkv[:, H:2 * H], qkv[:, 2 * H:], bias)
            return jnp.dot(a.astype(BF16), wo, preferred_element_type=F32) + bo

        def cross_attn(xq, mem, wq, bq, wkv, bkv, wo, bo, bias):
            q = jnp.dot(xq.astype(BF16), wq, preferred_element_type=F32) + bq
            kv = jnp.dot(mem.astype(BF16), wkv, preferred_element_type=F32) + bkv
            a = attention(q, kv[:, :H], kv[:, H:], bias)
            return jnp.dot(a.astype(BF16), wo, preferred_element_type=F32) + bo

        def ffn(xin, w1, b1, w2, b2):
            h1 = jnp.dot(xin.astype(BF16), w1, preferred_element_type=F32) + b1
            h1 = jnp.maximum(h1, 0.0)
            return jnp.dot(h1.astype(BF16), w2, preferred_element_type=F32) + b2

        # ---- input projection + positional encoding on the whole row slab ----
        xb = x_ref[...]                                         # (B*S, Fin)
        src_full = (jnp.dot(xb.astype(BF16), W('w_in'),
                            preferred_element_type=F32) + V('peb'))  # (B*S, 128)
        src_ref[...] = src_full                                 # lane-dense store

        h_enc = src_full[:NE, :H]            # encoder rows (8-row aligned slab)
        h_dec = src_full[NE:, :H]            # decoder rows (8-row aligned slab)

        # ---- encoder stack (no causal mask: src_mask never reaches the
        #      nn.Transformer call in the reference) ----
        enc_bias = V('enc_bias')             # batch block-diagonal only
        for l in range(Le):
            sa = self_attn(h_enc, W(f'enc{l}_wqkv'), V(f'enc{l}_bqkv'),
                           W(f'enc{l}_wo'), V(f'enc{l}_bo'), enc_bias)
            h_enc = layer_norm(h_enc + sa, V(f'enc{l}_ln1g'), V(f'enc{l}_ln1b'))
            ff = ffn(h_enc, W(f'enc{l}_w1'), V(f'enc{l}_b1'),
                     W(f'enc{l}_w2'), V(f'enc{l}_b2'))
            h_enc = layer_norm(h_enc + ff, V(f'enc{l}_ln2g'), V(f'enc{l}_ln2b'))
        mem = layer_norm(h_enc, V('enc_ng'), V('enc_nb'))

        # ---- decoder stack ----
        dec_bias = V('dec_bias')             # causal + batch block-diagonal
        x_bias = V('x_bias')                 # batch block-diagonal (cross attn)
        for l in range(Ld):
            sa = self_attn(h_dec, W(f'dec{l}_wqkv'), V(f'dec{l}_bqkv'),
                           W(f'dec{l}_wo1'), V(f'dec{l}_bo1'), dec_bias)
            h_dec = layer_norm(h_dec + sa, V(f'dec{l}_ln1g'), V(f'dec{l}_ln1b'))
            ca = cross_attn(h_dec, mem, W(f'dec{l}_wq'), V(f'dec{l}_bq'),
                            W(f'dec{l}_wkv'), V(f'dec{l}_bkv'),
                            W(f'dec{l}_wo2'), V(f'dec{l}_bo2'), x_bias)
            h_dec = layer_norm(h_dec + ca, V(f'dec{l}_ln2g'), V(f'dec{l}_ln2b'))
            ff = ffn(h_dec, W(f'dec{l}_w1'), V(f'dec{l}_b1'),
                     W(f'dec{l}_w2'), V(f'dec{l}_b2'))
            h_dec = layer_norm(h_dec + ff, V(f'dec{l}_ln3g'), V(f'dec{l}_ln3b'))
        h_dec = layer_norm(h_dec, V('dec_ng'), V('dec_nb'))

        # ---- output projection, lane-padded to 128 for dense stores ----
        out_ref[...] = (jnp.dot(h_dec.astype(BF16), W('w_out'),
                                preferred_element_type=F32) + V('b_out'))

    return kernel


# ----------------------------- forward wrapper -----------------------------

def transformer_forecast_forward(params, x, target, *, nhead=4):
    B, S, Fin = x.shape
    H = params['lin_in_w'].shape[1]
    # TODO(synk): split_seq is not defined in the reference module; using a
    # deterministic half/half split (encoder src = first half, decoder input =
    # second half, tgt = target second half), pad=False.
    s_len = S // 2
    t_len = S - s_len
    NE, ND = B * s_len, B * t_len

    w_slab, w_index, v_slab, v_index, dims = _prep_params(
        params, B, S, Fin, s_len, nhead)

    # Batch folded into rows; encoder-half rows first, then decoder-half rows
    # (both batch-major) so each half is an 8-row-aligned slab in the kernel.
    x_perm = jnp.concatenate(
        [x[:, :s_len].reshape(NE, Fin), x[:, s_len:].reshape(ND, Fin)],
        axis=0).astype(F32)

    io_bytes = sum(int(a.size) * a.dtype.itemsize for a in (x_perm, w_slab, v_slab))
    io_bytes += (ND * LANE + B * S * LANE) * 4
    vmem_limit = int(min(100 * 2 ** 20, max(32 * 2 ** 20, 4 * io_bytes)))

    kernel = _make_kernel(w_index, v_index, dims, nhead)
    out_pad, src_pad = pl.pallas_call(
        kernel,
        out_shape=(jax.ShapeDtypeStruct((ND, LANE), F32),
                   jax.ShapeDtypeStruct((B * S, LANE), F32)),
        in_specs=[pl.BlockSpec(x_perm.shape, lambda: (0, 0)),
                  pl.BlockSpec(w_slab.shape, lambda: (0, 0)),
                  pl.BlockSpec(v_slab.shape, lambda: (0, 0))],
        out_specs=(pl.BlockSpec((ND, LANE), lambda: (0, 0)),
                   pl.BlockSpec((B * S, LANE), lambda: (0, 0))),
        compiler_params=pltpu.CompilerParams(vmem_limit_bytes=vmem_limit),
        cost_estimate=_cost_estimate(dims, nhead, io_bytes),
    )(x_perm, w_slab, v_slab)

    out = out_pad.reshape(B, t_len, LANE)[:, :, :Fin]
    x_src = src_pad[:NE, :H].reshape(B, s_len, H)
    x_tgt = src_pad[NE:, :H].reshape(B, t_len, H)
    tgt = target[:, s_len:]
    src_len = jnp.full((B,), s_len, jnp.int32)
    tgt_len = jnp.full((B,), t_len, jnp.int32)
    return out, x_src, x_tgt, tgt, src_len, tgt_len


if __name__ == "__main__":
    B, S, Fin, H, NH, FF = 2, 8, 4, 32, 4, 64
    key = jax.random.PRNGKey(0)
    kx, kt, kprm = jax.random.split(key, 3)
    x = jax.random.normal(kx, (B, S, Fin), dtype=F32)
    target = (jax.random.uniform(kt, (B, S, Fin)) > 0.5).astype(F32)
    params = init_params(kprm, Fin, H, n_enc=3, n_dec=3, ffdim=FF)

    out, x_src, x_tgt, tgt, src_len, tgt_len = transformer_forecast_forward(
        params, x, target, nhead=NH)
    jax.block_until_ready(out)
    assert out.shape == (B, S - S // 2, Fin)
    assert x_src.shape == (B, S // 2, H)
    assert x_tgt.shape == (B, S - S // 2, H)
    assert bool(jnp.all(jnp.isfinite(out)))
    print("KERNEL_OK")
</pallas_src>

<mosaic_0001>
module attributes {stable_mosaic.version = 11 : i64} {
  func.func @kernel(%arg0: memref<16x4xf32, #tpu.memory_space<vmem>>, %arg1: memref<1296x128xbf16, #tpu.memory_space<vmem>>, %arg2: memref<108x128xf32, #tpu.memory_space<vmem>>, %arg3: memref<8x128xf32, #tpu.memory_space<vmem>>, %arg4: memref<16x128xf32, #tpu.memory_space<vmem>>) attributes {dimension_semantics = [], scalar_prefetch = 0 : i64, scratch_operands = 0 : i64, tpu.core_type = #tpu.core_type<tc>} {
    %0 = tpu.iota {dimensions = array<i32: 1>} : vector<1x32xi32>
    %c0_i32 = arith.constant 0 : i32
    %1 = vector.broadcast %c0_i32 : i32 to vector<1x32xi32>
    %2 = arith.cmpi sge, %0, %1 : vector<1x32xi32>
    %c8_i32 = arith.constant 8 : i32
    %3 = vector.broadcast %c8_i32 : i32 to vector<1x32xi32>
    %4 = arith.cmpi slt, %0, %3 : vector<1x32xi32>
    %5 = arith.andi %2, %4 : vector<1x32xi1>
    %6 = arith.extui %5 : vector<1x32xi1> to vector<1x32xi32>
    %7 = arith.sitofp %6 : vector<1x32xi32> to vector<1x32xf32>
    %c8_i32_0 = arith.constant 8 : i32
    %8 = vector.broadcast %c8_i32_0 : i32 to vector<1x32xi32>
    %9 = arith.cmpi sge, %0, %8 : vector<1x32xi32>
    %c16_i32 = arith.constant 16 : i32
    %10 = vector.broadcast %c16_i32 : i32 to vector<1x32xi32>
    %11 = arith.cmpi slt, %0, %10 : vector<1x32xi32>
    %12 = arith.andi %9, %11 : vector<1x32xi1>
    %13 = arith.extui %12 : vector<1x32xi1> to vector<1x32xi32>
    %14 = arith.sitofp %13 : vector<1x32xi32> to vector<1x32xf32>
    %c16_i32_1 = arith.constant 16 : i32
    %15 = vector.broadcast %c16_i32_1 : i32 to vector<1x32xi32>
    %16 = arith.cmpi sge, %0, %15 : vector<1x32xi32>
    %c24_i32 = arith.constant 24 : i32
    %17 = vector.broadcast %c24_i32 : i32 to vector<1x32xi32>
    %18 = arith.cmpi slt, %0, %17 : vector<1x32xi32>
    %19 = arith.andi %16, %18 : vector<1x32xi1>
    %20 = arith.extui %19 : vector<1x32xi1> to vector<1x32xi32>
    %21 = arith.sitofp %20 : vector<1x32xi32> to vector<1x32xf32>
    %c24_i32_2 = arith.constant 24 : i32
    %22 = vector.broadcast %c24_i32_2 : i32 to vector<1x32xi32>
    %23 = arith.cmpi sge, %0, %22 : vector<1x32xi32>
    %c32_i32 = arith.constant 32 : i32
    %24 = vector.broadcast %c32_i32 : i32 to vector<1x32xi32>
    %25 = arith.cmpi slt, %0, %24 : vector<1x32xi32>
    %26 = arith.andi %23, %25 : vector<1x32xi1>
    %27 = arith.extui %26 : vector<1x32xi1> to vector<1x32xi32>
    %28 = arith.sitofp %27 : vector<1x32xi32> to vector<1x32xf32>
    %c0 = arith.constant 0 : index
    %c0_3 = arith.constant 0 : index
    %29 = vector.load %arg0[%c0, %c0_3] : memref<16x4xf32, #tpu.memory_space<vmem>>, vector<16x4xf32>
    %30 = arith.truncf %29 : vector<16x4xf32> to vector<16x4xbf16>
    %c0_4 = arith.constant 0 : index
    %c0_5 = arith.constant 0 : index
    %31 = vector.load %arg1[%c0_4, %c0_5] : memref<1296x128xbf16, #tpu.memory_space<vmem>>, vector<4x128xbf16>
    %cst = arith.constant dense<0.000000e+00> : vector<16x128xf32>
    %32 = tpu.matmul %30, %31, %cst {dimension_numbers = #tpu.dot_dimension_numbers<[1], [0], [0], [1], [0, 0, 1, 1], [], []>} : vector<16x4xbf16>, vector<4x128xbf16>, vector<16x128xf32> -> vector<16x128xf32>
    %c0_6 = arith.constant 0 : index
    %c0_7 = arith.constant 0 : index
    %33 = vector.load %arg2[%c0_6, %c0_7] : memref<108x128xf32, #tpu.memory_space<vmem>>, vector<16x128xf32>
    %34 = arith.addf %32, %33 : vector<16x128xf32>
    %c0_8 = arith.constant 0 : index
    %c0_9 = arith.constant 0 : index
    %35 = vector.load %arg4[%c0_8, %c0_9] : memref<16x128xf32, #tpu.memory_space<vmem>>, vector<16x128xf32>
    tpu.vector_store %arg4[%c0_8, %c0_9], %34 {strides = array<i32>} : memref<16x128xf32, #tpu.memory_space<vmem>>, vector<16x128xf32>,
    %36 = vector.extract_strided_slice %34 {offsets = [0, 0], sizes = [8, 32], strides = [1, 1]} : vector<16x128xf32> to vector<8x32xf32>
    %37 = vector.extract_strided_slice %34 {offsets = [8, 0], sizes = [8, 32], strides = [1, 1]} : vector<16x128xf32> to vector<8x32xf32>
    %c16 = arith.constant 16 : index
    %c0_10 = arith.constant 0 : index
    %38 = vector.load %arg2[%c16, %c0_10] : memref<108x128xf32, #tpu.memory_space<vmem>>, vector<8x8xf32>
    %c48 = arith.constant 48 : index
    %c0_11 = arith.constant 0 : index
    %39 = vector.load %arg1[%c48, %c0_11] : memref<1296x128xbf16, #tpu.memory_space<vmem>>, vector<32x96xbf16>
    %c45 = arith.constant 45 : index
    %c0_12 = arith.constant 0 : index
    %40 = vector.load %arg2[%c45, %c0_12] : memref<108x128xf32, #tpu.memory_space<vmem>>, vector<1x96xf32>
    %c80 = arith.constant 80 : index
    %c0_13 = arith.constant 0 : index
    %41 = vector.load %arg1[%c80, %c0_13] : memref<1296x128xbf16, #tpu.memory_space<vmem>>, vector<32x32xbf16>
    %c46 = arith.constant 46 : index
    %c0_14 = arith.constant 0 : index
    %42 = vector.load %arg2[%c46, %c0_14] : memref<108x128xf32, #tpu.memory_space<vmem>>, vector<1x32xf32>
    %43 = arith.truncf %36 : vector<8x32xf32> to vector<8x32xbf16>
    %cst_15 = arith.constant dense<0.000000e+00> : vector<8x96xf32>
    %44 = tpu.matmul %43, %39, %cst_15 {dimension_numbers = #tpu.dot_dimension_numbers<[1], [0], [0], [1], [0, 0, 1, 1], [], []>} : vector<8x32xbf16>, vector<32x96xbf16>, vector<8x96xf32> -> vector<8x96xf32>
    %45 = vector.broadcast %40 : vector<1x96xf32> to vector<8x96xf32>
    %46 = arith.addf %44, %45 : vector<8x96xf32>
    %47 = vector.extract_strided_slice %46 {offsets = [0, 0], sizes = [8, 32], strides = [1, 1]} : vector<8x96xf32> to vector<8x32xf32>
    %48 = vector.extract_strided_slice %46 {offsets = [0, 32], sizes = [8, 32], strides = [1, 1]} : vector<8x96xf32> to vector<8x32xf32>
    %49 = vector.extract_strided_slice %46 {offsets = [0, 64], sizes = [8, 32], strides = [1, 1]} : vector<8x96xf32> to vector<8x32xf32>
    %50 = arith.truncf %48 : vector<8x32xf32> to vector<8x32xbf16>
    %cst_16 = arith.constant 0.000000e+00 : f32
    %51 = vector.broadcast %cst_16 : f32 to vector<8x32xf32>
    %52 = vector.broadcast %7 : vector<1x32xf32> to vector<8x32xf32>
    %53 = arith.mulf %47, %52 : vector<8x32xf32>
    %54 = arith.truncf %53 : vector<8x32xf32> to vector<8x32xbf16>
    %55 = vector.broadcast %7 : vector<1x32xf32> to vector<8x32xf32>
    %56 = arith.mulf %49, %55 : vector<8x32xf32>
    %57 = arith.truncf %56 : vector<8x32xf32> to vector<8x32xbf16>
    %cst_17 = arith.constant dense<0.000000e+00> : vector<8x8xf32>
    %58 = tpu.matmul %54, %50, %cst_17 {dimension_numbers = #tpu.dot_dimension_numbers<[1], [1], [0], [0], [0, 0, 1, 0], [], []>} : vector<8x32xbf16>, vector<8x32xbf16>, vector<8x8xf32> -> vector<8x8xf32>
    %cst_18 = arith.constant 0.353553385 : f32
    %59 = vector.broadcast %cst_18 : f32 to vector<8x8xf32>
    %60 = arith.mulf %58, %59 : vector<8x8xf32>
    %61 = arith.addf %60, %38 : vector<8x8xf32>
    %cst_19 = arith.constant dense<0xFF800000> : vector<8xf32>
    %62 = vector.multi_reduction <maximumf>, %61, %cst_19 [1] : vector<8x8xf32> to vector<8xf32>
    %63 = vector.shape_cast %62 : vector<8xf32> to vector<8x1xf32>
    %64 = vector.broadcast %63 : vector<8x1xf32> to vector<8x8xf32>
    %65 = arith.subf %61, %64 : vector<8x8xf32>
    %66 = math.exp %65 : vector<8x8xf32>
    %cst_20 = arith.constant dense<0.000000e+00> : vector<8xf32>
    %67 = vector.multi_reduction <add>, %66, %cst_20 [1] : vector<8x8xf32> to vector<8xf32>
    %68 = vector.shape_cast %67 : vector<8xf32> to vector<8x1xf32>
    %69 = vector.broadcast %68 : vector<8x1xf32> to vector<8x8xf32>
    %70 = arith.divf %66, %69 : vector<8x8xf32>
    %71 = arith.truncf %70 : vector<8x8xf32> to vector<8x8xbf16>
    %cst_21 = arith.constant dense<0.000000e+00> : vector<8x32xf32>
    %72 = tpu.matmul %71, %57, %cst_21 {dimension_numbers = #tpu.dot_dimension_numbers<[1], [0], [0], [1], [0, 0, 1, 1], [], []>} : vector<8x8xbf16>, vector<8x32xbf16>, vector<8x32xf32> -> vector<8x32xf32>
    %73 = arith.addf %51, %72 : vector<8x32xf32>
    %74 = vector.broadcast %14 : vector<1x32xf32> to vector<8x32xf32>
    %75 = arith.mulf %47, %74 : vector<8x32xf32>
    %76 = arith.truncf %75 : vector<8x32xf32> to vector<8x32xbf16>
    %77 = vector.broadcast %14 : vector<1x32xf32> to vector<8x32xf32>
    %78 = arith.mulf %49, %77 : vector<8x32xf32>
    %79 = arith.truncf %78 : vector<8x32xf32> to vector<8x32xbf16>
    %cst_22 = arith.constant dense<0.000000e+00> : vector<8x8xf32>
    %80 = tpu.matmul %76, %50, %cst_22 {dimension_numbers = #tpu.dot_dimension_numbers<[1], [1], [0], [0], [0, 0, 1, 0], [], []>} : vector<8x32xbf16>, vector<8x32xbf16>, vector<8x8xf32> -> vector<8x8xf32>
    %cst_23 = arith.constant 0.353553385 : f32
    %81 = vector.broadcast %cst_23 : f32 to vector<8x8xf32>
    %82 = arith.mulf %80, %81 : vector<8x8xf32>
    %83 = arith.addf %82, %38 : vector<8x8xf32>
    %cst_24 = arith.constant dense<0xFF800000> : vector<8xf32>
    %84 = vector.multi_reduction <maximumf>, %83, %cst_24 [1] : vector<8x8xf32> to vector<8xf32>
    %85 = vector.shape_cast %84 : vector<8xf32> to vector<8x1xf32>
    %86 = vector.broadcast %85 : vector<8x1xf32> to vector<8x8xf32>
    %87 = arith.subf %83, %86 : vector<8x8xf32>
    %88 = math.exp %87 : vector<8x8xf32>
    %cst_25 = arith.constant dense<0.000000e+00> : vector<8xf32>
    %89 = vector.multi_reduction <add>, %88, %cst_25 [1] : vector<8x8xf32> to vector<8xf32>
    %90 = vector.shape_cast %89 : vector<8xf32> to vector<8x1xf32>
    %91 = vector.broadcast %90 : vector<8x1xf32> to vector<8x8xf32>
    %92 = arith.divf %88, %91 : vector<8x8xf32>
    %93 = arith.truncf %92 : vector<8x8xf32> to vector<8x8xbf16>
    %cst_26 = arith.constant dense<0.000000e+00> : vector<8x32xf32>
    %94 = tpu.matmul %93, %79, %cst_26 {dimension_numbers = #tpu.dot_dimension_numbers<[1], [0], [0], [1], [0, 0, 1, 1], [], []>} : vector<8x8xbf16>, vector<8x32xbf16>, vector<8x32xf32> -> vector<8x32xf32>
    %95 = arith.addf %73, %94 : vector<8x32xf32>
    %96 = vector.broadcast %21 : vector<1x32xf32> to vector<8x32xf32>
    %97 = arith.mulf %47, %96 : vector<8x32xf32>
    %98 = arith.truncf %97 : vector<8x32xf32> to vector<8x32xbf16>
    %99 = vector.broadcast %21 : vector<1x32xf32> to vector<8x32xf32>
    %100 = arith.mulf %49, %99 : vector<8x32xf32>
    %101 = arith.truncf %100 : vector<8x32xf32> to vector<8x32xbf16>
    %cst_27 = arith.constant dense<0.000000e+00> : vector<8x8xf32>
    %102 = tpu.matmul %98, %50, %cst_27 {dimension_numbers = #tpu.dot_dimension_numbers<[1], [1], [0], [0], [0, 0, 1, 0], [], []>} : vector<8x32xbf16>, vector<8x32xbf16>, vector<8x8xf32> -> vector<8x8xf32>
    %cst_28 = arith.constant 0.353553385 : f32
    %103 = vector.broadcast %cst_28 : f32 to vector<8x8xf32>
    %104 = arith.mulf %102, %103 : vector<8x8xf32>
    %105 = arith.addf %104, %38 : vector<8x8xf32>
    %cst_29 = arith.constant dense<0xFF800000> : vector<8xf32>
    %106 = vector.multi_reduction <maximumf>, %105, %cst_29 [1] : vector<8x8xf32> to vector<8xf32>
    %107 = vector.shape_cast %106 : vector<8xf32> to vector<8x1xf32>
    %108 = vector.broadcast %107 : vector<8x1xf32> to vector<8x8xf32>
    %109 = arith.subf %105, %108 : vector<8x8xf32>
    %110 = math.exp %109 : vector<8x8xf32>
    %cst_30 = arith.constant dense<0.000000e+00> : vector<8xf32>
    %111 = vector.multi_reduction <add>, %110, %cst_30 [1] : vector<8x8xf32> to vector<8xf32>
    %112 = vector.shape_cast %111 : vector<8xf32> to vector<8x1xf32>
    %113 = vector.broadcast %112 : vector<8x1xf32> to vector<8x8xf32>
    %114 = arith.divf %110, %113 : vector<8x8xf32>
    %115 = arith.truncf %114 : vector<8x8xf32> to vector<8x8xbf16>
    %cst_31 = arith.constant dense<0.000000e+00> : vector<8x32xf32>
    %116 = tpu.matmul %115, %101, %cst_31 {dimension_numbers = #tpu.dot_dimension_numbers<[1], [0], [0], [1], [0, 0, 1, 1], [], []>} : vector<8x8xbf16>, vector<8x32xbf16>, vector<8x32xf32> -> vector<8x32xf32>
    %117 = arith.addf %95, %116 : vector<8x32xf32>
    %118 = vector.broadcast %28 : vector<1x32xf32> to vector<8x32xf32>
    %119 = arith.mulf %47, %118 : vector<8x32xf32>
    %120 = arith.truncf %119 : vector<8x32xf32> to vector<8x32xbf16>
    %121 = vector.broadcast %28 : vector<1x32xf32> to vector<8x32xf32>
    %122 = arith.mulf %49, %121 : vector<8x32xf32>
    %123 = arith.truncf %122 : vector<8x32xf32> to vector<8x32xbf16>
    %cst_32 = arith.constant dense<0.000000e+00> : vector<8x8xf32>
    %124 = tpu.matmul %120, %50, %cst_32 {dimension_numbers = #tpu.dot_dimension_numbers<[1], [1], [0], [0], [0, 0, 1, 0], [], []>} : vector<8x32xbf16>, vector<8x32xbf16>, vector<8x8xf32> -> vector<8x8xf32>
    %cst_33 = arith.constant 0.353553385 : f32
    %125 = vector.broadcast %cst_33 : f32 to vector<8x8xf32>
    %126 = arith.mulf %124, %125 : vector<8x8xf32>
    %127 = arith.addf %126, %38 : vector<8x8xf32>
    %cst_34 = arith.constant dense<0xFF800000> : vector<8xf32>
    %128 = vector.multi_reduction <maximumf>, %127, %cst_34 [1] : vector<8x8xf32> to vector<8xf32>
    %129 = vector.shape_cast %128 : vector<8xf32> to vector<8x1xf32>
    %130 = vector.broadcast %129 : vector<8x1xf32> to vector<8x8xf32>
    %131 = arith.subf %127, %130 : vector<8x8xf32>
    %132 = math.exp %131 : vector<8x8xf32>
    %cst_35 = arith.constant dense<0.000000e+00> : vector<8xf32>
    %133 = vector.multi_reduction <add>, %132, %cst_35 [1] : vector<8x8xf32> to vector<8xf32>
    %134 = vector.shape_cast %133 : vector<8xf32> to vector<8x1xf32>
    %135 = vector.broadcast %134 : vector<8x1xf32> to vector<8x8xf32>
    %136 = arith.divf %132, %135 : vector<8x8xf32>
    %137 = arith.truncf %136 : vector<8x8xf32> to vector<8x8xbf16>
    %cst_36 = arith.constant dense<0.000000e+00> : vector<8x32xf32>
    %138 = tpu.matmul %137, %123, %cst_36 {dimension_numbers = #tpu.dot_dimension_numbers<[1], [0], [0], [1], [0, 0, 1, 1], [], []>} : vector<8x8xbf16>, vector<8x32xbf16>, vector<8x32xf32> -> vector<8x32xf32>
    %139 = arith.addf %117, %138 : vector<8x32xf32>
    %140 = arith.truncf %139 : vector<8x32xf32> to vector<8x32xbf16>
    %cst_37 = arith.constant dense<0.000000e+00> : vector<8x32xf32>
    %141 = tpu.matmul %140, %41, %cst_37 {dimension_numbers = #tpu.dot_dimension_numbers<[1], [0], [0], [1], [0, 0, 1, 1], [], []>} : vector<8x32xbf16>, vector<32x32xbf16>, vector<8x32xf32> -> vector<8x32xf32>
    %142 = vector.broadcast %42 : vector<1x32xf32> to vector<8x32xf32>
    %143 = arith.addf %141, %142 : vector<8x32xf32>
    %144 = arith.addf %36, %143 : vector<8x32xf32>
    %c47 = arith.constant 47 : index
    %c0_38 = arith.constant 0 : index
    %145 = vector.load %arg2[%c47, %c0_38] : memref<108x128xf32, #tpu.memory_space<vmem>>, vector<1x32xf32>
    %c48_39 = arith.constant 48 : index
    %c0_40 = arith.constant 0 : index
    %146 = vector.load %arg2[%c48_39, %c0_40] : memref<108x128xf32, #tpu.memory_space<vmem>>, vector<1x32xf32>
    %cst_41 = arith.constant dense<0.000000e+00> : vector<8xf32>
    %147 = vector.multi_reduction <add>, %144, %cst_41 [1] : vector<8x32xf32> to vector<8xf32>
    %148 = vector.shape_cast %147 : vector<8xf32> to vector<8x1xf32>
    %cst_42 = arith.constant 3.200000e+01 : f32
    %149 = vector.broadcast %cst_42 : f32 to vector<8x1xf32>
    %150 = arith.divf %148, %149 : vector<8x1xf32>
    %151 = vector.broadcast %150 : vector<8x1xf32> to vector<8x32xf32>
    %152 = arith.subf %144, %151 : vector<8x32xf32>
    %153 = arith.mulf %152, %152 : vector<8x32xf32>
    %cst_43 = arith.constant dense<0.000000e+00> : vector<8xf32>
    %154 = vector.multi_reduction <add>, %153, %cst_43 [1] : vector<8x32xf32> to vector<8xf32>
    %155 = vector.shape_cast %154 : vector<8xf32> to vector<8x1xf32>
    %cst_44 = arith.constant 3.200000e+01 : f32
    %156 = vector.broadcast %cst_44 : f32 to vector<8x1xf32>
    %157 = arith.divf %155, %156 : vector<8x1xf32>
    %cst_45 = arith.constant 9.99999974E-6 : f32
    %158 = vector.broadcast %cst_45 : f32 to vector<8x1xf32>
    %159 = arith.addf %157, %158 : vector<8x1xf32>
    %160 = math.rsqrt %159 : vector<8x1xf32>
    %161 = vector.broadcast %160 : vector<8x1xf32> to vector<8x32xf32>
    %162 = arith.mulf %152, %161 : vector<8x32xf32>
    %163 = vector.broadcast %145 : vector<1x32xf32> to vector<8x32xf32>
    %164 = arith.mulf %162, %163 : vector<8x32xf32>
    %165 = vector.broadcast %146 : vector<1x32xf32> to vector<8x32xf32>
    %166 = arith.addf %164, %165 : vector<8x32xf32>
    %c112 = arith.constant 112 : index
    %c0_46 = arith.constant 0 : index
    %167 = vector.load %arg1[%c112, %c0_46] : memref<1296x128xbf16, #tpu.memory_space<vmem>>, vector<32x64xbf16>
    %c49 = arith.constant 49 : index
    %c0_47 = arith.constant 0 : index
    %168 = vector.load %arg2[%c49, %c0_47] : memref<108x128xf32, #tpu.memory_space<vmem>>, vector<1x64xf32>
    %c144 = arith.constant 144 : index
    %c0_48 = arith.constant 0 : index
    %169 = vector.load %arg1[%c144, %c0_48] : memref<1296x128xbf16, #tpu.memory_space<vmem>>, vector<64x32xbf16>
    %c50 = arith.constant 50 : index
    %c0_49 = arith.constant 0 : index
    %170 = vector.load %arg2[%c50, %c0_49] : memref<108x128xf32, #tpu.memory_space<vmem>>, vector<1x32xf32>
    %171 = arith.truncf %166 : vector<8x32xf32> to vector<8x32xbf16>
    %cst_50 = arith.constant dense<0.000000e+00> : vector<8x64xf32>
    %172 = tpu.matmul %171, %167, %cst_50 {dimension_numbers = #tpu.dot_dimension_numbers<[1], [0], [0], [1], [0, 0, 1, 1], [], []>} : vector<8x32xbf16>, vector<32x64xbf16>, vector<8x64xf32> -> vector<8x64xf32>
    %173 = vector.broadcast %168 : vector<1x64xf32> to vector<8x64xf32>
    %174 = arith.addf %172, %173 : vector<8x64xf32>
    %cst_51 = arith.constant 0.000000e+00 : f32
    %175 = vector.broadcast %cst_51 : f32 to vector<8x64xf32>
    %176 = arith.maximumf %174, %175 : vector<8x64xf32>
    %177 = arith.truncf %176 : vector<8x64xf32> to vector<8x64xbf16>
    %cst_52 = arith.constant dense<0.000000e+00> : vector<8x32xf32>
    %178 = tpu.matmul %177, %169, %cst_52 {dimension_numbers = #tpu.dot_dimension_numbers<[1], [0], [0], [1], [0, 0, 1, 1], [], []>} : vector<8x64xbf16>, vector<64x32xbf16>, vector<8x32xf32> -> vector<8x32xf32>
    %179 = vector.broadcast %170 : vector<1x32xf32> to vector<8x32xf32>
    %180 = arith.addf %178, %179 : vector<8x32xf32>
    %181 = arith.addf %166, %180 : vector<8x32xf32>
    %c51 = arith.constant 51 : index
    %c0_53 = arith.constant 0 : index
    %182 = vector.load %arg2[%c51, %c0_53] : memref<108x128xf32, #tpu.memory_space<vmem>>, vector<1x32xf32>
    %c52 = arith.constant 52 : index
    %c0_54 = arith.constant 0 : index
    %183 = vector.load %arg2[%c52, %c0_54] : memref<108x128xf32, #tpu.memory_space<vmem>>, vector<1x32xf32>
    %cst_55 = arith.constant dense<0.000000e+00> : vector<8xf32>
    %184 = vector.multi_reduction <add>, %181, %cst_55 [1] : vector<8x32xf32> to vector<8xf32>
    %185 = vector.shape_cast %184 : vector<8xf32> to vector<8x1xf32>
    %cst_56 = arith.constant 3.200000e+01 : f32
    %186 = vector.broadcast %cst_56 : f32 to vector<8x1xf32>
    %187 = arith.divf %185, %186 : vector<8x1xf32>
    %188 = vector.broadcast %187 : vector<8x1xf32> to vector<8x32xf32>
    %189 = arith.subf %181, %188 : vector<8x32xf32>
    %190 = arith.mulf %189, %189 : vector<8x32xf32>
    %cst_57 = arith.constant dense<0.000000e+00> : vector<8xf32>
    %191 = vector.multi_reduction <add>, %190, %cst_57 [1] : vector<8x32xf32> to vector<8xf32>
    %192 = vector.shape_cast %191 : vector<8xf32> to vector<8x1xf32>
    %cst_58 = arith.constant 3.200000e+01 : f32
    %193 = vector.broadcast %cst_58 : f32 to vector<8x1xf32>
    %194 = arith.divf %192, %193 : vector<8x1xf32>
    %cst_59 = arith.constant 9.99999974E-6 : f32
    %195 = vector.broadcast %cst_59 : f32 to vector<8x1xf32>
    %196 = arith.addf %194, %195 : vector<8x1xf32>
    %197 = math.rsqrt %196 : vector<8x1xf32>
    %198 = vector.broadcast %197 : vector<8x1xf32> to vector<8x32xf32>
    %199 = arith.mulf %189, %198 : vector<8x32xf32>
    %200 = vector.broadcast %182 : vector<1x32xf32> to vector<8x32xf32>
    %201 = arith.mulf %199, %200 : vector<8x32xf32>
    %202 = vector.broadcast %183 : vector<1x32xf32> to vector<8x32xf32>
    %203 = arith.addf %201, %202 : vector<8x32xf32>
    %c208 = arith.constant 208 : index
    %c0_60 = arith.constant 0 : index
    %204 = vector.load %arg1[%c208, %c0_60] : memref<1296x128xbf16, #tpu.memory_space<vmem>>, vector<32x96xbf16>
    %c53 = arith.constant 53 : index
    %c0_61 = arith.constant 0 : index
    %205 = vector.load %arg2[%c53, %c0_61] : memref<108x128xf32, #tpu.memory_space<vmem>>, vector<1x96xf32>
    %c240 = arith.constant 240 : index
    %c0_62 = arith.constant 0 : index
    %206 = vector.load %arg1[%c240, %c0_62] : memref<1296x128xbf16, #tpu.memory_space<vmem>>, vector<32x32xbf16>
    %c54 = arith.constant 54 : index
    %c0_63 = arith.constant 0 : index
    %207 = vector.load %arg2[%c54, %c0_63] : memref<108x128xf32, #tpu.memory_space<vmem>>, vector<1x32xf32>
    %208 = arith.truncf %203 : vector<8x32xf32> to vector<8x32xbf16>
    %cst_64 = arith.constant dense<0.000000e+00> : vector<8x96xf32>
    %209 = tpu.matmul %208, %204, %cst_64 {dimension_numbers = #tpu.dot_dimension_numbers<[1], [0], [0], [1], [0, 0, 1, 1], [], []>} : vector<8x32xbf16>, vector<32x96xbf16>, vector<8x96xf32> -> vector<8x96xf32>
    %210 = vector.broadcast %205 : vector<1x96xf32> to vector<8x96xf32>
    %211 = arith.addf %209, %210 : vector<8x96xf32>
    %212 = vector.extract_strided_slice %211 {offsets = [0, 0], sizes = [8, 32], strides = [1, 1]} : vector<8x96xf32> to vector<8x32xf32>
    %213 = vector.extract_strided_slice %211 {offsets = [0, 32], sizes = [8, 32], strides = [1, 1]} : vector<8x96xf32> to vector<8x32xf32>
    %214 = vector.extract_strided_slice %211 {offsets = [0, 64], sizes = [8, 32], strides = [1, 1]} : vector<8x96xf32> to vector<8x32xf32>
    %215 = arith.truncf %213 : vector<8x32xf32> to vector<8x32xbf16>
    %cst_65 = arith.constant 0.000000e+00 : f32
    %216 = vector.broadcast %cst_65 : f32 to vector<8x32xf32>
    %217 = vector.broadcast %7 : vector<1x32xf32> to vector<8x32xf32>
    %218 = arith.mulf %212, %217 : vector<8x32xf32>
    %219 = arith.truncf %218 : vector<8x32xf32> to vector<8x32xbf16>
    %220 = vector.broadcast %7 : vector<1x32xf32> to vector<8x32xf32>
    %221 = arith.mulf %214, %220 : vector<8x32xf32>
    %222 = arith.truncf %221 : vector<8x32xf32> to vector<8x32xbf16>
    %cst_66 = arith.constant dense<0.000000e+00> : vector<8x8xf32>
    %223 = tpu.matmul %219, %215, %cst_66 {dimension_numbers = #tpu.dot_dimension_numbers<[1], [1], [0], [0], [0, 0, 1, 0], [], []>} : vector<8x32xbf16>, vector<8x32xbf16>, vector<8x8xf32> -> vector<8x8xf32>
    %cst_67 = arith.constant 0.353553385 : f32
    %224 = vector.broadcast %cst_67 : f32 to vector<8x8xf32>
    %225 = arith.mulf %223, %224 : vector<8x8xf32>
    %226 = arith.addf %225, %38 : vector<8x8xf32>
    %cst_68 = arith.constant dense<0xFF800000> : vector<8xf32>
    %227 = vector.multi_reduction <maximumf>, %226, %cst_68 [1] : vector<8x8xf32> to vector<8xf32>
    %228 = vector.shape_cast %227 : vector<8xf32> to vector<8x1xf32>
    %229 = vector.broadcast %228 : vector<8x1xf32> to vector<8x8xf32>
    %230 = arith.subf %226, %229 : vector<8x8xf32>
    %231 = math.exp %230 : vector<8x8xf32>
    %cst_69 = arith.constant dense<0.000000e+00> : vector<8xf32>
    %232 = vector.multi_reduction <add>, %231, %cst_69 [1] : vector<8x8xf32> to vector<8xf32>
    %233 = vector.shape_cast %232 : vector<8xf32> to vector<8x1xf32>
    %234 = vector.broadcast %233 : vector<8x1xf32> to vector<8x8xf32>
    %235 = arith.divf %231, %234 : vector<8x8xf32>
    %236 = arith.truncf %235 : vector<8x8xf32> to vector<8x8xbf16>
    %cst_70 = arith.constant dense<0.000000e+00> : vector<8x32xf32>
    %237 = tpu.matmul %236, %222, %cst_70 {dimension_numbers = #tpu.dot_dimension_numbers<[1], [0], [0], [1], [0, 0, 1, 1], [], []>} : vector<8x8xbf16>, vector<8x32xbf16>, vector<8x32xf32> -> vector<8x32xf32>
    %238 = arith.addf %216, %237 : vector<8x32xf32>
    %239 = vector.broadcast %14 : vector<1x32xf32> to vector<8x32xf32>
    %240 = arith.mulf %212, %239 : vector<8x32xf32>
    %241 = arith.truncf %240 : vector<8x32xf32> to vector<8x32xbf16>
    %242 = vector.broadcast %14 : vector<1x32xf32> to vector<8x32xf32>
    %243 = arith.mulf %214, %242 : vector<8x32xf32>
    %244 = arith.truncf %243 : vector<8x32xf32> to vector<8x32xbf16>
    %cst_71 = arith.constant dense<0.000000e+00> : vector<8x8xf32>
    %245 = tpu.matmul %241, %215, %cst_71 {dimension_numbers = #tpu.dot_dimension_numbers<[1], [1], [0], [0], [0, 0, 1, 0], [], []>} : vector<8x32xbf16>, vector<8x32xbf16>, vector<8x8xf32> -> vector<8x8xf32>
    %cst_72 = arith.constant 0.353553385 : f32
    %246 = vector.broadcast %cst_72 : f32 to vector<8x8xf32>
    %247 = arith.mulf %245, %246 : vector<8x8xf32>
    %248 = arith.addf %247, %38 : vector<8x8xf32>
    %cst_73 = arith.constant dense<0xFF800000> : vector<8xf32>
    %249 = vector.multi_reduction <maximumf>, %248, %cst_73 [1] : vector<8x8xf32> to vector<8xf32>
    %250 = vector.shape_cast %249 : vector<8xf32> to vector<8x1xf32>
    %251 = vector.broadcast %250 : vector<8x1xf32> to vector<8x8xf32>
    %252 = arith.subf %248, %251 : vector<8x8xf32>
    %253 = math.exp %252 : vector<8x8xf32>
    %cst_74 = arith.constant dense<0.000000e+00> : vector<8xf32>
    %254 = vector.multi_reduction <add>, %253, %cst_74 [1] : vector<8x8xf32> to vector<8xf32>
    %255 = vector.shape_cast %254 : vector<8xf32> to vector<8x1xf32>
    %256 = vector.broadcast %255 : vector<8x1xf32> to vector<8x8xf32>
    %257 = arith.divf %253, %256 : vector<8x8xf32>
    %258 = arith.truncf %257 : vector<8x8xf32> to vector<8x8xbf16>
    %cst_75 = arith.constant dense<0.000000e+00> : vector<8x32xf32>
    %259 = tpu.matmul %258, %244, %cst_75 {dimension_numbers = #tpu.dot_dimension_numbers<[1], [0], [0], [1], [0, 0, 1, 1], [], []>} : vector<8x8xbf16>, vector<8x32xbf16>, vector<8x32xf32> -> vector<8x32xf32>
    %260 = arith.addf %238, %259 : vector<8x32xf32>
    %261 = vector.broadcast %21 : vector<1x32xf32> to vector<8x32xf32>
    %262 = arith.mulf %212, %261 : vector<8x32xf32>
    %263 = arith.truncf %262 : vector<8x32xf32> to vector<8x32xbf16>
    %264 = vector.broadcast %21 : vector<1x32xf32> to vector<8x32xf32>
    %265 = arith.mulf %214, %264 : vector<8x32xf32>
    %266 = arith.truncf %265 : vector<8x32xf32> to vector<8x32xbf16>
    %cst_76 = arith.constant dense<0.000000e+00> : vector<8x8xf32>
    %267 = tpu.matmul %263, %215, %cst_76 {dimension_numbers = #tpu.dot_dimension_numbers<[1], [1], [0], [0], [0, 0, 1, 0], [], []>} : vector<8x32xbf16>, vector<8x32xbf16>, vector<8x8xf32> -> vector<8x8xf32>
    %cst_77 = arith.constant 0.353553385 : f32
    %268 = vector.broadcast %cst_77 : f32 to vector<8x8xf32>
    %269 = arith.mulf %267, %268 : vector<8x8xf32>
    %270 = arith.addf %269, %38 : vector<8x8xf32>
    %cst_78 = arith.constant dense<0xFF800000> : vector<8xf32>
    %271 = vector.multi_reduction <maximumf>, %270, %cst_78 [1] : vector<8x8xf32> to vector<8xf32>
    %272 = vector.shape_cast %271 : vector<8xf32> to vector<8x1xf32>
    %273 = vector.broadcast %272 : vector<8x1xf32> to vector<8x8xf32>
    %274 = arith.subf %270, %273 : vector<8x8xf32>
    %275 = math.exp %274 : vector<8x8xf32>
    %cst_79 = arith.constant dense<0.000000e+00> : vector<8xf32>
    %276 = vector.multi_reduction <add>, %275, %cst_79 [1] : vector<8x8xf32> to vector<8xf32>
    %277 = vector.shape_cast %276 : vector<8xf32> to vector<8x1xf32>
    %278 = vector.broadcast %277 : vector<8x1xf32> to vector<8x8xf32>
    %279 = arith.divf %275, %278 : vector<8x8xf32>
    %280 = arith.truncf %279 : vector<8x8xf32> to vector<8x8xbf16>
    %cst_80 = arith.constant dense<0.000000e+00> : vector<8x32xf32>
    %281 = tpu.matmul %280, %266, %cst_80 {dimension_numbers = #tpu.dot_dimension_numbers<[1], [0], [0], [1], [0, 0, 1, 1], [], []>} : vector<8x8xbf16>, vector<8x32xbf16>, vector<8x32xf32> -> vector<8x32xf32>
    %282 = arith.addf %260, %281 : vector<8x32xf32>
    %283 = vector.broadcast %28 : vector<1x32xf32> to vector<8x32xf32>
    %284 = arith.mulf %212, %283 : vector<8x32xf32>
    %285 = arith.truncf %284 : vector<8x32xf32> to vector<8x32xbf16>
    %286 = vector.broadcast %28 : vector<1x32xf32> to vector<8x32xf32>
    %287 = arith.mulf %214, %286 : vector<8x32xf32>
    %288 = arith.truncf %287 : vector<8x32xf32> to vector<8x32xbf16>
    %cst_81 = arith.constant dense<0.000000e+00> : vector<8x8xf32>
    %289 = tpu.matmul %285, %215, %cst_81 {dimension_numbers = #tpu.dot_dimension_numbers<[1], [1], [0], [0], [0, 0, 1, 0], [], []>} : vector<8x32xbf16>, vector<8x32xbf16>, vector<8x8xf32> -> vector<8x8xf32>
    %cst_82 = arith.constant 0.353553385 : f32
    %290 = vector.broadcast %cst_82 : f32 to vector<8x8xf32>
    %291 = arith.mulf %289, %290 : vector<8x8xf32>
    %292 = arith.addf %291, %38 : vector<8x8xf32>
    %cst_83 = arith.constant dense<0xFF800000> : vector<8xf32>
    %293 = vector.multi_reduction <maximumf>, %292, %cst_83 [1] : vector<8x8xf32> to vector<8xf32>
    %294 = vector.shape_cast %293 : vector<8xf32> to vector<8x1xf32>
    %295 = vector.broadcast %294 : vector<8x1xf32> to vector<8x8xf32>
    %296 = arith.subf %292, %295 : vector<8x8xf32>
    %297 = math.exp %296 : vector<8x8xf32>
    %cst_84 = arith.constant dense<0.000000e+00> : vector<8xf32>
    %298 = vector.multi_reduction <add>, %297, %cst_84 [1] : vector<8x8xf32> to vector<8xf32>
    %299 = vector.shape_cast %298 : vector<8xf32> to vector<8x1xf32>
    %300 = vector.broadcast %299 : vector<8x1xf32> to vector<8x8xf32>
    %301 = arith.divf %297, %300 : vector<8x8xf32>
    %302 = arith.truncf %301 : vector<8x8xf32> to vector<8x8xbf16>
    %cst_85 = arith.constant dense<0.000000e+00> : vector<8x32xf32>
    %303 = tpu.matmul %302, %288, %cst_85 {dimension_numbers = #tpu.dot_dimension_numbers<[1], [0], [0], [1], [0, 0, 1, 1], [], []>} : vector<8x8xbf16>, vector<8x32xbf16>, vector<8x32xf32> -> vector<8x32xf32>
    %304 = arith.addf %282, %303 : vector<8x32xf32>
    %305 = arith.truncf %304 : vector<8x32xf32> to vector<8x32xbf16>
    %cst_86 = arith.constant dense<0.000000e+00> : vector<8x32xf32>
    %306 = tpu.matmul %305, %206, %cst_86 {dimension_numbers = #tpu.dot_dimension_numbers<[1], [0], [0], [1], [0, 0, 1, 1], [], []>} : vector<8x32xbf16>, vector<32x32xbf16>, vector<8x32xf32> -> vector<8x32xf32>
    %307 = vector.broadcast %207 : vector<1x32xf32> to vector<8x32xf32>
    %308 = arith.addf %306, %307 : vector<8x32xf32>
    %309 = arith.addf %203, %308 : vector<8x32xf32>
    %c55 = arith.constant 55 : index
    %c0_87 = arith.constant 0 : index
    %310 = vector.load %arg2[%c55, %c0_87] : memref<108x128xf32, #tpu.memory_space<vmem>>, vector<1x32xf32>
    %c56 = arith.constant 56 : index
    %c0_88 = arith.constant 0 : index
    %311 = vector.load %arg2[%c56, %c0_88] : memref<108x128xf32, #tpu.memory_space<vmem>>, vector<1x32xf32>
    %cst_89 = arith.constant dense<0.000000e+00> : vector<8xf32>
    %312 = vector.multi_reduction <add>, %309, %cst_89 [1] : vector<8x32xf32> to vector<8xf32>
    %313 = vector.shape_cast %312 : vector<8xf32> to vector<8x1xf32>
    %cst_90 = arith.constant 3.200000e+01 : f32
    %314 = vector.broadcast %cst_90 : f32 to vector<8x1xf32>
    %315 = arith.divf %313, %314 : vector<8x1xf32>
    %316 = vector.broadcast %315 : vector<8x1xf32> to vector<8x32xf32>
    %317 = arith.subf %309, %316 : vector<8x32xf32>
    %318 = arith.mulf %317, %317 : vector<8x32xf32>
    %cst_91 = arith.constant dense<0.000000e+00> : vector<8xf32>
    %319 = vector.multi_reduction <add>, %318, %cst_91 [1] : vector<8x32xf32> to vector<8xf32>
    %320 = vector.shape_cast %319 : vector<8xf32> to vector<8x1xf32>
    %cst_92 = arith.constant 3.200000e+01 : f32
    %321 = vector.broadcast %cst_92 : f32 to vector<8x1xf32>
    %322 = arith.divf %320, %321 : vector<8x1xf32>
    %cst_93 = arith.constant 9.99999974E-6 : f32
    %323 = vector.broadcast %cst_93 : f32 to vector<8x1xf32>
    %324 = arith.addf %322, %323 : vector<8x1xf32>
    %325 = math.rsqrt %324 : vector<8x1xf32>
    %326 = vector.broadcast %325 : vector<8x1xf32> to vector<8x32xf32>
    %327 = arith.mulf %317, %326 : vector<8x32xf32>
    %328 = vector.broadcast %310 : vector<1x32xf32> to vector<8x32xf32>
    %329 = arith.mulf %327, %328 : vector<8x32xf32>
    %330 = vector.broadcast %311 : vector<1x32xf32> to vector<8x32xf32>
    %331 = arith.addf %329, %330 : vector<8x32xf32>
    %c272 = arith.constant 272 : index
    %c0_94 = arith.constant 0 : index
    %332 = vector.load %arg1[%c272, %c0_94] : memref<1296x128xbf16, #tpu.memory_space<vmem>>, vector<32x64xbf16>
    %c57 = arith.constant 57 : index
    %c0_95 = arith.constant 0 : index
    %333 = vector.load %arg2[%c57, %c0_95] : memref<108x128xf32, #tpu.memory_space<vmem>>, vector<1x64xf32>
    %c304 = arith.constant 304 : index
    %c0_96 = arith.constant 0 : index
    %334 = vector.load %arg1[%c304, %c0_96] : memref<1296x128xbf16, #tpu.memory_space<vmem>>, vector<64x32xbf16>
    %c58 = arith.constant 58 : index
    %c0_97 = arith.constant 0 : index
    %335 = vector.load %arg2[%c58, %c0_97] : memref<108x128xf32, #tpu.memory_space<vmem>>, vector<1x32xf32>
    %336 = arith.truncf %331 : vector<8x32xf32> to vector<8x32xbf16>
    %cst_98 = arith.constant dense<0.000000e+00> : vector<8x64xf32>
    %337 = tpu.matmul %336, %332, %cst_98 {dimension_numbers = #tpu.dot_dimension_numbers<[1], [0], [0], [1], [0, 0, 1, 1], [], []>} : vector<8x32xbf16>, vector<32x64xbf16>, vector<8x64xf32> -> vector<8x64xf32>
    %338 = vector.broadcast %333 : vector<1x64xf32> to vector<8x64xf32>
    %339 = arith.addf %337, %338 : vector<8x64xf32>
    %cst_99 = arith.constant 0.000000e+00 : f32
    %340 = vector.broadcast %cst_99 : f32 to vector<8x64xf32>
    %341 = arith.maximumf %339, %340 : vector<8x64xf32>
    %342 = arith.truncf %341 : vector<8x64xf32> to vector<8x64xbf16>
    %cst_100 = arith.constant dense<0.000000e+00> : vector<8x32xf32>
    %343 = tpu.matmul %342, %334, %cst_100 {dimension_numbers = #tpu.dot_dimension_numbers<[1], [0], [0], [1], [0, 0, 1, 1], [], []>} : vector<8x64xbf16>, vector<64x32xbf16>, vector<8x32xf32> -> vector<8x32xf32>
    %344 = vector.broadcast %335 : vector<1x32xf32> to vector<8x32xf32>
    %345 = arith.addf %343, %344 : vector<8x32xf32>
    %346 = arith.addf %331, %345 : vector<8x32xf32>
    %c59 = arith.constant 59 : index
    %c0_101 = arith.constant 0 : index
    %347 = vector.load %arg2[%c59, %c0_101] : memref<108x128xf32, #tpu.memory_space<vmem>>, vector<1x32xf32>
    %c60 = arith.constant 60 : index
    %c0_102 = arith.constant 0 : index
    %348 = vector.load %arg2[%c60, %c0_102] : memref<108x128xf32, #tpu.memory_space<vmem>>, vector<1x32xf32>
    %cst_103 = arith.constant dense<0.000000e+00> : vector<8xf32>
    %349 = vector.multi_reduction <add>, %346, %cst_103 [1] : vector<8x32xf32> to vector<8xf32>
    %350 = vector.shape_cast %349 : vector<8xf32> to vector<8x1xf32>
    %cst_104 = arith.constant 3.200000e+01 : f32
    %351 = vector.broadcast %cst_104 : f32 to vector<8x1xf32>
    %352 = arith.divf %350, %351 : vector<8x1xf32>
    %353 = vector.broadcast %352 : vector<8x1xf32> to vector<8x32xf32>
    %354 = arith.subf %346, %353 : vector<8x32xf32>
    %355 = arith.mulf %354, %354 : vector<8x32xf32>
    %cst_105 = arith.constant dense<0.000000e+00> : vector<8xf32>
    %356 = vector.multi_reduction <add>, %355, %cst_105 [1] : vector<8x32xf32> to vector<8xf32>
    %357 = vector.shape_cast %356 : vector<8xf32> to vector<8x1xf32>
    %cst_106 = arith.constant 3.200000e+01 : f32
    %358 = vector.broadcast %cst_106 : f32 to vector<8x1xf32>
    %359 = arith.divf %357, %358 : vector<8x1xf32>
    %cst_107 = arith.constant 9.99999974E-6 : f32
    %360 = vector.broadcast %cst_107 : f32 to vector<8x1xf32>
    %361 = arith.addf %359, %360 : vector<8x1xf32>
    %362 = math.rsqrt %361 : vector<8x1xf32>
    %363 = vector.broadcast %362 : vector<8x1xf32> to vector<8x32xf32>
    %364 = arith.mulf %354, %363 : vector<8x32xf32>
    %365 = vector.broadcast %347 : vector<1x32xf32> to vector<8x32xf32>
    %366 = arith.mulf %364, %365 : vector<8x32xf32>
    %367 = vector.broadcast %348 : vector<1x32xf32> to vector<8x32xf32>
    %368 = arith.addf %366, %367 : vector<8x32xf32>
    %c368 = arith.constant 368 : index
    %c0_108 = arith.constant 0 : index
    %369 = vector.load %arg1[%c368, %c0_108] : memref<1296x128xbf16, #tpu.memory_space<vmem>>, vector<32x96xbf16>
    %c61 = arith.constant 61 : index
    %c0_109 = arith.constant 0 : index
    %370 = vector.load %arg2[%c61, %c0_109] : memref<108x128xf32, #tpu.memory_space<vmem>>, vector<1x96xf32>
    %c400 = arith.constant 400 : index
    %c0_110 = arith.constant 0 : index
    %371 = vector.load %arg1[%c400, %c0_110] : memref<1296x128xbf16, #tpu.memory_space<vmem>>, vector<32x32xbf16>
    %c62 = arith.constant 62 : index
    %c0_111 = arith.constant 0 : index
    %372 = vector.load %arg2[%c62, %c0_111] : memref<108x128xf32, #tpu.memory_space<vmem>>, vector<1x32xf32>
    %373 = arith.truncf %368 : vector<8x32xf32> to vector<8x32xbf16>
    %cst_112 = arith.constant dense<0.000000e+00> : vector<8x96xf32>
    %374 = tpu.matmul %373, %369, %cst_112 {dimension_numbers = #tpu.dot_dimension_numbers<[1], [0], [0], [1], [0, 0, 1, 1], [], []>} : vector<8x32xbf16>, vector<32x96xbf16>, vector<8x96xf32> -> vector<8x96xf32>
    %375 = vector.broadcast %370 : vector<1x96xf32> to vector<8x96xf32>
    %376 = arith.addf %374, %375 : vector<8x96xf32>
    %377 = vector.extract_strided_slice %376 {offsets = [0, 0], sizes = [8, 32], strides = [1, 1]} : vector<8x96xf32> to vector<8x32xf32>
    %378 = vector.extract_strided_slice %376 {offsets = [0, 32], sizes = [8, 32], strides = [1, 1]} : vector<8x96xf32> to vector<8x32xf32>
    %379 = vector.extract_strided_slice %376 {offsets = [0, 64], sizes = [8, 32], strides = [1, 1]} : vector<8x96xf32> to vector<8x32xf32>
    %380 = arith.truncf %378 : vector<8x32xf32> to vector<8x32xbf16>
    %cst_113 = arith.constant 0.000000e+00 : f32
    %381 = vector.broadcast %cst_113 : f32 to vector<8x32xf32>
    %382 = vector.broadcast %7 : vector<1x32xf32> to vector<8x32xf32>
    %383 = arith.mulf %377, %382 : vector<8x32xf32>
    %384 = arith.truncf %383 : vector<8x32xf32> to vector<8x32xbf16>
    %385 = vector.broadcast %7 : vector<1x32xf32> to vector<8x32xf32>
    %386 = arith.mulf %379, %385 : vector<8x32xf32>
    %387 = arith.truncf %386 : vector<8x32xf32> to vector<8x32xbf16>
    %cst_114 = arith.constant dense<0.000000e+00> : vector<8x8xf32>
    %388 = tpu.matmul %384, %380, %cst_114 {dimension_numbers = #tpu.dot_dimension_numbers<[1], [1], [0], [0], [0, 0, 1, 0], [], []>} : vector<8x32xbf16>, vector<8x32xbf16>, vector<8x8xf32> -> vector<8x8xf32>
    %cst_115 = arith.constant 0.353553385 : f32
    %389 = vector.broadcast %cst_115 : f32 to vector<8x8xf32>
    %390 = arith.mulf %388, %389 : vector<8x8xf32>
    %391 = arith.addf %390, %38 : vector<8x8xf32>
    %cst_116 = arith.constant dense<0xFF800000> : vector<8xf32>
    %392 = vector.multi_reduction <maximumf>, %391, %cst_116 [1] : vector<8x8xf32> to vector<8xf32>
    %393 = vector.shape_cast %392 : vector<8xf32> to vector<8x1xf32>
    %394 = vector.broadcast %393 : vector<8x1xf32> to vector<8x8xf32>
    %395 = arith.subf %391, %394 : vector<8x8xf32>
    %396 = math.exp %395 : vector<8x8xf32>
    %cst_117 = arith.constant dense<0.000000e+00> : vector<8xf32>
    %397 = vector.multi_reduction <add>, %396, %cst_117 [1] : vector<8x8xf32> to vector<8xf32>
    %398 = vector.shape_cast %397 : vector<8xf32> to vector<8x1xf32>
    %399 = vector.broadcast %398 : vector<8x1xf32> to vector<8x8xf32>
    %400 = arith.divf %396, %399 : vector<8x8xf32>
    %401 = arith.truncf %400 : vector<8x8xf32> to vector<8x8xbf16>
    %cst_118 = arith.constant dense<0.000000e+00> : vector<8x32xf32>
    %402 = tpu.matmul %401, %387, %cst_118 {dimension_numbers = #tpu.dot_dimension_numbers<[1], [0], [0], [1], [0, 0, 1, 1], [], []>} : vector<8x8xbf16>, vector<8x32xbf16>, vector<8x32xf32> -> vector<8x32xf32>
    %403 = arith.addf %381, %402 : vector<8x32xf32>
    %404 = vector.broadcast %14 : vector<1x32xf32> to vector<8x32xf32>
    %405 = arith.mulf %377, %404 : vector<8x32xf32>
    %406 = arith.truncf %405 : vector<8x32xf32> to vector<8x32xbf16>
    %407 = vector.broadcast %14 : vector<1x32xf32> to vector<8x32xf32>
    %408 = arith.mulf %379, %407 : vector<8x32xf32>
    %409 = arith.truncf %408 : vector<8x32xf32> to vector<8x32xbf16>
    %cst_119 = arith.constant dense<0.000000e+00> : vector<8x8xf32>
    %410 = tpu.matmul %406, %380, %cst_119 {dimension_numbers = #tpu.dot_dimension_numbers<[1], [1], [0], [0], [0, 0, 1, 0], [], []>} : vector<8x32xbf16>, vector<8x32xbf16>, vector<8x8xf32> -> vector<8x8xf32>
    %cst_120 = arith.constant 0.353553385 : f32
    %411 = vector.broadcast %cst_120 : f32 to vector<8x8xf32>
    %412 = arith.mulf %410, %411 : vector<8x8xf32>
    %413 = arith.addf %412, %38 : vector<8x8xf32>
    %cst_121 = arith.constant dense<0xFF800000> : vector<8xf32>
    %414 = vector.multi_reduction <maximumf>, %413, %cst_121 [1] : vector<8x8xf32> to vector<8xf32>
    %415 = vector.shape_cast %414 : vector<8xf32> to vector<8x1xf32>
    %416 = vector.broadcast %415 : vector<8x1xf32> to vector<8x8xf32>
    %417 = arith.subf %413, %416 : vector<8x8xf32>
    %418 = math.exp %417 : vector<8x8xf32>
    %cst_122 = arith.constant dense<0.000000e+00> : vector<8xf32>
    %419 = vector.multi_reduction <add>, %418, %cst_122 [1] : vector<8x8xf32> to vector<8xf32>
    %420 = vector.shape_cast %419 : vector<8xf32> to vector<8x1xf32>
    %421 = vector.broadcast %420 : vector<8x1xf32> to vector<8x8xf32>
    %422 = arith.divf %418, %421 : vector<8x8xf32>
    %423 = arith.truncf %422 : vector<8x8xf32> to vector<8x8xbf16>
    %cst_123 = arith.constant dense<0.000000e+00> : vector<8x32xf32>
    %424 = tpu.matmul %423, %409, %cst_123 {dimension_numbers = #tpu.dot_dimension_numbers<[1], [0], [0], [1], [0, 0, 1, 1], [], []>} : vector<8x8xbf16>, vector<8x32xbf16>, vector<8x32xf32> -> vector<8x32xf32>
    %425 = arith.addf %403, %424 : vector<8x32xf32>
    %426 = vector.broadcast %21 : vector<1x32xf32> to vector<8x32xf32>
    %427 = arith.mulf %377, %426 : vector<8x32xf32>
    %428 = arith.truncf %427 : vector<8x32xf32> to vector<8x32xbf16>
    %429 = vector.broadcast %21 : vector<1x32xf32> to vector<8x32xf32>
    %430 = arith.mulf %379, %429 : vector<8x32xf32>
    %431 = arith.truncf %430 : vector<8x32xf32> to vector<8x32xbf16>
    %cst_124 = arith.constant dense<0.000000e+00> : vector<8x8xf32>
    %432 = tpu.matmul %428, %380, %cst_124 {dimension_numbers = #tpu.dot_dimension_numbers<[1], [1], [0], [0], [0, 0, 1, 0], [], []>} : vector<8x32xbf16>, vector<8x32xbf16>, vector<8x8xf32> -> vector<8x8xf32>
    %cst_125 = arith.constant 0.353553385 : f32
    %433 = vector.broadcast %cst_125 : f32 to vector<8x8xf32>
    %434 = arith.mulf %432, %433 : vector<8x8xf32>
    %435 = arith.addf %434, %38 : vector<8x8xf32>
    %cst_126 = arith.constant dense<0xFF800000> : vector<8xf32>
    %436 = vector.multi_reduction <maximumf>, %435, %cst_126 [1] : vector<8x8xf32> to vector<8xf32>
    %437 = vector.shape_cast %436 : vector<8xf32> to vector<8x1xf32>
    %438 = vector.broadcast %437 : vector<8x1xf32> to vector<8x8xf32>
    %439 = arith.subf %435, %438 : vector<8x8xf32>
    %440 = math.exp %439 : vector<8x8xf32>
    %cst_127 = arith.constant dense<0.000000e+00> : vector<8xf32>
    %441 = vector.multi_reduction <add>, %440, %cst_127 [1] : vector<8x8xf32> to vector<8xf32>
    %442 = vector.shape_cast %441 : vector<8xf32> to vector<8x1xf32>
    %443 = vector.broadcast %442 : vector<8x1xf32> to vector<8x8xf32>
    %444 = arith.divf %440, %443 : vector<8x8xf32>
    %445 = arith.truncf %444 : vector<8x8xf32> to vector<8x8xbf16>
    %cst_128 = arith.constant dense<0.000000e+00> : vector<8x32xf32>
    %446 = tpu.matmul %445, %431, %cst_128 {dimension_numbers = #tpu.dot_dimension_numbers<[1], [0], [0], [1], [0, 0, 1, 1], [], []>} : vector<8x8xbf16>, vector<8x32xbf16>, vector<8x32xf32> -> vector<8x32xf32>
    %447 = arith.addf %425, %446 : vector<8x32xf32>
    %448 = vector.broadcast %28 : vector<1x32xf32> to vector<8x32xf32>
    %449 = arith.mulf %377, %448 : vector<8x32xf32>
    %450 = arith.truncf %449 : vector<8x32xf32> to vector<8x32xbf16>
    %451 = vector.broadcast %28 : vector<1x32xf32> to vector<8x32xf32>
    %452 = arith.mulf %379, %451 : vector<8x32xf32>
    %453 = arith.truncf %452 : vector<8x32xf32> to vector<8x32xbf16>
    %cst_129 = arith.constant dense<0.000000e+00> : vector<8x8xf32>
    %454 = tpu.matmul %450, %380, %cst_129 {dimension_numbers = #tpu.dot_dimension_numbers<[1], [1], [0], [0], [0, 0, 1, 0], [], []>} : vector<8x32xbf16>, vector<8x32xbf16>, vector<8x8xf32> -> vector<8x8xf32>
    %cst_130 = arith.constant 0.353553385 : f32
    %455 = vector.broadcast %cst_130 : f32 to vector<8x8xf32>
    %456 = arith.mulf %454, %455 : vector<8x8xf32>
    %457 = arith.addf %456, %38 : vector<8x8xf32>
    %cst_131 = arith.constant dense<0xFF800000> : vector<8xf32>
    %458 = vector.multi_reduction <maximumf>, %457, %cst_131 [1] : vector<8x8xf32> to vector<8xf32>
    %459 = vector.shape_cast %458 : vector<8xf32> to vector<8x1xf32>
    %460 = vector.broadcast %459 : vector<8x1xf32> to vector<8x8xf32>
    %461 = arith.subf %457, %460 : vector<8x8xf32>
    %462 = math.exp %461 : vector<8x8xf32>
    %cst_132 = arith.constant dense<0.000000e+00> : vector<8xf32>
    %463 = vector.multi_reduction <add>, %462, %cst_132 [1] : vector<8x8xf32> to vector<8xf32>
    %464 = vector.shape_cast %463 : vector<8xf32> to vector<8x1xf32>
    %465 = vector.broadcast %464 : vector<8x1xf32> to vector<8x8xf32>
    %466 = arith.divf %462, %465 : vector<8x8xf32>
    %467 = arith.truncf %466 : vector<8x8xf32> to vector<8x8xbf16>
    %cst_133 = arith.constant dense<0.000000e+00> : vector<8x32xf32>
    %468 = tpu.matmul %467, %453, %cst_133 {dimension_numbers = #tpu.dot_dimension_numbers<[1], [0], [0], [1], [0, 0, 1, 1], [], []>} : vector<8x8xbf16>, vector<8x32xbf16>, vector<8x32xf32> -> vector<8x32xf32>
    %469 = arith.addf %447, %468 : vector<8x32xf32>
    %470 = arith.truncf %469 : vector<8x32xf32> to vector<8x32xbf16>
    %cst_134 = arith.constant dense<0.000000e+00> : vector<8x32xf32>
    %471 = tpu.matmul %470, %371, %cst_134 {dimension_numbers = #tpu.dot_dimension_numbers<[1], [0], [0], [1], [0, 0, 1, 1], [], []>} : vector<8x32xbf16>, vector<32x32xbf16>, vector<8x32xf32> -> vector<8x32xf32>
    %472 = vector.broadcast %372 : vector<1x32xf32> to vector<8x32xf32>
    %473 = arith.addf %471, %472 : vector<8x32xf32>
    %474 = arith.addf %368, %473 : vector<8x32xf32>
    %c63 = arith.constant 63 : index
    %c0_135 = arith.constant 0 : index
    %475 = vector.load %arg2[%c63, %c0_135] : memref<108x128xf32, #tpu.memory_space<vmem>>, vector<1x32xf32>
    %c64 = arith.constant 64 : index
    %c0_136 = arith.constant 0 : index
    %476 = vector.load %arg2[%c64, %c0_136] : memref<108x128xf32, #tpu.memory_space<vmem>>, vector<1x32xf32>
    %cst_137 = arith.constant dense<0.000000e+00> : vector<8xf32>
    %477 = vector.multi_reduction <add>, %474, %cst_137 [1] : vector<8x32xf32> to vector<8xf32>
    %478 = vector.shape_cast %477 : vector<8xf32> to vector<8x1xf32>
    %cst_138 = arith.constant 3.200000e+01 : f32
    %479 = vector.broadcast %cst_138 : f32 to vector<8x1xf32>
    %480 = arith.divf %478, %479 : vector<8x1xf32>
    %481 = vector.broadcast %480 : vector<8x1xf32> to vector<8x32xf32>
    %482 = arith.subf %474, %481 : vector<8x32xf32>
    %483 = arith.mulf %482, %482 : vector<8x32xf32>
    %cst_139 = arith.constant dense<0.000000e+00> : vector<8xf32>
    %484 = vector.multi_reduction <add>, %483, %cst_139 [1] : vector<8x32xf32> to vector<8xf32>
    %485 = vector.shape_cast %484 : vector<8xf32> to vector<8x1xf32>
    %cst_140 = arith.constant 3.200000e+01 : f32
    %486 = vector.broadcast %cst_140 : f32 to vector<8x1xf32>
    %487 = arith.divf %485, %486 : vector<8x1xf32>
    %cst_141 = arith.constant 9.99999974E-6 : f32
    %488 = vector.broadcast %cst_141 : f32 to vector<8x1xf32>
    %489 = arith.addf %487, %488 : vector<8x1xf32>
    %490 = math.rsqrt %489 : vector<8x1xf32>
    %491 = vector.broadcast %490 : vector<8x1xf32> to vector<8x32xf32>
    %492 = arith.mulf %482, %491 : vector<8x32xf32>
    %493 = vector.broadcast %475 : vector<1x32xf32> to vector<8x32xf32>
    %494 = arith.mulf %492, %493 : vector<8x32xf32>
    %495 = vector.broadcast %476 : vector<1x32xf32> to vector<8x32xf32>
    %496 = arith.addf %494, %495 : vector<8x32xf32>
    %c432 = arith.constant 432 : index
    %c0_142 = arith.constant 0 : index
    %497 = vector.load %arg1[%c432, %c0_142] : memref<1296x128xbf16, #tpu.memory_space<vmem>>, vector<32x64xbf16>
    %c65 = arith.constant 65 : index
    %c0_143 = arith.constant 0 : index
    %498 = vector.load %arg2[%c65, %c0_143] : memref<108x128xf32, #tpu.memory_space<vmem>>, vector<1x64xf32>
    %c464 = arith.constant 464 : index
    %c0_144 = arith.constant 0 : index
    %499 = vector.load %arg1[%c464, %c0_144] : memref<1296x128xbf16, #tpu.memory_space<vmem>>, vector<64x32xbf16>
    %c66 = arith.constant 66 : index
    %c0_145 = arith.constant 0 : index
    %500 = vector.load %arg2[%c66, %c0_145] : memref<108x128xf32, #tpu.memory_space<vmem>>, vector<1x32xf32>
    %501 = arith.truncf %496 : vector<8x32xf32> to vector<8x32xbf16>
    %cst_146 = arith.constant dense<0.000000e+00> : vector<8x64xf32>
    %502 = tpu.matmul %501, %497, %cst_146 {dimension_numbers = #tpu.dot_dimension_numbers<[1], [0], [0], [1], [0, 0, 1, 1], [], []>} : vector<8x32xbf16>, vector<32x64xbf16>, vector<8x64xf32> -> vector<8x64xf32>
    %503 = vector.broadcast %498 : vector<1x64xf32> to vector<8x64xf32>
    %504 = arith.addf %502, %503 : vector<8x64xf32>
    %cst_147 = arith.constant 0.000000e+00 : f32
    %505 = vector.broadcast %cst_147 : f32 to vector<8x64xf32>
    %506 = arith.maximumf %504, %505 : vector<8x64xf32>
    %507 = arith.truncf %506 : vector<8x64xf32> to vector<8x64xbf16>
    %cst_148 = arith.constant dense<0.000000e+00> : vector<8x32xf32>
    %508 = tpu.matmul %507, %499, %cst_148 {dimension_numbers = #tpu.dot_dimension_numbers<[1], [0], [0], [1], [0, 0, 1, 1], [], []>} : vector<8x64xbf16>, vector<64x32xbf16>, vector<8x32xf32> -> vector<8x32xf32>
    %509 = vector.broadcast %500 : vector<1x32xf32> to vector<8x32xf32>
    %510 = arith.addf %508, %509 : vector<8x32xf32>
    %511 = arith.addf %496, %510 : vector<8x32xf32>
    %c67 = arith.constant 67 : index
    %c0_149 = arith.constant 0 : index
    %512 = vector.load %arg2[%c67, %c0_149] : memref<108x128xf32, #tpu.memory_space<vmem>>, vector<1x32xf32>
    %c68 = arith.constant 68 : index
    %c0_150 = arith.constant 0 : index
    %513 = vector.load %arg2[%c68, %c0_150] : memref<108x128xf32, #tpu.memory_space<vmem>>, vector<1x32xf32>
    %cst_151 = arith.constant dense<0.000000e+00> : vector<8xf32>
    %514 = vector.multi_reduction <add>, %511, %cst_151 [1] : vector<8x32xf32> to vector<8xf32>
    %515 = vector.shape_cast %514 : vector<8xf32> to vector<8x1xf32>
    %cst_152 = arith.constant 3.200000e+01 : f32
    %516 = vector.broadcast %cst_152 : f32 to vector<8x1xf32>
    %517 = arith.divf %515, %516 : vector<8x1xf32>
    %518 = vector.broadcast %517 : vector<8x1xf32> to vector<8x32xf32>
    %519 = arith.subf %511, %518 : vector<8x32xf32>
    %520 = arith.mulf %519, %519 : vector<8x32xf32>
    %cst_153 = arith.constant dense<0.000000e+00> : vector<8xf32>
    %521 = vector.multi_reduction <add>, %520, %cst_153 [1] : vector<8x32xf32> to vector<8xf32>
    %522 = vector.shape_cast %521 : vector<8xf32> to vector<8x1xf32>
    %cst_154 = arith.constant 3.200000e+01 : f32
    %523 = vector.broadcast %cst_154 : f32 to vector<8x1xf32>
    %524 = arith.divf %522, %523 : vector<8x1xf32>
    %cst_155 = arith.constant 9.99999974E-6 : f32
    %525 = vector.broadcast %cst_155 : f32 to vector<8x1xf32>
    %526 = arith.addf %524, %525 : vector<8x1xf32>
    %527 = math.rsqrt %526 : vector<8x1xf32>
    %528 = vector.broadcast %527 : vector<8x1xf32> to vector<8x32xf32>
    %529 = arith.mulf %519, %528 : vector<8x32xf32>
    %530 = vector.broadcast %512 : vector<1x32xf32> to vector<8x32xf32>
    %531 = arith.mulf %529, %530 : vector<8x32xf32>
    %532 = vector.broadcast %513 : vector<1x32xf32> to vector<8x32xf32>
    %533 = arith.addf %531, %532 : vector<8x32xf32>
    %c41 = arith.constant 41 : index
    %c0_156 = arith.constant 0 : index
    %534 = vector.load %arg2[%c41, %c0_156] : memref<108x128xf32, #tpu.memory_space<vmem>>, vector<1x32xf32>
    %c42 = arith.constant 42 : index
    %c0_157 = arith.constant 0 : index
    %535 = vector.load %arg2[%c42, %c0_157] : memref<108x128xf32, #tpu.memory_space<vmem>>, vector<1x32xf32>
    %cst_158 = arith.constant dense<0.000000e+00> : vector<8xf32>
    %536 = vector.multi_reduction <add>, %533, %cst_158 [1] : vector<8x32xf32> to vector<8xf32>
    %537 = vector.shape_cast %536 : vector<8xf32> to vector<8x1xf32>
    %cst_159 = arith.constant 3.200000e+01 : f32
    %538 = vector.broadcast %cst_159 : f32 to vector<8x1xf32>
    %539 = arith.divf %537, %538 : vector<8x1xf32>
    %540 = vector.broadcast %539 : vector<8x1xf32> to vector<8x32xf32>
    %541 = arith.subf %533, %540 : vector<8x32xf32>
    %542 = arith.mulf %541, %541 : vector<8x32xf32>
    %cst_160 = arith.constant dense<0.000000e+00> : vector<8xf32>
    %543 = vector.multi_reduction <add>, %542, %cst_160 [1] : vector<8x32xf32> to vector<8xf32>
    %544 = vector.shape_cast %543 : vector<8xf32> to vector<8x1xf32>
    %cst_161 = arith.constant 3.200000e+01 : f32
    %545 = vector.broadcast %cst_161 : f32 to vector<8x1xf32>
    %546 = arith.divf %544, %545 : vector<8x1xf32>
    %cst_162 = arith.constant 9.99999974E-6 : f32
    %547 = vector.broadcast %cst_162 : f32 to vector<8x1xf32>
    %548 = arith.addf %546, %547 : vector<8x1xf32>
    %549 = math.rsqrt %548 : vector<8x1xf32>
    %550 = vector.broadcast %549 : vector<8x1xf32> to vector<8x32xf32>
    %551 = arith.mulf %541, %550 : vector<8x32xf32>
    %552 = vector.broadcast %534 : vector<1x32xf32> to vector<8x32xf32>
    %553 = arith.mulf %551, %552 : vector<8x32xf32>
    %554 = vector.broadcast %535 : vector<1x32xf32> to vector<8x32xf32>
    %555 = arith.addf %553, %554 : vector<8x32xf32>
    %c24 = arith.constant 24 : index
    %c0_163 = arith.constant 0 : index
    %556 = vector.load %arg2[%c24, %c0_163] : memref<108x128xf32, #tpu.memory_space<vmem>>, vector<8x8xf32>
    %c32 = arith.constant 32 : index
    %c0_164 = arith.constant 0 : index
    %557 = vector.load %arg2[%c32, %c0_164] : memref<108x128xf32, #tpu.memory_space<vmem>>, vector<8x8xf32>
    %c528 = arith.constant 528 : index
    %c0_165 = arith.constant 0 : index
    %558 = vector.load %arg1[%c528, %c0_165] : memref<1296x128xbf16, #tpu.memory_space<vmem>>, vector<32x96xbf16>
    %c69 = arith.constant 69 : index
    %c0_166 = arith.constant 0 : index
    %559 = vector.load %arg2[%c69, %c0_166] : memref<108x128xf32, #tpu.memory_space<vmem>>, vector<1x96xf32>
    %c560 = arith.constant 560 : index
    %c0_167 = arith.constant 0 : index
    %560 = vector.load %arg1[%c560, %c0_167] : memref<1296x128xbf16, #tpu.memory_space<vmem>>, vector<32x32xbf16>
    %c70 = arith.constant 70 : index
    %c0_168 = arith.constant 0 : index
    %561 = vector.load %arg2[%c70, %c0_168] : memref<108x128xf32, #tpu.memory_space<vmem>>, vector<1x32xf32>
    %562 = arith.truncf %37 : vector<8x32xf32> to vector<8x32xbf16>
    %cst_169 = arith.constant dense<0.000000e+00> : vector<8x96xf32>
    %563 = tpu.matmul %562, %558, %cst_169 {dimension_numbers = #tpu.dot_dimension_numbers<[1], [0], [0], [1], [0, 0, 1, 1], [], []>} : vector<8x32xbf16>, vector<32x96xbf16>, vector<8x96xf32> -> vector<8x96xf32>
    %564 = vector.broadcast %559 : vector<1x96xf32> to vector<8x96xf32>
    %565 = arith.addf %563, %564 : vector<8x96xf32>
    %566 = vector.extract_strided_slice %565 {offsets = [0, 0], sizes = [8, 32], strides = [1, 1]} : vector<8x96xf32> to vector<8x32xf32>
    %567 = vector.extract_strided_slice %565 {offsets = [0, 32], sizes = [8, 32], strides = [1, 1]} : vector<8x96xf32> to vector<8x32xf32>
    %568 = vector.extract_strided_slice %565 {offsets = [0, 64], sizes = [8, 32], strides = [1, 1]} : vector<8x96xf32> to vector<8x32xf32>
    %569 = arith.truncf %567 : vector<8x32xf32> to vector<8x32xbf16>
    %cst_170 = arith.constant 0.000000e+00 : f32
    %570 = vector.broadcast %cst_170 : f32 to vector<8x32xf32>
    %571 = vector.broadcast %7 : vector<1x32xf32> to vector<8x32xf32>
    %572 = arith.mulf %566, %571 : vector<8x32xf32>
    %573 = arith.truncf %572 : vector<8x32xf32> to vector<8x32xbf16>
    %574 = vector.broadcast %7 : vector<1x32xf32> to vector<8x32xf32>
    %575 = arith.mulf %568, %574 : vector<8x32xf32>
    %576 = arith.truncf %575 : vector<8x32xf32> to vector<8x32xbf16>
    %cst_171 = arith.constant dense<0.000000e+00> : vector<8x8xf32>
    %577 = tpu.matmul %573, %569, %cst_171 {dimension_numbers = #tpu.dot_dimension_numbers<[1], [1], [0], [0], [0, 0, 1, 0], [], []>} : vector<8x32xbf16>, vector<8x32xbf16>, vector<8x8xf32> -> vector<8x8xf32>
    %cst_172 = arith.constant 0.353553385 : f32
    %578 = vector.broadcast %cst_172 : f32 to vector<8x8xf32>
    %579 = arith.mulf %577, %578 : vector<8x8xf32>
    %580 = arith.addf %579, %556 : vector<8x8xf32>
    %cst_173 = arith.constant dense<0xFF800000> : vector<8xf32>
    %581 = vector.multi_reduction <maximumf>, %580, %cst_173 [1] : vector<8x8xf32> to vector<8xf32>
    %582 = vector.shape_cast %581 : vector<8xf32> to vector<8x1xf32>
    %583 = vector.broadcast %582 : vector<8x1xf32> to vector<8x8xf32>
    %584 = arith.subf %580, %583 : vector<8x8xf32>
    %585 = math.exp %584 : vector<8x8xf32>
    %cst_174 = arith.constant dense<0.000000e+00> : vector<8xf32>
    %586 = vector.multi_reduction <add>, %585, %cst_174 [1] : vector<8x8xf32> to vector<8xf32>
    %587 = vector.shape_cast %586 : vector<8xf32> to vector<8x1xf32>
    %588 = vector.broadcast %587 : vector<8x1xf32> to vector<8x8xf32>
    %589 = arith.divf %585, %588 : vector<8x8xf32>
    %590 = arith.truncf %589 : vector<8x8xf32> to vector<8x8xbf16>
    %cst_175 = arith.constant dense<0.000000e+00> : vector<8x32xf32>
    %591 = tpu.matmul %590, %576, %cst_175 {dimension_numbers = #tpu.dot_dimension_numbers<[1], [0], [0], [1], [0, 0, 1, 1], [], []>} : vector<8x8xbf16>, vector<8x32xbf16>, vector<8x32xf32> -> vector<8x32xf32>
    %592 = arith.addf %570, %591 : vector<8x32xf32>
    %593 = vector.broadcast %14 : vector<1x32xf32> to vector<8x32xf32>
    %594 = arith.mulf %566, %593 : vector<8x32xf32>
    %595 = arith.truncf %594 : vector<8x32xf32> to vector<8x32xbf16>
    %596 = vector.broadcast %14 : vector<1x32xf32> to vector<8x32xf32>
    %597 = arith.mulf %568, %596 : vector<8x32xf32>
    %598 = arith.truncf %597 : vector<8x32xf32> to vector<8x32xbf16>
    %cst_176 = arith.constant dense<0.000000e+00> : vector<8x8xf32>
    %599 = tpu.matmul %595, %569, %cst_176 {dimension_numbers = #tpu.dot_dimension_numbers<[1], [1], [0], [0], [0, 0, 1, 0], [], []>} : vector<8x32xbf16>, vector<8x32xbf16>, vector<8x8xf32> -> vector<8x8xf32>
    %cst_177 = arith.constant 0.353553385 : f32
    %600 = vector.broadcast %cst_177 : f32 to vector<8x8xf32>
    %601 = arith.mulf %599, %600 : vector<8x8xf32>
    %602 = arith.addf %601, %556 : vector<8x8xf32>
    %cst_178 = arith.constant dense<0xFF800000> : vector<8xf32>
    %603 = vector.multi_reduction <maximumf>, %602, %cst_178 [1] : vector<8x8xf32> to vector<8xf32>
    %604 = vector.shape_cast %603 : vector<8xf32> to vector<8x1xf32>
    %605 = vector.broadcast %604 : vector<8x1xf32> to vector<8x8xf32>
    %606 = arith.subf %602, %605 : vector<8x8xf32>
    %607 = math.exp %606 : vector<8x8xf32>
    %cst_179 = arith.constant dense<0.000000e+00> : vector<8xf32>
    %608 = vector.multi_reduction <add>, %607, %cst_179 [1] : vector<8x8xf32> to vector<8xf32>
    %609 = vector.shape_cast %608 : vector<8xf32> to vector<8x1xf32>
    %610 = vector.broadcast %609 : vector<8x1xf32> to vector<8x8xf32>
    %611 = arith.divf %607, %610 : vector<8x8xf32>
    %612 = arith.truncf %611 : vector<8x8xf32> to vector<8x8xbf16>
    %cst_180 = arith.constant dense<0.000000e+00> : vector<8x32xf32>
    %613 = tpu.matmul %612, %598, %cst_180 {dimension_numbers = #tpu.dot_dimension_numbers<[1], [0], [0], [1], [0, 0, 1, 1], [], []>} : vector<8x8xbf16>, vector<8x32xbf16>, vector<8x32xf32> -> vector<8x32xf32>
    %614 = arith.addf %592, %613 : vector<8x32xf32>
    %615 = vector.broadcast %21 : vector<1x32xf32> to vector<8x32xf32>
    %616 = arith.mulf %566, %615 : vector<8x32xf32>
    %617 = arith.truncf %616 : vector<8x32xf32> to vector<8x32xbf16>
    %618 = vector.broadcast %21 : vector<1x32xf32> to vector<8x32xf32>
    %619 = arith.mulf %568, %618 : vector<8x32xf32>
    %620 = arith.truncf %619 : vector<8x32xf32> to vector<8x32xbf16>
    %cst_181 = arith.constant dense<0.000000e+00> : vector<8x8xf32>
    %621 = tpu.matmul %617, %569, %cst_181 {dimension_numbers = #tpu.dot_dimension_numbers<[1], [1], [0], [0], [0, 0, 1, 0], [], []>} : vector<8x32xbf16>, vector<8x32xbf16>, vector<8x8xf32> -> vector<8x8xf32>
    %cst_182 = arith.constant 0.353553385 : f32
    %622 = vector.broadcast %cst_182 : f32 to vector<8x8xf32>
    %623 = arith.mulf %621, %622 : vector<8x8xf32>
    %624 = arith.addf %623, %556 : vector<8x8xf32>
    %cst_183 = arith.constant dense<0xFF800000> : vector<8xf32>
    %625 = vector.multi_reduction <maximumf>, %624, %cst_183 [1] : vector<8x8xf32> to vector<8xf32>
    %626 = vector.shape_cast %625 : vector<8xf32> to vector<8x1xf32>
    %627 = vector.broadcast %626 : vector<8x1xf32> to vector<8x8xf32>
    %628 = arith.subf %624, %627 : vector<8x8xf32>
    %629 = math.exp %628 : vector<8x8xf32>
    %cst_184 = arith.constant dense<0.000000e+00> : vector<8xf32>
    %630 = vector.multi_reduction <add>, %629, %cst_184 [1] : vector<8x8xf32> to vector<8xf32>
    %631 = vector.shape_cast %630 : vector<8xf32> to vector<8x1xf32>
    %632 = vector.broadcast %631 : vector<8x1xf32> to vector<8x8xf32>
    %633 = arith.divf %629, %632 : vector<8x8xf32>
    %634 = arith.truncf %633 : vector<8x8xf32> to vector<8x8xbf16>
    %cst_185 = arith.constant dense<0.000000e+00> : vector<8x32xf32>
    %635 = tpu.matmul %634, %620, %cst_185 {dimension_numbers = #tpu.dot_dimension_numbers<[1], [0], [0], [1], [0, 0, 1, 1], [], []>} : vector<8x8xbf16>, vector<8x32xbf16>, vector<8x32xf32> -> vector<8x32xf32>
    %636 = arith.addf %614, %635 : vector<8x32xf32>
    %637 = vector.broadcast %28 : vector<1x32xf32> to vector<8x32xf32>
    %638 = arith.mulf %566, %637 : vector<8x32xf32>
    %639 = arith.truncf %638 : vector<8x32xf32> to vector<8x32xbf16>
    %640 = vector.broadcast %28 : vector<1x32xf32> to vector<8x32xf32>
    %641 = arith.mulf %568, %640 : vector<8x32xf32>
    %642 = arith.truncf %641 : vector<8x32xf32> to vector<8x32xbf16>
    %cst_186 = arith.constant dense<0.000000e+00> : vector<8x8xf32>
    %643 = tpu.matmul %639, %569, %cst_186 {dimension_numbers = #tpu.dot_dimension_numbers<[1], [1], [0], [0], [0, 0, 1, 0], [], []>} : vector<8x32xbf16>, vector<8x32xbf16>, vector<8x8xf32> -> vector<8x8xf32>
    %cst_187 = arith.constant 0.353553385 : f32
    %644 = vector.broadcast %cst_187 : f32 to vector<8x8xf32>
    %645 = arith.mulf %643, %644 : vector<8x8xf32>
    %646 = arith.addf %645, %556 : vector<8x8xf32>
    %cst_188 = arith.constant dense<0xFF800000> : vector<8xf32>
    %647 = vector.multi_reduction <maximumf>, %646, %cst_188 [1] : vector<8x8xf32> to vector<8xf32>
    %648 = vector.shape_cast %647 : vector<8xf32> to vector<8x1xf32>
    %649 = vector.broadcast %648 : vector<8x1xf32> to vector<8x8xf32>
    %650 = arith.subf %646, %649 : vector<8x8xf32>
    %651 = math.exp %650 : vector<8x8xf32>
    %cst_189 = arith.constant dense<0.000000e+00> : vector<8xf32>
    %652 = vector.multi_reduction <add>, %651, %cst_189 [1] : vector<8x8xf32> to vector<8xf32>
    %653 = vector.shape_cast %652 : vector<8xf32> to vector<8x1xf32>
    %654 = vector.broadcast %653 : vector<8x1xf32> to vector<8x8xf32>
    %655 = arith.divf %651, %654 : vector<8x8xf32>
    %656 = arith.truncf %655 : vector<8x8xf32> to vector<8x8xbf16>
    %cst_190 = arith.constant dense<0.000000e+00> : vector<8x32xf32>
    %657 = tpu.matmul %656, %642, %cst_190 {dimension_numbers = #tpu.dot_dimension_numbers<[1], [0], [0], [1], [0, 0, 1, 1], [], []>} : vector<8x8xbf16>, vector<8x32xbf16>, vector<8x32xf32> -> vector<8x32xf32>
    %658 = arith.addf %636, %657 : vector<8x32xf32>
    %659 = arith.truncf %658 : vector<8x32xf32> to vector<8x32xbf16>
    %cst_191 = arith.constant dense<0.000000e+00> : vector<8x32xf32>
    %660 = tpu.matmul %659, %560, %cst_191 {dimension_numbers = #tpu.dot_dimension_numbers<[1], [0], [0], [1], [0, 0, 1, 1], [], []>} : vector<8x32xbf16>, vector<32x32xbf16>, vector<8x32xf32> -> vector<8x32xf32>
    %661 = vector.broadcast %561 : vector<1x32xf32> to vector<8x32xf32>
    %662 = arith.addf %660, %661 : vector<8x32xf32>
    %663 = arith.addf %37, %662 : vector<8x32xf32>
    %c71 = arith.constant 71 : index
    %c0_192 = arith.constant 0 : index
    %664 = vector.load %arg2[%c71, %c0_192] : memref<108x128xf32, #tpu.memory_space<vmem>>, vector<1x32xf32>
    %c72 = arith.constant 72 : index
    %c0_193 = arith.constant 0 : index
    %665 = vector.load %arg2[%c72, %c0_193] : memref<108x128xf32, #tpu.memory_space<vmem>>, vector<1x32xf32>
    %cst_194 = arith.constant dense<0.000000e+00> : vector<8xf32>
    %666 = vector.multi_reduction <add>, %663, %cst_194 [1] : vector<8x32xf32> to vector<8xf32>
    %667 = vector.shape_cast %666 : vector<8xf32> to vector<8x1xf32>
    %cst_195 = arith.constant 3.200000e+01 : f32
    %668 = vector.broadcast %cst_195 : f32 to vector<8x1xf32>
    %669 = arith.divf %667, %668 : vector<8x1xf32>
    %670 = vector.broadcast %669 : vector<8x1xf32> to vector<8x32xf32>
    %671 = arith.subf %663, %670 : vector<8x32xf32>
    %672 = arith.mulf %671, %671 : vector<8x32xf32>
    %cst_196 = arith.constant dense<0.000000e+00> : vector<8xf32>
    %673 = vector.multi_reduction <add>, %672, %cst_196 [1] : vector<8x32xf32> to vector<8xf32>
    %674 = vector.shape_cast %673 : vector<8xf32> to vector<8x1xf32>
    %cst_197 = arith.constant 3.200000e+01 : f32
    %675 = vector.broadcast %cst_197 : f32 to vector<8x1xf32>
    %676 = arith.divf %674, %675 : vector<8x1xf32>
    %cst_198 = arith.constant 9.99999974E-6 : f32
    %677 = vector.broadcast %cst_198 : f32 to vector<8x1xf32>
    %678 = arith.addf %676, %677 : vector<8x1xf32>
    %679 = math.rsqrt %678 : vector<8x1xf32>
    %680 = vector.broadcast %679 : vector<8x1xf32> to vector<8x32xf32>
    %681 = arith.mulf %671, %680 : vector<8x32xf32>
    %682 = vector.broadcast %664 : vector<1x32xf32> to vector<8x32xf32>
    %683 = arith.mulf %681, %682 : vector<8x32xf32>
    %684 = vector.broadcast %665 : vector<1x32xf32> to vector<8x32xf32>
    %685 = arith.addf %683, %684 : vector<8x32xf32>
    %c592 = arith.constant 592 : index
    %c0_199 = arith.constant 0 : index
    %686 = vector.load %arg1[%c592, %c0_199] : memref<1296x128xbf16, #tpu.memory_space<vmem>>, vector<32x32xbf16>
    %c73 = arith.constant 73 : index
    %c0_200 = arith.constant 0 : index
    %687 = vector.load %arg2[%c73, %c0_200] : memref<108x128xf32, #tpu.memory_space<vmem>>, vector<1x32xf32>
    %c624 = arith.constant 624 : index
    %c0_201 = arith.constant 0 : index
    %688 = vector.load %arg1[%c624, %c0_201] : memref<1296x128xbf16, #tpu.memory_space<vmem>>, vector<32x64xbf16>
    %c74 = arith.constant 74 : index
    %c0_202 = arith.constant 0 : index
    %689 = vector.load %arg2[%c74, %c0_202] : memref<108x128xf32, #tpu.memory_space<vmem>>, vector<1x64xf32>
    %c656 = arith.constant 656 : index
    %c0_203 = arith.constant 0 : index
    %690 = vector.load %arg1[%c656, %c0_203] : memref<1296x128xbf16, #tpu.memory_space<vmem>>, vector<32x32xbf16>
    %c75 = arith.constant 75 : index
    %c0_204 = arith.constant 0 : index
    %691 = vector.load %arg2[%c75, %c0_204] : memref<108x128xf32, #tpu.memory_space<vmem>>, vector<1x32xf32>
    %692 = arith.truncf %685 : vector<8x32xf32> to vector<8x32xbf16>
    %cst_205 = arith.constant dense<0.000000e+00> : vector<8x32xf32>
    %693 = tpu.matmul %692, %686, %cst_205 {dimension_numbers = #tpu.dot_dimension_numbers<[1], [0], [0], [1], [0, 0, 1, 1], [], []>} : vector<8x32xbf16>, vector<32x32xbf16>, vector<8x32xf32> -> vector<8x32xf32>
    %694 = vector.broadcast %687 : vector<1x32xf32> to vector<8x32xf32>
    %695 = arith.addf %693, %694 : vector<8x32xf32>
    %696 = arith.truncf %555 : vector<8x32xf32> to vector<8x32xbf16>
    %cst_206 = arith.constant dense<0.000000e+00> : vector<8x64xf32>
    %697 = tpu.matmul %696, %688, %cst_206 {dimension_numbers = #tpu.dot_dimension_numbers<[1], [0], [0], [1], [0, 0, 1, 1], [], []>} : vector<8x32xbf16>, vector<32x64xbf16>, vector<8x64xf32> -> vector<8x64xf32>
    %698 = vector.broadcast %689 : vector<1x64xf32> to vector<8x64xf32>
    %699 = arith.addf %697, %698 : vector<8x64xf32>
    %700 = vector.extract_strided_slice %699 {offsets = [0, 0], sizes = [8, 32], strides = [1, 1]} : vector<8x64xf32> to vector<8x32xf32>
    %701 = vector.extract_strided_slice %699 {offsets = [0, 32], sizes = [8, 32], strides = [1, 1]} : vector<8x64xf32> to vector<8x32xf32>
    %702 = arith.truncf %700 : vector<8x32xf32> to vector<8x32xbf16>
    %cst_207 = arith.constant 0.000000e+00 : f32
    %703 = vector.broadcast %cst_207 : f32 to vector<8x32xf32>
    %704 = vector.broadcast %7 : vector<1x32xf32> to vector<8x32xf32>
    %705 = arith.mulf %695, %704 : vector<8x32xf32>
    %706 = arith.truncf %705 : vector<8x32xf32> to vector<8x32xbf16>
    %707 = vector.broadcast %7 : vector<1x32xf32> to vector<8x32xf32>
    %708 = arith.mulf %701, %707 : vector<8x32xf32>
    %709 = arith.truncf %708 : vector<8x32xf32> to vector<8x32xbf16>
    %cst_208 = arith.constant dense<0.000000e+00> : vector<8x8xf32>
    %710 = tpu.matmul %706, %702, %cst_208 {dimension_numbers = #tpu.dot_dimension_numbers<[1], [1], [0], [0], [0, 0, 1, 0], [], []>} : vector<8x32xbf16>, vector<8x32xbf16>, vector<8x8xf32> -> vector<8x8xf32>
    %cst_209 = arith.constant 0.353553385 : f32
    %711 = vector.broadcast %cst_209 : f32 to vector<8x8xf32>
    %712 = arith.mulf %710, %711 : vector<8x8xf32>
    %713 = arith.addf %712, %557 : vector<8x8xf32>
    %cst_210 = arith.constant dense<0xFF800000> : vector<8xf32>
    %714 = vector.multi_reduction <maximumf>, %713, %cst_210 [1] : vector<8x8xf32> to vector<8xf32>
    %715 = vector.shape_cast %714 : vector<8xf32> to vector<8x1xf32>
    %716 = vector.broadcast %715 : vector<8x1xf32> to vector<8x8xf32>
    %717 = arith.subf %713, %716 : vector<8x8xf32>
    %718 = math.exp %717 : vector<8x8xf32>
    %cst_211 = arith.constant dense<0.000000e+00> : vector<8xf32>
    %719 = vector.multi_reduction <add>, %718, %cst_211 [1] : vector<8x8xf32> to vector<8xf32>
    %720 = vector.shape_cast %719 : vector<8xf32> to vector<8x1xf32>
    %721 = vector.broadcast %720 : vector<8x1xf32> to vector<8x8xf32>
    %722 = arith.divf %718, %721 : vector<8x8xf32>
    %723 = arith.truncf %722 : vector<8x8xf32> to vector<8x8xbf16>
    %cst_212 = arith.constant dense<0.000000e+00> : vector<8x32xf32>
    %724 = tpu.matmul %723, %709, %cst_212 {dimension_numbers = #tpu.dot_dimension_numbers<[1], [0], [0], [1], [0, 0, 1, 1], [], []>} : vector<8x8xbf16>, vector<8x32xbf16>, vector<8x32xf32> -> vector<8x32xf32>
    %725 = arith.addf %703, %724 : vector<8x32xf32>
    %726 = vector.broadcast %14 : vector<1x32xf32> to vector<8x32xf32>
    %727 = arith.mulf %695, %726 : vector<8x32xf32>
    %728 = arith.truncf %727 : vector<8x32xf32> to vector<8x32xbf16>
    %729 = vector.broadcast %14 : vector<1x32xf32> to vector<8x32xf32>
    %730 = arith.mulf %701, %729 : vector<8x32xf32>
    %731 = arith.truncf %730 : vector<8x32xf32> to vector<8x32xbf16>
    %cst_213 = arith.constant dense<0.000000e+00> : vector<8x8xf32>
    %732 = tpu.matmul %728, %702, %cst_213 {dimension_numbers = #tpu.dot_dimension_numbers<[1], [1], [0], [0], [0, 0, 1, 0], [], []>} : vector<8x32xbf16>, vector<8x32xbf16>, vector<8x8xf32> -> vector<8x8xf32>
    %cst_214 = arith.constant 0.353553385 : f32
    %733 = vector.broadcast %cst_214 : f32 to vector<8x8xf32>
    %734 = arith.mulf %732, %733 : vector<8x8xf32>
    %735 = arith.addf %734, %557 : vector<8x8xf32>
    %cst_215 = arith.constant dense<0xFF800000> : vector<8xf32>
    %736 = vector.multi_reduction <maximumf>, %735, %cst_215 [1] : vector<8x8xf32> to vector<8xf32>
    %737 = vector.shape_cast %736 : vector<8xf32> to vector<8x1xf32>
    %738 = vector.broadcast %737 : vector<8x1xf32> to vector<8x8xf32>
    %739 = arith.subf %735, %738 : vector<8x8xf32>
    %740 = math.exp %739 : vector<8x8xf32>
    %cst_216 = arith.constant dense<0.000000e+00> : vector<8xf32>
    %741 = vector.multi_reduction <add>, %740, %cst_216 [1] : vector<8x8xf32> to vector<8xf32>
    %742 = vector.shape_cast %741 : vector<8xf32> to vector<8x1xf32>
    %743 = vector.broadcast %742 : vector<8x1xf32> to vector<8x8xf32>
    %744 = arith.divf %740, %743 : vector<8x8xf32>
    %745 = arith.truncf %744 : vector<8x8xf32> to vector<8x8xbf16>
    %cst_217 = arith.constant dense<0.000000e+00> : vector<8x32xf32>
    %746 = tpu.matmul %745, %731, %cst_217 {dimension_numbers = #tpu.dot_dimension_numbers<[1], [0], [0], [1], [0, 0, 1, 1], [], []>} : vector<8x8xbf16>, vector<8x32xbf16>, vector<8x32xf32> -> vector<8x32xf32>
    %747 = arith.addf %725, %746 : vector<8x32xf32>
    %748 = vector.broadcast %21 : vector<1x32xf32> to vector<8x32xf32>
    %749 = arith.mulf %695, %748 : vector<8x32xf32>
    %750 = arith.truncf %749 : vector<8x32xf32> to vector<8x32xbf16>
    %751 = vector.broadcast %21 : vector<1x32xf32> to vector<8x32xf32>
    %752 = arith.mulf %701, %751 : vector<8x32xf32>
    %753 = arith.truncf %752 : vector<8x32xf32> to vector<8x32xbf16>
    %cst_218 = arith.constant dense<0.000000e+00> : vector<8x8xf32>
    %754 = tpu.matmul %750, %702, %cst_218 {dimension_numbers = #tpu.dot_dimension_numbers<[1], [1], [0], [0], [0, 0, 1, 0], [], []>} : vector<8x32xbf16>, vector<8x32xbf16>, vector<8x8xf32> -> vector<8x8xf32>
    %cst_219 = arith.constant 0.353553385 : f32
    %755 = vector.broadcast %cst_219 : f32 to vector<8x8xf32>
    %756 = arith.mulf %754, %755 : vector<8x8xf32>
    %757 = arith.addf %756, %557 : vector<8x8xf32>
    %cst_220 = arith.constant dense<0xFF800000> : vector<8xf32>
    %758 = vector.multi_reduction <maximumf>, %757, %cst_220 [1] : vector<8x8xf32> to vector<8xf32>
    %759 = vector.shape_cast %758 : vector<8xf32> to vector<8x1xf32>
    %760 = vector.broadcast %759 : vector<8x1xf32> to vector<8x8xf32>
    %761 = arith.subf %757, %760 : vector<8x8xf32>
    %762 = math.exp %761 : vector<8x8xf32>
    %cst_221 = arith.constant dense<0.000000e+00> : vector<8xf32>
    %763 = vector.multi_reduction <add>, %762, %cst_221 [1] : vector<8x8xf32> to vector<8xf32>
    %764 = vector.shape_cast %763 : vector<8xf32> to vector<8x1xf32>
    %765 = vector.broadcast %764 : vector<8x1xf32> to vector<8x8xf32>
    %766 = arith.divf %762, %765 : vector<8x8xf32>
    %767 = arith.truncf %766 : vector<8x8xf32> to vector<8x8xbf16>
    %cst_222 = arith.constant dense<0.000000e+00> : vector<8x32xf32>
    %768 = tpu.matmul %767, %753, %cst_222 {dimension_numbers = #tpu.dot_dimension_numbers<[1], [0], [0], [1], [0, 0, 1, 1], [], []>} : vector<8x8xbf16>, vector<8x32xbf16>, vector<8x32xf32> -> vector<8x32xf32>
    %769 = arith.addf %747, %768 : vector<8x32xf32>
    %770 = vector.broadcast %28 : vector<1x32xf32> to vector<8x32xf32>
    %771 = arith.mulf %695, %770 : vector<8x32xf32>
    %772 = arith.truncf %771 : vector<8x32xf32> to vector<8x32xbf16>
    %773 = vector.broadcast %28 : vector<1x32xf32> to vector<8x32xf32>
    %774 = arith.mulf %701, %773 : vector<8x32xf32>
    %775 = arith.truncf %774 : vector<8x32xf32> to vector<8x32xbf16>
    %cst_223 = arith.constant dense<0.000000e+00> : vector<8x8xf32>
    %776 = tpu.matmul %772, %702, %cst_223 {dimension_numbers = #tpu.dot_dimension_numbers<[1], [1], [0], [0], [0, 0, 1, 0], [], []>} : vector<8x32xbf16>, vector<8x32xbf16>, vector<8x8xf32> -> vector<8x8xf32>
    %cst_224 = arith.constant 0.353553385 : f32
    %777 = vector.broadcast %cst_224 : f32 to vector<8x8xf32>
    %778 = arith.mulf %776, %777 : vector<8x8xf32>
    %779 = arith.addf %778, %557 : vector<8x8xf32>
    %cst_225 = arith.constant dense<0xFF800000> : vector<8xf32>
    %780 = vector.multi_reduction <maximumf>, %779, %cst_225 [1] : vector<8x8xf32> to vector<8xf32>
    %781 = vector.shape_cast %780 : vector<8xf32> to vector<8x1xf32>
    %782 = vector.broadcast %781 : vector<8x1xf32> to vector<8x8xf32>
    %783 = arith.subf %779, %782 : vector<8x8xf32>
    %784 = math.exp %783 : vector<8x8xf32>
    %cst_226 = arith.constant dense<0.000000e+00> : vector<8xf32>
    %785 = vector.multi_reduction <add>, %784, %cst_226 [1] : vector<8x8xf32> to vector<8xf32>
    %786 = vector.shape_cast %785 : vector<8xf32> to vector<8x1xf32>
    %787 = vector.broadcast %786 : vector<8x1xf32> to vector<8x8xf32>
    %788 = arith.divf %784, %787 : vector<8x8xf32>
    %789 = arith.truncf %788 : vector<8x8xf32> to vector<8x8xbf16>
    %cst_227 = arith.constant dense<0.000000e+00> : vector<8x32xf32>
    %790 = tpu.matmul %789, %775, %cst_227 {dimension_numbers = #tpu.dot_dimension_numbers<[1], [0], [0], [1], [0, 0, 1, 1], [], []>} : vector<8x8xbf16>, vector<8x32xbf16>, vector<8x32xf32> -> vector<8x32xf32>
    %791 = arith.addf %769, %790 : vector<8x32xf32>
    %792 = arith.truncf %791 : vector<8x32xf32> to vector<8x32xbf16>
    %cst_228 = arith.constant dense<0.000000e+00> : vector<8x32xf32>
    %793 = tpu.matmul %792, %690, %cst_228 {dimension_numbers = #tpu.dot_dimension_numbers<[1], [0], [0], [1], [0, 0, 1, 1], [], []>} : vector<8x32xbf16>, vector<32x32xbf16>, vector<8x32xf32> -> vector<8x32xf32>
    %794 = vector.broadcast %691 : vector<1x32xf32> to vector<8x32xf32>
    %795 = arith.addf %793, %794 : vector<8x32xf32>
    %796 = arith.addf %685, %795 : vector<8x32xf32>
    %c76 = arith.constant 76 : index
    %c0_229 = arith.constant 0 : index
    %797 = vector.load %arg2[%c76, %c0_229] : memref<108x128xf32, #tpu.memory_space<vmem>>, vector<1x32xf32>
    %c77 = arith.constant 77 : index
    %c0_230 = arith.constant 0 : index
    %798 = vector.load %arg2[%c77, %c0_230] : memref<108x128xf32, #tpu.memory_space<vmem>>, vector<1x32xf32>
    %cst_231 = arith.constant dense<0.000000e+00> : vector<8xf32>
    %799 = vector.multi_reduction <add>, %796, %cst_231 [1] : vector<8x32xf32> to vector<8xf32>
    %800 = vector.shape_cast %799 : vector<8xf32> to vector<8x1xf32>
    %cst_232 = arith.constant 3.200000e+01 : f32
    %801 = vector.broadcast %cst_232 : f32 to vector<8x1xf32>
    %802 = arith.divf %800, %801 : vector<8x1xf32>
    %803 = vector.broadcast %802 : vector<8x1xf32> to vector<8x32xf32>
    %804 = arith.subf %796, %803 : vector<8x32xf32>
    %805 = arith.mulf %804, %804 : vector<8x32xf32>
    %cst_233 = arith.constant dense<0.000000e+00> : vector<8xf32>
    %806 = vector.multi_reduction <add>, %805, %cst_233 [1] : vector<8x32xf32> to vector<8xf32>
    %807 = vector.shape_cast %806 : vector<8xf32> to vector<8x1xf32>
    %cst_234 = arith.constant 3.200000e+01 : f32
    %808 = vector.broadcast %cst_234 : f32 to vector<8x1xf32>
    %809 = arith.divf %807, %808 : vector<8x1xf32>
    %cst_235 = arith.constant 9.99999974E-6 : f32
    %810 = vector.broadcast %cst_235 : f32 to vector<8x1xf32>
    %811 = arith.addf %809, %810 : vector<8x1xf32>
    %812 = math.rsqrt %811 : vector<8x1xf32>
    %813 = vector.broadcast %812 : vector<8x1xf32> to vector<8x32xf32>
    %814 = arith.mulf %804, %813 : vector<8x32xf32>
    %815 = vector.broadcast %797 : vector<1x32xf32> to vector<8x32xf32>
    %816 = arith.mulf %814, %815 : vector<8x32xf32>
    %817 = vector.broadcast %798 : vector<1x32xf32> to vector<8x32xf32>
    %818 = arith.addf %816, %817 : vector<8x32xf32>
    %c688 = arith.constant 688 : index
    %c0_236 = arith.constant 0 : index
    %819 = vector.load %arg1[%c688, %c0_236] : memref<1296x128xbf16, #tpu.memory_space<vmem>>, vector<32x64xbf16>
    %c78 = arith.constant 78 : index
    %c0_237 = arith.constant 0 : index
    %820 = vector.load %arg2[%c78, %c0_237] : memref<108x128xf32, #tpu.memory_space<vmem>>, vector<1x64xf32>
    %c720 = arith.constant 720 : index
    %c0_238 = arith.constant 0 : index
    %821 = vector.load %arg1[%c720, %c0_238] : memref<1296x128xbf16, #tpu.memory_space<vmem>>, vector<64x32xbf16>
    %c79 = arith.constant 79 : index
    %c0_239 = arith.constant 0 : index
    %822 = vector.load %arg2[%c79, %c0_239] : memref<108x128xf32, #tpu.memory_space<vmem>>, vector<1x32xf32>
    %823 = arith.truncf %818 : vector<8x32xf32> to vector<8x32xbf16>
    %cst_240 = arith.constant dense<0.000000e+00> : vector<8x64xf32>
    %824 = tpu.matmul %823, %819, %cst_240 {dimension_numbers = #tpu.dot_dimension_numbers<[1], [0], [0], [1], [0, 0, 1, 1], [], []>} : vector<8x32xbf16>, vector<32x64xbf16>, vector<8x64xf32> -> vector<8x64xf32>
    %825 = vector.broadcast %820 : vector<1x64xf32> to vector<8x64xf32>
    %826 = arith.addf %824, %825 : vector<8x64xf32>
    %cst_241 = arith.constant 0.000000e+00 : f32
    %827 = vector.broadcast %cst_241 : f32 to vector<8x64xf32>
    %828 = arith.maximumf %826, %827 : vector<8x64xf32>
    %829 = arith.truncf %828 : vector<8x64xf32> to vector<8x64xbf16>
    %cst_242 = arith.constant dense<0.000000e+00> : vector<8x32xf32>
    %830 = tpu.matmul %829, %821, %cst_242 {dimension_numbers = #tpu.dot_dimension_numbers<[1], [0], [0], [1], [0, 0, 1, 1], [], []>} : vector<8x64xbf16>, vector<64x32xbf16>, vector<8x32xf32> -> vector<8x32xf32>
    %831 = vector.broadcast %822 : vector<1x32xf32> to vector<8x32xf32>
    %832 = arith.addf %830, %831 : vector<8x32xf32>
    %833 = arith.addf %818, %832 : vector<8x32xf32>
    %c80_243 = arith.constant 80 : index
    %c0_244 = arith.constant 0 : index
    %834 = vector.load %arg2[%c80_243, %c0_244] : memref<108x128xf32, #tpu.memory_space<vmem>>, vector<1x32xf32>
    %c81 = arith.constant 81 : index
    %c0_245 = arith.constant 0 : index
    %835 = vector.load %arg2[%c81, %c0_245] : memref<108x128xf32, #tpu.memory_space<vmem>>, vector<1x32xf32>
    %cst_246 = arith.constant dense<0.000000e+00> : vector<8xf32>
    %836 = vector.multi_reduction <add>, %833, %cst_246 [1] : vector<8x32xf32> to vector<8xf32>
    %837 = vector.shape_cast %836 : vector<8xf32> to vector<8x1xf32>
    %cst_247 = arith.constant 3.200000e+01 : f32
    %838 = vector.broadcast %cst_247 : f32 to vector<8x1xf32>
    %839 = arith.divf %837, %838 : vector<8x1xf32>
    %840 = vector.broadcast %839 : vector<8x1xf32> to vector<8x32xf32>
    %841 = arith.subf %833, %840 : vector<8x32xf32>
    %842 = arith.mulf %841, %841 : vector<8x32xf32>
    %cst_248 = arith.constant dense<0.000000e+00> : vector<8xf32>
    %843 = vector.multi_reduction <add>, %842, %cst_248 [1] : vector<8x32xf32> to vector<8xf32>
    %844 = vector.shape_cast %843 : vector<8xf32> to vector<8x1xf32>
    %cst_249 = arith.constant 3.200000e+01 : f32
    %845 = vector.broadcast %cst_249 : f32 to vector<8x1xf32>
    %846 = arith.divf %844, %845 : vector<8x1xf32>
    %cst_250 = arith.constant 9.99999974E-6 : f32
    %847 = vector.broadcast %cst_250 : f32 to vector<8x1xf32>
    %848 = arith.addf %846, %847 : vector<8x1xf32>
    %849 = math.rsqrt %848 : vector<8x1xf32>
    %850 = vector.broadcast %849 : vector<8x1xf32> to vector<8x32xf32>
    %851 = arith.mulf %841, %850 : vector<8x32xf32>
    %852 = vector.broadcast %834 : vector<1x32xf32> to vector<8x32xf32>
    %853 = arith.mulf %851, %852 : vector<8x32xf32>
    %854 = vector.broadcast %835 : vector<1x32xf32> to vector<8x32xf32>
    %855 = arith.addf %853, %854 : vector<8x32xf32>
    %c784 = arith.constant 784 : index
    %c0_251 = arith.constant 0 : index
    %856 = vector.load %arg1[%c784, %c0_251] : memref<1296x128xbf16, #tpu.memory_space<vmem>>, vector<32x96xbf16>
    %c82 = arith.constant 82 : index
    %c0_252 = arith.constant 0 : index
    %857 = vector.load %arg2[%c82, %c0_252] : memref<108x128xf32, #tpu.memory_space<vmem>>, vector<1x96xf32>
    %c816 = arith.constant 816 : index
    %c0_253 = arith.constant 0 : index
    %858 = vector.load %arg1[%c816, %c0_253] : memref<1296x128xbf16, #tpu.memory_space<vmem>>, vector<32x32xbf16>
    %c83 = arith.constant 83 : index
    %c0_254 = arith.constant 0 : index
    %859 = vector.load %arg2[%c83, %c0_254] : memref<108x128xf32, #tpu.memory_space<vmem>>, vector<1x32xf32>
    %860 = arith.truncf %855 : vector<8x32xf32> to vector<8x32xbf16>
    %cst_255 = arith.constant dense<0.000000e+00> : vector<8x96xf32>
    %861 = tpu.matmul %860, %856, %cst_255 {dimension_numbers = #tpu.dot_dimension_numbers<[1], [0], [0], [1], [0, 0, 1, 1], [], []>} : vector<8x32xbf16>, vector<32x96xbf16>, vector<8x96xf32> -> vector<8x96xf32>
    %862 = vector.broadcast %857 : vector<1x96xf32> to vector<8x96xf32>
    %863 = arith.addf %861, %862 : vector<8x96xf32>
    %864 = vector.extract_strided_slice %863 {offsets = [0, 0], sizes = [8, 32], strides = [1, 1]} : vector<8x96xf32> to vector<8x32xf32>
    %865 = vector.extract_strided_slice %863 {offsets = [0, 32], sizes = [8, 32], strides = [1, 1]} : vector<8x96xf32> to vector<8x32xf32>
    %866 = vector.extract_strided_slice %863 {offsets = [0, 64], sizes = [8, 32], strides = [1, 1]} : vector<8x96xf32> to vector<8x32xf32>
    %867 = arith.truncf %865 : vector<8x32xf32> to vector<8x32xbf16>
    %cst_256 = arith.constant 0.000000e+00 : f32
    %868 = vector.broadcast %cst_256 : f32 to vector<8x32xf32>
    %869 = vector.broadcast %7 : vector<1x32xf32> to vector<8x32xf32>
    %870 = arith.mulf %864, %869 : vector<8x32xf32>
    %871 = arith.truncf %870 : vector<8x32xf32> to vector<8x32xbf16>
    %872 = vector.broadcast %7 : vector<1x32xf32> to vector<8x32xf32>
    %873 = arith.mulf %866, %872 : vector<8x32xf32>
    %874 = arith.truncf %873 : vector<8x32xf32> to vector<8x32xbf16>
    %cst_257 = arith.constant dense<0.000000e+00> : vector<8x8xf32>
    %875 = tpu.matmul %871, %867, %cst_257 {dimension_numbers = #tpu.dot_dimension_numbers<[1], [1], [0], [0], [0, 0, 1, 0], [], []>} : vector<8x32xbf16>, vector<8x32xbf16>, vector<8x8xf32> -> vector<8x8xf32>
    %cst_258 = arith.constant 0.353553385 : f32
    %876 = vector.broadcast %cst_258 : f32 to vector<8x8xf32>
    %877 = arith.mulf %875, %876 : vector<8x8xf32>
    %878 = arith.addf %877, %556 : vector<8x8xf32>
    %cst_259 = arith.constant dense<0xFF800000> : vector<8xf32>
    %879 = vector.multi_reduction <maximumf>, %878, %cst_259 [1] : vector<8x8xf32> to vector<8xf32>
    %880 = vector.shape_cast %879 : vector<8xf32> to vector<8x1xf32>
    %881 = vector.broadcast %880 : vector<8x1xf32> to vector<8x8xf32>
    %882 = arith.subf %878, %881 : vector<8x8xf32>
    %883 = math.exp %882 : vector<8x8xf32>
    %cst_260 = arith.constant dense<0.000000e+00> : vector<8xf32>
    %884 = vector.multi_reduction <add>, %883, %cst_260 [1] : vector<8x8xf32> to vector<8xf32>
    %885 = vector.shape_cast %884 : vector<8xf32> to vector<8x1xf32>
    %886 = vector.broadcast %885 : vector<8x1xf32> to vector<8x8xf32>
    %887 = arith.divf %883, %886 : vector<8x8xf32>
    %888 = arith.truncf %887 : vector<8x8xf32> to vector<8x8xbf16>
    %cst_261 = arith.constant dense<0.000000e+00> : vector<8x32xf32>
    %889 = tpu.matmul %888, %874, %cst_261 {dimension_numbers = #tpu.dot_dimension_numbers<[1], [0], [0], [1], [0, 0, 1, 1], [], []>} : vector<8x8xbf16>, vector<8x32xbf16>, vector<8x32xf32> -> vector<8x32xf32>
    %890 = arith.addf %868, %889 : vector<8x32xf32>
    %891 = vector.broadcast %14 : vector<1x32xf32> to vector<8x32xf32>
    %892 = arith.mulf %864, %891 : vector<8x32xf32>
    %893 = arith.truncf %892 : vector<8x32xf32> to vector<8x32xbf16>
    %894 = vector.broadcast %14 : vector<1x32xf32> to vector<8x32xf32>
    %895 = arith.mulf %866, %894 : vector<8x32xf32>
    %896 = arith.truncf %895 : vector<8x32xf32> to vector<8x32xbf16>
    %cst_262 = arith.constant dense<0.000000e+00> : vector<8x8xf32>
    %897 = tpu.matmul %893, %867, %cst_262 {dimension_numbers = #tpu.dot_dimension_numbers<[1], [1], [0], [0], [0, 0, 1, 0], [], []>} : vector<8x32xbf16>, vector<8x32xbf16>, vector<8x8xf32> -> vector<8x8xf32>
    %cst_263 = arith.constant 0.353553385 : f32
    %898 = vector.broadcast %cst_263 : f32 to vector<8x8xf32>
    %899 = arith.mulf %897, %898 : vector<8x8xf32>
    %900 = arith.addf %899, %556 : vector<8x8xf32>
    %cst_264 = arith.constant dense<0xFF800000> : vector<8xf32>
    %901 = vector.multi_reduction <maximumf>, %900, %cst_264 [1] : vector<8x8xf32> to vector<8xf32>
    %902 = vector.shape_cast %901 : vector<8xf32> to vector<8x1xf32>
    %903 = vector.broadcast %902 : vector<8x1xf32> to vector<8x8xf32>
    %904 = arith.subf %900, %903 : vector<8x8xf32>
    %905 = math.exp %904 : vector<8x8xf32>
    %cst_265 = arith.constant dense<0.000000e+00> : vector<8xf32>
    %906 = vector.multi_reduction <add>, %905, %cst_265 [1] : vector<8x8xf32> to vector<8xf32>
    %907 = vector.shape_cast %906 : vector<8xf32> to vector<8x1xf32>
    %908 = vector.broadcast %907 : vector<8x1xf32> to vector<8x8xf32>
    %909 = arith.divf %905, %908 : vector<8x8xf32>
    %910 = arith.truncf %909 : vector<8x8xf32> to vector<8x8xbf16>
    %cst_266 = arith.constant dense<0.000000e+00> : vector<8x32xf32>
    %911 = tpu.matmul %910, %896, %cst_266 {dimension_numbers = #tpu.dot_dimension_numbers<[1], [0], [0], [1], [0, 0, 1, 1], [], []>} : vector<8x8xbf16>, vector<8x32xbf16>, vector<8x32xf32> -> vector<8x32xf32>
    %912 = arith.addf %890, %911 : vector<8x32xf32>
    %913 = vector.broadcast %21 : vector<1x32xf32> to vector<8x32xf32>
    %914 = arith.mulf %864, %913 : vector<8x32xf32>
    %915 = arith.truncf %914 : vector<8x32xf32> to vector<8x32xbf16>
    %916 = vector.broadcast %21 : vector<1x32xf32> to vector<8x32xf32>
    %917 = arith.mulf %866, %916 : vector<8x32xf32>
    %918 = arith.truncf %917 : vector<8x32xf32> to vector<8x32xbf16>
    %cst_267 = arith.constant dense<0.000000e+00> : vector<8x8xf32>
    %919 = tpu.matmul %915, %867, %cst_267 {dimension_numbers = #tpu.dot_dimension_numbers<[1], [1], [0], [0], [0, 0, 1, 0], [], []>} : vector<8x32xbf16>, vector<8x32xbf16>, vector<8x8xf32> -> vector<8x8xf32>
    %cst_268 = arith.constant 0.353553385 : f32
    %920 = vector.broadcast %cst_268 : f32 to vector<8x8xf32>
    %921 = arith.mulf %919, %920 : vector<8x8xf32>
    %922 = arith.addf %921, %556 : vector<8x8xf32>
    %cst_269 = arith.constant dense<0xFF800000> : vector<8xf32>
    %923 = vector.multi_reduction <maximumf>, %922, %cst_269 [1] : vector<8x8xf32> to vector<8xf32>
    %924 = vector.shape_cast %923 : vector<8xf32> to vector<8x1xf32>
    %925 = vector.broadcast %924 : vector<8x1xf32> to vector<8x8xf32>
    %926 = arith.subf %922, %925 : vector<8x8xf32>
    %927 = math.exp %926 : vector<8x8xf32>
    %cst_270 = arith.constant dense<0.000000e+00> : vector<8xf32>
    %928 = vector.multi_reduction <add>, %927, %cst_270 [1] : vector<8x8xf32> to vector<8xf32>
    %929 = vector.shape_cast %928 : vector<8xf32> to vector<8x1xf32>
    %930 = vector.broadcast %929 : vector<8x1xf32> to vector<8x8xf32>
    %931 = arith.divf %927, %930 : vector<8x8xf32>
    %932 = arith.truncf %931 : vector<8x8xf32> to vector<8x8xbf16>
    %cst_271 = arith.constant dense<0.000000e+00> : vector<8x32xf32>
    %933 = tpu.matmul %932, %918, %cst_271 {dimension_numbers = #tpu.dot_dimension_numbers<[1], [0], [0], [1], [0, 0, 1, 1], [], []>} : vector<8x8xbf16>, vector<8x32xbf16>, vector<8x32xf32> -> vector<8x32xf32>
    %934 = arith.addf %912, %933 : vector<8x32xf32>
    %935 = vector.broadcast %28 : vector<1x32xf32> to vector<8x32xf32>
    %936 = arith.mulf %864, %935 : vector<8x32xf32>
    %937 = arith.truncf %936 : vector<8x32xf32> to vector<8x32xbf16>
    %938 = vector.broadcast %28 : vector<1x32xf32> to vector<8x32xf32>
    %939 = arith.mulf %866, %938 : vector<8x32xf32>
    %940 = arith.truncf %939 : vector<8x32xf32> to vector<8x32xbf16>
    %cst_272 = arith.constant dense<0.000000e+00> : vector<8x8xf32>
    %941 = tpu.matmul %937, %867, %cst_272 {dimension_numbers = #tpu.dot_dimension_numbers<[1], [1], [0], [0], [0, 0, 1, 0], [], []>} : vector<8x32xbf16>, vector<8x32xbf16>, vector<8x8xf32> -> vector<8x8xf32>
    %cst_273 = arith.constant 0.353553385 : f32
    %942 = vector.broadcast %cst_273 : f32 to vector<8x8xf32>
    %943 = arith.mulf %941, %942 : vector<8x8xf32>
    %944 = arith.addf %943, %556 : vector<8x8xf32>
    %cst_274 = arith.constant dense<0xFF800000> : vector<8xf32>
    %945 = vector.multi_reduction <maximumf>, %944, %cst_274 [1] : vector<8x8xf32> to vector<8xf32>
    %946 = vector.shape_cast %945 : vector<8xf32> to vector<8x1xf32>
    %947 = vector.broadcast %946 : vector<8x1xf32> to vector<8x8xf32>
    %948 = arith.subf %944, %947 : vector<8x8xf32>
    %949 = math.exp %948 : vector<8x8xf32>
    %cst_275 = arith.constant dense<0.000000e+00> : vector<8xf32>
    %950 = vector.multi_reduction <add>, %949, %cst_275 [1] : vector<8x8xf32> to vector<8xf32>
    %951 = vector.shape_cast %950 : vector<8xf32> to vector<8x1xf32>
    %952 = vector.broadcast %951 : vector<8x1xf32> to vector<8x8xf32>
    %953 = arith.divf %949, %952 : vector<8x8xf32>
    %954 = arith.truncf %953 : vector<8x8xf32> to vector<8x8xbf16>
    %cst_276 = arith.constant dense<0.000000e+00> : vector<8x32xf32>
    %955 = tpu.matmul %954, %940, %cst_276 {dimension_numbers = #tpu.dot_dimension_numbers<[1], [0], [0], [1], [0, 0, 1, 1], [], []>} : vector<8x8xbf16>, vector<8x32xbf16>, vector<8x32xf32> -> vector<8x32xf32>
    %956 = arith.addf %934, %955 : vector<8x32xf32>
    %957 = arith.truncf %956 : vector<8x32xf32> to vector<8x32xbf16>
    %cst_277 = arith.constant dense<0.000000e+00> : vector<8x32xf32>
    %958 = tpu.matmul %957, %858, %cst_277 {dimension_numbers = #tpu.dot_dimension_numbers<[1], [0], [0], [1], [0, 0, 1, 1], [], []>} : vector<8x32xbf16>, vector<32x32xbf16>, vector<8x32xf32> -> vector<8x32xf32>
    %959 = vector.broadcast %859 : vector<1x32xf32> to vector<8x32xf32>
    %960 = arith.addf %958, %959 : vector<8x32xf32>
    %961 = arith.addf %855, %960 : vector<8x32xf32>
    %c84 = arith.constant 84 : index
    %c0_278 = arith.constant 0 : index
    %962 = vector.load %arg2[%c84, %c0_278] : memref<108x128xf32, #tpu.memory_space<vmem>>, vector<1x32xf32>
    %c85 = arith.constant 85 : index
    %c0_279 = arith.constant 0 : index
    %963 = vector.load %arg2[%c85, %c0_279] : memref<108x128xf32, #tpu.memory_space<vmem>>, vector<1x32xf32>
    %cst_280 = arith.constant dense<0.000000e+00> : vector<8xf32>
    %964 = vector.multi_reduction <add>, %961, %cst_280 [1] : vector<8x32xf32> to vector<8xf32>
    %965 = vector.shape_cast %964 : vector<8xf32> to vector<8x1xf32>
    %cst_281 = arith.constant 3.200000e+01 : f32
    %966 = vector.broadcast %cst_281 : f32 to vector<8x1xf32>
    %967 = arith.divf %965, %966 : vector<8x1xf32>
    %968 = vector.broadcast %967 : vector<8x1xf32> to vector<8x32xf32>
    %969 = arith.subf %961, %968 : vector<8x32xf32>
    %970 = arith.mulf %969, %969 : vector<8x32xf32>
    %cst_282 = arith.constant dense<0.000000e+00> : vector<8xf32>
    %971 = vector.multi_reduction <add>, %970, %cst_282 [1] : vector<8x32xf32> to vector<8xf32>
    %972 = vector.shape_cast %971 : vector<8xf32> to vector<8x1xf32>
    %cst_283 = arith.constant 3.200000e+01 : f32
    %973 = vector.broadcast %cst_283 : f32 to vector<8x1xf32>
    %974 = arith.divf %972, %973 : vector<8x1xf32>
    %cst_284 = arith.constant 9.99999974E-6 : f32
    %975 = vector.broadcast %cst_284 : f32 to vector<8x1xf32>
    %976 = arith.addf %974, %975 : vector<8x1xf32>
    %977 = math.rsqrt %976 : vector<8x1xf32>
    %978 = vector.broadcast %977 : vector<8x1xf32> to vector<8x32xf32>
    %979 = arith.mulf %969, %978 : vector<8x32xf32>
    %980 = vector.broadcast %962 : vector<1x32xf32> to vector<8x32xf32>
    %981 = arith.mulf %979, %980 : vector<8x32xf32>
    %982 = vector.broadcast %963 : vector<1x32xf32> to vector<8x32xf32>
    %983 = arith.addf %981, %982 : vector<8x32xf32>
    %c848 = arith.constant 848 : index
    %c0_285 = arith.constant 0 : index
    %984 = vector.load %arg1[%c848, %c0_285] : memref<1296x128xbf16, #tpu.memory_space<vmem>>, vector<32x32xbf16>
    %c86 = arith.constant 86 : index
    %c0_286 = arith.constant 0 : index
    %985 = vector.load %arg2[%c86, %c0_286] : memref<108x128xf32, #tpu.memory_space<vmem>>, vector<1x32xf32>
    %c880 = arith.constant 880 : index
    %c0_287 = arith.constant 0 : index
    %986 = vector.load %arg1[%c880, %c0_287] : memref<1296x128xbf16, #tpu.memory_space<vmem>>, vector<32x64xbf16>
    %c87 = arith.constant 87 : index
    %c0_288 = arith.constant 0 : index
    %987 = vector.load %arg2[%c87, %c0_288] : memref<108x128xf32, #tpu.memory_space<vmem>>, vector<1x64xf32>
    %c912 = arith.constant 912 : index
    %c0_289 = arith.constant 0 : index
    %988 = vector.load %arg1[%c912, %c0_289] : memref<1296x128xbf16, #tpu.memory_space<vmem>>, vector<32x32xbf16>
    %c88 = arith.constant 88 : index
    %c0_290 = arith.constant 0 : index
    %989 = vector.load %arg2[%c88, %c0_290] : memref<108x128xf32, #tpu.memory_space<vmem>>, vector<1x32xf32>
    %990 = arith.truncf %983 : vector<8x32xf32> to vector<8x32xbf16>
    %cst_291 = arith.constant dense<0.000000e+00> : vector<8x32xf32>
    %991 = tpu.matmul %990, %984, %cst_291 {dimension_numbers = #tpu.dot_dimension_numbers<[1], [0], [0], [1], [0, 0, 1, 1], [], []>} : vector<8x32xbf16>, vector<32x32xbf16>, vector<8x32xf32> -> vector<8x32xf32>
    %992 = vector.broadcast %985 : vector<1x32xf32> to vector<8x32xf32>
    %993 = arith.addf %991, %992 : vector<8x32xf32>
    %994 = arith.truncf %555 : vector<8x32xf32> to vector<8x32xbf16>
    %cst_292 = arith.constant dense<0.000000e+00> : vector<8x64xf32>
    %995 = tpu.matmul %994, %986, %cst_292 {dimension_numbers = #tpu.dot_dimension_numbers<[1], [0], [0], [1], [0, 0, 1, 1], [], []>} : vector<8x32xbf16>, vector<32x64xbf16>, vector<8x64xf32> -> vector<8x64xf32>
    %996 = vector.broadcast %987 : vector<1x64xf32> to vector<8x64xf32>
    %997 = arith.addf %995, %996 : vector<8x64xf32>
    %998 = vector.extract_strided_slice %997 {offsets = [0, 0], sizes = [8, 32], strides = [1, 1]} : vector<8x64xf32> to vector<8x32xf32>
    %999 = vector.extract_strided_slice %997 {offsets = [0, 32], sizes = [8, 32], strides = [1, 1]} : vector<8x64xf32> to vector<8x32xf32>
    %1000 = arith.truncf %998 : vector<8x32xf32> to vector<8x32xbf16>
    %cst_293 = arith.constant 0.000000e+00 : f32
    %1001 = vector.broadcast %cst_293 : f32 to vector<8x32xf32>
    %1002 = vector.broadcast %7 : vector<1x32xf32> to vector<8x32xf32>
    %1003 = arith.mulf %993, %1002 : vector<8x32xf32>
    %1004 = arith.truncf %1003 : vector<8x32xf32> to vector<8x32xbf16>
    %1005 = vector.broadcast %7 : vector<1x32xf32> to vector<8x32xf32>
    %1006 = arith.mulf %999, %1005 : vector<8x32xf32>
    %1007 = arith.truncf %1006 : vector<8x32xf32> to vector<8x32xbf16>
    %cst_294 = arith.constant dense<0.000000e+00> : vector<8x8xf32>
    %1008 = tpu.matmul %1004, %1000, %cst_294 {dimension_numbers = #tpu.dot_dimension_numbers<[1], [1], [0], [0], [0, 0, 1, 0], [], []>} : vector<8x32xbf16>, vector<8x32xbf16>, vector<8x8xf32> -> vector<8x8xf32>
    %cst_295 = arith.constant 0.353553385 : f32
    %1009 = vector.broadcast %cst_295 : f32 to vector<8x8xf32>
    %1010 = arith.mulf %1008, %1009 : vector<8x8xf32>
    %1011 = arith.addf %1010, %557 : vector<8x8xf32>
    %cst_296 = arith.constant dense<0xFF800000> : vector<8xf32>
    %1012 = vector.multi_reduction <maximumf>, %1011, %cst_296 [1] : vector<8x8xf32> to vector<8xf32>
    %1013 = vector.shape_cast %1012 : vector<8xf32> to vector<8x1xf32>
    %1014 = vector.broadcast %1013 : vector<8x1xf32> to vector<8x8xf32>
    %1015 = arith.subf %1011, %1014 : vector<8x8xf32>
    %1016 = math.exp %1015 : vector<8x8xf32>
    %cst_297 = arith.constant dense<0.000000e+00> : vector<8xf32>
    %1017 = vector.multi_reduction <add>, %1016, %cst_297 [1] : vector<8x8xf32> to vector<8xf32>
    %1018 = vector.shape_cast %1017 : vector<8xf32> to vector<8x1xf32>
    %1019 = vector.broadcast %1018 : vector<8x1xf32> to vector<8x8xf32>
    %1020 = arith.divf %1016, %1019 : vector<8x8xf32>
    %1021 = arith.truncf %1020 : vector<8x8xf32> to vector<8x8xbf16>
    %cst_298 = arith.constant dense<0.000000e+00> : vector<8x32xf32>
    %1022 = tpu.matmul %1021, %1007, %cst_298 {dimension_numbers = #tpu.dot_dimension_numbers<[1], [0], [0], [1], [0, 0, 1, 1], [], []>} : vector<8x8xbf16>, vector<8x32xbf16>, vector<8x32xf32> -> vector<8x32xf32>
    %1023 = arith.addf %1001, %1022 : vector<8x32xf32>
    %1024 = vector.broadcast %14 : vector<1x32xf32> to vector<8x32xf32>
    %1025 = arith.mulf %993, %1024 : vector<8x32xf32>
    %1026 = arith.truncf %1025 : vector<8x32xf32> to vector<8x32xbf16>
    %1027 = vector.broadcast %14 : vector<1x32xf32> to vector<8x32xf32>
    %1028 = arith.mulf %999, %1027 : vector<8x32xf32>
    %1029 = arith.truncf %1028 : vector<8x32xf32> to vector<8x32xbf16>
    %cst_299 = arith.constant dense<0.000000e+00> : vector<8x8xf32>
    %1030 = tpu.matmul %1026, %1000, %cst_299 {dimension_numbers = #tpu.dot_dimension_numbers<[1], [1], [0], [0], [0, 0, 1, 0], [], []>} : vector<8x32xbf16>, vector<8x32xbf16>, vector<8x8xf32> -> vector<8x8xf32>
    %cst_300 = arith.constant 0.353553385 : f32
    %1031 = vector.broadcast %cst_300 : f32 to vector<8x8xf32>
    %1032 = arith.mulf %1030, %1031 : vector<8x8xf32>
    %1033 = arith.addf %1032, %557 : vector<8x8xf32>
    %cst_301 = arith.constant dense<0xFF800000> : vector<8xf32>
    %1034 = vector.multi_reduction <maximumf>, %1033, %cst_301 [1] : vector<8x8xf32> to vector<8xf32>
    %1035 = vector.shape_cast %1034 : vector<8xf32> to vector<8x1xf32>
    %1036 = vector.broadcast %1035 : vector<8x1xf32> to vector<8x8xf32>
    %1037 = arith.subf %1033, %1036 : vector<8x8xf32>
    %1038 = math.exp %1037 : vector<8x8xf32>
    %cst_302 = arith.constant dense<0.000000e+00> : vector<8xf32>
    %1039 = vector.multi_reduction <add>, %1038, %cst_302 [1] : vector<8x8xf32> to vector<8xf32>
    %1040 = vector.shape_cast %1039 : vector<8xf32> to vector<8x1xf32>
    %1041 = vector.broadcast %1040 : vector<8x1xf32> to vector<8x8xf32>
    %1042 = arith.divf %1038, %1041 : vector<8x8xf32>
    %1043 = arith.truncf %1042 : vector<8x8xf32> to vector<8x8xbf16>
    %cst_303 = arith.constant dense<0.000000e+00> : vector<8x32xf32>
    %1044 = tpu.matmul %1043, %1029, %cst_303 {dimension_numbers = #tpu.dot_dimension_numbers<[1], [0], [0], [1], [0, 0, 1, 1], [], []>} : vector<8x8xbf16>, vector<8x32xbf16>, vector<8x32xf32> -> vector<8x32xf32>
    %1045 = arith.addf %1023, %1044 : vector<8x32xf32>
    %1046 = vector.broadcast %21 : vector<1x32xf32> to vector<8x32xf32>
    %1047 = arith.mulf %993, %1046 : vector<8x32xf32>
    %1048 = arith.truncf %1047 : vector<8x32xf32> to vector<8x32xbf16>
    %1049 = vector.broadcast %21 : vector<1x32xf32> to vector<8x32xf32>
    %1050 = arith.mulf %999, %1049 : vector<8x32xf32>
    %1051 = arith.truncf %1050 : vector<8x32xf32> to vector<8x32xbf16>
    %cst_304 = arith.constant dense<0.000000e+00> : vector<8x8xf32>
    %1052 = tpu.matmul %1048, %1000, %cst_304 {dimension_numbers = #tpu.dot_dimension_numbers<[1], [1], [0], [0], [0, 0, 1, 0], [], []>} : vector<8x32xbf16>, vector<8x32xbf16>, vector<8x8xf32> -> vector<8x8xf32>
    %cst_305 = arith.constant 0.353553385 : f32
    %1053 = vector.broadcast %cst_305 : f32 to vector<8x8xf32>
    %1054 = arith.mulf %1052, %1053 : vector<8x8xf32>
    %1055 = arith.addf %1054, %557 : vector<8x8xf32>
    %cst_306 = arith.constant dense<0xFF800000> : vector<8xf32>
    %1056 = vector.multi_reduction <maximumf>, %1055, %cst_306 [1] : vector<8x8xf32> to vector<8xf32>
    %1057 = vector.shape_cast %1056 : vector<8xf32> to vector<8x1xf32>
    %1058 = vector.broadcast %1057 : vector<8x1xf32> to vector<8x8xf32>
    %1059 = arith.subf %1055, %1058 : vector<8x8xf32>
    %1060 = math.exp %1059 : vector<8x8xf32>
    %cst_307 = arith.constant dense<0.000000e+00> : vector<8xf32>
    %1061 = vector.multi_reduction <add>, %1060, %cst_307 [1] : vector<8x8xf32> to vector<8xf32>
    %1062 = vector.shape_cast %1061 : vector<8xf32> to vector<8x1xf32>
    %1063 = vector.broadcast %1062 : vector<8x1xf32> to vector<8x8xf32>
    %1064 = arith.divf %1060, %1063 : vector<8x8xf32>
    %1065 = arith.truncf %1064 : vector<8x8xf32> to vector<8x8xbf16>
    %cst_308 = arith.constant dense<0.000000e+00> : vector<8x32xf32>
    %1066 = tpu.matmul %1065, %1051, %cst_308 {dimension_numbers = #tpu.dot_dimension_numbers<[1], [0], [0], [1], [0, 0, 1, 1], [], []>} : vector<8x8xbf16>, vector<8x32xbf16>, vector<8x32xf32> -> vector<8x32xf32>
    %1067 = arith.addf %1045, %1066 : vector<8x32xf32>
    %1068 = vector.broadcast %28 : vector<1x32xf32> to vector<8x32xf32>
    %1069 = arith.mulf %993, %1068 : vector<8x32xf32>
    %1070 = arith.truncf %1069 : vector<8x32xf32> to vector<8x32xbf16>
    %1071 = vector.broadcast %28 : vector<1x32xf32> to vector<8x32xf32>
    %1072 = arith.mulf %999, %1071 : vector<8x32xf32>
    %1073 = arith.truncf %1072 : vector<8x32xf32> to vector<8x32xbf16>
    %cst_309 = arith.constant dense<0.000000e+00> : vector<8x8xf32>
    %1074 = tpu.matmul %1070, %1000, %cst_309 {dimension_numbers = #tpu.dot_dimension_numbers<[1], [1], [0], [0], [0, 0, 1, 0], [], []>} : vector<8x32xbf16>, vector<8x32xbf16>, vector<8x8xf32> -> vector<8x8xf32>
    %cst_310 = arith.constant 0.353553385 : f32
    %1075 = vector.broadcast %cst_310 : f32 to vector<8x8xf32>
    %1076 = arith.mulf %1074, %1075 : vector<8x8xf32>
    %1077 = arith.addf %1076, %557 : vector<8x8xf32>
    %cst_311 = arith.constant dense<0xFF800000> : vector<8xf32>
    %1078 = vector.multi_reduction <maximumf>, %1077, %cst_311 [1] : vector<8x8xf32> to vector<8xf32>
    %1079 = vector.shape_cast %1078 : vector<8xf32> to vector<8x1xf32>
    %1080 = vector.broadcast %1079 : vector<8x1xf32> to vector<8x8xf32>
    %1081 = arith.subf %1077, %1080 : vector<8x8xf32>
    %1082 = math.exp %1081 : vector<8x8xf32>
    %cst_312 = arith.constant dense<0.000000e+00> : vector<8xf32>
    %1083 = vector.multi_reduction <add>, %1082, %cst_312 [1] : vector<8x8xf32> to vector<8xf32>
    %1084 = vector.shape_cast %1083 : vector<8xf32> to vector<8x1xf32>
    %1085 = vector.broadcast %1084 : vector<8x1xf32> to vector<8x8xf32>
    %1086 = arith.divf %1082, %1085 : vector<8x8xf32>
    %1087 = arith.truncf %1086 : vector<8x8xf32> to vector<8x8xbf16>
    %cst_313 = arith.constant dense<0.000000e+00> : vector<8x32xf32>
    %1088 = tpu.matmul %1087, %1073, %cst_313 {dimension_numbers = #tpu.dot_dimension_numbers<[1], [0], [0], [1], [0, 0, 1, 1], [], []>} : vector<8x8xbf16>, vector<8x32xbf16>, vector<8x32xf32> -> vector<8x32xf32>
    %1089 = arith.addf %1067, %1088 : vector<8x32xf32>
    %1090 = arith.truncf %1089 : vector<8x32xf32> to vector<8x32xbf16>
    %cst_314 = arith.constant dense<0.000000e+00> : vector<8x32xf32>
    %1091 = tpu.matmul %1090, %988, %cst_314 {dimension_numbers = #tpu.dot_dimension_numbers<[1], [0], [0], [1], [0, 0, 1, 1], [], []>} : vector<8x32xbf16>, vector<32x32xbf16>, vector<8x32xf32> -> vector<8x32xf32>
    %1092 = vector.broadcast %989 : vector<1x32xf32> to vector<8x32xf32>
    %1093 = arith.addf %1091, %1092 : vector<8x32xf32>
    %1094 = arith.addf %983, %1093 : vector<8x32xf32>
    %c89 = arith.constant 89 : index
    %c0_315 = arith.constant 0 : index
    %1095 = vector.load %arg2[%c89, %c0_315] : memref<108x128xf32, #tpu.memory_space<vmem>>, vector<1x32xf32>
    %c90 = arith.constant 90 : index
    %c0_316 = arith.constant 0 : index
    %1096 = vector.load %arg2[%c90, %c0_316] : memref<108x128xf32, #tpu.memory_space<vmem>>, vector<1x32xf32>
    %cst_317 = arith.constant dense<0.000000e+00> : vector<8xf32>
    %1097 = vector.multi_reduction <add>, %1094, %cst_317 [1] : vector<8x32xf32> to vector<8xf32>
    %1098 = vector.shape_cast %1097 : vector<8xf32> to vector<8x1xf32>
    %cst_318 = arith.constant 3.200000e+01 : f32
    %1099 = vector.broadcast %cst_318 : f32 to vector<8x1xf32>
    %1100 = arith.divf %1098, %1099 : vector<8x1xf32>
    %1101 = vector.broadcast %1100 : vector<8x1xf32> to vector<8x32xf32>
    %1102 = arith.subf %1094, %1101 : vector<8x32xf32>
    %1103 = arith.mulf %1102, %1102 : vector<8x32xf32>
    %cst_319 = arith.constant dense<0.000000e+00> : vector<8xf32>
    %1104 = vector.multi_reduction <add>, %1103, %cst_319 [1] : vector<8x32xf32> to vector<8xf32>
    %1105 = vector.shape_cast %1104 : vector<8xf32> to vector<8x1xf32>
    %cst_320 = arith.constant 3.200000e+01 : f32
    %1106 = vector.broadcast %cst_320 : f32 to vector<8x1xf32>
    %1107 = arith.divf %1105, %1106 : vector<8x1xf32>
    %cst_321 = arith.constant 9.99999974E-6 : f32
    %1108 = vector.broadcast %cst_321 : f32 to vector<8x1xf32>
    %1109 = arith.addf %1107, %1108 : vector<8x1xf32>
    %1110 = math.rsqrt %1109 : vector<8x1xf32>
    %1111 = vector.broadcast %1110 : vector<8x1xf32> to vector<8x32xf32>
    %1112 = arith.mulf %1102, %1111 : vector<8x32xf32>
    %1113 = vector.broadcast %1095 : vector<1x32xf32> to vector<8x32xf32>
    %1114 = arith.mulf %1112, %1113 : vector<8x32xf32>
    %1115 = vector.broadcast %1096 : vector<1x32xf32> to vector<8x32xf32>
    %1116 = arith.addf %1114, %1115 : vector<8x32xf32>
    %c944 = arith.constant 944 : index
    %c0_322 = arith.constant 0 : index
    %1117 = vector.load %arg1[%c944, %c0_322] : memref<1296x128xbf16, #tpu.memory_space<vmem>>, vector<32x64xbf16>
    %c91 = arith.constant 91 : index
    %c0_323 = arith.constant 0 : index
    %1118 = vector.load %arg2[%c91, %c0_323] : memref<108x128xf32, #tpu.memory_space<vmem>>, vector<1x64xf32>
    %c976 = arith.constant 976 : index
    %c0_324 = arith.constant 0 : index
    %1119 = vector.load %arg1[%c976, %c0_324] : memref<1296x128xbf16, #tpu.memory_space<vmem>>, vector<64x32xbf16>
    %c92 = arith.constant 92 : index
    %c0_325 = arith.constant 0 : index
    %1120 = vector.load %arg2[%c92, %c0_325] : memref<108x128xf32, #tpu.memory_space<vmem>>, vector<1x32xf32>
    %1121 = arith.truncf %1116 : vector<8x32xf32> to vector<8x32xbf16>
    %cst_326 = arith.constant dense<0.000000e+00> : vector<8x64xf32>
    %1122 = tpu.matmul %1121, %1117, %cst_326 {dimension_numbers = #tpu.dot_dimension_numbers<[1], [0], [0], [1], [0, 0, 1, 1], [], []>} : vector<8x32xbf16>, vector<32x64xbf16>, vector<8x64xf32> -> vector<8x64xf32>
    %1123 = vector.broadcast %1118 : vector<1x64xf32> to vector<8x64xf32>
    %1124 = arith.addf %1122, %1123 : vector<8x64xf32>
    %cst_327 = arith.constant 0.000000e+00 : f32
    %1125 = vector.broadcast %cst_327 : f32 to vector<8x64xf32>
    %1126 = arith.maximumf %1124, %1125 : vector<8x64xf32>
    %1127 = arith.truncf %1126 : vector<8x64xf32> to vector<8x64xbf16>
    %cst_328 = arith.constant dense<0.000000e+00> : vector<8x32xf32>
    %1128 = tpu.matmul %1127, %1119, %cst_328 {dimension_numbers = #tpu.dot_dimension_numbers<[1], [0], [0], [1], [0, 0, 1, 1], [], []>} : vector<8x64xbf16>, vector<64x32xbf16>, vector<8x32xf32> -> vector<8x32xf32>
    %1129 = vector.broadcast %1120 : vector<1x32xf32> to vector<8x32xf32>
    %1130 = arith.addf %1128, %1129 : vector<8x32xf32>
    %1131 = arith.addf %1116, %1130 : vector<8x32xf32>
    %c93 = arith.constant 93 : index
    %c0_329 = arith.constant 0 : index
    %1132 = vector.load %arg2[%c93, %c0_329] : memref<108x128xf32, #tpu.memory_space<vmem>>, vector<1x32xf32>
    %c94 = arith.constant 94 : index
    %c0_330 = arith.constant 0 : index
    %1133 = vector.load %arg2[%c94, %c0_330] : memref<108x128xf32, #tpu.memory_space<vmem>>, vector<1x32xf32>
    %cst_331 = arith.constant dense<0.000000e+00> : vector<8xf32>
    %1134 = vector.multi_reduction <add>, %1131, %cst_331 [1] : vector<8x32xf32> to vector<8xf32>
    %1135 = vector.shape_cast %1134 : vector<8xf32> to vector<8x1xf32>
    %cst_332 = arith.constant 3.200000e+01 : f32
    %1136 = vector.broadcast %cst_332 : f32 to vector<8x1xf32>
    %1137 = arith.divf %1135, %1136 : vector<8x1xf32>
    %1138 = vector.broadcast %1137 : vector<8x1xf32> to vector<8x32xf32>
    %1139 = arith.subf %1131, %1138 : vector<8x32xf32>
    %1140 = arith.mulf %1139, %1139 : vector<8x32xf32>
    %cst_333 = arith.constant dense<0.000000e+00> : vector<8xf32>
    %1141 = vector.multi_reduction <add>, %1140, %cst_333 [1] : vector<8x32xf32> to vector<8xf32>
    %1142 = vector.shape_cast %1141 : vector<8xf32> to vector<8x1xf32>
    %cst_334 = arith.constant 3.200000e+01 : f32
    %1143 = vector.broadcast %cst_334 : f32 to vector<8x1xf32>
    %1144 = arith.divf %1142, %1143 : vector<8x1xf32>
    %cst_335 = arith.constant 9.99999974E-6 : f32
    %1145 = vector.broadcast %cst_335 : f32 to vector<8x1xf32>
    %1146 = arith.addf %1144, %1145 : vector<8x1xf32>
    %1147 = math.rsqrt %1146 : vector<8x1xf32>
    %1148 = vector.broadcast %1147 : vector<8x1xf32> to vector<8x32xf32>
    %1149 = arith.mulf %1139, %1148 : vector<8x32xf32>
    %1150 = vector.broadcast %1132 : vector<1x32xf32> to vector<8x32xf32>
    %1151 = arith.mulf %1149, %1150 : vector<8x32xf32>
    %1152 = vector.broadcast %1133 : vector<1x32xf32> to vector<8x32xf32>
    %1153 = arith.addf %1151, %1152 : vector<8x32xf32>
    %c1040 = arith.constant 1040 : index
    %c0_336 = arith.constant 0 : index
    %1154 = vector.load %arg1[%c1040, %c0_336] : memref<1296x128xbf16, #tpu.memory_space<vmem>>, vector<32x96xbf16>
    %c95 = arith.constant 95 : index
    %c0_337 = arith.constant 0 : index
    %1155 = vector.load %arg2[%c95, %c0_337] : memref<108x128xf32, #tpu.memory_space<vmem>>, vector<1x96xf32>
    %c1072 = arith.constant 1072 : index
    %c0_338 = arith.constant 0 : index
    %1156 = vector.load %arg1[%c1072, %c0_338] : memref<1296x128xbf16, #tpu.memory_space<vmem>>, vector<32x32xbf16>
    %c96 = arith.constant 96 : index
    %c0_339 = arith.constant 0 : index
    %1157 = vector.load %arg2[%c96, %c0_339] : memref<108x128xf32, #tpu.memory_space<vmem>>, vector<1x32xf32>
    %1158 = arith.truncf %1153 : vector<8x32xf32> to vector<8x32xbf16>
    %cst_340 = arith.constant dense<0.000000e+00> : vector<8x96xf32>
    %1159 = tpu.matmul %1158, %1154, %cst_340 {dimension_numbers = #tpu.dot_dimension_numbers<[1], [0], [0], [1], [0, 0, 1, 1], [], []>} : vector<8x32xbf16>, vector<32x96xbf16>, vector<8x96xf32> -> vector<8x96xf32>
    %1160 = vector.broadcast %1155 : vector<1x96xf32> to vector<8x96xf32>
    %1161 = arith.addf %1159, %1160 : vector<8x96xf32>
    %1162 = vector.extract_strided_slice %1161 {offsets = [0, 0], sizes = [8, 32], strides = [1, 1]} : vector<8x96xf32> to vector<8x32xf32>
    %1163 = vector.extract_strided_slice %1161 {offsets = [0, 32], sizes = [8, 32], strides = [1, 1]} : vector<8x96xf32> to vector<8x32xf32>
    %1164 = vector.extract_strided_slice %1161 {offsets = [0, 64], sizes = [8, 32], strides = [1, 1]} : vector<8x96xf32> to vector<8x32xf32>
    %1165 = arith.truncf %1163 : vector<8x32xf32> to vector<8x32xbf16>
    %cst_341 = arith.constant 0.000000e+00 : f32
    %1166 = vector.broadcast %cst_341 : f32 to vector<8x32xf32>
    %1167 = vector.broadcast %7 : vector<1x32xf32> to vector<8x32xf32>
    %1168 = arith.mulf %1162, %1167 : vector<8x32xf32>
    %1169 = arith.truncf %1168 : vector<8x32xf32> to vector<8x32xbf16>
    %1170 = vector.broadcast %7 : vector<1x32xf32> to vector<8x32xf32>
    %1171 = arith.mulf %1164, %1170 : vector<8x32xf32>
    %1172 = arith.truncf %1171 : vector<8x32xf32> to vector<8x32xbf16>
    %cst_342 = arith.constant dense<0.000000e+00> : vector<8x8xf32>
    %1173 = tpu.matmul %1169, %1165, %cst_342 {dimension_numbers = #tpu.dot_dimension_numbers<[1], [1], [0], [0], [0, 0, 1, 0], [], []>} : vector<8x32xbf16>, vector<8x32xbf16>, vector<8x8xf32> -> vector<8x8xf32>
    %cst_343 = arith.constant 0.353553385 : f32
    %1174 = vector.broadcast %cst_343 : f32 to vector<8x8xf32>
    %1175 = arith.mulf %1173, %1174 : vector<8x8xf32>
    %1176 = arith.addf %1175, %556 : vector<8x8xf32>
    %cst_344 = arith.constant dense<0xFF800000> : vector<8xf32>
    %1177 = vector.multi_reduction <maximumf>, %1176, %cst_344 [1] : vector<8x8xf32> to vector<8xf32>
    %1178 = vector.shape_cast %1177 : vector<8xf32> to vector<8x1xf32>
    %1179 = vector.broadcast %1178 : vector<8x1xf32> to vector<8x8xf32>
    %1180 = arith.subf %1176, %1179 : vector<8x8xf32>
    %1181 = math.exp %1180 : vector<8x8xf32>
    %cst_345 = arith.constant dense<0.000000e+00> : vector<8xf32>
    %1182 = vector.multi_reduction <add>, %1181, %cst_345 [1] : vector<8x8xf32> to vector<8xf32>
    %1183 = vector.shape_cast %1182 : vector<8xf32> to vector<8x1xf32>
    %1184 = vector.broadcast %1183 : vector<8x1xf32> to vector<8x8xf32>
    %1185 = arith.divf %1181, %1184 : vector<8x8xf32>
    %1186 = arith.truncf %1185 : vector<8x8xf32> to vector<8x8xbf16>
    %cst_346 = arith.constant dense<0.000000e+00> : vector<8x32xf32>
    %1187 = tpu.matmul %1186, %1172, %cst_346 {dimension_numbers = #tpu.dot_dimension_numbers<[1], [0], [0], [1], [0, 0, 1, 1], [], []>} : vector<8x8xbf16>, vector<8x32xbf16>, vector<8x32xf32> -> vector<8x32xf32>
    %1188 = arith.addf %1166, %1187 : vector<8x32xf32>
    %1189 = vector.broadcast %14 : vector<1x32xf32> to vector<8x32xf32>
    %1190 = arith.mulf %1162, %1189 : vector<8x32xf32>
    %1191 = arith.truncf %1190 : vector<8x32xf32> to vector<8x32xbf16>
    %1192 = vector.broadcast %14 : vector<1x32xf32> to vector<8x32xf32>
    %1193 = arith.mulf %1164, %1192 : vector<8x32xf32>
    %1194 = arith.truncf %1193 : vector<8x32xf32> to vector<8x32xbf16>
    %cst_347 = arith.constant dense<0.000000e+00> : vector<8x8xf32>
    %1195 = tpu.matmul %1191, %1165, %cst_347 {dimension_numbers = #tpu.dot_dimension_numbers<[1], [1], [0], [0], [0, 0, 1, 0], [], []>} : vector<8x32xbf16>, vector<8x32xbf16>, vector<8x8xf32> -> vector<8x8xf32>
    %cst_348 = arith.constant 0.353553385 : f32
    %1196 = vector.broadcast %cst_348 : f32 to vector<8x8xf32>
    %1197 = arith.mulf %1195, %1196 : vector<8x8xf32>
    %1198 = arith.addf %1197, %556 : vector<8x8xf32>
    %cst_349 = arith.constant dense<0xFF800000> : vector<8xf32>
    %1199 = vector.multi_reduction <maximumf>, %1198, %cst_349 [1] : vector<8x8xf32> to vector<8xf32>
    %1200 = vector.shape_cast %1199 : vector<8xf32> to vector<8x1xf32>
    %1201 = vector.broadcast %1200 : vector<8x1xf32> to vector<8x8xf32>
    %1202 = arith.subf %1198, %1201 : vector<8x8xf32>
    %1203 = math.exp %1202 : vector<8x8xf32>
    %cst_350 = arith.constant dense<0.000000e+00> : vector<8xf32>
    %1204 = vector.multi_reduction <add>, %1203, %cst_350 [1] : vector<8x8xf32> to vector<8xf32>
    %1205 = vector.shape_cast %1204 : vector<8xf32> to vector<8x1xf32>
    %1206 = vector.broadcast %1205 : vector<8x1xf32> to vector<8x8xf32>
    %1207 = arith.divf %1203, %1206 : vector<8x8xf32>
    %1208 = arith.truncf %1207 : vector<8x8xf32> to vector<8x8xbf16>
    %cst_351 = arith.constant dense<0.000000e+00> : vector<8x32xf32>
    %1209 = tpu.matmul %1208, %1194, %cst_351 {dimension_numbers = #tpu.dot_dimension_numbers<[1], [0], [0], [1], [0, 0, 1, 1], [], []>} : vector<8x8xbf16>, vector<8x32xbf16>, vector<8x32xf32> -> vector<8x32xf32>
    %1210 = arith.addf %1188, %1209 : vector<8x32xf32>
    %1211 = vector.broadcast %21 : vector<1x32xf32> to vector<8x32xf32>
    %1212 = arith.mulf %1162, %1211 : vector<8x32xf32>
    %1213 = arith.truncf %1212 : vector<8x32xf32> to vector<8x32xbf16>
    %1214 = vector.broadcast %21 : vector<1x32xf32> to vector<8x32xf32>
    %1215 = arith.mulf %1164, %1214 : vector<8x32xf32>
    %1216 = arith.truncf %1215 : vector<8x32xf32> to vector<8x32xbf16>
    %cst_352 = arith.constant dense<0.000000e+00> : vector<8x8xf32>
    %1217 = tpu.matmul %1213, %1165, %cst_352 {dimension_numbers = #tpu.dot_dimension_numbers<[1], [1], [0], [0], [0, 0, 1, 0], [], []>} : vector<8x32xbf16>, vector<8x32xbf16>, vector<8x8xf32> -> vector<8x8xf32>
    %cst_353 = arith.constant 0.353553385 : f32
    %1218 = vector.broadcast %cst_353 : f32 to vector<8x8xf32>
    %1219 = arith.mulf %1217, %1218 : vector<8x8xf32>
    %1220 = arith.addf %1219, %556 : vector<8x8xf32>
    %cst_354 = arith.constant dense<0xFF800000> : vector<8xf32>
    %1221 = vector.multi_reduction <maximumf>, %1220, %cst_354 [1] : vector<8x8xf32> to vector<8xf32>
    %1222 = vector.shape_cast %1221 : vector<8xf32> to vector<8x1xf32>
    %1223 = vector.broadcast %1222 : vector<8x1xf32> to vector<8x8xf32>
    %1224 = arith.subf %1220, %1223 : vector<8x8xf32>
    %1225 = math.exp %1224 : vector<8x8xf32>
    %cst_355 = arith.constant dense<0.000000e+00> : vector<8xf32>
    %1226 = vector.multi_reduction <add>, %1225, %cst_355 [1] : vector<8x8xf32> to vector<8xf32>
    %1227 = vector.shape_cast %1226 : vector<8xf32> to vector<8x1xf32>
    %1228 = vector.broadcast %1227 : vector<8x1xf32> to vector<8x8xf32>
    %1229 = arith.divf %1225, %1228 : vector<8x8xf32>
    %1230 = arith.truncf %1229 : vector<8x8xf32> to vector<8x8xbf16>
    %cst_356 = arith.constant dense<0.000000e+00> : vector<8x32xf32>
    %1231 = tpu.matmul %1230, %1216, %cst_356 {dimension_numbers = #tpu.dot_dimension_numbers<[1], [0], [0], [1], [0, 0, 1, 1], [], []>} : vector<8x8xbf16>, vector<8x32xbf16>, vector<8x32xf32> -> vector<8x32xf32>
    %1232 = arith.addf %1210, %1231 : vector<8x32xf32>
    %1233 = vector.broadcast %28 : vector<1x32xf32> to vector<8x32xf32>
    %1234 = arith.mulf %1162, %1233 : vector<8x32xf32>
    %1235 = arith.truncf %1234 : vector<8x32xf32> to vector<8x32xbf16>
    %1236 = vector.broadcast %28 : vector<1x32xf32> to vector<8x32xf32>
    %1237 = arith.mulf %1164, %1236 : vector<8x32xf32>
    %1238 = arith.truncf %1237 : vector<8x32xf32> to vector<8x32xbf16>
    %cst_357 = arith.constant dense<0.000000e+00> : vector<8x8xf32>
    %1239 = tpu.matmul %1235, %1165, %cst_357 {dimension_numbers = #tpu.dot_dimension_numbers<[1], [1], [0], [0], [0, 0, 1, 0], [], []>} : vector<8x32xbf16>, vector<8x32xbf16>, vector<8x8xf32> -> vector<8x8xf32>
    %cst_358 = arith.constant 0.353553385 : f32
    %1240 = vector.broadcast %cst_358 : f32 to vector<8x8xf32>
    %1241 = arith.mulf %1239, %1240 : vector<8x8xf32>
    %1242 = arith.addf %1241, %556 : vector<8x8xf32>
    %cst_359 = arith.constant dense<0xFF800000> : vector<8xf32>
    %1243 = vector.multi_reduction <maximumf>, %1242, %cst_359 [1] : vector<8x8xf32> to vector<8xf32>
    %1244 = vector.shape_cast %1243 : vector<8xf32> to vector<8x1xf32>
    %1245 = vector.broadcast %1244 : vector<8x1xf32> to vector<8x8xf32>
    %1246 = arith.subf %1242, %1245 : vector<8x8xf32>
    %1247 = math.exp %1246 : vector<8x8xf32>
    %cst_360 = arith.constant dense<0.000000e+00> : vector<8xf32>
    %1248 = vector.multi_reduction <add>, %1247, %cst_360 [1] : vector<8x8xf32> to vector<8xf32>
    %1249 = vector.shape_cast %1248 : vector<8xf32> to vector<8x1xf32>
    %1250 = vector.broadcast %1249 : vector<8x1xf32> to vector<8x8xf32>
    %1251 = arith.divf %1247, %1250 : vector<8x8xf32>
    %1252 = arith.truncf %1251 : vector<8x8xf32> to vector<8x8xbf16>
    %cst_361 = arith.constant dense<0.000000e+00> : vector<8x32xf32>
    %1253 = tpu.matmul %1252, %1238, %cst_361 {dimension_numbers = #tpu.dot_dimension_numbers<[1], [0], [0], [1], [0, 0, 1, 1], [], []>} : vector<8x8xbf16>, vector<8x32xbf16>, vector<8x32xf32> -> vector<8x32xf32>
    %1254 = arith.addf %1232, %1253 : vector<8x32xf32>
    %1255 = arith.truncf %1254 : vector<8x32xf32> to vector<8x32xbf16>
    %cst_362 = arith.constant dense<0.000000e+00> : vector<8x32xf32>
    %1256 = tpu.matmul %1255, %1156, %cst_362 {dimension_numbers = #tpu.dot_dimension_numbers<[1], [0], [0], [1], [0, 0, 1, 1], [], []>} : vector<8x32xbf16>, vector<32x32xbf16>, vector<8x32xf32> -> vector<8x32xf32>
    %1257 = vector.broadcast %1157 : vector<1x32xf32> to vector<8x32xf32>
    %1258 = arith.addf %1256, %1257 : vector<8x32xf32>
    %1259 = arith.addf %1153, %1258 : vector<8x32xf32>
    %c97 = arith.constant 97 : index
    %c0_363 = arith.constant 0 : index
    %1260 = vector.load %arg2[%c97, %c0_363] : memref<108x128xf32, #tpu.memory_space<vmem>>, vector<1x32xf32>
    %c98 = arith.constant 98 : index
    %c0_364 = arith.constant 0 : index
    %1261 = vector.load %arg2[%c98, %c0_364] : memref<108x128xf32, #tpu.memory_space<vmem>>, vector<1x32xf32>
    %cst_365 = arith.constant dense<0.000000e+00> : vector<8xf32>
    %1262 = vector.multi_reduction <add>, %1259, %cst_365 [1] : vector<8x32xf32> to vector<8xf32>
    %1263 = vector.shape_cast %1262 : vector<8xf32> to vector<8x1xf32>
    %cst_366 = arith.constant 3.200000e+01 : f32
    %1264 = vector.broadcast %cst_366 : f32 to vector<8x1xf32>
    %1265 = arith.divf %1263, %1264 : vector<8x1xf32>
    %1266 = vector.broadcast %1265 : vector<8x1xf32> to vector<8x32xf32>
    %1267 = arith.subf %1259, %1266 : vector<8x32xf32>
    %1268 = arith.mulf %1267, %1267 : vector<8x32xf32>
    %cst_367 = arith.constant dense<0.000000e+00> : vector<8xf32>
    %1269 = vector.multi_reduction <add>, %1268, %cst_367 [1] : vector<8x32xf32> to vector<8xf32>
    %1270 = vector.shape_cast %1269 : vector<8xf32> to vector<8x1xf32>
    %cst_368 = arith.constant 3.200000e+01 : f32
    %1271 = vector.broadcast %cst_368 : f32 to vector<8x1xf32>
    %1272 = arith.divf %1270, %1271 : vector<8x1xf32>
    %cst_369 = arith.constant 9.99999974E-6 : f32
    %1273 = vector.broadcast %cst_369 : f32 to vector<8x1xf32>
    %1274 = arith.addf %1272, %1273 : vector<8x1xf32>
    %1275 = math.rsqrt %1274 : vector<8x1xf32>
    %1276 = vector.broadcast %1275 : vector<8x1xf32> to vector<8x32xf32>
    %1277 = arith.mulf %1267, %1276 : vector<8x32xf32>
    %1278 = vector.broadcast %1260 : vector<1x32xf32> to vector<8x32xf32>
    %1279 = arith.mulf %1277, %1278 : vector<8x32xf32>
    %1280 = vector.broadcast %1261 : vector<1x32xf32> to vector<8x32xf32>
    %1281 = arith.addf %1279, %1280 : vector<8x32xf32>
    %c1104 = arith.constant 1104 : index
    %c0_370 = arith.constant 0 : index
    %1282 = vector.load %arg1[%c1104, %c0_370] : memref<1296x128xbf16, #tpu.memory_space<vmem>>, vector<32x32xbf16>
    %c99 = arith.constant 99 : index
    %c0_371 = arith.constant 0 : index
    %1283 = vector.load %arg2[%c99, %c0_371] : memref<108x128xf32, #tpu.memory_space<vmem>>, vector<1x32xf32>
    %c1136 = arith.constant 1136 : index
    %c0_372 = arith.constant 0 : index
    %1284 = vector.load %arg1[%c1136, %c0_372] : memref<1296x128xbf16, #tpu.memory_space<vmem>>, vector<32x64xbf16>
    %c100 = arith.constant 100 : index
    %c0_373 = arith.constant 0 : index
    %1285 = vector.load %arg2[%c100, %c0_373] : memref<108x128xf32, #tpu.memory_space<vmem>>, vector<1x64xf32>
    %c1168 = arith.constant 1168 : index
    %c0_374 = arith.constant 0 : index
    %1286 = vector.load %arg1[%c1168, %c0_374] : memref<1296x128xbf16, #tpu.memory_space<vmem>>, vector<32x32xbf16>
    %c101 = arith.constant 101 : index
    %c0_375 = arith.constant 0 : index
    %1287 = vector.load %arg2[%c101, %c0_375] : memref<108x128xf32, #tpu.memory_space<vmem>>, vector<1x32xf32>
    %1288 = arith.truncf %1281 : vector<8x32xf32> to vector<8x32xbf16>
    %cst_376 = arith.constant dense<0.000000e+00> : vector<8x32xf32>
    %1289 = tpu.matmul %1288, %1282, %cst_376 {dimension_numbers = #tpu.dot_dimension_numbers<[1], [0], [0], [1], [0, 0, 1, 1], [], []>} : vector<8x32xbf16>, vector<32x32xbf16>, vector<8x32xf32> -> vector<8x32xf32>
    %1290 = vector.broadcast %1283 : vector<1x32xf32> to vector<8x32xf32>
    %1291 = arith.addf %1289, %1290 : vector<8x32xf32>
    %1292 = arith.truncf %555 : vector<8x32xf32> to vector<8x32xbf16>
    %cst_377 = arith.constant dense<0.000000e+00> : vector<8x64xf32>
    %1293 = tpu.matmul %1292, %1284, %cst_377 {dimension_numbers = #tpu.dot_dimension_numbers<[1], [0], [0], [1], [0, 0, 1, 1], [], []>} : vector<8x32xbf16>, vector<32x64xbf16>, vector<8x64xf32> -> vector<8x64xf32>
    %1294 = vector.broadcast %1285 : vector<1x64xf32> to vector<8x64xf32>
    %1295 = arith.addf %1293, %1294 : vector<8x64xf32>
    %1296 = vector.extract_strided_slice %1295 {offsets = [0, 0], sizes = [8, 32], strides = [1, 1]} : vector<8x64xf32> to vector<8x32xf32>
    %1297 = vector.extract_strided_slice %1295 {offsets = [0, 32], sizes = [8, 32], strides = [1, 1]} : vector<8x64xf32> to vector<8x32xf32>
    %1298 = arith.truncf %1296 : vector<8x32xf32> to vector<8x32xbf16>
    %cst_378 = arith.constant 0.000000e+00 : f32
    %1299 = vector.broadcast %cst_378 : f32 to vector<8x32xf32>
    %1300 = vector.broadcast %7 : vector<1x32xf32> to vector<8x32xf32>
    %1301 = arith.mulf %1291, %1300 : vector<8x32xf32>
    %1302 = arith.truncf %1301 : vector<8x32xf32> to vector<8x32xbf16>
    %1303 = vector.broadcast %7 : vector<1x32xf32> to vector<8x32xf32>
    %1304 = arith.mulf %1297, %1303 : vector<8x32xf32>
    %1305 = arith.truncf %1304 : vector<8x32xf32> to vector<8x32xbf16>
    %cst_379 = arith.constant dense<0.000000e+00> : vector<8x8xf32>
    %1306 = tpu.matmul %1302, %1298, %cst_379 {dimension_numbers = #tpu.dot_dimension_numbers<[1], [1], [0], [0], [0, 0, 1, 0], [], []>} : vector<8x32xbf16>, vector<8x32xbf16>, vector<8x8xf32> -> vector<8x8xf32>
    %cst_380 = arith.constant 0.353553385 : f32
    %1307 = vector.broadcast %cst_380 : f32 to vector<8x8xf32>
    %1308 = arith.mulf %1306, %1307 : vector<8x8xf32>
    %1309 = arith.addf %1308, %557 : vector<8x8xf32>
    %cst_381 = arith.constant dense<0xFF800000> : vector<8xf32>
    %1310 = vector.multi_reduction <maximumf>, %1309, %cst_381 [1] : vector<8x8xf32> to vector<8xf32>
    %1311 = vector.shape_cast %1310 : vector<8xf32> to vector<8x1xf32>
    %1312 = vector.broadcast %1311 : vector<8x1xf32> to vector<8x8xf32>
    %1313 = arith.subf %1309, %1312 : vector<8x8xf32>
    %1314 = math.exp %1313 : vector<8x8xf32>
    %cst_382 = arith.constant dense<0.000000e+00> : vector<8xf32>
    %1315 = vector.multi_reduction <add>, %1314, %cst_382 [1] : vector<8x8xf32> to vector<8xf32>
    %1316 = vector.shape_cast %1315 : vector<8xf32> to vector<8x1xf32>
    %1317 = vector.broadcast %1316 : vector<8x1xf32> to vector<8x8xf32>
    %1318 = arith.divf %1314, %1317 : vector<8x8xf32>
    %1319 = arith.truncf %1318 : vector<8x8xf32> to vector<8x8xbf16>
    %cst_383 = arith.constant dense<0.000000e+00> : vector<8x32xf32>
    %1320 = tpu.matmul %1319, %1305, %cst_383 {dimension_numbers = #tpu.dot_dimension_numbers<[1], [0], [0], [1], [0, 0, 1, 1], [], []>} : vector<8x8xbf16>, vector<8x32xbf16>, vector<8x32xf32> -> vector<8x32xf32>
    %1321 = arith.addf %1299, %1320 : vector<8x32xf32>
    %1322 = vector.broadcast %14 : vector<1x32xf32> to vector<8x32xf32>
    %1323 = arith.mulf %1291, %1322 : vector<8x32xf32>
    %1324 = arith.truncf %1323 : vector<8x32xf32> to vector<8x32xbf16>
    %1325 = vector.broadcast %14 : vector<1x32xf32> to vector<8x32xf32>
    %1326 = arith.mulf %1297, %1325 : vector<8x32xf32>
    %1327 = arith.truncf %1326 : vector<8x32xf32> to vector<8x32xbf16>
    %cst_384 = arith.constant dense<0.000000e+00> : vector<8x8xf32>
    %1328 = tpu.matmul %1324, %1298, %cst_384 {dimension_numbers = #tpu.dot_dimension_numbers<[1], [1], [0], [0], [0, 0, 1, 0], [], []>} : vector<8x32xbf16>, vector<8x32xbf16>, vector<8x8xf32> -> vector<8x8xf32>
    %cst_385 = arith.constant 0.353553385 : f32
    %1329 = vector.broadcast %cst_385 : f32 to vector<8x8xf32>
    %1330 = arith.mulf %1328, %1329 : vector<8x8xf32>
    %1331 = arith.addf %1330, %557 : vector<8x8xf32>
    %cst_386 = arith.constant dense<0xFF800000> : vector<8xf32>
    %1332 = vector.multi_reduction <maximumf>, %1331, %cst_386 [1] : vector<8x8xf32> to vector<8xf32>
    %1333 = vector.shape_cast %1332 : vector<8xf32> to vector<8x1xf32>
    %1334 = vector.broadcast %1333 : vector<8x1xf32> to vector<8x8xf32>
    %1335 = arith.subf %1331, %1334 : vector<8x8xf32>
    %1336 = math.exp %1335 : vector<8x8xf32>
    %cst_387 = arith.constant dense<0.000000e+00> : vector<8xf32>
    %1337 = vector.multi_reduction <add>, %1336, %cst_387 [1] : vector<8x8xf32> to vector<8xf32>
    %1338 = vector.shape_cast %1337 : vector<8xf32> to vector<8x1xf32>
    %1339 = vector.broadcast %1338 : vector<8x1xf32> to vector<8x8xf32>
    %1340 = arith.divf %1336, %1339 : vector<8x8xf32>
    %1341 = arith.truncf %1340 : vector<8x8xf32> to vector<8x8xbf16>
    %cst_388 = arith.constant dense<0.000000e+00> : vector<8x32xf32>
    %1342 = tpu.matmul %1341, %1327, %cst_388 {dimension_numbers = #tpu.dot_dimension_numbers<[1], [0], [0], [1], [0, 0, 1, 1], [], []>} : vector<8x8xbf16>, vector<8x32xbf16>, vector<8x32xf32> -> vector<8x32xf32>
    %1343 = arith.addf %1321, %1342 : vector<8x32xf32>
    %1344 = vector.broadcast %21 : vector<1x32xf32> to vector<8x32xf32>
    %1345 = arith.mulf %1291, %1344 : vector<8x32xf32>
    %1346 = arith.truncf %1345 : vector<8x32xf32> to vector<8x32xbf16>
    %1347 = vector.broadcast %21 : vector<1x32xf32> to vector<8x32xf32>
    %1348 = arith.mulf %1297, %1347 : vector<8x32xf32>
    %1349 = arith.truncf %1348 : vector<8x32xf32> to vector<8x32xbf16>
    %cst_389 = arith.constant dense<0.000000e+00> : vector<8x8xf32>
    %1350 = tpu.matmul %1346, %1298, %cst_389 {dimension_numbers = #tpu.dot_dimension_numbers<[1], [1], [0], [0], [0, 0, 1, 0], [], []>} : vector<8x32xbf16>, vector<8x32xbf16>, vector<8x8xf32> -> vector<8x8xf32>
    %cst_390 = arith.constant 0.353553385 : f32
    %1351 = vector.broadcast %cst_390 : f32 to vector<8x8xf32>
    %1352 = arith.mulf %1350, %1351 : vector<8x8xf32>
    %1353 = arith.addf %1352, %557 : vector<8x8xf32>
    %cst_391 = arith.constant dense<0xFF800000> : vector<8xf32>
    %1354 = vector.multi_reduction <maximumf>, %1353, %cst_391 [1] : vector<8x8xf32> to vector<8xf32>
    %1355 = vector.shape_cast %1354 : vector<8xf32> to vector<8x1xf32>
    %1356 = vector.broadcast %1355 : vector<8x1xf32> to vector<8x8xf32>
    %1357 = arith.subf %1353, %1356 : vector<8x8xf32>
    %1358 = math.exp %1357 : vector<8x8xf32>
    %cst_392 = arith.constant dense<0.000000e+00> : vector<8xf32>
    %1359 = vector.multi_reduction <add>, %1358, %cst_392 [1] : vector<8x8xf32> to vector<8xf32>
    %1360 = vector.shape_cast %1359 : vector<8xf32> to vector<8x1xf32>
    %1361 = vector.broadcast %1360 : vector<8x1xf32> to vector<8x8xf32>
    %1362 = arith.divf %1358, %1361 : vector<8x8xf32>
    %1363 = arith.truncf %1362 : vector<8x8xf32> to vector<8x8xbf16>
    %cst_393 = arith.constant dense<0.000000e+00> : vector<8x32xf32>
    %1364 = tpu.matmul %1363, %1349, %cst_393 {dimension_numbers = #tpu.dot_dimension_numbers<[1], [0], [0], [1], [0, 0, 1, 1], [], []>} : vector<8x8xbf16>, vector<8x32xbf16>, vector<8x32xf32> -> vector<8x32xf32>
    %1365 = arith.addf %1343, %1364 : vector<8x32xf32>
    %1366 = vector.broadcast %28 : vector<1x32xf32> to vector<8x32xf32>
    %1367 = arith.mulf %1291, %1366 : vector<8x32xf32>
    %1368 = arith.truncf %1367 : vector<8x32xf32> to vector<8x32xbf16>
    %1369 = vector.broadcast %28 : vector<1x32xf32> to vector<8x32xf32>
    %1370 = arith.mulf %1297, %1369 : vector<8x32xf32>
    %1371 = arith.truncf %1370 : vector<8x32xf32> to vector<8x32xbf16>
    %cst_394 = arith.constant dense<0.000000e+00> : vector<8x8xf32>
    %1372 = tpu.matmul %1368, %1298, %cst_394 {dimension_numbers = #tpu.dot_dimension_numbers<[1], [1], [0], [0], [0, 0, 1, 0], [], []>} : vector<8x32xbf16>, vector<8x32xbf16>, vector<8x8xf32> -> vector<8x8xf32>
    %cst_395 = arith.constant 0.353553385 : f32
    %1373 = vector.broadcast %cst_395 : f32 to vector<8x8xf32>
    %1374 = arith.mulf %1372, %1373 : vector<8x8xf32>
    %1375 = arith.addf %1374, %557 : vector<8x8xf32>
    %cst_396 = arith.constant dense<0xFF800000> : vector<8xf32>
    %1376 = vector.multi_reduction <maximumf>, %1375, %cst_396 [1] : vector<8x8xf32> to vector<8xf32>
    %1377 = vector.shape_cast %1376 : vector<8xf32> to vector<8x1xf32>
    %1378 = vector.broadcast %1377 : vector<8x1xf32> to vector<8x8xf32>
    %1379 = arith.subf %1375, %1378 : vector<8x8xf32>
    %1380 = math.exp %1379 : vector<8x8xf32>
    %cst_397 = arith.constant dense<0.000000e+00> : vector<8xf32>
    %1381 = vector.multi_reduction <add>, %1380, %cst_397 [1] : vector<8x8xf32> to vector<8xf32>
    %1382 = vector.shape_cast %1381 : vector<8xf32> to vector<8x1xf32>
    %1383 = vector.broadcast %1382 : vector<8x1xf32> to vector<8x8xf32>
    %1384 = arith.divf %1380, %1383 : vector<8x8xf32>
    %1385 = arith.truncf %1384 : vector<8x8xf32> to vector<8x8xbf16>
    %cst_398 = arith.constant dense<0.000000e+00> : vector<8x32xf32>
    %1386 = tpu.matmul %1385, %1371, %cst_398 {dimension_numbers = #tpu.dot_dimension_numbers<[1], [0], [0], [1], [0, 0, 1, 1], [], []>} : vector<8x8xbf16>, vector<8x32xbf16>, vector<8x32xf32> -> vector<8x32xf32>
    %1387 = arith.addf %1365, %1386 : vector<8x32xf32>
    %1388 = arith.truncf %1387 : vector<8x32xf32> to vector<8x32xbf16>
    %cst_399 = arith.constant dense<0.000000e+00> : vector<8x32xf32>
    %1389 = tpu.matmul %1388, %1286, %cst_399 {dimension_numbers = #tpu.dot_dimension_numbers<[1], [0], [0], [1], [0, 0, 1, 1], [], []>} : vector<8x32xbf16>, vector<32x32xbf16>, vector<8x32xf32> -> vector<8x32xf32>
    %1390 = vector.broadcast %1287 : vector<1x32xf32> to vector<8x32xf32>
    %1391 = arith.addf %1389, %1390 : vector<8x32xf32>
    %1392 = arith.addf %1281, %1391 : vector<8x32xf32>
    %c102 = arith.constant 102 : index
    %c0_400 = arith.constant 0 : index
    %1393 = vector.load %arg2[%c102, %c0_400] : memref<108x128xf32, #tpu.memory_space<vmem>>, vector<1x32xf32>
    %c103 = arith.constant 103 : index
    %c0_401 = arith.constant 0 : index
    %1394 = vector.load %arg2[%c103, %c0_401] : memref<108x128xf32, #tpu.memory_space<vmem>>, vector<1x32xf32>
    %cst_402 = arith.constant dense<0.000000e+00> : vector<8xf32>
    %1395 = vector.multi_reduction <add>, %1392, %cst_402 [1] : vector<8x32xf32> to vector<8xf32>
    %1396 = vector.shape_cast %1395 : vector<8xf32> to vector<8x1xf32>
    %cst_403 = arith.constant 3.200000e+01 : f32
    %1397 = vector.broadcast %cst_403 : f32 to vector<8x1xf32>
    %1398 = arith.divf %1396, %1397 : vector<8x1xf32>
    %1399 = vector.broadcast %1398 : vector<8x1xf32> to vector<8x32xf32>
    %1400 = arith.subf %1392, %1399 : vector<8x32xf32>
    %1401 = arith.mulf %1400, %1400 : vector<8x32xf32>
    %cst_404 = arith.constant dense<0.000000e+00> : vector<8xf32>
    %1402 = vector.multi_reduction <add>, %1401, %cst_404 [1] : vector<8x32xf32> to vector<8xf32>
    %1403 = vector.shape_cast %1402 : vector<8xf32> to vector<8x1xf32>
    %cst_405 = arith.constant 3.200000e+01 : f32
    %1404 = vector.broadcast %cst_405 : f32 to vector<8x1xf32>
    %1405 = arith.divf %1403, %1404 : vector<8x1xf32>
    %cst_406 = arith.constant 9.99999974E-6 : f32
    %1406 = vector.broadcast %cst_406 : f32 to vector<8x1xf32>
    %1407 = arith.addf %1405, %1406 : vector<8x1xf32>
    %1408 = math.rsqrt %1407 : vector<8x1xf32>
    %1409 = vector.broadcast %1408 : vector<8x1xf32> to vector<8x32xf32>
    %1410 = arith.mulf %1400, %1409 : vector<8x32xf32>
    %1411 = vector.broadcast %1393 : vector<1x32xf32> to vector<8x32xf32>
    %1412 = arith.mulf %1410, %1411 : vector<8x32xf32>
    %1413 = vector.broadcast %1394 : vector<1x32xf32> to vector<8x32xf32>
    %1414 = arith.addf %1412, %1413 : vector<8x32xf32>
    %c1200 = arith.constant 1200 : index
    %c0_407 = arith.constant 0 : index
    %1415 = vector.load %arg1[%c1200, %c0_407] : memref<1296x128xbf16, #tpu.memory_space<vmem>>, vector<32x64xbf16>
    %c104 = arith.constant 104 : index
    %c0_408 = arith.constant 0 : index
    %1416 = vector.load %arg2[%c104, %c0_408] : memref<108x128xf32, #tpu.memory_space<vmem>>, vector<1x64xf32>
    %c1232 = arith.constant 1232 : index
    %c0_409 = arith.constant 0 : index
    %1417 = vector.load %arg1[%c1232, %c0_409] : memref<1296x128xbf16, #tpu.memory_space<vmem>>, vector<64x32xbf16>
    %c105 = arith.constant 105 : index
    %c0_410 = arith.constant 0 : index
    %1418 = vector.load %arg2[%c105, %c0_410] : memref<108x128xf32, #tpu.memory_space<vmem>>, vector<1x32xf32>
    %1419 = arith.truncf %1414 : vector<8x32xf32> to vector<8x32xbf16>
    %cst_411 = arith.constant dense<0.000000e+00> : vector<8x64xf32>
    %1420 = tpu.matmul %1419, %1415, %cst_411 {dimension_numbers = #tpu.dot_dimension_numbers<[1], [0], [0], [1], [0, 0, 1, 1], [], []>} : vector<8x32xbf16>, vector<32x64xbf16>, vector<8x64xf32> -> vector<8x64xf32>
    %1421 = vector.broadcast %1416 : vector<1x64xf32> to vector<8x64xf32>
    %1422 = arith.addf %1420, %1421 : vector<8x64xf32>
    %cst_412 = arith.constant 0.000000e+00 : f32
    %1423 = vector.broadcast %cst_412 : f32 to vector<8x64xf32>
    %1424 = arith.maximumf %1422, %1423 : vector<8x64xf32>
    %1425 = arith.truncf %1424 : vector<8x64xf32> to vector<8x64xbf16>
    %cst_413 = arith.constant dense<0.000000e+00> : vector<8x32xf32>
    %1426 = tpu.matmul %1425, %1417, %cst_413 {dimension_numbers = #tpu.dot_dimension_numbers<[1], [0], [0], [1], [0, 0, 1, 1], [], []>} : vector<8x64xbf16>, vector<64x32xbf16>, vector<8x32xf32> -> vector<8x32xf32>
    %1427 = vector.broadcast %1418 : vector<1x32xf32> to vector<8x32xf32>
    %1428 = arith.addf %1426, %1427 : vector<8x32xf32>
    %1429 = arith.addf %1414, %1428 : vector<8x32xf32>
    %c106 = arith.constant 106 : index
    %c0_414 = arith.constant 0 : index
    %1430 = vector.load %arg2[%c106, %c0_414] : memref<108x128xf32, #tpu.memory_space<vmem>>, vector<1x32xf32>
    %c107 = arith.constant 107 : index
    %c0_415 = arith.constant 0 : index
    %1431 = vector.load %arg2[%c107, %c0_415] : memref<108x128xf32, #tpu.memory_space<vmem>>, vector<1x32xf32>
    %cst_416 = arith.constant dense<0.000000e+00> : vector<8xf32>
    %1432 = vector.multi_reduction <add>, %1429, %cst_416 [1] : vector<8x32xf32> to vector<8xf32>
    %1433 = vector.shape_cast %1432 : vector<8xf32> to vector<8x1xf32>
    %cst_417 = arith.constant 3.200000e+01 : f32
    %1434 = vector.broadcast %cst_417 : f32 to vector<8x1xf32>
    %1435 = arith.divf %1433, %1434 : vector<8x1xf32>
    %1436 = vector.broadcast %1435 : vector<8x1xf32> to vector<8x32xf32>
    %1437 = arith.subf %1429, %1436 : vector<8x32xf32>
    %1438 = arith.mulf %1437, %1437 : vector<8x32xf32>
    %cst_418 = arith.constant dense<0.000000e+00> : vector<8xf32>
    %1439 = vector.multi_reduction <add>, %1438, %cst_418 [1] : vector<8x32xf32> to vector<8xf32>
    %1440 = vector.shape_cast %1439 : vector<8xf32> to vector<8x1xf32>
    %cst_419 = arith.constant 3.200000e+01 : f32
    %1441 = vector.broadcast %cst_419 : f32 to vector<8x1xf32>
    %1442 = arith.divf %1440, %1441 : vector<8x1xf32>
    %cst_420 = arith.constant 9.99999974E-6 : f32
    %1443 = vector.broadcast %cst_420 : f32 to vector<8x1xf32>
    %1444 = arith.addf %1442, %1443 : vector<8x1xf32>
    %1445 = math.rsqrt %1444 : vector<8x1xf32>
    %1446 = vector.broadcast %1445 : vector<8x1xf32> to vector<8x32xf32>
    %1447 = arith.mulf %1437, %1446 : vector<8x32xf32>
    %1448 = vector.broadcast %1430 : vector<1x32xf32> to vector<8x32xf32>
    %1449 = arith.mulf %1447, %1448 : vector<8x32xf32>
    %1450 = vector.broadcast %1431 : vector<1x32xf32> to vector<8x32xf32>
    %1451 = arith.addf %1449, %1450 : vector<8x32xf32>
    %c43 = arith.constant 43 : index
    %c0_421 = arith.constant 0 : index
    %1452 = vector.load %arg2[%c43, %c0_421] : memref<108x128xf32, #tpu.memory_space<vmem>>, vector<1x32xf32>
    %c44 = arith.constant 44 : index
    %c0_422 = arith.constant 0 : index
    %1453 = vector.load %arg2[%c44, %c0_422] : memref<108x128xf32, #tpu.memory_space<vmem>>, vector<1x32xf32>
    %cst_423 = arith.constant dense<0.000000e+00> : vector<8xf32>
    %1454 = vector.multi_reduction <add>, %1451, %cst_423 [1] : vector<8x32xf32> to vector<8xf32>
    %1455 = vector.shape_cast %1454 : vector<8xf32> to vector<8x1xf32>
    %cst_424 = arith.constant 3.200000e+01 : f32
    %1456 = vector.broadcast %cst_424 : f32 to vector<8x1xf32>
    %1457 = arith.divf %1455, %1456 : vector<8x1xf32>
    %1458 = vector.broadcast %1457 : vector<8x1xf32> to vector<8x32xf32>
    %1459 = arith.subf %1451, %1458 : vector<8x32xf32>
    %1460 = arith.mulf %1459, %1459 : vector<8x32xf32>
    %cst_425 = arith.constant dense<0.000000e+00> : vector<8xf32>
    %1461 = vector.multi_reduction <add>, %1460, %cst_425 [1] : vector<8x32xf32> to vector<8xf32>
    %1462 = vector.shape_cast %1461 : vector<8xf32> to vector<8x1xf32>
    %cst_426 = arith.constant 3.200000e+01 : f32
    %1463 = vector.broadcast %cst_426 : f32 to vector<8x1xf32>
    %1464 = arith.divf %1462, %1463 : vector<8x1xf32>
    %cst_427 = arith.constant 9.99999974E-6 : f32
    %1465 = vector.broadcast %cst_427 : f32 to vector<8x1xf32>
    %1466 = arith.addf %1464, %1465 : vector<8x1xf32>
    %1467 = math.rsqrt %1466 : vector<8x1xf32>
    %1468 = vector.broadcast %1467 : vector<8x1xf32> to vector<8x32xf32>
    %1469 = arith.mulf %1459, %1468 : vector<8x32xf32>
    %1470 = vector.broadcast %1452 : vector<1x32xf32> to vector<8x32xf32>
    %1471 = arith.mulf %1469, %1470 : vector<8x32xf32>
    %1472 = vector.broadcast %1453 : vector<1x32xf32> to vector<8x32xf32>
    %1473 = arith.addf %1471, %1472 : vector<8x32xf32>
    %1474 = arith.truncf %1473 : vector<8x32xf32> to vector<8x32xbf16>
    %c16_428 = arith.constant 16 : index
    %c0_429 = arith.constant 0 : index
    %1475 = vector.load %arg1[%c16_428, %c0_429] : memref<1296x128xbf16, #tpu.memory_space<vmem>>, vector<32x128xbf16>
    %cst_430 = arith.constant dense<0.000000e+00> : vector<8x128xf32>
    %1476 = tpu.matmul %1474, %1475, %cst_430 {dimension_numbers = #tpu.dot_dimension_numbers<[1], [0], [0], [1], [0, 0, 1, 1], [], []>} : vector<8x32xbf16>, vector<32x128xbf16>, vector<8x128xf32> -> vector<8x128xf32>
    %c40 = arith.constant 40 : index
    %c0_431 = arith.constant 0 : index
    %1477 = vector.load %arg2[%c40, %c0_431] : memref<108x128xf32, #tpu.memory_space<vmem>>, vector<1x128xf32>
    %1478 = vector.broadcast %1477 : vector<1x128xf32> to vector<8x128xf32>
    %1479 = arith.addf %1476, %1478 : vector<8x128xf32>
    %c0_432 = arith.constant 0 : index
    %c0_433 = arith.constant 0 : index
    %1480 = vector.load %arg3[%c0_432, %c0_433] : memref<8x128xf32, #tpu.memory_space<vmem>>, vector<8x128xf32>
    tpu.vector_store %arg3[%c0_432, %c0_433], %1479 {strides = array<i32>} : memref<8x128xf32, #tpu.memory_space<vmem>>, vector<8x128xf32>,
    return
  }
}

</mosaic_0001>

<llo_original>
// kernel: tpu_custom_call.1
$region0: #{tpu_custom_call.1}
  #allocation0 [shape = 'u32[]', space=smem, size = 0x4, offset = 0x4, fixed_abs, tag = 'smem constant byte address 0x4 - core index']
  #allocation1 [shape = 'u32[144,128]{1,0:T(1,128)}', space=vmem, size = 0x12000, scoped, tag = 'internal scratch']
  %s0 = inlined_call_operand.vmem [shape: f32[16,4], index: 0, kind: input, shape index: {}]
  %s1 = inlined_call_operand.hbm [shape: bf16[1296,128], index: 1, kind: input, shape index: {}]
  %s2 = inlined_call_operand.hbm [shape: f32[108,128], index: 2, kind: input, shape index: {}]
  %s3 = inlined_call_operand.hbm [shape: f32[8,128], index: 3, kind: output, shape index: {0}]
  %s4 = inlined_call_operand.hbm [shape: f32[16,128], index: 4, kind: output, shape index: {1}]
  %5 = xla_tuple %s3, %s4
  %s6 = sld [smem:[#allocation0]]
  $region38: #{tpu_custom_call.1} parent=0
    _
  %s8 = ssub.s32 1, %s6
  %s9 = scalar_select 0, %s8, %s6
  $region1: #{tpu_custom_call.1} parent=0
    #allocation2 [shape = 'u8[331776]{0}', space=vmem, size = 0x51000, scoped, tag = 'input window, operand 1, single buffered']
    #allocation3 [shape = 's32[1]{0}', space=sflag, size = 0x4, scoped, tag = 'scoped memory for tpu_custom_call.1']
    #allocation4 [shape = 's32[1]{0}', space=sflag, size = 0x4, scoped, tag = 'scoped memory for tpu_custom_call.1']
    #allocation5 [shape = 'u8[57344]{0}', space=vmem, size = 0xe000, scoped, tag = 'input window, operand 2, single buffered']
    #allocation6 [shape = 's32[1]{0}', space=sflag, size = 0x4, scoped, tag = 'scoped memory for tpu_custom_call.1']
    #allocation7 [shape = 'u8[4096]{0}', space=vmem, size = 0x1000, scoped, tag = 'output window, operand 0, single buffered']
    #allocation8 [shape = 'u8[8192]{0}', space=vmem, size = 0x2000, scoped, tag = 'output window, operand 1, single buffered']
    #allocation9 [shape = 's32[1]{0}', space=sflag, size = 0x4, scoped, tag = 'scoped memory for tpu_custom_call.1']
    %10 = vsyncpa [#allocation3], 0
    %11 = vsyncpa [#allocation6], 0
    %12 = vsyncpa [#allocation4], 0
    %13 = vsyncpa [#allocation9], 0
    // Predicated region
    $region2: #{tpu_custom_call.1} parent=1 // pred_check
      _
    $region3: #{tpu_custom_call.1} parent=1 // pred_check_branch
      %15 = sbr.rel (0) target = $region5
    $region4: #{tpu_custom_call.1} parent=1 // pred_region
      _
    $region5: #{tpu_custom_call.1} parent=1 // pred_fallthru
      _
    // Predicated region
    $region6: #{tpu_custom_call.1} parent=1 // pred_check
      _
    $region7: #{tpu_custom_call.1} parent=1 // pred_check_branch
      %17 = sbr.rel (0) target = $region9
    $region8: #{tpu_custom_call.1} parent=1 // pred_region
      %s19 = ssub.s32 10368, 10368
      %20 = vsyncadd [#allocation3], %s19
      %s21 = sshll.u32 [#allocation2], 4
      %s22 = int_to_ptr.vmem [resolvable:$true] %s21
      %27 = dma.hbm_to_vmem [thread:$0]  %s1, 10368, %s22, [#allocation3], 64, 64, 4
    $region9: #{tpu_custom_call.1} parent=1 // pred_fallthru
      _
    // Predicated region
    $region10: #{tpu_custom_call.1} parent=1 // pred_check
      _
    $region11: #{tpu_custom_call.1} parent=1 // pred_check_branch
      %29 = sbr.rel (0) target = $region13
    $region12: #{tpu_custom_call.1} parent=1 // pred_region
      %s31 = ssub.s32 1792, 1792
      %32 = vsyncadd [#allocation6], %s31
      %s33 = sshll.u32 [#allocation5], 4
      %s34 = int_to_ptr.vmem [resolvable:$true] %s33
      %39 = dma.hbm_to_vmem [thread:$0]  %s2, 1792, %s34, [#allocation6], 128, 128, 8
    $region13: #{tpu_custom_call.1} parent=1 // pred_fallthru
      _
    // Predicated region
    $region14: #{tpu_custom_call.1} parent=1 // pred_check
      _
    $region15: #{tpu_custom_call.1} parent=1 // pred_check_branch
      %41 = sbr.rel (0) target = $region17
    $region16: #{tpu_custom_call.1} parent=1 // pred_region
      %42 = dma.done [#allocation3], 10368
    $region17: #{tpu_custom_call.1} parent=1 // pred_fallthru
      _
    // Predicated region
    $region18: #{tpu_custom_call.1} parent=1 // pred_check
      _
    $region19: #{tpu_custom_call.1} parent=1 // pred_check_branch
      %44 = sbr.rel (0) target = $region21
    $region20: #{tpu_custom_call.1} parent=1 // pred_region
      %45 = dma.done [#allocation6], 1792
    $region21: #{tpu_custom_call.1} parent=1 // pred_fallthru
      _
    %v47 = vlaneseq
    %v48 = vand.u32 %v47, 127
    %vm49 = vcmp.ge.s32.totalorder %v48, 0
    %vm50 = vcmp.lt.s32.totalorder %v48, 8
    %vm51 = vmand %vm49, %vm50
    %v52 = vsel %vm51, 1, 0
    %v53 = vcvt.s32.f32 %v52
    %vm54 = vcmp.ge.s32.totalorder %v48, 8
    %vm55 = vcmp.lt.s32.totalorder %v48, 16
    %vm56 = vmand %vm54, %vm55
    %v57 = vsel %vm56, 1, 0
    %v58 = vcvt.s32.f32 %v57
    %vm59 = vcmp.ge.s32.totalorder %v48, 16
    %vm60 = vcmp.lt.s32.totalorder %v48, 24
    %vm61 = vmand %vm59, %vm60
    %v62 = vsel %vm61, 1, 0
    %v63 = vcvt.s32.f32 %v62
    %vm64 = vcmp.ge.s32.totalorder %v48, 24
    %vm65 = vcmp.lt.s32.totalorder %v48, 32
    %vm66 = vmand %vm64, %vm65
    %v67 = vsel %vm66, 1, 0
    %v68 = vcvt.s32.f32 %v67
    %v69 = vld [vmem:[%s0] sm:$0xff]
    %v70 = vld [vmem:[%s0 + $0x8] sm:$0xff]
    %v71 = vpack.c.bf16 %v70, %v69
    %v72 = vld [vmem:[#allocation2] sm:$0x3]
    %v73 = vld [vmem:[#allocation5] sm:$0xff]
    %v74 = vld [vmem:[#allocation5 + $0x8] sm:$0xff]
    %vm75 = vcmask 31744
    %v77 = vsel %vm75, %v71, 0
    %vm79 = vcmask 1041408
    %v81 = vsel %vm79, %v72, 0
    %83 = vmatprep.subr.bf16.mxu0 0
    %84 = vmatpush1.bf16.msra.mxu0 %v81
    %85 = vmatprep.subr.bf16.mxu0 0
    %86 = vmatpush1.bf16.msra.mxu0 0
    %87 = vmatprep.subr.bf16.mxu0 0
    %88 = vmatpush1.bf16.msra.mxu0 0
    %89 = vmatprep.subr.bf16.mxu0 0
    %90 = vmatpush1.bf16.msra.mxu0 0
    %91 = vmatprep.subr.bf16.mxu0 0
    %92 = vmatpush1.bf16.msra.mxu0 0
    %93 = vmatprep.subr.bf16.mxu0 0
    %94 = vmatpush1.bf16.msra.mxu0 0
    %95 = vmatprep.subr.bf16.mxu0 0
    %96 = vmatpush1.bf16.msra.mxu0 0
    %97 = vmatprep.subr.bf16.mxu0 0
    %98 = vmatpush1.bf16.msra.mxu0 0
    %99 = vmatprep.subr.bf16.mxu0 0
    %100 = vmatpush1.bf16.msra.mxu0 0
    %101 = vmatprep.subr.bf16.mxu0 0
    %102 = vmatpush1.bf16.msra.mxu0 0
    %103 = vmatprep.subr.bf16.mxu0 0
    %104 = vmatpush1.bf16.msra.mxu0 0
    %105 = vmatprep.subr.bf16.mxu0 0
    %106 = vmatpush1.bf16.msra.mxu0 0
    %107 = vmatprep.subr.bf16.mxu0 0
    %108 = vmatpush1.bf16.msra.mxu0 0
    %109 = vmatprep.subr.bf16.mxu0 0
    %110 = vmatpush1.bf16.msra.mxu0 0
    %111 = vmatprep.subr.bf16.mxu0 0
    %112 = vmatpush1.bf16.msra.mxu0 0
    %113 = vmatprep.subr.bf16.mxu0 0
    %114 = vmatpush1.bf16.msra.mxu0 0
    %115 = vmatprep.mubr.bf16.mxu0 0
    %116 = vmatmul.mubr.bf16.gmra.mrb[0].mxu0 %v77
    %v117 = vpop.f32.mrb[0].mxu0
    %v118 = vadd.f32 %v73, %v117
    %v119 = vpop.f32.mrb[0].mxu0
    %v120 = vpop.f32.mrb[0].mxu0
    %v121 = vadd.f32 %v74, %v120
    %v122 = vpop.f32.mrb[0].mxu0
    %123 = vdwg.mxu0
    %124 = vst [vmem:[#allocation8] sm:$0xff] %v118
    %125 = vst [vmem:[#allocation8 + $0x8] sm:$0xff] %v121
    %v126 = vld [vmem:[#allocation5 + $0x10] sm:$0xff]
    %v127 = vld [vmem:[#allocation2 + $0x18] sm:$0xf]
    %v128 = vld [vmem:[#allocation2 + $0x1c] sm:$0xf]
    %v129 = vld [vmem:[#allocation2 + $0x20] sm:$0xf]
    %v130 = vld [vmem:[#allocation2 + $0x24] sm:$0xf]
    %v131 = vld [vmem:[#allocation5 + $0x2d] sm:$0x1]
    %v132 = vld [vmem:[#allocation2 + $0x28] sm:$0xf]
    %v133 = vld [vmem:[#allocation2 + $0x2c] sm:$0xf]
    %v134 = vld [vmem:[#allocation2 + $0x30] sm:$0xf]
    %v135 = vld [vmem:[#allocation2 + $0x34] sm:$0xf]
    %v136 = vld [vmem:[#allocation5 + $0x2e] sm:$0x1]
    %v137 = vpack.c.bf16 %v118, %v118
    %v138 = vlaneseq
    %v139 = vshrl.u32 %v138, 7
    %v140 = vsub.s32 0, %v139
    %v141 = vrot.slane %v131, %v140
    %v146 = vunpack.c.l.b16 %v127
    %v147 = vunpack.c.l.b16 %v128
    %v148 = vunpack.c.l.b16 %v129
    %v149 = vunpack.c.l.b16 %v130
    %v150 = vpack.c.b16 %v147, %v146
    %v151 = vpack.c.b16 %v149, %v148
    %vm154 = vcmask 261120
    %v156 = vsel %vm154, %v137, 0
    %158 = vmatprep.subr.bf16.mxu0 0
    %159 = vmatpush1.bf16.msra.mxu0 %v150
    %160 = vmatprep.subr.bf16.mxu0 0
    %161 = vmatpush1.bf16.msra.mxu0 %v151
    %162 = vmatprep.subr.bf16.mxu0 0
    %163 = vmatpush1.bf16.msra.mxu0 0
    %164 = vmatprep.subr.bf16.mxu0 0
    %165 = vmatpush1.bf16.msra.mxu0 0
    %166 = vmatprep.subr.bf16.mxu0 0
    %167 = vmatpush1.bf16.msra.mxu0 0
    %168 = vmatprep.subr.bf16.mxu0 0
    %169 = vmatpush1.bf16.msra.mxu0 0
    %170 = vmatprep.subr.bf16.mxu0 0
    %171 = vmatpush1.bf16.msra.mxu0 0
    %172 = vmatprep.subr.bf16.mxu0 0
    %173 = vmatpush1.bf16.msra.mxu0 0
    %174 = vmatprep.subr.bf16.mxu0 0
    %175 = vmatpush1.bf16.msra.mxu0 0
    %176 = vmatprep.subr.bf16.mxu0 0
    %177 = vmatpush1.bf16.msra.mxu0 0
    %178 = vmatprep.subr.bf16.mxu0 0
    %179 = vmatpush1.bf16.msra.mxu0 0
    %180 = vmatprep.subr.bf16.mxu0 0
    %181 = vmatpush1.bf16.msra.mxu0 0
    %182 = vmatprep.subr.bf16.mxu0 0
    %183 = vmatpush1.bf16.msra.mxu0 0
    %184 = vmatprep.subr.bf16.mxu0 0
    %185 = vmatpush1.bf16.msra.mxu0 0
    %186 = vmatprep.subr.bf16.mxu0 0
    %187 = vmatpush1.bf16.msra.mxu0 0
    %188 = vmatprep.subr.bf16.mxu0 0
    %189 = vmatpush1.bf16.msra.mxu0 0
    %190 = vmatprep.mubr.bf16.mxu0 0
    %191 = vmatmul.mubr.bf16.gmra.mrb[0].mxu0 %v156
    %v192 = vpop.f32.mrb[0].mxu0
    %v193 = vadd.f32 %v141, %v192
    %v194 = vpop.f32.mrb[0].mxu0
    %v195 = vpop.f32.mrb[0].mxu0
    %v196 = vpop.f32.mrb[0].mxu0
    %197 = vdwg.mxu0
    %v198 = vpack.c.bf16 %v193, %v193
    %v199 = vmul.f32 %v193, %v53
    %v200 = vpack.c.bf16 %v199, %v199
    %202 = vrot.lane.b32.xlu0 %v53, 64
    %v203 = vpop.permute.xlu0 %202
    %v205 = vmul.f32 %v193, %v203
    %v206 = vpack.c.bf16 %v205, %v205
    %208 = vrot.lane.b32.xlu0 %v198, 96
    %v209 = vpop.permute.xlu0 %208
    %v211 = vsel %vm154, %v200, 0
    %v214 = vsel %vm154, %v209, 0
    %216 = vmatprep.subr.bf16.mxu0 0
    %217 = vmatpush1.bf16.xpose.msra.mxu0 %v214
    %218 = vmatprep.subr.bf16.mxu0 0
    %219 = vmatpush1.bf16.xpose.msra.mxu0 0
    %220 = vmatprep.subr.bf16.mxu0 0
    %221 = vmatpush1.bf16.xpose.msra.mxu0 0
    %222 = vmatprep.subr.bf16.mxu0 0
    %223 = vmatpush1.bf16.xpose.msra.mxu0 0
    %224 = vmatprep.subr.bf16.mxu0 0
    %225 = vmatpush1.bf16.xpose.msra.mxu0 0
    %226 = vmatprep.subr.bf16.mxu0 0
    %227 = vmatpush1.bf16.xpose.msra.mxu0 0
    %228 = vmatprep.subr.bf16.mxu0 0
    %229 = vmatpush1.bf16.xpose.msra.mxu0 0
    %230 = vmatprep.subr.bf16.mxu0 0
    %231 = vmatpush1.bf16.xpose.msra.mxu0 0
    %232 = vmatprep.subr.bf16.mxu0 0
    %233 = vmatpush1.bf16.xpose.msra.mxu0 0
    %234 = vmatprep.subr.bf16.mxu0 0
    %235 = vmatpush1.bf16.xpose.msra.mxu0 0
    %236 = vmatprep.subr.bf16.mxu0 0
    %237 = vmatpush1.bf16.xpose.msra.mxu0 0
    %238 = vmatprep.subr.bf16.mxu0 0
    %239 = vmatpush1.bf16.xpose.msra.mxu0 0
    %240 = vmatprep.subr.bf16.mxu0 0
    %241 = vmatpush1.bf16.xpose.msra.mxu0 0
    %242 = vmatprep.subr.bf16.mxu0 0
    %243 = vmatpush1.bf16.xpose.msra.mxu0 0
    %244 = vmatprep.subr.bf16.mxu0 0
    %245 = vmatpush1.bf16.xpose.msra.mxu0 0
    %246 = vmatprep.subr.bf16.mxu0 0
    %247 = vmatpush1.bf16.xpose.msra.mxu0 0
    %248 = vmatprep.mubr.bf16.mxu0 0
    %249 = vmatmul.mubr.bf16.gmra.mrb[0].mxu0 %v211
    %v250 = vpop.f32.mrb[0].mxu0
    %v251 = vadd.f32 0.0, %v250
    %v252 = vpop.f32.mrb[0].mxu0
    %v253 = vpop.f32.mrb[0].mxu0
    %v254 = vpop.f32.mrb[0].mxu0
    %255 = vdwg.mxu0
    %v256 = vmul.f32 %v251, 0.35355338
    %v257 = vadd.f32 %v256, %v126
    %vm258 = vcmask 64512
    %v259 = vsel %vm258, %v257, -inf
    %260 = vmax.xlane.f32.xlu0 %v259
    %v261 = vpop.xlane.xlu0 %260
    %v262 = vsub.f32 %v257, %v261
    %v263 = vmul.f32 %v262, 1.442695
    %v264 = vpow.pop %v263
    %v265 = vsel %vm258, %v264, 0.0
    %266 = vadd.xlane.f32.xlu0 %v265
    %v267 = vpop.xlane.xlu0 %266
    %v268 = vrcp.pop %v267
    %v269 = vmul.f32 %v264, %v268
    %v270 = vpack.c.bf16 %v269, %v269
    %v271 = vmul.f32 %v193, %v58
    %v272 = vpack.c.bf16 %v271, %v271
    %274 = vrot.lane.b32.xlu0 %v58, 64
    %v275 = vpop.permute.xlu0 %274
    %v277 = vmul.f32 %v193, %v275
    %v278 = vpack.c.bf16 %v277, %v277
    %v280 = vsel %vm154, %v272, 0
    %282 = vmatprep.subr.bf16.mxu0 0
    %283 = vmatpush1.bf16.xpose.msra.mxu0 %v214
    %284 = vmatprep.subr.bf16.mxu0 0
    %285 = vmatpush1.bf16.xpose.msra.mxu0 0
    %286 = vmatprep.subr.bf16.mxu0 0
    %287 = vmatpush1.bf16.xpose.msra.mxu0 0
    %288 = vmatprep.subr.bf16.mxu0 0
    %289 = vmatpush1.bf16.xpose.msra.mxu0 0
    %290 = vmatprep.subr.bf16.mxu0 0
    %291 = vmatpush1.bf16.xpose.msra.mxu0 0
    %292 = vmatprep.subr.bf16.mxu0 0
    %293 = vmatpush1.bf16.xpose.msra.mxu0 0
    %294 = vmatprep.subr.bf16.mxu0 0
    %295 = vmatpush1.bf16.xpose.msra.mxu0 0
    %296 = vmatprep.subr.bf16.mxu0 0
    %297 = vmatpush1.bf16.xpose.msra.mxu0 0
    %298 = vmatprep.subr.bf16.mxu0 0
    %299 = vmatpush1.bf16.xpose.msra.mxu0 0
    %300 = vmatprep.subr.bf16.mxu0 0
    %301 = vmatpush1.bf16.xpose.msra.mxu0 0
    %302 = vmatprep.subr.bf16.mxu0 0
    %303 = vmatpush1.bf16.xpose.msra.mxu0 0
    %304 = vmatprep.subr.bf16.mxu0 0
    %305 = vmatpush1.bf16.xpose.msra.mxu0 0
    %306 = vmatprep.subr.bf16.mxu0 0
    %307 = vmatpush1.bf16.xpose.msra.mxu0 0
    %308 = vmatprep.subr.bf16.mxu0 0
    %309 = vmatpush1.bf16.xpose.msra.mxu0 0
    %310 = vmatprep.subr.bf16.mxu0 0
    %311 = vmatpush1.bf16.xpose.msra.mxu0 0
    %312 = vmatprep.subr.bf16.mxu0 0
    %313 = vmatpush1.bf16.xpose.msra.mxu0 0
    %314 = vmatprep.mubr.bf16.mxu0 0
    %315 = vmatmul.mubr.bf16.gmra.mrb[0].mxu0 %v280
    %v316 = vpop.f32.mrb[0].mxu0
    %v317 = vadd.f32 0.0, %v316
    %v318 = vpop.f32.mrb[0].mxu0
    %v319 = vpop.f32.mrb[0].mxu0
    %v320 = vpop.f32.mrb[0].mxu0
    %321 = vdwg.mxu0
    %v322 = vmul.f32 %v317, 0.35355338
    %v323 = vadd.f32 %v322, %v126
    %v324 = vsel %vm258, %v323, -inf
    %325 = vmax.xlane.f32.xlu0 %v324
    %v326 = vpop.xlane.xlu0 %325
    %v327 = vsub.f32 %v323, %v326
    %v328 = vmul.f32 %v327, 1.442695
    %v329 = vpow.pop %v328
    %v330 = vsel %vm258, %v329, 0.0
    %331 = vadd.xlane.f32.xlu0 %v330
    %v332 = vpop.xlane.xlu0 %331
    %v333 = vrcp.pop %v332
    %v334 = vmul.f32 %v329, %v333
    %v335 = vpack.c.bf16 %v334, %v334
    %337 = vrot.lane.b32.xlu0 %v278, 64
    %v338 = vpop.permute.xlu0 %337
    %v340 = vsel %vm258, %v335, 0
    %vm342 = vcmask 1043456
    %v344 = vsel %vm342, %v338, 0
    %346 = vmatprep.subr.bf16.mxu0 0
    %347 = vmatpush1.bf16.msra.mxu0 %v344
    %348 = vmatprep.subr.bf16.mxu0 0
    %349 = vmatpush1.bf16.msra.mxu0 0
    %350 = vmatprep.subr.bf16.mxu0 0
    %351 = vmatpush1.bf16.msra.mxu0 0
    %352 = vmatprep.subr.bf16.mxu0 0
    %353 = vmatpush1.bf16.msra.mxu0 0
    %354 = vmatprep.subr.bf16.mxu0 0
    %355 = vmatpush1.bf16.msra.mxu0 0
    %356 = vmatprep.subr.bf16.mxu0 0
    %357 = vmatpush1.bf16.msra.mxu0 0
    %358 = vmatprep.subr.bf16.mxu0 0
    %359 = vmatpush1.bf16.msra.mxu0 0
    %360 = vmatprep.subr.bf16.mxu0 0
    %361 = vmatpush1.bf16.msra.mxu0 0
    %362 = vmatprep.subr.bf16.mxu0 0
    %363 = vmatpush1.bf16.msra.mxu0 0
    %364 = vmatprep.subr.bf16.mxu0 0
    %365 = vmatpush1.bf16.msra.mxu0 0
    %366 = vmatprep.subr.bf16.mxu0 0
    %367 = vmatpush1.bf16.msra.mxu0 0
    %368 = vmatprep.subr.bf16.mxu0 0
    %369 = vmatpush1.bf16.msra.mxu0 0
    %370 = vmatprep.subr.bf16.mxu0 0
    %371 = vmatpush1.bf16.msra.mxu0 0
    %372 = vmatprep.subr.bf16.mxu0 0
    %373 = vmatpush1.bf16.msra.mxu0 0
    %374 = vmatprep.subr.bf16.mxu0 0
    %375 = vmatpush1.bf16.msra.mxu0 0
    %376 = vmatprep.subr.bf16.mxu0 0
    %377 = vmatpush1.bf16.msra.mxu0 0
    %378 = vmatprep.mubr.bf16.mxu0 0
    %379 = vmatmul.mubr.bf16.gmra.mrb[0].mxu0 %v340
    %v380 = vpop.f32.mrb[0].mxu0
    %v381 = vadd.f32 0.0, %v380
    %v382 = vpop.f32.mrb[0].mxu0
    %v383 = vpop.f32.mrb[0].mxu0
    %v384 = vpop.f32.mrb[0].mxu0
    %385 = vdwg.mxu0
    %387 = vrot.lane.b32.xlu0 %v206, 64
    %v388 = vpop.permute.xlu0 %387
    %v390 = vsel %vm258, %v270, 0
    %v393 = vsel %vm342, %v388, 0
    %395 = vmatprep.subr.bf16.mxu0 0
    %396 = vmatpush1.bf16.msra.mxu0 %v393
    %397 = vmatprep.subr.bf16.mxu0 0
    %398 = vmatpush1.bf16.msra.mxu0 0
    %399 = vmatprep.subr.bf16.mxu0 0
    %400 = vmatpush1.bf16.msra.mxu0 0
    %401 = vmatprep.subr.bf16.mxu0 0
    %402 = vmatpush1.bf16.msra.mxu0 0
    %403 = vmatprep.subr.bf16.mxu0 0
    %404 = vmatpush1.bf16.msra.mxu0 0
    %405 = vmatprep.subr.bf16.mxu0 0
    %406 = vmatpush1.bf16.msra.mxu0 0
    %407 = vmatprep.subr.bf16.mxu0 0
    %408 = vmatpush1.bf16.msra.mxu0 0
    %409 = vmatprep.subr.bf16.mxu0 0
    %410 = vmatpush1.bf16.msra.mxu0 0
    %411 = vmatprep.subr.bf16.mxu0 0
    %412 = vmatpush1.bf16.msra.mxu0 0
    %413 = vmatprep.subr.bf16.mxu0 0
    %414 = vmatpush1.bf16.msra.mxu0 0
    %415 = vmatprep.subr.bf16.mxu0 0
    %416 = vmatpush1.bf16.msra.mxu0 0
    %417 = vmatprep.subr.bf16.mxu0 0
    %418 = vmatpush1.bf16.msra.mxu0 0
    %419 = vmatprep.subr.bf16.mxu0 0
    %420 = vmatpush1.bf16.msra.mxu0 0
    %421 = vmatprep.subr.bf16.mxu0 0
    %422 = vmatpush1.bf16.msra.mxu0 0
    %423 = vmatprep.subr.bf16.mxu0 0
    %424 = vmatpush1.bf16.msra.mxu0 0
    %425 = vmatprep.subr.bf16.mxu0 0
    %426 = vmatpush1.bf16.msra.mxu0 0
    %427 = vmatprep.mubr.bf16.mxu0 0
    %428 = vmatmul.mubr.bf16.gmra.mrb[0].mxu0 %v390
    %v429 = vpop.f32.mrb[0].mxu0
    %v430 = vadd.f32 %v381, %v429
    %v431 = vpop.f32.mrb[0].mxu0
    %v432 = vpop.f32.mrb[0].mxu0
    %v433 = vpop.f32.mrb[0].mxu0
    %434 = vdwg.mxu0
    %v435 = vmul.f32 %v193, %v63
    %v436 = vpack.c.bf16 %v435, %v435
    %438 = vrot.lane.b32.xlu0 %v63, 64
    %v439 = vpop.permute.xlu0 %438
    %v441 = vmul.f32 %v193, %v439
    %v442 = vpack.c.bf16 %v441, %v441
    %v444 = vsel %vm154, %v436, 0
    %446 = vmatprep.subr.bf16.mxu0 0
    %447 = vmatpush1.bf16.xpose.msra.mxu0 %v214
    %448 = vmatprep.subr.bf16.mxu0 0
    %449 = vmatpush1.bf16.xpose.msra.mxu0 0
    %450 = vmatprep.subr.bf16.mxu0 0
    %451 = vmatpush1.bf16.xpose.msra.mxu0 0
    %452 = vmatprep.subr.bf16.mxu0 0
    %453 = vmatpush1.bf16.xpose.msra.mxu0 0
    %454 = vmatprep.subr.bf16.mxu0 0
    %455 = vmatpush1.bf16.xpose.msra.mxu0 0
    %456 = vmatprep.subr.bf16.mxu0 0
    %457 = vmatpush1.bf16.xpose.msra.mxu0 0
    %458 = vmatprep.subr.bf16.mxu0 0
    %459 = vmatpush1.bf16.xpose.msra.mxu0 0
    %460 = vmatprep.subr.bf16.mxu0 0
    %461 = vmatpush1.bf16.xpose.msra.mxu0 0
    %462 = vmatprep.subr.bf16.mxu0 0
    %463 = vmatpush1.bf16.xpose.msra.mxu0 0
    %464 = vmatprep.subr.bf16.mxu0 0
    %465 = vmatpush1.bf16.xpose.msra.mxu0 0
    %466 = vmatprep.subr.bf16.mxu0 0
    %467 = vmatpush1.bf16.xpose.msra.mxu0 0
    %468 = vmatprep.subr.bf16.mxu0 0
    %469 = vmatpush1.bf16.xpose.msra.mxu0 0
    %470 = vmatprep.subr.bf16.mxu0 0
    %471 = vmatpush1.bf16.xpose.msra.mxu0 0
    %472 = vmatprep.subr.bf16.mxu0 0
    %473 = vmatpush1.bf16.xpose.msra.mxu0 0
    %474 = vmatprep.subr.bf16.mxu0 0
    %475 = vmatpush1.bf16.xpose.msra.mxu0 0
    %476 = vmatprep.subr.bf16.mxu0 0
    %477 = vmatpush1.bf16.xpose.msra.mxu0 0
    %478 = vmatprep.mubr.bf16.mxu0 0
    %479 = vmatmul.mubr.bf16.gmra.mrb[0].mxu0 %v444
    %v480 = vpop.f32.mrb[0].mxu0
    %v481 = vadd.f32 0.0, %v480
    %v482 = vpop.f32.mrb[0].mxu0
    %v483 = vpop.f32.mrb[0].mxu0
    %v484 = vpop.f32.mrb[0].mxu0
    %485 = vdwg.mxu0
    %v486 = vmul.f32 %v481, 0.35355338
    %v487 = vadd.f32 %v486, %v126
    %v488 = vsel %vm258, %v487, -inf
    %489 = vmax.xlane.f32.xlu0 %v488
    %v490 = vpop.xlane.xlu0 %489
    %v491 = vsub.f32 %v487, %v490
    %v492 = vmul.f32 %v491, 1.442695
    %v493 = vpow.pop %v492
    %v494 = vsel %vm258, %v493, 0.0
    %495 = vadd.xlane.f32.xlu0 %v494
    %v496 = vpop.xlane.xlu0 %495
    %v497 = vrcp.pop %v496
    %v498 = vmul.f32 %v493, %v497
    %v499 = vpack.c.bf16 %v498, %v498
    %501 = vrot.lane.b32.xlu0 %v442, 64
    %v502 = vpop.permute.xlu0 %501
    %v504 = vsel %vm258, %v499, 0
    %v507 = vsel %vm342, %v502, 0
    %509 = vmatprep.subr.bf16.mxu0 0
    %510 = vmatpush1.bf16.msra.mxu0 %v507
    %511 = vmatprep.subr.bf16.mxu0 0
    %512 = vmatpush1.bf16.msra.mxu0 0
    %513 = vmatprep.subr.bf16.mxu0 0
    %514 = vmatpush1.bf16.msra.mxu0 0
    %515 = vmatprep.subr.bf16.mxu0 0
    %516 = vmatpush1.bf16.msra.mxu0 0
    %517 = vmatprep.subr.bf16.mxu0 0
    %518 = vmatpush1.bf16.msra.mxu0 0
    %519 = vmatprep.subr.bf16.mxu0 0
    %520 = vmatpush1.bf16.msra.mxu0 0
    %521 = vmatprep.subr.bf16.mxu0 0
    %522 = vmatpush1.bf16.msra.mxu0 0
    %523 = vmatprep.subr.bf16.mxu0 0
    %524 = vmatpush1.bf16.msra.mxu0 0
    %525 = vmatprep.subr.bf16.mxu0 0
    %526 = vmatpush1.bf16.msra.mxu0 0
    %527 = vmatprep.subr.bf16.mxu0 0
    %528 = vmatpush1.bf16.msra.mxu0 0
    %529 = vmatprep.subr.bf16.mxu0 0
    %530 = vmatpush1.bf16.msra.mxu0 0
    %531 = vmatprep.subr.bf16.mxu0 0
    %532 = vmatpush1.bf16.msra.mxu0 0
    %533 = vmatprep.subr.bf16.mxu0 0
    %534 = vmatpush1.bf16.msra.mxu0 0
    %535 = vmatprep.subr.bf16.mxu0 0
    %536 = vmatpush1.bf16.msra.mxu0 0
    %537 = vmatprep.subr.bf16.mxu0 0
    %538 = vmatpush1.bf16.msra.mxu0 0
    %539 = vmatprep.subr.bf16.mxu0 0
    %540 = vmatpush1.bf16.msra.mxu0 0
    %541 = vmatprep.mubr.bf16.mxu0 0
    %542 = vmatmul.mubr.bf16.gmra.mrb[0].mxu0 %v504
    %v543 = vpop.f32.mrb[0].mxu0
    %v544 = vadd.f32 0.0, %v543
    %v545 = vpop.f32.mrb[0].mxu0
    %v546 = vpop.f32.mrb[0].mxu0
    %v547 = vpop.f32.mrb[0].mxu0
    %548 = vdwg.mxu0
    %v549 = vadd.f32 %v430, %v544
    %v550 = vmul.f32 %v193, %v68
    %v551 = vpack.c.bf16 %v550, %v550
    %553 = vrot.lane.b32.xlu0 %v68, 64
    %v554 = vpop.permute.xlu0 %553
    %v556 = vmul.f32 %v193, %v554
    %v557 = vpack.c.bf16 %v556, %v556
    %v559 = vsel %vm154, %v551, 0
    %561 = vmatprep.subr.bf16.mxu0 0
    %562 = vmatpush1.bf16.xpose.msra.mxu0 %v214
    %563 = vmatprep.subr.bf16.mxu0 0
    %564 = vmatpush1.bf16.xpose.msra.mxu0 0
    %565 = vmatprep.subr.bf16.mxu0 0
    %566 = vmatpush1.bf16.xpose.msra.mxu0 0
    %567 = vmatprep.subr.bf16.mxu0 0
    %568 = vmatpush1.bf16.xpose.msra.mxu0 0
    %569 = vmatprep.subr.bf16.mxu0 0
    %570 = vmatpush1.bf16.xpose.msra.mxu0 0
    %571 = vmatprep.subr.bf16.mxu0 0
    %572 = vmatpush1.bf16.xpose.msra.mxu0 0
    %573 = vmatprep.subr.bf16.mxu0 0
    %574 = vmatpush1.bf16.xpose.msra.mxu0 0
    %575 = vmatprep.subr.bf16.mxu0 0
    %576 = vmatpush1.bf16.xpose.msra.mxu0 0
    %577 = vmatprep.subr.bf16.mxu0 0
    %578 = vmatpush1.bf16.xpose.msra.mxu0 0
    %579 = vmatprep.subr.bf16.mxu0 0
    %580 = vmatpush1.bf16.xpose.msra.mxu0 0
    %581 = vmatprep.subr.bf16.mxu0 0
    %582 = vmatpush1.bf16.xpose.msra.mxu0 0
    %583 = vmatprep.subr.bf16.mxu0 0
    %584 = vmatpush1.bf16.xpose.msra.mxu0 0
    %585 = vmatprep.subr.bf16.mxu0 0
    %586 = vmatpush1.bf16.xpose.msra.mxu0 0
    %587 = vmatprep.subr.bf16.mxu0 0
    %588 = vmatpush1.bf16.xpose.msra.mxu0 0
    %589 = vmatprep.subr.bf16.mxu0 0
    %590 = vmatpush1.bf16.xpose.msra.mxu0 0
    %591 = vmatprep.subr.bf16.mxu0 0
    %592 = vmatpush1.bf16.xpose.msra.mxu0 0
    %593 = vmatprep.mubr.bf16.mxu0 0
    %594 = vmatmul.mubr.bf16.gmra.mrb[0].mxu0 %v559
    %v595 = vpop.f32.mrb[0].mxu0
    %v596 = vadd.f32 0.0, %v595
    %v597 = vpop.f32.mrb[0].mxu0
    %v598 = vpop.f32.mrb[0].mxu0
    %v599 = vpop.f32.mrb[0].mxu0
    %600 = vdwg.mxu0
    %v601 = vmul.f32 %v596, 0.35355338
    %v602 = vadd.f32 %v601, %v126
    %v603 = vsel %vm258, %v602, -inf
    %604 = vmax.xlane.f32.xlu0 %v603
    %v605 = vpop.xlane.xlu0 %604
    %v606 = vsub.f32 %v602, %v605
    %v607 = vmul.f32 %v606, 1.442695
    %v608 = vpow.pop %v607
    %v609 = vsel %vm258, %v608, 0.0
    %610 = vadd.xlane.f32.xlu0 %v609
    %v611 = vpop.xlane.xlu0 %610
    %v612 = vrcp.pop %v611
    %v613 = vmul.f32 %v608, %v612
    %v614 = vpack.c.bf16 %v613, %v613
    %616 = vrot.lane.b32.xlu0 %v557, 64
    %v617 = vpop.permute.xlu0 %616
    %v619 = vsel %vm258, %v614, 0
    %v622 = vsel %vm342, %v617, 0
    %624 = vmatprep.subr.bf16.mxu0 0
    %625 = vmatpush1.bf16.msra.mxu0 %v622
    %626 = vmatprep.subr.bf16.mxu0 0
    %627 = vmatpush1.bf16.msra.mxu0 0
    %628 = vmatprep.subr.bf16.mxu0 0
    %629 = vmatpush1.bf16.msra.mxu0 0
    %630 = vmatprep.subr.bf16.mxu0 0
    %631 = vmatpush1.bf16.msra.mxu0 0
    %632 = vmatprep.subr.bf16.mxu0 0
    %633 = vmatpush1.bf16.msra.mxu0 0
    %634 = vmatprep.subr.bf16.mxu0 0
    %635 = vmatpush1.bf16.msra.mxu0 0
    %636 = vmatprep.subr.bf16.mxu0 0
    %637 = vmatpush1.bf16.msra.mxu0 0
    %638 = vmatprep.subr.bf16.mxu0 0
    %639 = vmatpush1.bf16.msra.mxu0 0
    %640 = vmatprep.subr.bf16.mxu0 0
    %641 = vmatpush1.bf16.msra.mxu0 0
    %642 = vmatprep.subr.bf16.mxu0 0
    %643 = vmatpush1.bf16.msra.mxu0 0
    %644 = vmatprep.subr.bf16.mxu0 0
    %645 = vmatpush1.bf16.msra.mxu0 0
    %646 = vmatprep.subr.bf16.mxu0 0
    %647 = vmatpush1.bf16.msra.mxu0 0
    %648 = vmatprep.subr.bf16.mxu0 0
    %649 = vmatpush1.bf16.msra.mxu0 0
    %650 = vmatprep.subr.bf16.mxu0 0
    %651 = vmatpush1.bf16.msra.mxu0 0
    %652 = vmatprep.subr.bf16.mxu0 0
    %653 = vmatpush1.bf16.msra.mxu0 0
    %654 = vmatprep.subr.bf16.mxu0 0
    %655 = vmatpush1.bf16.msra.mxu0 0
    %656 = vmatprep.mubr.bf16.mxu0 0
    %657 = vmatmul.mubr.bf16.gmra.mrb[0].mxu0 %v619
    %v658 = vpop.f32.mrb[0].mxu0
    %v659 = vadd.f32 0.0, %v658
    %v660 = vpop.f32.mrb[0].mxu0
    %v661 = vpop.f32.mrb[0].mxu0
    %v662 = vpop.f32.mrb[0].mxu0
    %663 = vdwg.mxu0
    %v664 = vadd.f32 %v549, %v659
    %v665 = vpack.c.bf16 %v664, %v664
    %v666 = vlaneseq
    %v667 = vshrl.u32 %v666, 7
    %v668 = vsub.s32 0, %v667
    %v669 = vrot.slane %v136, %v668
    %v674 = vunpack.c.l.b16 %v132
    %v675 = vunpack.c.l.b16 %v133
    %v676 = vunpack.c.l.b16 %v134
    %v677 = vunpack.c.l.b16 %v135
    %v678 = vpack.c.b16 %v675, %v674
    %v679 = vpack.c.b16 %v677, %v676
    %v683 = vsel %vm154, %v665, 0
    %685 = vmatprep.subr.bf16.mxu0 0
    %686 = vmatpush1.bf16.msra.mxu0 %v678
    %687 = vmatprep.subr.bf16.mxu0 0
    %688 = vmatpush1.bf16.msra.mxu0 %v679
    %689 = vmatprep.subr.bf16.mxu0 0
    %690 = vmatpush1.bf16.msra.mxu0 0
    %691 = vmatprep.subr.bf16.mxu0 0
    %692 = vmatpush1.bf16.msra.mxu0 0
    %693 = vmatprep.subr.bf16.mxu0 0
    %694 = vmatpush1.bf16.msra.mxu0 0
    %695 = vmatprep.subr.bf16.mxu0 0
    %696 = vmatpush1.bf16.msra.mxu0 0
    %697 = vmatprep.subr.bf16.mxu0 0
    %698 = vmatpush1.bf16.msra.mxu0 0
    %699 = vmatprep.subr.bf16.mxu0 0
    %700 = vmatpush1.bf16.msra.mxu0 0
    %701 = vmatprep.subr.bf16.mxu0 0
    %702 = vmatpush1.bf16.msra.mxu0 0
    %703 = vmatprep.subr.bf16.mxu0 0
    %704 = vmatpush1.bf16.msra.mxu0 0
    %705 = vmatprep.subr.bf16.mxu0 0
    %706 = vmatpush1.bf16.msra.mxu0 0
    %707 = vmatprep.subr.bf16.mxu0 0
    %708 = vmatpush1.bf16.msra.mxu0 0
    %709 = vmatprep.subr.bf16.mxu0 0
    %710 = vmatpush1.bf16.msra.mxu0 0
    %711 = vmatprep.subr.bf16.mxu0 0
    %712 = vmatpush1.bf16.msra.mxu0 0
    %713 = vmatprep.subr.bf16.mxu0 0
    %714 = vmatpush1.bf16.msra.mxu0 0
    %715 = vmatprep.subr.bf16.mxu0 0
    %716 = vmatpush1.bf16.msra.mxu0 0
    %717 = vmatprep.mubr.bf16.mxu0 0
    %718 = vmatmul.mubr.bf16.gmra.mrb[0].mxu0 %v683
    %v719 = vpop.f32.mrb[0].mxu0
    %v720 = vadd.f32 %v669, %v719
    %v721 = vpop.f32.mrb[0].mxu0
    %v722 = vpop.f32.mrb[0].mxu0
    %v723 = vpop.f32.mrb[0].mxu0
    %724 = vdwg.mxu0
    %v725 = vadd.f32 %v118, %v720
    %v726 = vld [vmem:[#allocation5 + $0x2f] sm:$0x1]
    %v727 = vld [vmem:[#allocation5 + $0x30] sm:$0x1]
    %v728 = vsel %vm154, %v725, 0.0
    %729 = vadd.xlane.f32.xlu0 %v728
    %v730 = vpop.xlane.xlu0 %729
    %v731 = vrcp.pop 32.0
    %v732 = vmul.f32 %v730, %v731
    %v733 = vsub.f32 %v725, %v732
    %v734 = vmul.f32 %v733, %v733
    %v735 = vsel %vm154, %v734, 0.0
    %736 = vadd.xlane.f32.xlu0 %v735
    %v737 = vpop.xlane.xlu0 %736
    %v738 = vmul.f32 %v737, %v731
    %v739 = vadd.f32 %v738, 1e-05
    %v740 = vrsqrt.pop %v739
    %v741 = vmul.f32 %v733, %v740
    %v742 = vlaneseq
    %v743 = vshrl.u32 %v742, 7
    %v744 = vsub.s32 0, %v743
    %v745 = vrot.slane %v726, %v744
    %v746 = vmul.f32 %v741, %v745
    %v747 = vlaneseq
    %v748 = vshrl.u32 %v747, 7
    %v749 = vsub.s32 0, %v748
    %v750 = vrot.slane %v727, %v749
    %v751 = vadd.f32 %v746, %v750
    %v752 = vld [vmem:[#allocation2 + $0x38] sm:$0xf]
    %v753 = vld [vmem:[#allocation2 + $0x3c] sm:$0xf]
    %v754 = vld [vmem:[#allocation2 + $0x40] sm:$0xf]
    %v755 = vld [vmem:[#allocation2 + $0x44] sm:$0xf]
    %v756 = vld [vmem:[#allocation5 + $0x31] sm:$0x1]
    %v757 = vld [vmem:[#allocation2 + $0x48] sm:$0xf]
    %v758 = vld [vmem:[#allocation2 + $0x4c] sm:$0xf]
    %v759 = vld [vmem:[#allocation2 + $0x50] sm:$0xf]
    %v760 = vld [vmem:[#allocation2 + $0x54] sm:$0xf]
    %v761 = vld [vmem:[#allocation2 + $0x58] sm:$0xf]
    %v762 = vld [vmem:[#allocation2 + $0x5c] sm:$0xf]
    %v763 = vld [vmem:[#allocation2 + $0x60] sm:$0xf]
    %v764 = vld [vmem:[#allocation2 + $0x64] sm:$0xf]
    %v765 = vld [vmem:[#allocation5 + $0x32] sm:$0x1]
    %v766 = vpack.c.bf16 %v751, %v751
    %v767 = vlaneseq
    %v768 = vshrl.u32 %v767, 7
    %v769 = vsub.s32 0, %v768
    %v770 = vrot.slane %v756, %v769
    %v775 = vunpack.c.l.b16 %v752
    %v776 = vunpack.c.l.b16 %v753
    %v777 = vunpack.c.l.b16 %v754
    %v778 = vunpack.c.l.b16 %v755
    %v779 = vpack.c.b16 %v776, %v775
    %v780 = vpack.c.b16 %v778, %v777
    %v784 = vsel %vm154, %v766, 0
    %786 = vmatprep.subr.bf16.mxu0 0
    %787 = vmatpush1.bf16.msra.mxu0 %v779
    %788 = vmatprep.subr.bf16.mxu0 0
    %789 = vmatpush1.bf16.msra.mxu0 %v780
    %790 = vmatprep.subr.bf16.mxu0 0
    %791 = vmatpush1.bf16.msra.mxu0 0
    %792 = vmatprep.subr.bf16.mxu0 0
    %793 = vmatpush1.bf16.msra.mxu0 0
    %794 = vmatprep.subr.bf16.mxu0 0
    %795 = vmatpush1.bf16.msra.mxu0 0
    %796 = vmatprep.subr.bf16.mxu0 0
    %797 = vmatpush1.bf16.msra.mxu0 0
    %798 = vmatprep.subr.bf16.mxu0 0
    %799 = vmatpush1.bf16.msra.mxu0 0
    %800 = vmatprep.subr.bf16.mxu0 0
    %801 = vmatpush1.bf16.msra.mxu0 0
    %802 = vmatprep.subr.bf16.mxu0 0
    %803 = vmatpush1.bf16.msra.mxu0 0
    %804 = vmatprep.subr.bf16.mxu0 0
    %805 = vmatpush1.bf16.msra.mxu0 0
    %806 = vmatprep.subr.bf16.mxu0 0
    %807 = vmatpush1.bf16.msra.mxu0 0
    %808 = vmatprep.subr.bf16.mxu0 0
    %809 = vmatpush1.bf16.msra.mxu0 0
    %810 = vmatprep.subr.bf16.mxu0 0
    %811 = vmatpush1.bf16.msra.mxu0 0
    %812 = vmatprep.subr.bf16.mxu0 0
    %813 = vmatpush1.bf16.msra.mxu0 0
    %814 = vmatprep.subr.bf16.mxu0 0
    %815 = vmatpush1.bf16.msra.mxu0 0
    %816 = vmatprep.subr.bf16.mxu0 0
    %817 = vmatpush1.bf16.msra.mxu0 0
    %818 = vmatprep.mubr.bf16.mxu0 0
    %819 = vmatmul.mubr.bf16.gmra.mrb[0].mxu0 %v784
    %v820 = vpop.f32.mrb[0].mxu0
    %v821 = vadd.f32 %v770, %v820
    %v822 = vpop.f32.mrb[0].mxu0
    %v823 = vpop.f32.mrb[0].mxu0
    %v824 = vpop.f32.mrb[0].mxu0
    %825 = vdwg.mxu0
    %v826 = vmax.f32 %v821, 0.0
    %v827 = vpack.c.bf16 %v826, %v826
    %v828 = vlaneseq
    %v829 = vshrl.u32 %v828, 7
    %v830 = vsub.s32 0, %v829
    %v831 = vrot.slane %v765, %v830
    %v840 = vunpack.c.l.b16 %v757
    %v841 = vunpack.c.l.b16 %v758
    %v842 = vunpack.c.l.b16 %v759
    %v843 = vunpack.c.l.b16 %v760
    %v844 = vunpack.c.l.b16 %v761
    %v845 = vunpack.c.l.b16 %v762
    %v846 = vunpack.c.l.b16 %v763
    %v847 = vunpack.c.l.b16 %v764
    %v848 = vpack.c.b16 %v841, %v840
    %v849 = vpack.c.b16 %v843, %v842
    %v850 = vpack.c.b16 %v845, %v844
    %v851 = vpack.c.b16 %v847, %v846
    %vm856 = vcmask 523264
    %v858 = vsel %vm856, %v827, 0
    %860 = vmatprep.subr.bf16.mxu0 0
    %861 = vmatpush1.bf16.msra.mxu0 %v848
    %862 = vmatprep.subr.bf16.mxu0 0
    %863 = vmatpush1.bf16.msra.mxu0 %v849
    %864 = vmatprep.subr.bf16.mxu0 0
    %865 = vmatpush1.bf16.msra.mxu0 %v850
    %866 = vmatprep.subr.bf16.mxu0 0
    %867 = vmatpush1.bf16.msra.mxu0 %v851
    %868 = vmatprep.subr.bf16.mxu0 0
    %869 = vmatpush1.bf16.msra.mxu0 0
    %870 = vmatprep.subr.bf16.mxu0 0
    %871 = vmatpush1.bf16.msra.mxu0 0
    %872 = vmatprep.subr.bf16.mxu0 0
    %873 = vmatpush1.bf16.msra.mxu0 0
    %874 = vmatprep.subr.bf16.mxu0 0
    %875 = vmatpush1.bf16.msra.mxu0 0
    %876 = vmatprep.subr.bf16.mxu0 0
    %877 = vmatpush1.bf16.msra.mxu0 0
    %878 = vmatprep.subr.bf16.mxu0 0
    %879 = vmatpush1.bf16.msra.mxu0 0
    %880 = vmatprep.subr.bf16.mxu0 0
    %881 = vmatpush1.bf16.msra.mxu0 0
    %882 = vmatprep.subr.bf16.mxu0 0
    %883 = vmatpush1.bf16.msra.mxu0 0
    %884 = vmatprep.subr.bf16.mxu0 0
    %885 = vmatpush1.bf16.msra.mxu0 0
    %886 = vmatprep.subr.bf16.mxu0 0
    %887 = vmatpush1.bf16.msra.mxu0 0
    %888 = vmatprep.subr.bf16.mxu0 0
    %889 = vmatpush1.bf16.msra.mxu0 0
    %890 = vmatprep.subr.bf16.mxu0 0
    %891 = vmatpush1.bf16.msra.mxu0 0
    %892 = vmatprep.mubr.bf16.mxu0 0
    %893 = vmatmul.mubr.bf16.gmra.mrb[0].mxu0 %v858
    %v894 = vpop.f32.mrb[0].mxu0
    %v895 = vadd.f32 %v831, %v894
    %v896 = vpop.f32.mrb[0].mxu0
    %v897 = vpop.f32.mrb[0].mxu0
    %v898 = vpop.f32.mrb[0].mxu0
    %899 = vdwg.mxu0
    %v900 = vadd.f32 %v751, %v895
    %v901 = vld [vmem:[#allocation5 + $0x33] sm:$0x1]
    %v902 = vld [vmem:[#allocation5 + $0x34] sm:$0x1]
    %v903 = vsel %vm154, %v900, 0.0
    %904 = vadd.xlane.f32.xlu0 %v903
    %v905 = vpop.xlane.xlu0 %904
    %v906 = vmul.f32 %v905, %v731
    %v907 = vsub.f32 %v900, %v906
    %v908 = vmul.f32 %v907, %v907
    %v909 = vsel %vm154, %v908, 0.0
    %910 = vadd.xlane.f32.xlu0 %v909
    %v911 = vpop.xlane.xlu0 %910
    %v912 = vmul.f32 %v911, %v731
    %v913 = vadd.f32 %v912, 1e-05
    %v914 = vrsqrt.pop %v913
    %v915 = vmul.f32 %v907, %v914
    %v916 = vlaneseq
    %v917 = vshrl.u32 %v916, 7
    %v918 = vsub.s32 0, %v917
    %v919 = vrot.slane %v901, %v918
    %v920 = vmul.f32 %v915, %v919
    %v921 = vlaneseq
    %v922 = vshrl.u32 %v921, 7
    %v923 = vsub.s32 0, %v922
    %v924 = vrot.slane %v902, %v923
    %v925 = vadd.f32 %v920, %v924
    %v926 = vld [vmem:[#allocation2 + $0x68] sm:$0xf]
    %v927 = vld [vmem:[#allocation2 + $0x6c] sm:$0xf]
    %v928 = vld [vmem:[#allocation2 + $0x70] sm:$0xf]
    %v929 = vld [vmem:[#allocation2 + $0x74] sm:$0xf]
    %v930 = vld [vmem:[#allocation5 + $0x35] sm:$0x1]
    %v931 = vld [vmem:[#allocation2 + $0x78] sm:$0xf]
    %v932 = vld [vmem:[#allocation2 + $0x7c] sm:$0xf]
    %v933 = vld [vmem:[#allocation2 + $0x80] sm:$0xf]
    %v934 = vld [vmem:[#allocation2 + $0x84] sm:$0xf]
    %v935 = vld [vmem:[#allocation5 + $0x36] sm:$0x1]
    %v936 = vpack.c.bf16 %v925, %v925
    %v937 = vlaneseq
    %v938 = vshrl.u32 %v937, 7
    %v939 = vsub.s32 0, %v938
    %v940 = vrot.slane %v930, %v939
    %v945 = vunpack.c.l.b16 %v926
    %v946 = vunpack.c.l.b16 %v927
    %v947 = vunpack.c.l.b16 %v928
    %v948 = vunpack.c.l.b16 %v929
    %v949 = vpack.c.b16 %v946, %v945
    %v950 = vpack.c.b16 %v948, %v947
    %v954 = vsel %vm154, %v936, 0
    %956 = vmatprep.subr.bf16.mxu0 0
    %957 = vmatpush1.bf16.msra.mxu0 %v949
    %958 = vmatprep.subr.bf16.mxu0 0
    %959 = vmatpush1.bf16.msra.mxu0 %v950
    %960 = vmatprep.subr.bf16.mxu0 0
    %961 = vmatpush1.bf16.msra.mxu0 0
    %962 = vmatprep.subr.bf16.mxu0 0
    %963 = vmatpush1.bf16.msra.mxu0 0
    %964 = vmatprep.subr.bf16.mxu0 0
    %965 = vmatpush1.bf16.msra.mxu0 0
    %966 = vmatprep.subr.bf16.mxu0 0
    %967 = vmatpush1.bf16.msra.mxu0 0
    %968 = vmatprep.subr.bf16.mxu0 0
    %969 = vmatpush1.bf16.msra.mxu0 0
    %970 = vmatprep.subr.bf16.mxu0 0
    %971 = vmatpush1.bf16.msra.mxu0 0
    %972 = vmatprep.subr.bf16.mxu0 0
    %973 = vmatpush1.bf16.msra.mxu0 0
    %974 = vmatprep.subr.bf16.mxu0 0
    %975 = vmatpush1.bf16.msra.mxu0 0
    %976 = vmatprep.subr.bf16.mxu0 0
    %977 = vmatpush1.bf16.msra.mxu0 0
    %978 = vmatprep.subr.bf16.mxu0 0
    %979 = vmatpush1.bf16.msra.mxu0 0
    %980 = vmatprep.subr.bf16.mxu0 0
    %981 = vmatpush1.bf16.msra.mxu0 0
    %982 = vmatprep.subr.bf16.mxu0 0
    %983 = vmatpush1.bf16.msra.mxu0 0
    %984 = vmatprep.subr.bf16.mxu0 0
    %985 = vmatpush1.bf16.msra.mxu0 0
    %986 = vmatprep.subr.bf16.mxu0 0
    %987 = vmatpush1.bf16.msra.mxu0 0
    %988 = vmatprep.mubr.bf16.mxu0 0
    %989 = vmatmul.mubr.bf16.gmra.mrb[0].mxu0 %v954
    %v990 = vpop.f32.mrb[0].mxu0
    %v991 = vadd.f32 %v940, %v990
    %v992 = vpop.f32.mrb[0].mxu0
    %v993 = vpop.f32.mrb[0].mxu0
    %v994 = vpop.f32.mrb[0].mxu0
    %995 = vdwg.mxu0
    %v996 = vpack.c.bf16 %v991, %v991
    %v997 = vmul.f32 %v991, %v53
    %v998 = vpack.c.bf16 %v997, %v997
    %v999 = vmul.f32 %v991, %v203
    %v1000 = vpack.c.bf16 %v999, %v999
    %1002 = vrot.lane.b32.xlu0 %v996, 96
    %v1003 = vpop.permute.xlu0 %1002
    %v1005 = vsel %vm154, %v998, 0
    %v1008 = vsel %vm154, %v1003, 0
    %1010 = vmatprep.subr.bf16.mxu0 0
    %1011 = vmatpush1.bf16.xpose.msra.mxu0 %v1008
    %1012 = vmatprep.subr.bf16.mxu0 0
    %1013 = vmatpush1.bf16.xpose.msra.mxu0 0
    %1014 = vmatprep.subr.bf16.mxu0 0
    %1015 = vmatpush1.bf16.xpose.msra.mxu0 0
    %1016 = vmatprep.subr.bf16.mxu0 0
    %1017 = vmatpush1.bf16.xpose.msra.mxu0 0
    %1018 = vmatprep.subr.bf16.mxu0 0
    %1019 = vmatpush1.bf16.xpose.msra.mxu0 0
    %1020 = vmatprep.subr.bf16.mxu0 0
    %1021 = vmatpush1.bf16.xpose.msra.mxu0 0
    %1022 = vmatprep.subr.bf16.mxu0 0
    %1023 = vmatpush1.bf16.xpose.msra.mxu0 0
    %1024 = vmatprep.subr.bf16.mxu0 0
    %1025 = vmatpush1.bf16.xpose.msra.mxu0 0
    %1026 = vmatprep.subr.bf16.mxu0 0
    %1027 = vmatpush1.bf16.xpose.msra.mxu0 0
    %1028 = vmatprep.subr.bf16.mxu0 0
    %1029 = vmatpush1.bf16.xpose.msra.mxu0 0
    %1030 = vmatprep.subr.bf16.mxu0 0
    %1031 = vmatpush1.bf16.xpose.msra.mxu0 0
    %1032 = vmatprep.subr.bf16.mxu0 0
    %1033 = vmatpush1.bf16.xpose.msra.mxu0 0
    %1034 = vmatprep.subr.bf16.mxu0 0
    %1035 = vmatpush1.bf16.xpose.msra.mxu0 0
    %1036 = vmatprep.subr.bf16.mxu0 0
    %1037 = vmatpush1.bf16.xpose.msra.mxu0 0
    %1038 = vmatprep.subr.bf16.mxu0 0
    %1039 = vmatpush1.bf16.xpose.msra.mxu0 0
    %1040 = vmatprep.subr.bf16.mxu0 0
    %1041 = vmatpush1.bf16.xpose.msra.mxu0 0
    %1042 = vmatprep.mubr.bf16.mxu0 0
    %1043 = vmatmul.mubr.bf16.gmra.mrb[0].mxu0 %v1005
    %v1044 = vpop.f32.mrb[0].mxu0
    %v1045 = vadd.f32 0.0, %v1044
    %v1046 = vpop.f32.mrb[0].mxu0
    %v1047 = vpop.f32.mrb[0].mxu0
    %v1048 = vpop.f32.mrb[0].mxu0
    %1049 = vdwg.mxu0
    %v1050 = vmul.f32 %v1045, 0.35355338
    %v1051 = vadd.f32 %v1050, %v126
    %v1052 = vsel %vm258, %v1051, -inf
    %1053 = vmax.xlane.f32.xlu0 %v1052
    %v1054 = vpop.xlane.xlu0 %1053
    %v1055 = vsub.f32 %v1051, %v1054
    %v1056 = vmul.f32 %v1055, 1.442695
    %v1057 = vpow.pop %v1056
    %v1058 = vsel %vm258, %v1057, 0.0
    %1059 = vadd.xlane.f32.xlu0 %v1058
    %v1060 = vpop.xlane.xlu0 %1059
    %v1061 = vrcp.pop %v1060
    %v1062 = vmul.f32 %v1057, %v1061
    %v1063 = vpack.c.bf16 %v1062, %v1062
    %v1064 = vmul.f32 %v991, %v58
    %v1065 = vpack.c.bf16 %v1064, %v1064
    %v1066 = vmul.f32 %v991, %v275
    %v1067 = vpack.c.bf16 %v1066, %v1066
    %v1069 = vsel %vm154, %v1065, 0
    %1071 = vmatprep.subr.bf16.mxu0 0
    %1072 = vmatpush1.bf16.xpose.msra.mxu0 %v1008
    %1073 = vmatprep.subr.bf16.mxu0 0
    %1074 = vmatpush1.bf16.xpose.msra.mxu0 0
    %1075 = vmatprep.subr.bf16.mxu0 0
    %1076 = vmatpush1.bf16.xpose.msra.mxu0 0
    %1077 = vmatprep.subr.bf16.mxu0 0
    %1078 = vmatpush1.bf16.xpose.msra.mxu0 0
    %1079 = vmatprep.subr.bf16.mxu0 0
    %1080 = vmatpush1.bf16.xpose.msra.mxu0 0
    %1081 = vmatprep.subr.bf16.mxu0 0
    %1082 = vmatpush1.bf16.xpose.msra.mxu0 0
    %1083 = vmatprep.subr.bf16.mxu0 0
    %1084 = vmatpush1.bf16.xpose.msra.mxu0 0
    %1085 = vmatprep.subr.bf16.mxu0 0
    %1086 = vmatpush1.bf16.xpose.msra.mxu0 0
    %1087 = vmatprep.subr.bf16.mxu0 0
    %1088 = vmatpush1.bf16.xpose.msra.mxu0 0
    %1089 = vmatprep.subr.bf16.mxu0 0
    %1090 = vmatpush1.bf16.xpose.msra.mxu0 0
    %1091 = vmatprep.subr.bf16.mxu0 0
    %1092 = vmatpush1.bf16.xpose.msra.mxu0 0
    %1093 = vmatprep.subr.bf16.mxu0 0
    %1094 = vmatpush1.bf16.xpose.msra.mxu0 0
    %1095 = vmatprep.subr.bf16.mxu0 0
    %1096 = vmatpush1.bf16.xpose.msra.mxu0 0
    %1097 = vmatprep.subr.bf16.mxu0 0
    %1098 = vmatpush1.bf16.xpose.msra.mxu0 0
    %1099 = vmatprep.subr.bf16.mxu0 0
    %1100 = vmatpush1.bf16.xpose.msra.mxu0 0
    %1101 = vmatprep.subr.bf16.mxu0 0
    %1102 = vmatpush1.bf16.xpose.msra.mxu0 0
    %1103 = vmatprep.mubr.bf16.mxu0 0
    %1104 = vmatmul.mubr.bf16.gmra.mrb[0].mxu0 %v1069
    %v1105 = vpop.f32.mrb[0].mxu0
    %v1106 = vadd.f32 0.0, %v1105
    %v1107 = vpop.f32.mrb[0].mxu0
    %v1108 = vpop.f32.mrb[0].mxu0
    %v1109 = vpop.f32.mrb[0].mxu0
    %1110 = vdwg.mxu0
    %v1111 = vmul.f32 %v1106, 0.35355338
    %v1112 = vadd.f32 %v1111, %v126
    %v1113 = vsel %vm258, %v1112, -inf
    %1114 = vmax.xlane.f32.xlu0 %v1113
    %v1115 = vpop.xlane.xlu0 %1114
    %v1116 = vsub.f32 %v1112, %v1115
    %v1117 = vmul.f32 %v1116, 1.442695
    %v1118 = vpow.pop %v1117
    %v1119 = vsel %vm258, %v1118, 0.0
    %1120 = vadd.xlane.f32.xlu0 %v1119
    %v1121 = vpop.xlane.xlu0 %1120
    %v1122 = vrcp.pop %v1121
    %v1123 = vmul.f32 %v1118, %v1122
    %v1124 = vpack.c.bf16 %v1123, %v1123
    %1126 = vrot.lane.b32.xlu0 %v1067, 64
    %v1127 = vpop.permute.xlu0 %1126
    %v1129 = vsel %vm258, %v1124, 0
    %v1132 = vsel %vm342, %v1127, 0
    %1134 = vmatprep.subr.bf16.mxu0 0
    %1135 = vmatpush1.bf16.msra.mxu0 %v1132
    %1136 = vmatprep.subr.bf16.mxu0 0
    %1137 = vmatpush1.bf16.msra.mxu0 0
    %1138 = vmatprep.subr.bf16.mxu0 0
    %1139 = vmatpush1.bf16.msra.mxu0 0
    %1140 = vmatprep.subr.bf16.mxu0 0
    %1141 = vmatpush1.bf16.msra.mxu0 0
    %1142 = vmatprep.subr.bf16.mxu0 0
    %1143 = vmatpush1.bf16.msra.mxu0 0
    %1144 = vmatprep.subr.bf16.mxu0 0
    %1145 = vmatpush1.bf16.msra.mxu0 0
    %1146 = vmatprep.subr.bf16.mxu0 0
    %1147 = vmatpush1.bf16.msra.mxu0 0
    %1148 = vmatprep.subr.bf16.mxu0 0
    %1149 = vmatpush1.bf16.msra.mxu0 0
    %1150 = vmatprep.subr.bf16.mxu0 0
    %1151 = vmatpush1.bf16.msra.mxu0 0
    %1152 = vmatprep.subr.bf16.mxu0 0
    %1153 = vmatpush1.bf16.msra.mxu0 0
    %1154 = vmatprep.subr.bf16.mxu0 0
    %1155 = vmatpush1.bf16.msra.mxu0 0
    %1156 = vmatprep.subr.bf16.mxu0 0
    %1157 = vmatpush1.bf16.msra.mxu0 0
    %1158 = vmatprep.subr.bf16.mxu0 0
    %1159 = vmatpush1.bf16.msra.mxu0 0
    %1160 = vmatprep.subr.bf16.mxu0 0
    %1161 = vmatpush1.bf16.msra.mxu0 0
    %1162 = vmatprep.subr.bf16.mxu0 0
    %1163 = vmatpush1.bf16.msra.mxu0 0
    %1164 = vmatprep.subr.bf16.mxu0 0
    %1165 = vmatpush1.bf16.msra.mxu0 0
    %1166 = vmatprep.mubr.bf16.mxu0 0
    %1167 = vmatmul.mubr.bf16.gmra.mrb[0].mxu0 %v1129
    %v1168 = vpop.f32.mrb[0].mxu0
    %v1169 = vadd.f32 0.0, %v1168
    %v1170 = vpop.f32.mrb[0].mxu0
    %v1171 = vpop.f32.mrb[0].mxu0
    %v1172 = vpop.f32.mrb[0].mxu0
    %1173 = vdwg.mxu0
    %1175 = vrot.lane.b32.xlu0 %v1000, 64
    %v1176 = vpop.permute.xlu0 %1175
    %v1178 = vsel %vm258, %v1063, 0
    %v1181 = vsel %vm342, %v1176, 0
    %1183 = vmatprep.subr.bf16.mxu0 0
    %1184 = vmatpush1.bf16.msra.mxu0 %v1181
    %1185 = vmatprep.subr.bf16.mxu0 0
    %1186 = vmatpush1.bf16.msra.mxu0 0
    %1187 = vmatprep.subr.bf16.mxu0 0
    %1188 = vmatpush1.bf16.msra.mxu0 0
    %1189 = vmatprep.subr.bf16.mxu0 0
    %1190 = vmatpush1.bf16.msra.mxu0 0
    %1191 = vmatprep.subr.bf16.mxu0 0
    %1192 = vmatpush1.bf16.msra.mxu0 0
    %1193 = vmatprep.subr.bf16.mxu0 0
    %1194 = vmatpush1.bf16.msra.mxu0 0
    %1195 = vmatprep.subr.bf16.mxu0 0
    %1196 = vmatpush1.bf16.msra.mxu0 0
    %1197 = vmatprep.subr.bf16.mxu0 0
    %1198 = vmatpush1.bf16.msra.mxu0 0
    %1199 = vmatprep.subr.bf16.mxu0 0
    %1200 = vmatpush1.bf16.msra.mxu0 0
    %1201 = vmatprep.subr.bf16.mxu0 0
    %1202 = vmatpush1.bf16.msra.mxu0 0
    %1203 = vmatprep.subr.bf16.mxu0 0
    %1204 = vmatpush1.bf16.msra.mxu0 0
    %1205 = vmatprep.subr.bf16.mxu0 0
    %1206 = vmatpush1.bf16.msra.mxu0 0
    %1207 = vmatprep.subr.bf16.mxu0 0
    %1208 = vmatpush1.bf16.msra.mxu0 0
    %1209 = vmatprep.subr.bf16.mxu0 0
    %1210 = vmatpush1.bf16.msra.mxu0 0
    %1211 = vmatprep.subr.bf16.mxu0 0
    %1212 = vmatpush1.bf16.msra.mxu0 0
    %1213 = vmatprep.subr.bf16.mxu0 0
    %1214 = vmatpush1.bf16.msra.mxu0 0
    %1215 = vmatprep.mubr.bf16.mxu0 0
    %1216 = vmatmul.mubr.bf16.gmra.mrb[0].mxu0 %v1178
    %v1217 = vpop.f32.mrb[0].mxu0
    %v1218 = vadd.f32 %v1169, %v1217
    %v1219 = vpop.f32.mrb[0].mxu0
    %v1220 = vpop.f32.mrb[0].mxu0
    %v1221 = vpop.f32.mrb[0].mxu0
    %1222 = vdwg.mxu0
    %v1223 = vmul.f32 %v991, %v63
    %v1224 = vpack.c.bf16 %v1223, %v1223
    %v1225 = vmul.f32 %v991, %v439
    %v1226 = vpack.c.bf16 %v1225, %v1225
    %v1228 = vsel %vm154, %v1224, 0
    %1230 = vmatprep.subr.bf16.mxu0 0
    %1231 = vmatpush1.bf16.xpose.msra.mxu0 %v1008
    %1232 = vmatprep.subr.bf16.mxu0 0
    %1233 = vmatpush1.bf16.xpose.msra.mxu0 0
    %1234 = vmatprep.subr.bf16.mxu0 0
    %1235 = vmatpush1.bf16.xpose.msra.mxu0 0
    %1236 = vmatprep.subr.bf16.mxu0 0
    %1237 = vmatpush1.bf16.xpose.msra.mxu0 0
    %1238 = vmatprep.subr.bf16.mxu0 0
    %1239 = vmatpush1.bf16.xpose.msra.mxu0 0
    %1240 = vmatprep.subr.bf16.mxu0 0
    %1241 = vmatpush1.bf16.xpose.msra.mxu0 0
    %1242 = vmatprep.subr.bf16.mxu0 0
    %1243 = vmatpush1.bf16.xpose.msra.mxu0 0
    %1244 = vmatprep.subr.bf16.mxu0 0
    %1245 = vmatpush1.bf16.xpose.msra.mxu0 0
    %1246 = vmatprep.subr.bf16.mxu0 0
    %1247 = vmatpush1.bf16.xpose.msra.mxu0 0
    %1248 = vmatprep.subr.bf16.mxu0 0
    %1249 = vmatpush1.bf16.xpose.msra.mxu0 0
    %1250 = vmatprep.subr.bf16.mxu0 0
    %1251 = vmatpush1.bf16.xpose.msra.mxu0 0
    %1252 = vmatprep.subr.bf16.mxu0 0
    %1253 = vmatpush1.bf16.xpose.msra.mxu0 0
    %1254 = vmatprep.subr.bf16.mxu0 0
    %1255 = vmatpush1.bf16.xpose.msra.mxu0 0
    %1256 = vmatprep.subr.bf16.mxu0 0
    %1257 = vmatpush1.bf16.xpose.msra.mxu0 0
    %1258 = vmatprep.subr.bf16.mxu0 0
    %1259 = vmatpush1.bf16.xpose.msra.mxu0 0
    %1260 = vmatprep.subr.bf16.mxu0 0
    %1261 = vmatpush1.bf16.xpose.msra.mxu0 0
    %1262 = vmatprep.mubr.bf16.mxu0 0
    %1263 = vmatmul.mubr.bf16.gmra.mrb[0].mxu0 %v1228
    %v1264 = vpop.f32.mrb[0].mxu0
    %v1265 = vadd.f32 0.0, %v1264
    %v1266 = vpop.f32.mrb[0].mxu0
    %v1267 = vpop.f32.mrb[0].mxu0
    %v1268 = vpop.f32.mrb[0].mxu0
    %1269 = vdwg.mxu0
    %v1270 = vmul.f32 %v1265, 0.35355338
    %v1271 = vadd.f32 %v1270, %v126
    %v1272 = vsel %vm258, %v1271, -inf
    %1273 = vmax.xlane.f32.xlu0 %v1272
    %v1274 = vpop.xlane.xlu0 %1273
    %v1275 = vsub.f32 %v1271, %v1274
    %v1276 = vmul.f32 %v1275, 1.442695
    %v1277 = vpow.pop %v1276
    %v1278 = vsel %vm258, %v1277, 0.0
    %1279 = vadd.xlane.f32.xlu0 %v1278
    %v1280 = vpop.xlane.xlu0 %1279
    %v1281 = vrcp.pop %v1280
    %v1282 = vmul.f32 %v1277, %v1281
    %v1283 = vpack.c.bf16 %v1282, %v1282
    %1285 = vrot.lane.b32.xlu0 %v1226, 64
    %v1286 = vpop.permute.xlu0 %1285
    %v1288 = vsel %vm258, %v1283, 0
    %v1291 = vsel %vm342, %v1286, 0
    %1293 = vmatprep.subr.bf16.mxu0 0
    %1294 = vmatpush1.bf16.msra.mxu0 %v1291
    %1295 = vmatprep.subr.bf16.mxu0 0
    %1296 = vmatpush1.bf16.msra.mxu0 0
    %1297 = vmatprep.subr.bf16.mxu0 0
    %1298 = vmatpush1.bf16.msra.mxu0 0
    %1299 = vmatprep.subr.bf16.mxu0 0
    %1300 = vmatpush1.bf16.msra.mxu0 0
    %1301 = vmatprep.subr.bf16.mxu0 0
    %1302 = vmatpush1.bf16.msra.mxu0 0
    %1303 = vmatprep.subr.bf16.mxu0 0
    %1304 = vmatpush1.bf16.msra.mxu0 0
    %1305 = vmatprep.subr.bf16.mxu0 0
    %1306 = vmatpush1.bf16.msra.mxu0 0
    %1307 = vmatprep.subr.bf16.mxu0 0
    %1308 = vmatpush1.bf16.msra.mxu0 0
    %1309 = vmatprep.subr.bf16.mxu0 0
    %1310 = vmatpush1.bf16.msra.mxu0 0
    %1311 = vmatprep.subr.bf16.mxu0 0
    %1312 = vmatpush1.bf16.msra.mxu0 0
    %1313 = vmatprep.subr.bf16.mxu0 0
    %1314 = vmatpush1.bf16.msra.mxu0 0
    %1315 = vmatprep.subr.bf16.mxu0 0
    %1316 = vmatpush1.bf16.msra.mxu0 0
    %1317 = vmatprep.subr.bf16.mxu0 0
    %1318 = vmatpush1.bf16.msra.mxu0 0
    %1319 = vmatprep.subr.bf16.mxu0 0
    %1320 = vmatpush1.bf16.msra.mxu0 0
    %1321 = vmatprep.subr.bf16.mxu0 0
    %1322 = vmatpush1.bf16.msra.mxu0 0
    %1323 = vmatprep.subr.bf16.mxu0 0
    %1324 = vmatpush1.bf16.msra.mxu0 0
    %1325 = vmatprep.mubr.bf16.mxu0 0
    %1326 = vmatmul.mubr.bf16.gmra.mrb[0].mxu0 %v1288
    %v1327 = vpop.f32.mrb[0].mxu0
    %v1328 = vadd.f32 0.0, %v1327
    %v1329 = vpop.f32.mrb[0].mxu0
    %v1330 = vpop.f32.mrb[0].mxu0
    %v1331 = vpop.f32.mrb[0].mxu0
    %1332 = vdwg.mxu0
    %v1333 = vadd.f32 %v1218, %v1328
    %v1334 = vmul.f32 %v991, %v68
    %v1335 = vpack.c.bf16 %v1334, %v1334
    %v1336 = vmul.f32 %v991, %v554
    %v1337 = vpack.c.bf16 %v1336, %v1336
    %v1339 = vsel %vm154, %v1335, 0
    %1341 = vmatprep.subr.bf16.mxu0 0
    %1342 = vmatpush1.bf16.xpose.msra.mxu0 %v1008
    %1343 = vmatprep.subr.bf16.mxu0 0
    %1344 = vmatpush1.bf16.xpose.msra.mxu0 0
    %1345 = vmatprep.subr.bf16.mxu0 0
    %1346 = vmatpush1.bf16.xpose.msra.mxu0 0
    %1347 = vmatprep.subr.bf16.mxu0 0
    %1348 = vmatpush1.bf16.xpose.msra.mxu0 0
    %1349 = vmatprep.subr.bf16.mxu0 0
    %1350 = vmatpush1.bf16.xpose.msra.mxu0 0
    %1351 = vmatprep.subr.bf16.mxu0 0
    %1352 = vmatpush1.bf16.xpose.msra.mxu0 0
    %1353 = vmatprep.subr.bf16.mxu0 0
    %1354 = vmatpush1.bf16.xpose.msra.mxu0 0
    %1355 = vmatprep.subr.bf16.mxu0 0
    %1356 = vmatpush1.bf16.xpose.msra.mxu0 0
    %1357 = vmatprep.subr.bf16.mxu0 0
    %1358 = vmatpush1.bf16.xpose.msra.mxu0 0
    %1359 = vmatprep.subr.bf16.mxu0 0
    %1360 = vmatpush1.bf16.xpose.msra.mxu0 0
    %1361 = vmatprep.subr.bf16.mxu0 0
    %1362 = vmatpush1.bf16.xpose.msra.mxu0 0
    %1363 = vmatprep.subr.bf16.mxu0 0
    %1364 = vmatpush1.bf16.xpose.msra.mxu0 0
    %1365 = vmatprep.subr.bf16.mxu0 0
    %1366 = vmatpush1.bf16.xpose.msra.mxu0 0
    %1367 = vmatprep.subr.bf16.mxu0 0
    %1368 = vmatpush1.bf16.xpose.msra.mxu0 0
    %1369 = vmatprep.subr.bf16.mxu0 0
    %1370 = vmatpush1.bf16.xpose.msra.mxu0 0
    %1371 = vmatprep.subr.bf16.mxu0 0
    %1372 = vmatpush1.bf16.xpose.msra.mxu0 0
    %1373 = vmatprep.mubr.bf16.mxu0 0
    %1374 = vmatmul.mubr.bf16.gmra.mrb[0].mxu0 %v1339
    %v1375 = vpop.f32.mrb[0].mxu0
    %v1376 = vadd.f32 0.0, %v1375
    %v1377 = vpop.f32.mrb[0].mxu0
    %v1378 = vpop.f32.mrb[0].mxu0
    %v1379 = vpop.f32.mrb[0].mxu0
    %1380 = vdwg.mxu0
    %v1381 = vmul.f32 %v1376, 0.35355338
    %v1382 = vadd.f32 %v1381, %v126
    %v1383 = vsel %vm258, %v1382, -inf
    %1384 = vmax.xlane.f32.xlu0 %v1383
    %v1385 = vpop.xlane.xlu0 %1384
    %v1386 = vsub.f32 %v1382, %v1385
    %v1387 = vmul.f32 %v1386, 1.442695
    %v1388 = vpow.pop %v1387
    %v1389 = vsel %vm258, %v1388, 0.0
    %1390 = vadd.xlane.f32.xlu0 %v1389
    %v1391 = vpop.xlane.xlu0 %1390
    %v1392 = vrcp.pop %v1391
    %v1393 = vmul.f32 %v1388, %v1392
    %v1394 = vpack.c.bf16 %v1393, %v1393
    %1396 = vrot.lane.b32.xlu0 %v1337, 64
    %v1397 = vpop.permute.xlu0 %1396
    %v1399 = vsel %vm258, %v1394, 0
    %v1402 = vsel %vm342, %v1397, 0
    %1404 = vmatprep.subr.bf16.mxu0 0
    %1405 = vmatpush1.bf16.msra.mxu0 %v1402
    %1406 = vmatprep.subr.bf16.mxu0 0
    %1407 = vmatpush1.bf16.msra.mxu0 0
    %1408 = vmatprep.subr.bf16.mxu0 0
    %1409 = vmatpush1.bf16.msra.mxu0 0
    %1410 = vmatprep.subr.bf16.mxu0 0
    %1411 = vmatpush1.bf16.msra.mxu0 0
    %1412 = vmatprep.subr.bf16.mxu0 0
    %1413 = vmatpush1.bf16.msra.mxu0 0
    %1414 = vmatprep.subr.bf16.mxu0 0
    %1415 = vmatpush1.bf16.msra.mxu0 0
    %1416 = vmatprep.subr.bf16.mxu0 0
    %1417 = vmatpush1.bf16.msra.mxu0 0
    %1418 = vmatprep.subr.bf16.mxu0 0
    %1419 = vmatpush1.bf16.msra.mxu0 0
    %1420 = vmatprep.subr.bf16.mxu0 0
    %1421 = vmatpush1.bf16.msra.mxu0 0
    %1422 = vmatprep.subr.bf16.mxu0 0
    %1423 = vmatpush1.bf16.msra.mxu0 0
    %1424 = vmatprep.subr.bf16.mxu0 0
    %1425 = vmatpush1.bf16.msra.mxu0 0
    %1426 = vmatprep.subr.bf16.mxu0 0
    %1427 = vmatpush1.bf16.msra.mxu0 0
    %1428 = vmatprep.subr.bf16.mxu0 0
    %1429 = vmatpush1.bf16.msra.mxu0 0
    %1430 = vmatprep.subr.bf16.mxu0 0
    %1431 = vmatpush1.bf16.msra.mxu0 0
    %1432 = vmatprep.subr.bf16.mxu0 0
    %1433 = vmatpush1.bf16.msra.mxu0 0
    %1434 = vmatprep.subr.bf16.mxu0 0
    %1435 = vmatpush1.bf16.msra.mxu0 0
    %1436 = vmatprep.mubr.bf16.mxu0 0
    %1437 = vmatmul.mubr.bf16.gmra.mrb[0].mxu0 %v1399
    %v1438 = vpop.f32.mrb[0].mxu0
    %v1439 = vadd.f32 0.0, %v1438
    %v1440 = vpop.f32.mrb[0].mxu0
    %v1441 = vpop.f32.mrb[0].mxu0
    %v1442 = vpop.f32.mrb[0].mxu0
    %1443 = vdwg.mxu0
    %v1444 = vadd.f32 %v1333, %v1439
    %v1445 = vpack.c.bf16 %v1444, %v1444
    %v1446 = vlaneseq
    %v1447 = vshrl.u32 %v1446, 7
    %v1448 = vsub.s32 0, %v1447
    %v1449 = vrot.slane %v935, %v1448
    %v1454 = vunpack.c.l.b16 %v931
    %v1455 = vunpack.c.l.b16 %v932
    %v1456 = vunpack.c.l.b16 %v933
    %v1457 = vunpack.c.l.b16 %v934
    %v1458 = vpack.c.b16 %v1455, %v1454
    %v1459 = vpack.c.b16 %v1457, %v1456
    %v1463 = vsel %vm154, %v1445, 0
    %1465 = vmatprep.subr.bf16.mxu0 0
    %1466 = vmatpush1.bf16.msra.mxu0 %v1458
    %1467 = vmatprep.subr.bf16.mxu0 0
    %1468 = vmatpush1.bf16.msra.mxu0 %v1459
    %1469 = vmatprep.subr.bf16.mxu0 0
    %1470 = vmatpush1.bf16.msra.mxu0 0
    %1471 = vmatprep.subr.bf16.mxu0 0
    %1472 = vmatpush1.bf16.msra.mxu0 0
    %1473 = vmatprep.subr.bf16.mxu0 0
    %1474 = vmatpush1.bf16.msra.mxu0 0
    %1475 = vmatprep.subr.bf16.mxu0 0
    %1476 = vmatpush1.bf16.msra.mxu0 0
    %1477 = vmatprep.subr.bf16.mxu0 0
    %1478 = vmatpush1.bf16.msra.mxu0 0
    %1479 = vmatprep.subr.bf16.mxu0 0
    %1480 = vmatpush1.bf16.msra.mxu0 0
    %1481 = vmatprep.subr.bf16.mxu0 0
    %1482 = vmatpush1.bf16.msra.mxu0 0
    %1483 = vmatprep.subr.bf16.mxu0 0
    %1484 = vmatpush1.bf16.msra.mxu0 0
    %1485 = vmatprep.subr.bf16.mxu0 0
    %1486 = vmatpush1.bf16.msra.mxu0 0
    %1487 = vmatprep.subr.bf16.mxu0 0
    %1488 = vmatpush1.bf16.msra.mxu0 0
    %1489 = vmatprep.subr.bf16.mxu0 0
    %1490 = vmatpush1.bf16.msra.mxu0 0
    %1491 = vmatprep.subr.bf16.mxu0 0
    %1492 = vmatpush1.bf16.msra.mxu0 0
    %1493 = vmatprep.subr.bf16.mxu0 0
    %1494 = vmatpush1.bf16.msra.mxu0 0
    %1495 = vmatprep.subr.bf16.mxu0 0
    %1496 = vmatpush1.bf16.msra.mxu0 0
    %1497 = vmatprep.mubr.bf16.mxu0 0
    %1498 = vmatmul.mubr.bf16.gmra.mrb[0].mxu0 %v1463
    %v1499 = vpop.f32.mrb[0].mxu0
    %v1500 = vadd.f32 %v1449, %v1499
    %v1501 = vpop.f32.mrb[0].mxu0
    %v1502 = vpop.f32.mrb[0].mxu0
    %v1503 = vpop.f32.mrb[0].mxu0
    %1504 = vdwg.mxu0
    %v1505 = vadd.f32 %v925, %v1500
    %v1506 = vld [vmem:[#allocation5 + $0x37] sm:$0x1]
    %v1507 = vld [vmem:[#allocation5 + $0x38] sm:$0x1]
    %v1508 = vsel %vm154, %v1505, 0.0
    %1509 = vadd.xlane.f32.xlu0 %v1508
    %v1510 = vpop.xlane.xlu0 %1509
    %v1511 = vmul.f32 %v1510, %v731
    %v1512 = vsub.f32 %v1505, %v1511
    %v1513 = vmul.f32 %v1512, %v1512
    %v1514 = vsel %vm154, %v1513, 0.0
    %1515 = vadd.xlane.f32.xlu0 %v1514
    %v1516 = vpop.xlane.xlu0 %1515
    %v1517 = vmul.f32 %v1516, %v731
    %v1518 = vadd.f32 %v1517, 1e-05
    %v1519 = vrsqrt.pop %v1518
    %v1520 = vmul.f32 %v1512, %v1519
    %v1521 = vlaneseq
    %v1522 = vshrl.u32 %v1521, 7
    %v1523 = vsub.s32 0, %v1522
    %v1524 = vrot.slane %v1506, %v1523
    %v1525 = vmul.f32 %v1520, %v1524
    %v1526 = vlaneseq
    %v1527 = vshrl.u32 %v1526, 7
    %v1528 = vsub.s32 0, %v1527
    %v1529 = vrot.slane %v1507, %v1528
    %v1530 = vadd.f32 %v1525, %v1529
    %v1531 = vld [vmem:[#allocation2 + $0x88] sm:$0xf]
    %v1532 = vld [vmem:[#allocation2 + $0x8c] sm:$0xf]
    %v1533 = vld [vmem:[#allocation2 + $0x90] sm:$0xf]
    %v1534 = vld [vmem:[#allocation2 + $0x94] sm:$0xf]
    %v1535 = vld [vmem:[#allocation5 + $0x39] sm:$0x1]
    %v1536 = vld [vmem:[#allocation2 + $0x98] sm:$0xf]
    %v1537 = vld [vmem:[#allocation2 + $0x9c] sm:$0xf]
    %v1538 = vld [vmem:[#allocation2 + $0xa0] sm:$0xf]
    %v1539 = vld [vmem:[#allocation2 + $0xa4] sm:$0xf]
    %v1540 = vld [vmem:[#allocation2 + $0xa8] sm:$0xf]
    %v1541 = vld [vmem:[#allocation2 + $0xac] sm:$0xf]
    %v1542 = vld [vmem:[#allocation2 + $0xb0] sm:$0xf]
    %v1543 = vld [vmem:[#allocation2 + $0xb4] sm:$0xf]
    %v1544 = vld [vmem:[#allocation5 + $0x3a] sm:$0x1]
    %v1545 = vpack.c.bf16 %v1530, %v1530
    %v1546 = vlaneseq
    %v1547 = vshrl.u32 %v1546, 7
    %v1548 = vsub.s32 0, %v1547
    %v1549 = vrot.slane %v1535, %v1548
    %v1554 = vunpack.c.l.b16 %v1531
    %v1555 = vunpack.c.l.b16 %v1532
    %v1556 = vunpack.c.l.b16 %v1533
    %v1557 = vunpack.c.l.b16 %v1534
    %v1558 = vpack.c.b16 %v1555, %v1554
    %v1559 = vpack.c.b16 %v1557, %v1556
    %v1563 = vsel %vm154, %v1545, 0
    %1565 = vmatprep.subr.bf16.mxu0 0
    %1566 = vmatpush1.bf16.msra.mxu0 %v1558
    %1567 = vmatprep.subr.bf16.mxu0 0
    %1568 = vmatpush1.bf16.msra.mxu0 %v1559
    %1569 = vmatprep.subr.bf16.mxu0 0
    %1570 = vmatpush1.bf16.msra.mxu0 0
    %1571 = vmatprep.subr.bf16.mxu0 0
    %1572 = vmatpush1.bf16.msra.mxu0 0
    %1573 = vmatprep.subr.bf16.mxu0 0
    %1574 = vmatpush1.bf16.msra.mxu0 0
    %1575 = vmatprep.subr.bf16.mxu0 0
    %1576 = vmatpush1.bf16.msra.mxu0 0
    %1577 = vmatprep.subr.bf16.mxu0 0
    %1578 = vmatpush1.bf16.msra.mxu0 0
    %1579 = vmatprep.subr.bf16.mxu0 0
    %1580 = vmatpush1.bf16.msra.mxu0 0
    %1581 = vmatprep.subr.bf16.mxu0 0
    %1582 = vmatpush1.bf16.msra.mxu0 0
    %1583 = vmatprep.subr.bf16.mxu0 0
    %1584 = vmatpush1.bf16.msra.mxu0 0
    %1585 = vmatprep.subr.bf16.mxu0 0
    %1586 = vmatpush1.bf16.msra.mxu0 0
    %1587 = vmatprep.subr.bf16.mxu0 0
    %1588 = vmatpush1.bf16.msra.mxu0 0
    %1589 = vmatprep.subr.bf16.mxu0 0
    %1590 = vmatpush1.bf16.msra.mxu0 0
    %1591 = vmatprep.subr.bf16.mxu0 0
    %1592 = vmatpush1.bf16.msra.mxu0 0
    %1593 = vmatprep.subr.bf16.mxu0 0
    %1594 = vmatpush1.bf16.msra.mxu0 0
    %1595 = vmatprep.subr.bf16.mxu0 0
    %1596 = vmatpush1.bf16.msra.mxu0 0
    %1597 = vmatprep.mubr.bf16.mxu0 0
    %1598 = vmatmul.mubr.bf16.gmra.mrb[0].mxu0 %v1563
    %v1599 = vpop.f32.mrb[0].mxu0
    %v1600 = vadd.f32 %v1549, %v1599
    %v1601 = vpop.f32.mrb[0].mxu0
    %v1602 = vpop.f32.mrb[0].mxu0
    %v1603 = vpop.f32.mrb[0].mxu0
    %1604 = vdwg.mxu0
    %v1605 = vmax.f32 %v1600, 0.0
    %v1606 = vpack.c.bf16 %v1605, %v1605
    %v1607 = vlaneseq
    %v1608 = vshrl.u32 %v1607, 7
    %v1609 = vsub.s32 0, %v1608
    %v1610 = vrot.slane %v1544, %v1609
    %v1619 = vunpack.c.l.b16 %v1536
    %v1620 = vunpack.c.l.b16 %v1537
    %v1621 = vunpack.c.l.b16 %v1538
    %v1622 = vunpack.c.l.b16 %v1539
    %v1623 = vunpack.c.l.b16 %v1540
    %v1624 = vunpack.c.l.b16 %v1541
    %v1625 = vunpack.c.l.b16 %v1542
    %v1626 = vunpack.c.l.b16 %v1543
    %v1627 = vpack.c.b16 %v1620, %v1619
    %v1628 = vpack.c.b16 %v1622, %v1621
    %v1629 = vpack.c.b16 %v1624, %v1623
    %v1630 = vpack.c.b16 %v1626, %v1625
    %v1636 = vsel %vm856, %v1606, 0
    %1638 = vmatprep.subr.bf16.mxu0 0
    %1639 = vmatpush1.bf16.msra.mxu0 %v1627
    %1640 = vmatprep.subr.bf16.mxu0 0
    %1641 = vmatpush1.bf16.msra.mxu0 %v1628
    %1642 = vmatprep.subr.bf16.mxu0 0
    %1643 = vmatpush1.bf16.msra.mxu0 %v1629
    %1644 = vmatprep.subr.bf16.mxu0 0
    %1645 = vmatpush1.bf16.msra.mxu0 %v1630
    %1646 = vmatprep.subr.bf16.mxu0 0
    %1647 = vmatpush1.bf16.msra.mxu0 0
    %1648 = vmatprep.subr.bf16.mxu0 0
    %1649 = vmatpush1.bf16.msra.mxu0 0
    %1650 = vmatprep.subr.bf16.mxu0 0
    %1651 = vmatpush1.bf16.msra.mxu0 0
    %1652 = vmatprep.subr.bf16.mxu0 0
    %1653 = vmatpush1.bf16.msra.mxu0 0
    %1654 = vmatprep.subr.bf16.mxu0 0
    %1655 = vmatpush1.bf16.msra.mxu0 0
    %1656 = vmatprep.subr.bf16.mxu0 0
    %1657 = vmatpush1.bf16.msra.mxu0 0
    %1658 = vmatprep.subr.bf16.mxu0 0
    %1659 = vmatpush1.bf16.msra.mxu0 0
    %1660 = vmatprep.subr.bf16.mxu0 0
    %1661 = vmatpush1.bf16.msra.mxu0 0
    %1662 = vmatprep.subr.bf16.mxu0 0
    %1663 = vmatpush1.bf16.msra.mxu0 0
    %1664 = vmatprep.subr.bf16.mxu0 0
    %1665 = vmatpush1.bf16.msra.mxu0 0
    %1666 = vmatprep.subr.bf16.mxu0 0
    %1667 = vmatpush1.bf16.msra.mxu0 0
    %1668 = vmatprep.subr.bf16.mxu0 0
    %1669 = vmatpush1.bf16.msra.mxu0 0
    %1670 = vmatprep.mubr.bf16.mxu0 0
    %1671 = vmatmul.mubr.bf16.gmra.mrb[0].mxu0 %v1636
    %v1672 = vpop.f32.mrb[0].mxu0
    %v1673 = vadd.f32 %v1610, %v1672
    %v1674 = vpop.f32.mrb[0].mxu0
    %v1675 = vpop.f32.mrb[0].mxu0
    %v1676 = vpop.f32.mrb[0].mxu0
    %1677 = vdwg.mxu0
    %v1678 = vadd.f32 %v1530, %v1673
    %v1679 = vld [vmem:[#allocation5 + $0x3b] sm:$0x1]
    %v1680 = vld [vmem:[#allocation5 + $0x3c] sm:$0x1]
    %v1681 = vsel %vm154, %v1678, 0.0
    %1682 = vadd.xlane.f32.xlu0 %v1681
    %v1683 = vpop.xlane.xlu0 %1682
    %v1684 = vmul.f32 %v1683, %v731
    %v1685 = vsub.f32 %v1678, %v1684
    %v1686 = vmul.f32 %v1685, %v1685
    %v1687 = vsel %vm154, %v1686, 0.0
    %1688 = vadd.xlane.f32.xlu0 %v1687
    %v1689 = vpop.xlane.xlu0 %1688
    %v1690 = vmul.f32 %v1689, %v731
    %v1691 = vadd.f32 %v1690, 1e-05
    %v1692 = vrsqrt.pop %v1691
    %v1693 = vmul.f32 %v1685, %v1692
    %v1694 = vlaneseq
    %v1695 = vshrl.u32 %v1694, 7
    %v1696 = vsub.s32 0, %v1695
    %v1697 = vrot.slane %v1679, %v1696
    %v1698 = vmul.f32 %v1693, %v1697
    %v1699 = vlaneseq
    %v1700 = vshrl.u32 %v1699, 7
    %v1701 = vsub.s32 0, %v1700
    %v1702 = vrot.slane %v1680, %v1701
    %v1703 = vadd.f32 %v1698, %v1702
    %v1704 = vld [vmem:[#allocation2 + $0xb8] sm:$0xf]
    %v1705 = vld [vmem:[#allocation2 + $0xbc] sm:$0xf]
    %v1706 = vld [vmem:[#allocation2 + $0xc0] sm:$0xf]
    %v1707 = vld [vmem:[#allocation2 + $0xc4] sm:$0xf]
    %v1708 = vld [vmem:[#allocation5 + $0x3d] sm:$0x1]
    %v1709 = vld [vmem:[#allocation2 + $0xc8] sm:$0xf]
    %v1710 = vld [vmem:[#allocation2 + $0xcc] sm:$0xf]
    %v1711 = vld [vmem:[#allocation2 + $0xd0] sm:$0xf]
    %v1712 = vld [vmem:[#allocation2 + $0xd4] sm:$0xf]
    %v1713 = vld [vmem:[#allocation5 + $0x3e] sm:$0x1]
    %v1714 = vpack.c.bf16 %v1703, %v1703
    %v1715 = vlaneseq
    %v1716 = vshrl.u32 %v1715, 7
    %v1717 = vsub.s32 0, %v1716
    %v1718 = vrot.slane %v1708, %v1717
    %v1723 = vunpack.c.l.b16 %v1704
    %v1724 = vunpack.c.l.b16 %v1705
    %v1725 = vunpack.c.l.b16 %v1706
    %v1726 = vunpack.c.l.b16 %v1707
    %v1727 = vpack.c.b16 %v1724, %v1723
    %v1728 = vpack.c.b16 %v1726, %v1725
    %v1732 = vsel %vm154, %v1714, 0
    %1734 = vmatprep.subr.bf16.mxu0 0
    %1735 = vmatpush1.bf16.msra.mxu0 %v1727
    %1736 = vmatprep.subr.bf16.mxu0 0
    %1737 = vmatpush1.bf16.msra.mxu0 %v1728
    %1738 = vmatprep.subr.bf16.mxu0 0
    %1739 = vmatpush1.bf16.msra.mxu0 0
    %1740 = vmatprep.subr.bf16.mxu0 0
    %1741 = vmatpush1.bf16.msra.mxu0 0
    %1742 = vmatprep.subr.bf16.mxu0 0
    %1743 = vmatpush1.bf16.msra.mxu0 0
    %1744 = vmatprep.subr.bf16.mxu0 0
    %1745 = vmatpush1.bf16.msra.mxu0 0
    %1746 = vmatprep.subr.bf16.mxu0 0
    %1747 = vmatpush1.bf16.msra.mxu0 0
    %1748 = vmatprep.subr.bf16.mxu0 0
    %1749 = vmatpush1.bf16.msra.mxu0 0
    %1750 = vmatprep.subr.bf16.mxu0 0
    %1751 = vmatpush1.bf16.msra.mxu0 0
    %1752 = vmatprep.subr.bf16.mxu0 0
    %1753 = vmatpush1.bf16.msra.mxu0 0
    %1754 = vmatprep.subr.bf16.mxu0 0
    %1755 = vmatpush1.bf16.msra.mxu0 0
    %1756 = vmatprep.subr.bf16.mxu0 0
    %1757 = vmatpush1.bf16.msra.mxu0 0
    %1758 = vmatprep.subr.bf16.mxu0 0
    %1759 = vmatpush1.bf16.msra.mxu0 0
    %1760 = vmatprep.subr.bf16.mxu0 0
    %1761 = vmatpush1.bf16.msra.mxu0 0
    %1762 = vmatprep.subr.bf16.mxu0 0
    %1763 = vmatpush1.bf16.msra.mxu0 0
    %1764 = vmatprep.subr.bf16.mxu0 0
    %1765 = vmatpush1.bf16.msra.mxu0 0
    %1766 = vmatprep.mubr.bf16.mxu0 0
    %1767 = vmatmul.mubr.bf16.gmra.mrb[0].mxu0 %v1732
    %v1768 = vpop.f32.mrb[0].mxu0
    %v1769 = vadd.f32 %v1718, %v1768
    %v1770 = vpop.f32.mrb[0].mxu0
    %v1771 = vpop.f32.mrb[0].mxu0
    %v1772 = vpop.f32.mrb[0].mxu0
    %1773 = vdwg.mxu0
    %v1774 = vpack.c.bf16 %v1769, %v1769
    %v1775 = vmul.f32 %v1769, %v53
    %v1776 = vpack.c.bf16 %v1775, %v1775
    %v1777 = vmul.f32 %v1769, %v203
    %v1778 = vpack.c.bf16 %v1777, %v1777
    %1780 = vrot.lane.b32.xlu0 %v1774, 96
    %v1781 = vpop.permute.xlu0 %1780
    %v1783 = vsel %vm154, %v1776, 0
    %v1786 = vsel %vm154, %v1781, 0
    %1788 = vmatprep.subr.bf16.mxu0 0
    %1789 = vmatpush1.bf16.xpose.msra.mxu0 %v1786
    %1790 = vmatprep.subr.bf16.mxu0 0
    %1791 = vmatpush1.bf16.xpose.msra.mxu0 0
    %1792 = vmatprep.subr.bf16.mxu0 0
    %1793 = vmatpush1.bf16.xpose.msra.mxu0 0
    %1794 = vmatprep.subr.bf16.mxu0 0
    %1795 = vmatpush1.bf16.xpose.msra.mxu0 0
    %1796 = vmatprep.subr.bf16.mxu0 0
    %1797 = vmatpush1.bf16.xpose.msra.mxu0 0
    %1798 = vmatprep.subr.bf16.mxu0 0
    %1799 = vmatpush1.bf16.xpose.msra.mxu0 0
    %1800 = vmatprep.subr.bf16.mxu0 0
    %1801 = vmatpush1.bf16.xpose.msra.mxu0 0
    %1802 = vmatprep.subr.bf16.mxu0 0
    %1803 = vmatpush1.bf16.xpose.msra.mxu0 0
    %1804 = vmatprep.subr.bf16.mxu0 0
    %1805 = vmatpush1.bf16.xpose.msra.mxu0 0
    %1806 = vmatprep.subr.bf16.mxu0 0
    %1807 = vmatpush1.bf16.xpose.msra.mxu0 0
    %1808 = vmatprep.subr.bf16.mxu0 0
    %1809 = vmatpush1.bf16.xpose.msra.mxu0 0
    %1810 = vmatprep.subr.bf16.mxu0 0
    %1811 = vmatpush1.bf16.xpose.msra.mxu0 0
    %1812 = vmatprep.subr.bf16.mxu0 0
    %1813 = vmatpush1.bf16.xpose.msra.mxu0 0
    %1814 = vmatprep.subr.bf16.mxu0 0
    %1815 = vmatpush1.bf16.xpose.msra.mxu0 0
    %1816 = vmatprep.subr.bf16.mxu0 0
    %1817 = vmatpush1.bf16.xpose.msra.mxu0 0
    %1818 = vmatprep.subr.bf16.mxu0 0
    %1819 = vmatpush1.bf16.xpose.msra.mxu0 0
    %1820 = vmatprep.mubr.bf16.mxu0 0
    %1821 = vmatmul.mubr.bf16.gmra.mrb[0].mxu0 %v1783
    %v1822 = vpop.f32.mrb[0].mxu0
    %v1823 = vadd.f32 0.0, %v1822
    %v1824 = vpop.f32.mrb[0].mxu0
    %v1825 = vpop.f32.mrb[0].mxu0
    %v1826 = vpop.f32.mrb[0].mxu0
    %1827 = vdwg.mxu0
    %v1828 = vmul.f32 %v1823, 0.35355338
    %v1829 = vadd.f32 %v1828, %v126
    %v1830 = vsel %vm258, %v1829, -inf
    %1831 = vmax.xlane.f32.xlu0 %v1830
    %v1832 = vpop.xlane.xlu0 %1831
    %v1833 = vsub.f32 %v1829, %v1832
    %v1834 = vmul.f32 %v1833, 1.442695
    %v1835 = vpow.pop %v1834
    %v1836 = vsel %vm258, %v1835, 0.0
    %1837 = vadd.xlane.f32.xlu0 %v1836
    %v1838 = vpop.xlane.xlu0 %1837
    %v1839 = vrcp.pop %v1838
    %v1840 = vmul.f32 %v1835, %v1839
    %v1841 = vpack.c.bf16 %v1840, %v1840
    %v1842 = vmul.f32 %v1769, %v58
    %v1843 = vpack.c.bf16 %v1842, %v1842
    %v1844 = vmul.f32 %v1769, %v275
    %v1845 = vpack.c.bf16 %v1844, %v1844
    %v1847 = vsel %vm154, %v1843, 0
    %1849 = vmatprep.subr.bf16.mxu0 0
    %1850 = vmatpush1.bf16.xpose.msra.mxu0 %v1786
    %1851 = vmatprep.subr.bf16.mxu0 0
    %1852 = vmatpush1.bf16.xpose.msra.mxu0 0
    %1853 = vmatprep.subr.bf16.mxu0 0
    %1854 = vmatpush1.bf16.xpose.msra.mxu0 0
    %1855 = vmatprep.subr.bf16.mxu0 0
    %1856 = vmatpush1.bf16.xpose.msra.mxu0 0
    %1857 = vmatprep.subr.bf16.mxu0 0
    %1858 = vmatpush1.bf16.xpose.msra.mxu0 0
    %1859 = vmatprep.subr.bf16.mxu0 0
    %1860 = vmatpush1.bf16.xpose.msra.mxu0 0
    %1861 = vmatprep.subr.bf16.mxu0 0
    %1862 = vmatpush1.bf16.xpose.msra.mxu0 0
    %1863 = vmatprep.subr.bf16.mxu0 0
    %1864 = vmatpush1.bf16.xpose.msra.mxu0 0
    %1865 = vmatprep.subr.bf16.mxu0 0
    %1866 = vmatpush1.bf16.xpose.msra.mxu0 0
    %1867 = vmatprep.subr.bf16.mxu0 0
    %1868 = vmatpush1.bf16.xpose.msra.mxu0 0
    %1869 = vmatprep.subr.bf16.mxu0 0
    %1870 = vmatpush1.bf16.xpose.msra.mxu0 0
    %1871 = vmatprep.subr.bf16.mxu0 0
    %1872 = vmatpush1.bf16.xpose.msra.mxu0 0
    %1873 = vmatprep.subr.bf16.mxu0 0
    %1874 = vmatpush1.bf16.xpose.msra.mxu0 0
    %1875 = vmatprep.subr.bf16.mxu0 0
    %1876 = vmatpush1.bf16.xpose.msra.mxu0 0
    %1877 = vmatprep.subr.bf16.mxu0 0
    %1878 = vmatpush1.bf16.xpose.msra.mxu0 0
    %1879 = vmatprep.subr.bf16.mxu0 0
    %1880 = vmatpush1.bf16.xpose.msra.mxu0 0
    %1881 = vmatprep.mubr.bf16.mxu0 0
    %1882 = vmatmul.mubr.bf16.gmra.mrb[0].mxu0 %v1847
    %v1883 = vpop.f32.mrb[0].mxu0
    %v1884 = vadd.f32 0.0, %v1883
    %v1885 = vpop.f32.mrb[0].mxu0
    %v1886 = vpop.f32.mrb[0].mxu0
    %v1887 = vpop.f32.mrb[0].mxu0
    %1888 = vdwg.mxu0
    %v1889 = vmul.f32 %v1884, 0.35355338
    %v1890 = vadd.f32 %v1889, %v126
    %v1891 = vsel %vm258, %v1890, -inf
    %1892 = vmax.xlane.f32.xlu0 %v1891
    %v1893 = vpop.xlane.xlu0 %1892
    %v1894 = vsub.f32 %v1890, %v1893
    %v1895 = vmul.f32 %v1894, 1.442695
    %v1896 = vpow.pop %v1895
    %v1897 = vsel %vm258, %v1896, 0.0
    %1898 = vadd.xlane.f32.xlu0 %v1897
    %v1899 = vpop.xlane.xlu0 %1898
    %v1900 = vrcp.pop %v1899
    %v1901 = vmul.f32 %v1896, %v1900
    %v1902 = vpack.c.bf16 %v1901, %v1901
    %1904 = vrot.lane.b32.xlu0 %v1845, 64
    %v1905 = vpop.permute.xlu0 %1904
    %v1907 = vsel %vm258, %v1902, 0
    %v1910 = vsel %vm342, %v1905, 0
    %1912 = vmatprep.subr.bf16.mxu0 0
    %1913 = vmatpush1.bf16.msra.mxu0 %v1910
    %1914 = vmatprep.subr.bf16.mxu0 0
    %1915 = vmatpush1.bf16.msra.mxu0 0
    %1916 = vmatprep.subr.bf16.mxu0 0
    %1917 = vmatpush1.bf16.msra.mxu0 0
    %1918 = vmatprep.subr.bf16.mxu0 0
    %1919 = vmatpush1.bf16.msra.mxu0 0
    %1920 = vmatprep.subr.bf16.mxu0 0
    %1921 = vmatpush1.bf16.msra.mxu0 0
    %1922 = vmatprep.subr.bf16.mxu0 0
    %1923 = vmatpush1.bf16.msra.mxu0 0
    %1924 = vmatprep.subr.bf16.mxu0 0
    %1925 = vmatpush1.bf16.msra.mxu0 0
    %1926 = vmatprep.subr.bf16.mxu0 0
    %1927 = vmatpush1.bf16.msra.mxu0 0
    %1928 = vmatprep.subr.bf16.mxu0 0
    %1929 = vmatpush1.bf16.msra.mxu0 0
    %1930 = vmatprep.subr.bf16.mxu0 0
    %1931 = vmatpush1.bf16.msra.mxu0 0
    %1932 = vmatprep.subr.bf16.mxu0 0
    %1933 = vmatpush1.bf16.msra.mxu0 0
    %1934 = vmatprep.subr.bf16.mxu0 0
    %1935 = vmatpush1.bf16.msra.mxu0 0
    %1936 = vmatprep.subr.bf16.mxu0 0
    %1937 = vmatpush1.bf16.msra.mxu0 0
    %1938 = vmatprep.subr.bf16.mxu0 0
    %1939 = vmatpush1.bf16.msra.mxu0 0
    %1940 = vmatprep.subr.bf16.mxu0 0
    %1941 = vmatpush1.bf16.msra.mxu0 0
    %1942 = vmatprep.subr.bf16.mxu0 0
    %1943 = vmatpush1.bf16.msra.mxu0 0
    %1944 = vmatprep.mubr.bf16.mxu0 0
    %1945 = vmatmul.mubr.bf16.gmra.mrb[0].mxu0 %v1907
    %v1946 = vpop.f32.mrb[0].mxu0
    %v1947 = vadd.f32 0.0, %v1946
    %v1948 = vpop.f32.mrb[0].mxu0
    %v1949 = vpop.f32.mrb[0].mxu0
    %v1950 = vpop.f32.mrb[0].mxu0
    %1951 = vdwg.mxu0
    %1953 = vrot.lane.b32.xlu0 %v1778, 64
    %v1954 = vpop.permute.xlu0 %1953
    %v1956 = vsel %vm258, %v1841, 0
    %v1959 = vsel %vm342, %v1954, 0
    %1961 = vmatprep.subr.bf16.mxu0 0
    %1962 = vmatpush1.bf16.msra.mxu0 %v1959
    %1963 = vmatprep.subr.bf16.mxu0 0
    %1964 = vmatpush1.bf16.msra.mxu0 0
    %1965 = vmatprep.subr.bf16.mxu0 0
    %1966 = vmatpush1.bf16.msra.mxu0 0
    %1967 = vmatprep.subr.bf16.mxu0 0
    %1968 = vmatpush1.bf16.msra.mxu0 0
    %1969 = vmatprep.subr.bf16.mxu0 0
    %1970 = vmatpush1.bf16.msra.mxu0 0
    %1971 = vmatprep.subr.bf16.mxu0 0
    %1972 = vmatpush1.bf16.msra.mxu0 0
    %1973 = vmatprep.subr.bf16.mxu0 0
    %1974 = vmatpush1.bf16.msra.mxu0 0
    %1975 = vmatprep.subr.bf16.mxu0 0
    %1976 = vmatpush1.bf16.msra.mxu0 0
    %1977 = vmatprep.subr.bf16.mxu0 0
    %1978 = vmatpush1.bf16.msra.mxu0 0
    %1979 = vmatprep.subr.bf16.mxu0 0
    %1980 = vmatpush1.bf16.msra.mxu0 0
    %1981 = vmatprep.subr.bf16.mxu0 0
    %1982 = vmatpush1.bf16.msra.mxu0 0
    %1983 = vmatprep.subr.bf16.mxu0 0
    %1984 = vmatpush1.bf16.msra.mxu0 0
    %1985 = vmatprep.subr.bf16.mxu0 0
    %1986 = vmatpush1.bf16.msra.mxu0 0
    %1987 = vmatprep.subr.bf16.mxu0 0
    %1988 = vmatpush1.bf16.msra.mxu0 0
    %1989 = vmatprep.subr.bf16.mxu0 0
    %1990 = vmatpush1.bf16.msra.mxu0 0
    %1991 = vmatprep.subr.bf16.mxu0 0
    %1992 = vmatpush1.bf16.msra.mxu0 0
    %1993 = vmatprep.mubr.bf16.mxu0 0
    %1994 = vmatmul.mubr.bf16.gmra.mrb[0].mxu0 %v1956
    %v1995 = vpop.f32.mrb[0].mxu0
    %v1996 = vadd.f32 %v1947, %v1995
    %v1997 = vpop.f32.mrb[0].mxu0
    %v1998 = vpop.f32.mrb[0].mxu0
    %v1999 = vpop.f32.mrb[0].mxu0
    %2000 = vdwg.mxu0
    %v2001 = vmul.f32 %v1769, %v63
    %v2002 = vpack.c.bf16 %v2001, %v2001
    %v2003 = vmul.f32 %v1769, %v439
    %v2004 = vpack.c.bf16 %v2003, %v2003
    %v2006 = vsel %vm154, %v2002, 0
    %2008 = vmatprep.subr.bf16.mxu0 0
    %2009 = vmatpush1.bf16.xpose.msra.mxu0 %v1786
    %2010 = vmatprep.subr.bf16.mxu0 0
    %2011 = vmatpush1.bf16.xpose.msra.mxu0 0
    %2012 = vmatprep.subr.bf16.mxu0 0
    %2013 = vmatpush1.bf16.xpose.msra.mxu0 0
    %2014 = vmatprep.subr.bf16.mxu0 0
    %2015 = vmatpush1.bf16.xpose.msra.mxu0 0
    %2016 = vmatprep.subr.bf16.mxu0 0
    %2017 = vmatpush1.bf16.xpose.msra.mxu0 0
    %2018 = vmatprep.subr.bf16.mxu0 0
    %2019 = vmatpush1.bf16.xpose.msra.mxu0 0
    %2020 = vmatprep.subr.bf16.mxu0 0
    %2021 = vmatpush1.bf16.xpose.msra.mxu0 0
    %2022 = vmatprep.subr.bf16.mxu0 0
    %2023 = vmatpush1.bf16.xpose.msra.mxu0 0
    %2024 = vmatprep.subr.bf16.mxu0 0
    %2025 = vmatpush1.bf16.xpose.msra.mxu0 0
    %2026 = vmatprep.subr.bf16.mxu0 0
    %2027 = vmatpush1.bf16.xpose.msra.mxu0 0
    %2028 = vmatprep.subr.bf16.mxu0 0
    %2029 = vmatpush1.bf16.xpose.msra.mxu0 0
    %2030 = vmatprep.subr.bf16.mxu0 0
    %2031 = vmatpush1.bf16.xpose.msra.mxu0 0
    %2032 = vmatprep.subr.bf16.mxu0 0
    %2033 = vmatpush1.bf16.xpose.msra.mxu0 0
    %2034 = vmatprep.subr.bf16.mxu0 0
    %2035 = vmatpush1.bf16.xpose.msra.mxu0 0
    %2036 = vmatprep.subr.bf16.mxu0 0
    %2037 = vmatpush1.bf16.xpose.msra.mxu0 0
    %2038 = vmatprep.subr.bf16.mxu0 0
    %2039 = vmatpush1.bf16.xpose.msra.mxu0 0
    %2040 = vmatprep.mubr.bf16.mxu0 0
    %2041 = vmatmul.mubr.bf16.gmra.mrb[0].mxu0 %v2006
    %v2042 = vpop.f32.mrb[0].mxu0
    %v2043 = vadd.f32 0.0, %v2042
    %v2044 = vpop.f32.mrb[0].mxu0
    %v2045 = vpop.f32.mrb[0].mxu0
    %v2046 = vpop.f32.mrb[0].mxu0
    %2047 = vdwg.mxu0
    %v2048 = vmul.f32 %v2043, 0.35355338
    %v2049 = vadd.f32 %v2048, %v126
    %v2050 = vsel %vm258, %v2049, -inf
    %2051 = vmax.xlane.f32.xlu0 %v2050
    %v2052 = vpop.xlane.xlu0 %2051
    %v2053 = vsub.f32 %v2049, %v2052
    %v2054 = vmul.f32 %v2053, 1.442695
    %v2055 = vpow.pop %v2054
    %v2056 = vsel %vm258, %v2055, 0.0
    %2057 = vadd.xlane.f32.xlu0 %v2056
    %v2058 = vpop.xlane.xlu0 %2057
    %v2059 = vrcp.pop %v2058
    %v2060 = vmul.f32 %v2055, %v2059
    %v2061 = vpack.c.bf16 %v2060, %v2060
    %2063 = vrot.lane.b32.xlu0 %v2004, 64
    %v2064 = vpop.permute.xlu0 %2063
    %v2066 = vsel %vm258, %v2061, 0
    %v2069 = vsel %vm342, %v2064, 0
    %2071 = vmatprep.subr.bf16.mxu0 0
    %2072 = vmatpush1.bf16.msra.mxu0 %v2069
    %2073 = vmatprep.subr.bf16.mxu0 0
    %2074 = vmatpush1.bf16.msra.mxu0 0
    %2075 = vmatprep.subr.bf16.mxu0 0
    %2076 = vmatpush1.bf16.msra.mxu0 0
    %2077 = vmatprep.subr.bf16.mxu0 0
    %2078 = vmatpush1.bf16.msra.mxu0 0
    %2079 = vmatprep.subr.bf16.mxu0 0
    %2080 = vmatpush1.bf16.msra.mxu0 0
    %2081 = vmatprep.subr.bf16.mxu0 0
    %2082 = vmatpush1.bf16.msra.mxu0 0
    %2083 = vmatprep.subr.bf16.mxu0 0
    %2084 = vmatpush1.bf16.msra.mxu0 0
    %2085 = vmatprep.subr.bf16.mxu0 0
    %2086 = vmatpush1.bf16.msra.mxu0 0
    %2087 = vmatprep.subr.bf16.mxu0 0
    %2088 = vmatpush1.bf16.msra.mxu0 0
    %2089 = vmatprep.subr.bf16.mxu0 0
    %2090 = vmatpush1.bf16.msra.mxu0 0
    %2091 = vmatprep.subr.bf16.mxu0 0
    %2092 = vmatpush1.bf16.msra.mxu0 0
    %2093 = vmatprep.subr.bf16.mxu0 0
    %2094 = vmatpush1.bf16.msra.mxu0 0
    %2095 = vmatprep.subr.bf16.mxu0 0
    %2096 = vmatpush1.bf16.msra.mxu0 0
    %2097 = vmatprep.subr.bf16.mxu0 0
    %2098 = vmatpush1.bf16.msra.mxu0 0
    %2099 = vmatprep.subr.bf16.mxu0 0
    %2100 = vmatpush1.bf16.msra.mxu0 0
    %2101 = vmatprep.subr.bf16.mxu0 0
    %2102 = vmatpush1.bf16.msra.mxu0 0
    %2103 = vmatprep.mubr.bf16.mxu0 0
    %2104 = vmatmul.mubr.bf16.gmra.mrb[0].mxu0 %v2066
    %v2105 = vpop.f32.mrb[0].mxu0
    %v2106 = vadd.f32 0.0, %v2105
    %v2107 = vpop.f32.mrb[0].mxu0
    %v2108 = vpop.f32.mrb[0].mxu0
    %v2109 = vpop.f32.mrb[0].mxu0
    %2110 = vdwg.mxu0
    %v2111 = vadd.f32 %v1996, %v2106
    %v2112 = vmul.f32 %v1769, %v68
    %v2113 = vpack.c.bf16 %v2112, %v2112
    %v2114 = vmul.f32 %v1769, %v554
    %v2115 = vpack.c.bf16 %v2114, %v2114
    %v2117 = vsel %vm154, %v2113, 0
    %2119 = vmatprep.subr.bf16.mxu0 0
    %2120 = vmatpush1.bf16.xpose.msra.mxu0 %v1786
    %2121 = vmatprep.subr.bf16.mxu0 0
    %2122 = vmatpush1.bf16.xpose.msra.mxu0 0
    %2123 = vmatprep.subr.bf16.mxu0 0
    %2124 = vmatpush1.bf16.xpose.msra.mxu0 0
    %2125 = vmatprep.subr.bf16.mxu0 0
    %2126 = vmatpush1.bf16.xpose.msra.mxu0 0
    %2127 = vmatprep.subr.bf16.mxu0 0
    %2128 = vmatpush1.bf16.xpose.msra.mxu0 0
    %2129 = vmatprep.subr.bf16.mxu0 0
    %2130 = vmatpush1.bf16.xpose.msra.mxu0 0
    %2131 = vmatprep.subr.bf16.mxu0 0
    %2132 = vmatpush1.bf16.xpose.msra.mxu0 0
    %2133 = vmatprep.subr.bf16.mxu0 0
    %2134 = vmatpush1.bf16.xpose.msra.mxu0 0
    %2135 = vmatprep.subr.bf16.mxu0 0
    %2136 = vmatpush1.bf16.xpose.msra.mxu0 0
    %2137 = vmatprep.subr.bf16.mxu0 0
    %2138 = vmatpush1.bf16.xpose.msra.mxu0 0
    %2139 = vmatprep.subr.bf16.mxu0 0
    %2140 = vmatpush1.bf16.xpose.msra.mxu0 0
    %2141 = vmatprep.subr.bf16.mxu0 0
    %2142 = vmatpush1.bf16.xpose.msra.mxu0 0
    %2143 = vmatprep.subr.bf16.mxu0 0
    %2144 = vmatpush1.bf16.xpose.msra.mxu0 0
    %2145 = vmatprep.subr.bf16.mxu0 0
    %2146 = vmatpush1.bf16.xpose.msra.mxu0 0
    %2147 = vmatprep.subr.bf16.mxu0 0
    %2148 = vmatpush1.bf16.xpose.msra.mxu0 0
    %2149 = vmatprep.subr.bf16.mxu0 0
    %2150 = vmatpush1.bf16.xpose.msra.mxu0 0
    %2151 = vmatprep.mubr.bf16.mxu0 0
    %2152 = vmatmul.mubr.bf16.gmra.mrb[0].mxu0 %v2117
    %v2153 = vpop.f32.mrb[0].mxu0
    %v2154 = vadd.f32 0.0, %v2153
    %v2155 = vpop.f32.mrb[0].mxu0
    %v2156 = vpop.f32.mrb[0].mxu0
    %v2157 = vpop.f32.mrb[0].mxu0
    %2158 = vdwg.mxu0
    %v2159 = vmul.f32 %v2154, 0.35355338
    %v2160 = vadd.f32 %v2159, %v126
    %v2161 = vsel %vm258, %v2160, -inf
    %2162 = vmax.xlane.f32.xlu0 %v2161
    %v2163 = vpop.xlane.xlu0 %2162
    %v2164 = vsub.f32 %v2160, %v2163
    %v2165 = vmul.f32 %v2164, 1.442695
    %v2166 = vpow.pop %v2165
    %v2167 = vsel %vm258, %v2166, 0.0
    %2168 = vadd.xlane.f32.xlu0 %v2167
    %v2169 = vpop.xlane.xlu0 %2168
    %v2170 = vrcp.pop %v2169
    %v2171 = vmul.f32 %v2166, %v2170
    %v2172 = vpack.c.bf16 %v2171, %v2171
    %2174 = vrot.lane.b32.xlu0 %v2115, 64
    %v2175 = vpop.permute.xlu0 %2174
    %v2177 = vsel %vm258, %v2172, 0
    %v2180 = vsel %vm342, %v2175, 0
    %2182 = vmatprep.subr.bf16.mxu0 0
    %2183 = vmatpush1.bf16.msra.mxu0 %v2180
    %2184 = vmatprep.subr.bf16.mxu0 0
    %2185 = vmatpush1.bf16.msra.mxu0 0
    %2186 = vmatprep.subr.bf16.mxu0 0
    %2187 = vmatpush1.bf16.msra.mxu0 0
    %2188 = vmatprep.subr.bf16.mxu0 0
    %2189 = vmatpush1.bf16.msra.mxu0 0
    %2190 = vmatprep.subr.bf16.mxu0 0
    %2191 = vmatpush1.bf16.msra.mxu0 0
    %2192 = vmatprep.subr.bf16.mxu0 0
    %2193 = vmatpush1.bf16.msra.mxu0 0
    %2194 = vmatprep.subr.bf16.mxu0 0
    %2195 = vmatpush1.bf16.msra.mxu0 0
    %2196 = vmatprep.subr.bf16.mxu0 0
    %2197 = vmatpush1.bf16.msra.mxu0 0
    %2198 = vmatprep.subr.bf16.mxu0 0
    %2199 = vmatpush1.bf16.msra.mxu0 0
    %2200 = vmatprep.subr.bf16.mxu0 0
    %2201 = vmatpush1.bf16.msra.mxu0 0
    %2202 = vmatprep.subr.bf16.mxu0 0
    %2203 = vmatpush1.bf16.msra.mxu0 0
    %2204 = vmatprep.subr.bf16.mxu0 0
    %2205 = vmatpush1.bf16.msra.mxu0 0
    %2206 = vmatprep.subr.bf16.mxu0 0
    %2207 = vmatpush1.bf16.msra.mxu0 0
    %2208 = vmatprep.subr.bf16.mxu0 0
    %2209 = vmatpush1.bf16.msra.mxu0 0
    %2210 = vmatprep.subr.bf16.mxu0 0
    %2211 = vmatpush1.bf16.msra.mxu0 0
    %2212 = vmatprep.subr.bf16.mxu0 0
    %2213 = vmatpush1.bf16.msra.mxu0 0
    %2214 = vmatprep.mubr.bf16.mxu0 0
    %2215 = vmatmul.mubr.bf16.gmra.mrb[0].mxu0 %v2177
    %v2216 = vpop.f32.mrb[0].mxu0
    %v2217 = vadd.f32 0.0, %v2216
    %v2218 = vpop.f32.mrb[0].mxu0
    %v2219 = vpop.f32.mrb[0].mxu0
    %v2220 = vpop.f32.mrb[0].mxu0
    %2221 = vdwg.mxu0
    %v2222 = vadd.f32 %v2111, %v2217
    %v2223 = vpack.c.bf16 %v2222, %v2222
    %v2224 = vlaneseq
    %v2225 = vshrl.u32 %v2224, 7
    %v2226 = vsub.s32 0, %v2225
    %v2227 = vrot.slane %v1713, %v2226
    %v2232 = vunpack.c.l.b16 %v1709
    %v2233 = vunpack.c.l.b16 %v1710
    %v2234 = vunpack.c.l.b16 %v1711
    %v2235 = vunpack.c.l.b16 %v1712
    %v2236 = vpack.c.b16 %v2233, %v2232
    %v2237 = vpack.c.b16 %v2235, %v2234
    %v2241 = vsel %vm154, %v2223, 0
    %2243 = vmatprep.subr.bf16.mxu0 0
    %2244 = vmatpush1.bf16.msra.mxu0 %v2236
    %2245 = vmatprep.subr.bf16.mxu0 0
    %2246 = vmatpush1.bf16.msra.mxu0 %v2237
    %2247 = vmatprep.subr.bf16.mxu0 0
    %2248 = vmatpush1.bf16.msra.mxu0 0
    %2249 = vmatprep.subr.bf16.mxu0 0
    %2250 = vmatpush1.bf16.msra.mxu0 0
    %2251 = vmatprep.subr.bf16.mxu0 0
    %2252 = vmatpush1.bf16.msra.mxu0 0
    %2253 = vmatprep.subr.bf16.mxu0 0
    %2254 = vmatpush1.bf16.msra.mxu0 0
    %2255 = vmatprep.subr.bf16.mxu0 0
    %2256 = vmatpush1.bf16.msra.mxu0 0
    %2257 = vmatprep.subr.bf16.mxu0 0
    %2258 = vmatpush1.bf16.msra.mxu0 0
    %2259 = vmatprep.subr.bf16.mxu0 0
    %2260 = vmatpush1.bf16.msra.mxu0 0
    %2261 = vmatprep.subr.bf16.mxu0 0
    %2262 = vmatpush1.bf16.msra.mxu0 0
    %2263 = vmatprep.subr.bf16.mxu0 0
    %2264 = vmatpush1.bf16.msra.mxu0 0
    %2265 = vmatprep.subr.bf16.mxu0 0
    %2266 = vmatpush1.bf16.msra.mxu0 0
    %2267 = vmatprep.subr.bf16.mxu0 0
    %2268 = vmatpush1.bf16.msra.mxu0 0
    %2269 = vmatprep.subr.bf16.mxu0 0
    %2270 = vmatpush1.bf16.msra.mxu0 0
    %2271 = vmatprep.subr.bf16.mxu0 0
    %2272 = vmatpush1.bf16.msra.mxu0 0
    %2273 = vmatprep.subr.bf16.mxu0 0
    %2274 = vmatpush1.bf16.msra.mxu0 0
    %2275 = vmatprep.mubr.bf16.mxu0 0
    %2276 = vmatmul.mubr.bf16.gmra.mrb[0].mxu0 %v2241
    %v2277 = vpop.f32.mrb[0].mxu0
    %v2278 = vadd.f32 %v2227, %v2277
    %v2279 = vpop.f32.mrb[0].mxu0
    %v2280 = vpop.f32.mrb[0].mxu0
    %v2281 = vpop.f32.mrb[0].mxu0
    %2282 = vdwg.mxu0
    %v2283 = vadd.f32 %v1703, %v2278
    %v2284 = vld [vmem:[#allocation5 + $0x3f] sm:$0x1]
    %v2285 = vld [vmem:[#allocation5 + $0x40] sm:$0x1]
    %v2286 = vsel %vm154, %v2283, 0.0
    %2287 = vadd.xlane.f32.xlu0 %v2286
    %v2288 = vpop.xlane.xlu0 %2287
    %v2289 = vmul.f32 %v2288, %v731
    %v2290 = vsub.f32 %v2283, %v2289
    %v2291 = vmul.f32 %v2290, %v2290
    %v2292 = vsel %vm154, %v2291, 0.0
    %2293 = vadd.xlane.f32.xlu0 %v2292
    %v2294 = vpop.xlane.xlu0 %2293
    %v2295 = vmul.f32 %v2294, %v731
    %v2296 = vadd.f32 %v2295, 1e-05
    %v2297 = vrsqrt.pop %v2296
    %v2298 = vmul.f32 %v2290, %v2297
    %v2299 = vlaneseq
    %v2300 = vshrl.u32 %v2299, 7
    %v2301 = vsub.s32 0, %v2300
    %v2302 = vrot.slane %v2284, %v2301
    %v2303 = vmul.f32 %v2298, %v2302
    %v2304 = vlaneseq
    %v2305 = vshrl.u32 %v2304, 7
    %v2306 = vsub.s32 0, %v2305
    %v2307 = vrot.slane %v2285, %v2306
    %v2308 = vadd.f32 %v2303, %v2307
    %v2309 = vld [vmem:[#allocation2 + $0xd8] sm:$0xf]
    %v2310 = vld [vmem:[#allocation2 + $0xdc] sm:$0xf]
    %v2311 = vld [vmem:[#allocation2 + $0xe0] sm:$0xf]
    %v2312 = vld [vmem:[#allocation2 + $0xe4] sm:$0xf]
    %v2313 = vld [vmem:[#allocation5 + $0x41] sm:$0x1]
    %v2314 = vld [vmem:[#allocation2 + $0xe8] sm:$0xf]
    %v2315 = vld [vmem:[#allocation2 + $0xec] sm:$0xf]
    %v2316 = vld [vmem:[#allocation2 + $0xf0] sm:$0xf]
    %v2317 = vld [vmem:[#allocation2 + $0xf4] sm:$0xf]
    %v2318 = vld [vmem:[#allocation2 + $0xf8] sm:$0xf]
    %v2319 = vld [vmem:[#allocation2 + $0xfc] sm:$0xf]
    %v2320 = vld [vmem:[#allocation2 + $0x100] sm:$0xf]
    %v2321 = vld [vmem:[#allocation2 + $0x104] sm:$0xf]
    %v2322 = vld [vmem:[#allocation5 + $0x42] sm:$0x1]
    %v2323 = vpack.c.bf16 %v2308, %v2308
    %v2324 = vlaneseq
    %v2325 = vshrl.u32 %v2324, 7
    %v2326 = vsub.s32 0, %v2325
    %v2327 = vrot.slane %v2313, %v2326
    %v2332 = vunpack.c.l.b16 %v2309
    %v2333 = vunpack.c.l.b16 %v2310
    %v2334 = vunpack.c.l.b16 %v2311
    %v2335 = vunpack.c.l.b16 %v2312
    %v2336 = vpack.c.b16 %v2333, %v2332
    %v2337 = vpack.c.b16 %v2335, %v2334
    %v2341 = vsel %vm154, %v2323, 0
    %2343 = vmatprep.subr.bf16.mxu0 0
    %2344 = vmatpush1.bf16.msra.mxu0 %v2336
    %2345 = vmatprep.subr.bf16.mxu0 0
    %2346 = vmatpush1.bf16.msra.mxu0 %v2337
    %2347 = vmatprep.subr.bf16.mxu0 0
    %2348 = vmatpush1.bf16.msra.mxu0 0
    %2349 = vmatprep.subr.bf16.mxu0 0
    %2350 = vmatpush1.bf16.msra.mxu0 0
    %2351 = vmatprep.subr.bf16.mxu0 0
    %2352 = vmatpush1.bf16.msra.mxu0 0
    %2353 = vmatprep.subr.bf16.mxu0 0
    %2354 = vmatpush1.bf16.msra.mxu0 0
    %2355 = vmatprep.subr.bf16.mxu0 0
    %2356 = vmatpush1.bf16.msra.mxu0 0
    %2357 = vmatprep.subr.bf16.mxu0 0
    %2358 = vmatpush1.bf16.msra.mxu0 0
    %2359 = vmatprep.subr.bf16.mxu0 0
    %2360 = vmatpush1.bf16.msra.mxu0 0
    %2361 = vmatprep.subr.bf16.mxu0 0
    %2362 = vmatpush1.bf16.msra.mxu0 0
    %2363 = vmatprep.subr.bf16.mxu0 0
    %2364 = vmatpush1.bf16.msra.mxu0 0
    %2365 = vmatprep.subr.bf16.mxu0 0
    %2366 = vmatpush1.bf16.msra.mxu0 0
    %2367 = vmatprep.subr.bf16.mxu0 0
    %2368 = vmatpush1.bf16.msra.mxu0 0
    %2369 = vmatprep.subr.bf16.mxu0 0
    %2370 = vmatpush1.bf16.msra.mxu0 0
    %2371 = vmatprep.subr.bf16.mxu0 0
    %2372 = vmatpush1.bf16.msra.mxu0 0
    %2373 = vmatprep.subr.bf16.mxu0 0
    %2374 = vmatpush1.bf16.msra.mxu0 0
    %2375 = vmatprep.mubr.bf16.mxu0 0
    %2376 = vmatmul.mubr.bf16.gmra.mrb[0].mxu0 %v2341
    %v2377 = vpop.f32.mrb[0].mxu0
    %v2378 = vadd.f32 %v2327, %v2377
    %v2379 = vpop.f32.mrb[0].mxu0
    %v2380 = vpop.f32.mrb[0].mxu0
    %v2381 = vpop.f32.mrb[0].mxu0
    %2382 = vdwg.mxu0
    %v2383 = vmax.f32 %v2378, 0.0
    %v2384 = vpack.c.bf16 %v2383, %v2383
    %v2385 = vlaneseq
    %v2386 = vshrl.u32 %v2385, 7
    %v2387 = vsub.s32 0, %v2386
    %v2388 = vrot.slane %v2322, %v2387
    %v2397 = vunpack.c.l.b16 %v2314
    %v2398 = vunpack.c.l.b16 %v2315
    %v2399 = vunpack.c.l.b16 %v2316
    %v2400 = vunpack.c.l.b16 %v2317
    %v2401 = vunpack.c.l.b16 %v2318
    %v2402 = vunpack.c.l.b16 %v2319
    %v2403 = vunpack.c.l.b16 %v2320
    %v2404 = vunpack.c.l.b16 %v2321
    %v2405 = vpack.c.b16 %v2398, %v2397
    %v2406 = vpack.c.b16 %v2400, %v2399
    %v2407 = vpack.c.b16 %v2402, %v2401
    %v2408 = vpack.c.b16 %v2404, %v2403
    %v2414 = vsel %vm856, %v2384, 0
    %2416 = vmatprep.subr.bf16.mxu0 0
    %2417 = vmatpush1.bf16.msra.mxu0 %v2405
    %2418 = vmatprep.subr.bf16.mxu0 0
    %2419 = vmatpush1.bf16.msra.mxu0 %v2406
    %2420 = vmatprep.subr.bf16.mxu0 0
    %2421 = vmatpush1.bf16.msra.mxu0 %v2407
    %2422 = vmatprep.subr.bf16.mxu0 0
    %2423 = vmatpush1.bf16.msra.mxu0 %v2408
    %2424 = vmatprep.subr.bf16.mxu0 0
    %2425 = vmatpush1.bf16.msra.mxu0 0
    %2426 = vmatprep.subr.bf16.mxu0 0
    %2427 = vmatpush1.bf16.msra.mxu0 0
    %2428 = vmatprep.subr.bf16.mxu0 0
    %2429 = vmatpush1.bf16.msra.mxu0 0
    %2430 = vmatprep.subr.bf16.mxu0 0
    %2431 = vmatpush1.bf16.msra.mxu0 0
    %2432 = vmatprep.subr.bf16.mxu0 0
    %2433 = vmatpush1.bf16.msra.mxu0 0
    %2434 = vmatprep.subr.bf16.mxu0 0
    %2435 = vmatpush1.bf16.msra.mxu0 0
    %2436 = vmatprep.subr.bf16.mxu0 0
    %2437 = vmatpush1.bf16.msra.mxu0 0
    %2438 = vmatprep.subr.bf16.mxu0 0
    %2439 = vmatpush1.bf16.msra.mxu0 0
    %2440 = vmatprep.subr.bf16.mxu0 0
    %2441 = vmatpush1.bf16.msra.mxu0 0
    %2442 = vmatprep.subr.bf16.mxu0 0
    %2443 = vmatpush1.bf16.msra.mxu0 0
    %2444 = vmatprep.subr.bf16.mxu0 0
    %2445 = vmatpush1.bf16.msra.mxu0 0
    %2446 = vmatprep.subr.bf16.mxu0 0
    %2447 = vmatpush1.bf16.msra.mxu0 0
    %2448 = vmatprep.mubr.bf16.mxu0 0
    %2449 = vmatmul.mubr.bf16.gmra.mrb[0].mxu0 %v2414
    %v2450 = vpop.f32.mrb[0].mxu0
    %v2451 = vadd.f32 %v2388, %v2450
    %v2452 = vpop.f32.mrb[0].mxu0
    %v2453 = vpop.f32.mrb[0].mxu0
    %v2454 = vpop.f32.mrb[0].mxu0
    %2455 = vdwg.mxu0
    %v2456 = vadd.f32 %v2308, %v2451
    %v2457 = vld [vmem:[#allocation5 + $0x43] sm:$0x1]
    %v2458 = vld [vmem:[#allocation5 + $0x44] sm:$0x1]
    %v2459 = vsel %vm154, %v2456, 0.0
    %2460 = vadd.xlane.f32.xlu0 %v2459
    %v2461 = vpop.xlane.xlu0 %2460
    %v2462 = vmul.f32 %v2461, %v731
    %v2463 = vsub.f32 %v2456, %v2462
    %v2464 = vmul.f32 %v2463, %v2463
    %v2465 = vsel %vm154, %v2464, 0.0
    %2466 = vadd.xlane.f32.xlu0 %v2465
    %v2467 = vpop.xlane.xlu0 %2466
    %v2468 = vmul.f32 %v2467, %v731
    %v2469 = vadd.f32 %v2468, 1e-05
    %v2470 = vrsqrt.pop %v2469
    %v2471 = vmul.f32 %v2463, %v2470
    %v2472 = vlaneseq
    %v2473 = vshrl.u32 %v2472, 7
    %v2474 = vsub.s32 0, %v2473
    %v2475 = vrot.slane %v2457, %v2474
    %v2476 = vmul.f32 %v2471, %v2475
    %v2477 = vlaneseq
    %v2478 = vshrl.u32 %v2477, 7
    %v2479 = vsub.s32 0, %v2478
    %v2480 = vrot.slane %v2458, %v2479
    %v2481 = vadd.f32 %v2476, %v2480
    %v2482 = vld [vmem:[#allocation5 + $0x29] sm:$0x1]
    %v2483 = vld [vmem:[#allocation5 + $0x2a] sm:$0x1]
    %v2484 = vsel %vm154, %v2481, 0.0
    %2485 = vadd.xlane.f32.xlu0 %v2484
    %v2486 = vpop.xlane.xlu0 %2485
    %v2487 = vmul.f32 %v2486, %v731
    %v2488 = vsub.f32 %v2481, %v2487
    %v2489 = vmul.f32 %v2488, %v2488
    %v2490 = vsel %vm154, %v2489, 0.0
    %2491 = vadd.xlane.f32.xlu0 %v2490
    %v2492 = vpop.xlane.xlu0 %2491
    %v2493 = vmul.f32 %v2492, %v731
    %v2494 = vadd.f32 %v2493, 1e-05
    %v2495 = vrsqrt.pop %v2494
    %v2496 = vmul.f32 %v2488, %v2495
    %v2497 = vlaneseq
    %v2498 = vshrl.u32 %v2497, 7
    %v2499 = vsub.s32 0, %v2498
    %v2500 = vrot.slane %v2482, %v2499
    %v2501 = vmul.f32 %v2496, %v2500
    %v2502 = vlaneseq
    %v2503 = vshrl.u32 %v2502, 7
    %v2504 = vsub.s32 0, %v2503
    %v2505 = vrot.slane %v2483, %v2504
    %v2506 = vadd.f32 %v2501, %v2505
    %v2507 = vld [vmem:[#allocation5 + $0x18] sm:$0xff]
    %v2508 = vld [vmem:[#allocation5 + $0x20] sm:$0xff]
    %v2509 = vld [vmem:[#allocation2 + $0x108] sm:$0xf]
    %v2510 = vld [vmem:[#allocation2 + $0x10c] sm:$0xf]
    %v2511 = vld [vmem:[#allocation2 + $0x110] sm:$0xf]
    %v2512 = vld [vmem:[#allocation2 + $0x114] sm:$0xf]
    %v2513 = vld [vmem:[#allocation5 + $0x45] sm:$0x1]
    %v2514 = vld [vmem:[#allocation2 + $0x118] sm:$0xf]
    %v2515 = vld [vmem:[#allocation2 + $0x11c] sm:$0xf]
    %v2516 = vld [vmem:[#allocation2 + $0x120] sm:$0xf]
    %v2517 = vld [vmem:[#allocation2 + $0x124] sm:$0xf]
    %v2518 = vld [vmem:[#allocation5 + $0x46] sm:$0x1]
    %v2519 = vpack.c.bf16 %v121, %v121
    %v2520 = vlaneseq
    %v2521 = vshrl.u32 %v2520, 7
    %v2522 = vsub.s32 0, %v2521
    %v2523 = vrot.slane %v2513, %v2522
    %v2528 = vunpack.c.l.b16 %v2509
    %v2529 = vunpack.c.l.b16 %v2510
    %v2530 = vunpack.c.l.b16 %v2511
    %v2531 = vunpack.c.l.b16 %v2512
    %v2532 = vpack.c.b16 %v2529, %v2528
    %v2533 = vpack.c.b16 %v2531, %v2530
    %v2537 = vsel %vm154, %v2519, 0
    %2539 = vmatprep.subr.bf16.mxu0 0
    %2540 = vmatpush1.bf16.msra.mxu0 %v2532
    %2541 = vmatprep.subr.bf16.mxu0 0
    %2542 = vmatpush1.bf16.msra.mxu0 %v2533
    %2543 = vmatprep.subr.bf16.mxu0 0
    %2544 = vmatpush1.bf16.msra.mxu0 0
    %2545 = vmatprep.subr.bf16.mxu0 0
    %2546 = vmatpush1.bf16.msra.mxu0 0
    %2547 = vmatprep.subr.bf16.mxu0 0
    %2548 = vmatpush1.bf16.msra.mxu0 0
    %2549 = vmatprep.subr.bf16.mxu0 0
    %2550 = vmatpush1.bf16.msra.mxu0 0
    %2551 = vmatprep.subr.bf16.mxu0 0
    %2552 = vmatpush1.bf16.msra.mxu0 0
    %2553 = vmatprep.subr.bf16.mxu0 0
    %2554 = vmatpush1.bf16.msra.mxu0 0
    %2555 = vmatprep.subr.bf16.mxu0 0
    %2556 = vmatpush1.bf16.msra.mxu0 0
    %2557 = vmatprep.subr.bf16.mxu0 0
    %2558 = vmatpush1.bf16.msra.mxu0 0
    %2559 = vmatprep.subr.bf16.mxu0 0
    %2560 = vmatpush1.bf16.msra.mxu0 0
    %2561 = vmatprep.subr.bf16.mxu0 0
    %2562 = vmatpush1.bf16.msra.mxu0 0
    %2563 = vmatprep.subr.bf16.mxu0 0
    %2564 = vmatpush1.bf16.msra.mxu0 0
    %2565 = vmatprep.subr.bf16.mxu0 0
    %2566 = vmatpush1.bf16.msra.mxu0 0
    %2567 = vmatprep.subr.bf16.mxu0 0
    %2568 = vmatpush1.bf16.msra.mxu0 0
    %2569 = vmatprep.subr.bf16.mxu0 0
    %2570 = vmatpush1.bf16.msra.mxu0 0
    %2571 = vmatprep.mubr.bf16.mxu0 0
    %2572 = vmatmul.mubr.bf16.gmra.mrb[0].mxu0 %v2537
    %v2573 = vpop.f32.mrb[0].mxu0
    %v2574 = vadd.f32 %v2523, %v2573
    %v2575 = vpop.f32.mrb[0].mxu0
    %v2576 = vpop.f32.mrb[0].mxu0
    %v2577 = vpop.f32.mrb[0].mxu0
    %2578 = vdwg.mxu0
    %v2579 = vpack.c.bf16 %v2574, %v2574
    %v2580 = vmul.f32 %v2574, %v53
    %v2581 = vpack.c.bf16 %v2580, %v2580
    %v2582 = vmul.f32 %v2574, %v203
    %v2583 = vpack.c.bf16 %v2582, %v2582
    %2585 = vrot.lane.b32.xlu0 %v2579, 96
    %v2586 = vpop.permute.xlu0 %2585
    %v2588 = vsel %vm154, %v2581, 0
    %v2591 = vsel %vm154, %v2586, 0
    %2593 = vmatprep.subr.bf16.mxu0 0
    %2594 = vmatpush1.bf16.xpose.msra.mxu0 %v2591
    %2595 = vmatprep.subr.bf16.mxu0 0
    %2596 = vmatpush1.bf16.xpose.msra.mxu0 0
    %2597 = vmatprep.subr.bf16.mxu0 0
    %2598 = vmatpush1.bf16.xpose.msra.mxu0 0
    %2599 = vmatprep.subr.bf16.mxu0 0
    %2600 = vmatpush1.bf16.xpose.msra.mxu0 0
    %2601 = vmatprep.subr.bf16.mxu0 0
    %2602 = vmatpush1.bf16.xpose.msra.mxu0 0
    %2603 = vmatprep.subr.bf16.mxu0 0
    %2604 = vmatpush1.bf16.xpose.msra.mxu0 0
    %2605 = vmatprep.subr.bf16.mxu0 0
    %2606 = vmatpush1.bf16.xpose.msra.mxu0 0
    %2607 = vmatprep.subr.bf16.mxu0 0
    %2608 = vmatpush1.bf16.xpose.msra.mxu0 0
    %2609 = vmatprep.subr.bf16.mxu0 0
    %2610 = vmatpush1.bf16.xpose.msra.mxu0 0
    %2611 = vmatprep.subr.bf16.mxu0 0
    %2612 = vmatpush1.bf16.xpose.msra.mxu0 0
    %2613 = vmatprep.subr.bf16.mxu0 0
    %2614 = vmatpush1.bf16.xpose.msra.mxu0 0
    %2615 = vmatprep.subr.bf16.mxu0 0
    %2616 = vmatpush1.bf16.xpose.msra.mxu0 0
    %2617 = vmatprep.subr.bf16.mxu0 0
    %2618 = vmatpush1.bf16.xpose.msra.mxu0 0
    %2619 = vmatprep.subr.bf16.mxu0 0
    %2620 = vmatpush1.bf16.xpose.msra.mxu0 0
    %2621 = vmatprep.subr.bf16.mxu0 0
    %2622 = vmatpush1.bf16.xpose.msra.mxu0 0
    %2623 = vmatprep.subr.bf16.mxu0 0
    %2624 = vmatpush1.bf16.xpose.msra.mxu0 0
    %2625 = vmatprep.mubr.bf16.mxu0 0
    %2626 = vmatmul.mubr.bf16.gmra.mrb[0].mxu0 %v2588
    %v2627 = vpop.f32.mrb[0].mxu0
    %v2628 = vadd.f32 0.0, %v2627
    %v2629 = vpop.f32.mrb[0].mxu0
    %v2630 = vpop.f32.mrb[0].mxu0
    %v2631 = vpop.f32.mrb[0].mxu0
    %2632 = vdwg.mxu0
    %v2633 = vmul.f32 %v2628, 0.35355338
    %v2634 = vadd.f32 %v2633, %v2507
    %v2635 = vsel %vm258, %v2634, -inf
    %2636 = vmax.xlane.f32.xlu0 %v2635
    %v2637 = vpop.xlane.xlu0 %2636
    %v2638 = vsub.f32 %v2634, %v2637
    %v2639 = vmul.f32 %v2638, 1.442695
    %v2640 = vpow.pop %v2639
    %v2641 = vsel %vm258, %v2640, 0.0
    %2642 = vadd.xlane.f32.xlu0 %v2641
    %v2643 = vpop.xlane.xlu0 %2642
    %v2644 = vrcp.pop %v2643
    %v2645 = vmul.f32 %v2640, %v2644
    %v2646 = vpack.c.bf16 %v2645, %v2645
    %v2647 = vmul.f32 %v2574, %v58
    %v2648 = vpack.c.bf16 %v2647, %v2647
    %v2649 = vmul.f32 %v2574, %v275
    %v2650 = vpack.c.bf16 %v2649, %v2649
    %v2652 = vsel %vm154, %v2648, 0
    %2654 = vmatprep.subr.bf16.mxu0 0
    %2655 = vmatpush1.bf16.xpose.msra.mxu0 %v2591
    %2656 = vmatprep.subr.bf16.mxu0 0
    %2657 = vmatpush1.bf16.xpose.msra.mxu0 0
    %2658 = vmatprep.subr.bf16.mxu0 0
    %2659 = vmatpush1.bf16.xpose.msra.mxu0 0
    %2660 = vmatprep.subr.bf16.mxu0 0
    %2661 = vmatpush1.bf16.xpose.msra.mxu0 0
    %2662 = vmatprep.subr.bf16.mxu0 0
    %2663 = vmatpush1.bf16.xpose.msra.mxu0 0
    %2664 = vmatprep.subr.bf16.mxu0 0
    %2665 = vmatpush1.bf16.xpose.msra.mxu0 0
    %2666 = vmatprep.subr.bf16.mxu0 0
    %2667 = vmatpush1.bf16.xpose.msra.mxu0 0
    %2668 = vmatprep.subr.bf16.mxu0 0
    %2669 = vmatpush1.bf16.xpose.msra.mxu0 0
    %2670 = vmatprep.subr.bf16.mxu0 0
    %2671 = vmatpush1.bf16.xpose.msra.mxu0 0
    %2672 = vmatprep.subr.bf16.mxu0 0
    %2673 = vmatpush1.bf16.xpose.msra.mxu0 0
    %2674 = vmatprep.subr.bf16.mxu0 0
    %2675 = vmatpush1.bf16.xpose.msra.mxu0 0
    %2676 = vmatprep.subr.bf16.mxu0 0
    %2677 = vmatpush1.bf16.xpose.msra.mxu0 0
    %2678 = vmatprep.subr.bf16.mxu0 0
    %2679 = vmatpush1.bf16.xpose.msra.mxu0 0
    %2680 = vmatprep.subr.bf16.mxu0 0
    %2681 = vmatpush1.bf16.xpose.msra.mxu0 0
    %2682 = vmatprep.subr.bf16.mxu0 0
    %2683 = vmatpush1.bf16.xpose.msra.mxu0 0
    %2684 = vmatprep.subr.bf16.mxu0 0
    %2685 = vmatpush1.bf16.xpose.msra.mxu0 0
    %2686 = vmatprep.mubr.bf16.mxu0 0
    %2687 = vmatmul.mubr.bf16.gmra.mrb[0].mxu0 %v2652
    %v2688 = vpop.f32.mrb[0].mxu0
    %v2689 = vadd.f32 0.0, %v2688
    %v2690 = vpop.f32.mrb[0].mxu0
    %v2691 = vpop.f32.mrb[0].mxu0
    %v2692 = vpop.f32.mrb[0].mxu0
    %2693 = vdwg.mxu0
    %v2694 = vmul.f32 %v2689, 0.35355338
    %v2695 = vadd.f32 %v2694, %v2507
    %v2696 = vsel %vm258, %v2695, -inf
    %2697 = vmax.xlane.f32.xlu0 %v2696
    %v2698 = vpop.xlane.xlu0 %2697
    %v2699 = vsub.f32 %v2695, %v2698
    %v2700 = vmul.f32 %v2699, 1.442695
    %v2701 = vpow.pop %v2700
    %v2702 = vsel %vm258, %v2701, 0.0
    %2703 = vadd.xlane.f32.xlu0 %v2702
    %v2704 = vpop.xlane.xlu0 %2703
    %v2705 = vrcp.pop %v2704
    %v2706 = vmul.f32 %v2701, %v2705
    %v2707 = vpack.c.bf16 %v2706, %v2706
    %2709 = vrot.lane.b32.xlu0 %v2650, 64
    %v2710 = vpop.permute.xlu0 %2709
    %v2712 = vsel %vm258, %v2707, 0
    %v2715 = vsel %vm342, %v2710, 0
    %2717 = vmatprep.subr.bf16.mxu0 0
    %2718 = vmatpush1.bf16.msra.mxu0 %v2715
    %2719 = vmatprep.subr.bf16.mxu0 0
    %2720 = vmatpush1.bf16.msra.mxu0 0
    %2721 = vmatprep.subr.bf16.mxu0 0
    %2722 = vmatpush1.bf16.msra.mxu0 0
    %2723 = vmatprep.subr.bf16.mxu0 0
    %2724 = vmatpush1.bf16.msra.mxu0 0
    %2725 = vmatprep.subr.bf16.mxu0 0
    %2726 = vmatpush1.bf16.msra.mxu0 0
    %2727 = vmatprep.subr.bf16.mxu0 0
    %2728 = vmatpush1.bf16.msra.mxu0 0
    %2729 = vmatprep.subr.bf16.mxu0 0
    %2730 = vmatpush1.bf16.msra.mxu0 0
    %2731 = vmatprep.subr.bf16.mxu0 0
    %2732 = vmatpush1.bf16.msra.mxu0 0
    %2733 = vmatprep.subr.bf16.mxu0 0
    %2734 = vmatpush1.bf16.msra.mxu0 0
    %2735 = vmatprep.subr.bf16.mxu0 0
    %2736 = vmatpush1.bf16.msra.mxu0 0
    %2737 = vmatprep.subr.bf16.mxu0 0
    %2738 = vmatpush1.bf16.msra.mxu0 0
    %2739 = vmatprep.subr.bf16.mxu0 0
    %2740 = vmatpush1.bf16.msra.mxu0 0
    %2741 = vmatprep.subr.bf16.mxu0 0
    %2742 = vmatpush1.bf16.msra.mxu0 0
    %2743 = vmatprep.subr.bf16.mxu0 0
    %2744 = vmatpush1.bf16.msra.mxu0 0
    %2745 = vmatprep.subr.bf16.mxu0 0
    %2746 = vmatpush1.bf16.msra.mxu0 0
    %2747 = vmatprep.subr.bf16.mxu0 0
    %2748 = vmatpush1.bf16.msra.mxu0 0
    %2749 = vmatprep.mubr.bf16.mxu0 0
    %2750 = vmatmul.mubr.bf16.gmra.mrb[0].mxu0 %v2712
    %v2751 = vpop.f32.mrb[0].mxu0
    %v2752 = vadd.f32 0.0, %v2751
    %v2753 = vpop.f32.mrb[0].mxu0
    %v2754 = vpop.f32.mrb[0].mxu0
    %v2755 = vpop.f32.mrb[0].mxu0
    %2756 = vdwg.mxu0
    %2758 = vrot.lane.b32.xlu0 %v2583, 64
    %v2759 = vpop.permute.xlu0 %2758
    %v2761 = vsel %vm258, %v2646, 0
    %v2764 = vsel %vm342, %v2759, 0
    %2766 = vmatprep.subr.bf16.mxu0 0
    %2767 = vmatpush1.bf16.msra.mxu0 %v2764
    %2768 = vmatprep.subr.bf16.mxu0 0
    %2769 = vmatpush1.bf16.msra.mxu0 0
    %2770 = vmatprep.subr.bf16.mxu0 0
    %2771 = vmatpush1.bf16.msra.mxu0 0
    %2772 = vmatprep.subr.bf16.mxu0 0
    %2773 = vmatpush1.bf16.msra.mxu0 0
    %2774 = vmatprep.subr.bf16.mxu0 0
    %2775 = vmatpush1.bf16.msra.mxu0 0
    %2776 = vmatprep.subr.bf16.mxu0 0
    %2777 = vmatpush1.bf16.msra.mxu0 0
    %2778 = vmatprep.subr.bf16.mxu0 0
    %2779 = vmatpush1.bf16.msra.mxu0 0
    %2780 = vmatprep.subr.bf16.mxu0 0
    %2781 = vmatpush1.bf16.msra.mxu0 0
    %2782 = vmatprep.subr.bf16.mxu0 0
    %2783 = vmatpush1.bf16.msra.mxu0 0
    %2784 = vmatprep.subr.bf16.mxu0 0
    %2785 = vmatpush1.bf16.msra.mxu0 0
    %2786 = vmatprep.subr.bf16.mxu0 0
    %2787 = vmatpush1.bf16.msra.mxu0 0
    %2788 = vmatprep.subr.bf16.mxu0 0
    %2789 = vmatpush1.bf16.msra.mxu0 0
    %2790 = vmatprep.subr.bf16.mxu0 0
    %2791 = vmatpush1.bf16.msra.mxu0 0
    %2792 = vmatprep.subr.bf16.mxu0 0
    %2793 = vmatpush1.bf16.msra.mxu0 0
    %2794 = vmatprep.subr.bf16.mxu0 0
    %2795 = vmatpush1.bf16.msra.mxu0 0
    %2796 = vmatprep.subr.bf16.mxu0 0
    %2797 = vmatpush1.bf16.msra.mxu0 0
    %2798 = vmatprep.mubr.bf16.mxu0 0
    %2799 = vmatmul.mubr.bf16.gmra.mrb[0].mxu0 %v2761
    %v2800 = vpop.f32.mrb[0].mxu0
    %v2801 = vadd.f32 %v2752, %v2800
    %v2802 = vpop.f32.mrb[0].mxu0
    %v2803 = vpop.f32.mrb[0].mxu0
    %v2804 = vpop.f32.mrb[0].mxu0
    %2805 = vdwg.mxu0
    %v2806 = vmul.f32 %v2574, %v63
    %v2807 = vpack.c.bf16 %v2806, %v2806
    %v2808 = vmul.f32 %v2574, %v439
    %v2809 = vpack.c.bf16 %v2808, %v2808
    %v2811 = vsel %vm154, %v2807, 0
    %2813 = vmatprep.subr.bf16.mxu0 0
    %2814 = vmatpush1.bf16.xpose.msra.mxu0 %v2591
    %2815 = vmatprep.subr.bf16.mxu0 0
    %2816 = vmatpush1.bf16.xpose.msra.mxu0 0
    %2817 = vmatprep.subr.bf16.mxu0 0
    %2818 = vmatpush1.bf16.xpose.msra.mxu0 0
    %2819 = vmatprep.subr.bf16.mxu0 0
    %2820 = vmatpush1.bf16.xpose.msra.mxu0 0
    %2821 = vmatprep.subr.bf16.mxu0 0
    %2822 = vmatpush1.bf16.xpose.msra.mxu0 0
    %2823 = vmatprep.subr.bf16.mxu0 0
    %2824 = vmatpush1.bf16.xpose.msra.mxu0 0
    %2825 = vmatprep.subr.bf16.mxu0 0
    %2826 = vmatpush1.bf16.xpose.msra.mxu0 0
    %2827 = vmatprep.subr.bf16.mxu0 0
    %2828 = vmatpush1.bf16.xpose.msra.mxu0 0
    %2829 = vmatprep.subr.bf16.mxu0 0
    %2830 = vmatpush1.bf16.xpose.msra.mxu0 0
    %2831 = vmatprep.subr.bf16.mxu0 0
    %2832 = vmatpush1.bf16.xpose.msra.mxu0 0
    %2833 = vmatprep.subr.bf16.mxu0 0
    %2834 = vmatpush1.bf16.xpose.msra.mxu0 0
    %2835 = vmatprep.subr.bf16.mxu0 0
    %2836 = vmatpush1.bf16.xpose.msra.mxu0 0
    %2837 = vmatprep.subr.bf16.mxu0 0
    %2838 = vmatpush1.bf16.xpose.msra.mxu0 0
    %2839 = vmatprep.subr.bf16.mxu0 0
    %2840 = vmatpush1.bf16.xpose.msra.mxu0 0
    %2841 = vmatprep.subr.bf16.mxu0 0
    %2842 = vmatpush1.bf16.xpose.msra.mxu0 0
    %2843 = vmatprep.subr.bf16.mxu0 0
    %2844 = vmatpush1.bf16.xpose.msra.mxu0 0
    %2845 = vmatprep.mubr.bf16.mxu0 0
    %2846 = vmatmul.mubr.bf16.gmra.mrb[0].mxu0 %v2811
    %v2847 = vpop.f32.mrb[0].mxu0
    %v2848 = vadd.f32 0.0, %v2847
    %v2849 = vpop.f32.mrb[0].mxu0
    %v2850 = vpop.f32.mrb[0].mxu0
    %v2851 = vpop.f32.mrb[0].mxu0
    %2852 = vdwg.mxu0
    %v2853 = vmul.f32 %v2848, 0.35355338
    %v2854 = vadd.f32 %v2853, %v2507
    %v2855 = vsel %vm258, %v2854, -inf
    %2856 = vmax.xlane.f32.xlu0 %v2855
    %v2857 = vpop.xlane.xlu0 %2856
    %v2858 = vsub.f32 %v2854, %v2857
    %v2859 = vmul.f32 %v2858, 1.442695
    %v2860 = vpow.pop %v2859
    %v2861 = vsel %vm258, %v2860, 0.0
    %2862 = vadd.xlane.f32.xlu0 %v2861
    %v2863 = vpop.xlane.xlu0 %2862
    %v2864 = vrcp.pop %v2863
    %v2865 = vmul.f32 %v2860, %v2864
    %v2866 = vpack.c.bf16 %v2865, %v2865
    %2868 = vrot.lane.b32.xlu0 %v2809, 64
    %v2869 = vpop.permute.xlu0 %2868
    %v2871 = vsel %vm258, %v2866, 0
    %v2874 = vsel %vm342, %v2869, 0
    %2876 = vmatprep.subr.bf16.mxu0 0
    %2877 = vmatpush1.bf16.msra.mxu0 %v2874
    %2878 = vmatprep.subr.bf16.mxu0 0
    %2879 = vmatpush1.bf16.msra.mxu0 0
    %2880 = vmatprep.subr.bf16.mxu0 0
    %2881 = vmatpush1.bf16.msra.mxu0 0
    %2882 = vmatprep.subr.bf16.mxu0 0
    %2883 = vmatpush1.bf16.msra.mxu0 0
    %2884 = vmatprep.subr.bf16.mxu0 0
    %2885 = vmatpush1.bf16.msra.mxu0 0
    %2886 = vmatprep.subr.bf16.mxu0 0
    %2887 = vmatpush1.bf16.msra.mxu0 0
    %2888 = vmatprep.subr.bf16.mxu0 0
    %2889 = vmatpush1.bf16.msra.mxu0 0
    %2890 = vmatprep.subr.bf16.mxu0 0
    %2891 = vmatpush1.bf16.msra.mxu0 0
    %2892 = vmatprep.subr.bf16.mxu0 0
    %2893 = vmatpush1.bf16.msra.mxu0 0
    %2894 = vmatprep.subr.bf16.mxu0 0
    %2895 = vmatpush1.bf16.msra.mxu0 0
    %2896 = vmatprep.subr.bf16.mxu0 0
    %2897 = vmatpush1.bf16.msra.mxu0 0
    %2898 = vmatprep.subr.bf16.mxu0 0
    %2899 = vmatpush1.bf16.msra.mxu0 0
    %2900 = vmatprep.subr.bf16.mxu0 0
    %2901 = vmatpush1.bf16.msra.mxu0 0
    %2902 = vmatprep.subr.bf16.mxu0 0
    %2903 = vmatpush1.bf16.msra.mxu0 0
    %2904 = vmatprep.subr.bf16.mxu0 0
    %2905 = vmatpush1.bf16.msra.mxu0 0
    %2906 = vmatprep.subr.bf16.mxu0 0
    %2907 = vmatpush1.bf16.msra.mxu0 0
    %2908 = vmatprep.mubr.bf16.mxu0 0
    %2909 = vmatmul.mubr.bf16.gmra.mrb[0].mxu0 %v2871
    %v2910 = vpop.f32.mrb[0].mxu0
    %v2911 = vadd.f32 0.0, %v2910
    %v2912 = vpop.f32.mrb[0].mxu0
    %v2913 = vpop.f32.mrb[0].mxu0
    %v2914 = vpop.f32.mrb[0].mxu0
    %2915 = vdwg.mxu0
    %v2916 = vadd.f32 %v2801, %v2911
    %v2917 = vmul.f32 %v2574, %v68
    %v2918 = vpack.c.bf16 %v2917, %v2917
    %v2919 = vmul.f32 %v2574, %v554
    %v2920 = vpack.c.bf16 %v2919, %v2919
    %v2922 = vsel %vm154, %v2918, 0
    %2924 = vmatprep.subr.bf16.mxu0 0
    %2925 = vmatpush1.bf16.xpose.msra.mxu0 %v2591
    %2926 = vmatprep.subr.bf16.mxu0 0
    %2927 = vmatpush1.bf16.xpose.msra.mxu0 0
    %2928 = vmatprep.subr.bf16.mxu0 0
    %2929 = vmatpush1.bf16.xpose.msra.mxu0 0
    %2930 = vmatprep.subr.bf16.mxu0 0
    %2931 = vmatpush1.bf16.xpose.msra.mxu0 0
    %2932 = vmatprep.subr.bf16.mxu0 0
    %2933 = vmatpush1.bf16.xpose.msra.mxu0 0
    %2934 = vmatprep.subr.bf16.mxu0 0
    %2935 = vmatpush1.bf16.xpose.msra.mxu0 0
    %2936 = vmatprep.subr.bf16.mxu0 0
    %2937 = vmatpush1.bf16.xpose.msra.mxu0 0
    %2938 = vmatprep.subr.bf16.mxu0 0
    %2939 = vmatpush1.bf16.xpose.msra.mxu0 0
    %2940 = vmatprep.subr.bf16.mxu0 0
    %2941 = vmatpush1.bf16.xpose.msra.mxu0 0
    %2942 = vmatprep.subr.bf16.mxu0 0
    %2943 = vmatpush1.bf16.xpose.msra.mxu0 0
    %2944 = vmatprep.subr.bf16.mxu0 0
    %2945 = vmatpush1.bf16.xpose.msra.mxu0 0
    %2946 = vmatprep.subr.bf16.mxu0 0
    %2947 = vmatpush1.bf16.xpose.msra.mxu0 0
    %2948 = vmatprep.subr.bf16.mxu0 0
    %2949 = vmatpush1.bf16.xpose.msra.mxu0 0
    %2950 = vmatprep.subr.bf16.mxu0 0
    %2951 = vmatpush1.bf16.xpose.msra.mxu0 0
    %2952 = vmatprep.subr.bf16.mxu0 0
    %2953 = vmatpush1.bf16.xpose.msra.mxu0 0
    %2954 = vmatprep.subr.bf16.mxu0 0
    %2955 = vmatpush1.bf16.xpose.msra.mxu0 0
    %2956 = vmatprep.mubr.bf16.mxu0 0
    %2957 = vmatmul.mubr.bf16.gmra.mrb[0].mxu0 %v2922
    %v2958 = vpop.f32.mrb[0].mxu0
    %v2959 = vadd.f32 0.0, %v2958
    %v2960 = vpop.f32.mrb[0].mxu0
    %v2961 = vpop.f32.mrb[0].mxu0
    %v2962 = vpop.f32.mrb[0].mxu0
    %2963 = vdwg.mxu0
    %v2964 = vmul.f32 %v2959, 0.35355338
    %v2965 = vadd.f32 %v2964, %v2507
    %v2966 = vsel %vm258, %v2965, -inf
    %2967 = vmax.xlane.f32.xlu0 %v2966
    %v2968 = vpop.xlane.xlu0 %2967
    %v2969 = vsub.f32 %v2965, %v2968
    %v2970 = vmul.f32 %v2969, 1.442695
    %v2971 = vpow.pop %v2970
    %v2972 = vsel %vm258, %v2971, 0.0
    %2973 = vadd.xlane.f32.xlu0 %v2972
    %v2974 = vpop.xlane.xlu0 %2973
    %v2975 = vrcp.pop %v2974
    %v2976 = vmul.f32 %v2971, %v2975
    %v2977 = vpack.c.bf16 %v2976, %v2976
    %2979 = vrot.lane.b32.xlu0 %v2920, 64
    %v2980 = vpop.permute.xlu0 %2979
    %v2982 = vsel %vm258, %v2977, 0
    %v2985 = vsel %vm342, %v2980, 0
    %2987 = vmatprep.subr.bf16.mxu0 0
    %2988 = vmatpush1.bf16.msra.mxu0 %v2985
    %2989 = vmatprep.subr.bf16.mxu0 0
    %2990 = vmatpush1.bf16.msra.mxu0 0
    %2991 = vmatprep.subr.bf16.mxu0 0
    %2992 = vmatpush1.bf16.msra.mxu0 0
    %2993 = vmatprep.subr.bf16.mxu0 0
    %2994 = vmatpush1.bf16.msra.mxu0 0
    %2995 = vmatprep.subr.bf16.mxu0 0
    %2996 = vmatpush1.bf16.msra.mxu0 0
    %2997 = vmatprep.subr.bf16.mxu0 0
    %2998 = vmatpush1.bf16.msra.mxu0 0
    %2999 = vmatprep.subr.bf16.mxu0 0
    %3000 = vmatpush1.bf16.msra.mxu0 0
    %3001 = vmatprep.subr.bf16.mxu0 0
    %3002 = vmatpush1.bf16.msra.mxu0 0
    %3003 = vmatprep.subr.bf16.mxu0 0
    %3004 = vmatpush1.bf16.msra.mxu0 0
    %3005 = vmatprep.subr.bf16.mxu0 0
    %3006 = vmatpush1.bf16.msra.mxu0 0
    %3007 = vmatprep.subr.bf16.mxu0 0
    %3008 = vmatpush1.bf16.msra.mxu0 0
    %3009 = vmatprep.subr.bf16.mxu0 0
    %3010 = vmatpush1.bf16.msra.mxu0 0
    %3011 = vmatprep.subr.bf16.mxu0 0
    %3012 = vmatpush1.bf16.msra.mxu0 0
    %3013 = vmatprep.subr.bf16.mxu0 0
    %3014 = vmatpush1.bf16.msra.mxu0 0
    %3015 = vmatprep.subr.bf16.mxu0 0
    %3016 = vmatpush1.bf16.msra.mxu0 0
    %3017 = vmatprep.subr.bf16.mxu0 0
    %3018 = vmatpush1.bf16.msra.mxu0 0
    %3019 = vmatprep.mubr.bf16.mxu0 0
    %3020 = vmatmul.mubr.bf16.gmra.mrb[0].mxu0 %v2982
    %v3021 = vpop.f32.mrb[0].mxu0
    %v3022 = vadd.f32 0.0, %v3021
    %v3023 = vpop.f32.mrb[0].mxu0
    %v3024 = vpop.f32.mrb[0].mxu0
    %v3025 = vpop.f32.mrb[0].mxu0
    %3026 = vdwg.mxu0
    %v3027 = vadd.f32 %v2916, %v3022
    %v3028 = vpack.c.bf16 %v3027, %v3027
    %v3029 = vlaneseq
    %v3030 = vshrl.u32 %v3029, 7
    %v3031 = vsub.s32 0, %v3030
    %v3032 = vrot.slane %v2518, %v3031
    %v3037 = vunpack.c.l.b16 %v2514
    %v3038 = vunpack.c.l.b16 %v2515
    %v3039 = vunpack.c.l.b16 %v2516
    %v3040 = vunpack.c.l.b16 %v2517
    %v3041 = vpack.c.b16 %v3038, %v3037
    %v3042 = vpack.c.b16 %v3040, %v3039
    %v3046 = vsel %vm154, %v3028, 0
    %3048 = vmatprep.subr.bf16.mxu0 0
    %3049 = vmatpush1.bf16.msra.mxu0 %v3041
    %3050 = vmatprep.subr.bf16.mxu0 0
    %3051 = vmatpush1.bf16.msra.mxu0 %v3042
    %3052 = vmatprep.subr.bf16.mxu0 0
    %3053 = vmatpush1.bf16.msra.mxu0 0
    %3054 = vmatprep.subr.bf16.mxu0 0
    %3055 = vmatpush1.bf16.msra.mxu0 0
    %3056 = vmatprep.subr.bf16.mxu0 0
    %3057 = vmatpush1.bf16.msra.mxu0 0
    %3058 = vmatprep.subr.bf16.mxu0 0
    %3059 = vmatpush1.bf16.msra.mxu0 0
    %3060 = vmatprep.subr.bf16.mxu0 0
    %3061 = vmatpush1.bf16.msra.mxu0 0
    %3062 = vmatprep.subr.bf16.mxu0 0
    %3063 = vmatpush1.bf16.msra.mxu0 0
    %3064 = vmatprep.subr.bf16.mxu0 0
    %3065 = vmatpush1.bf16.msra.mxu0 0
    %3066 = vmatprep.subr.bf16.mxu0 0
    %3067 = vmatpush1.bf16.msra.mxu0 0
    %3068 = vmatprep.subr.bf16.mxu0 0
    %3069 = vmatpush1.bf16.msra.mxu0 0
    %3070 = vmatprep.subr.bf16.mxu0 0
    %3071 = vmatpush1.bf16.msra.mxu0 0
    %3072 = vmatprep.subr.bf16.mxu0 0
    %3073 = vmatpush1.bf16.msra.mxu0 0
    %3074 = vmatprep.subr.bf16.mxu0 0
    %3075 = vmatpush1.bf16.msra.mxu0 0
    %3076 = vmatprep.subr.bf16.mxu0 0
    %3077 = vmatpush1.bf16.msra.mxu0 0
    %3078 = vmatprep.subr.bf16.mxu0 0
    %3079 = vmatpush1.bf16.msra.mxu0 0
    %3080 = vmatprep.mubr.bf16.mxu0 0
    %3081 = vmatmul.mubr.bf16.gmra.mrb[0].mxu0 %v3046
    %v3082 = vpop.f32.mrb[0].mxu0
    %v3083 = vadd.f32 %v3032, %v3082
    %v3084 = vpop.f32.mrb[0].mxu0
    %v3085 = vpop.f32.mrb[0].mxu0
    %v3086 = vpop.f32.mrb[0].mxu0
    %3087 = vdwg.mxu0
    %v3088 = vadd.f32 %v121, %v3083
    %v3089 = vld [vmem:[#allocation5 + $0x47] sm:$0x1]
    %v3090 = vld [vmem:[#allocation5 + $0x48] sm:$0x1]
    %v3091 = vsel %vm154, %v3088, 0.0
    %3092 = vadd.xlane.f32.xlu0 %v3091
    %v3093 = vpop.xlane.xlu0 %3092
    %v3094 = vmul.f32 %v3093, %v731
    %v3095 = vsub.f32 %v3088, %v3094
    %v3096 = vmul.f32 %v3095, %v3095
    %v3097 = vsel %vm154, %v3096, 0.0
    %3098 = vadd.xlane.f32.xlu0 %v3097
    %v3099 = vpop.xlane.xlu0 %3098
    %v3100 = vmul.f32 %v3099, %v731
    %v3101 = vadd.f32 %v3100, 1e-05
    %v3102 = vrsqrt.pop %v3101
    %v3103 = vmul.f32 %v3095, %v3102
    %v3104 = vlaneseq
    %v3105 = vshrl.u32 %v3104, 7
    %v3106 = vsub.s32 0, %v3105
    %v3107 = vrot.slane %v3089, %v3106
    %v3108 = vmul.f32 %v3103, %v3107
    %v3109 = vlaneseq
    %v3110 = vshrl.u32 %v3109, 7
    %v3111 = vsub.s32 0, %v3110
    %v3112 = vrot.slane %v3090, %v3111
    %v3113 = vadd.f32 %v3108, %v3112
    %v3114 = vld [vmem:[#allocation2 + $0x128] sm:$0xf]
    %v3115 = vld [vmem:[#allocation2 + $0x12c] sm:$0xf]
    %v3116 = vld [vmem:[#allocation2 + $0x130] sm:$0xf]
    %v3117 = vld [vmem:[#allocation2 + $0x134] sm:$0xf]
    %v3118 = vld [vmem:[#allocation5 + $0x49] sm:$0x1]
    %v3119 = vld [vmem:[#allocation2 + $0x138] sm:$0xf]
    %v3120 = vld [vmem:[#allocation2 + $0x13c] sm:$0xf]
    %v3121 = vld [vmem:[#allocation2 + $0x140] sm:$0xf]
    %v3122 = vld [vmem:[#allocation2 + $0x144] sm:$0xf]
    %v3123 = vld [vmem:[#allocation5 + $0x4a] sm:$0x1]
    %v3124 = vld [vmem:[#allocation2 + $0x148] sm:$0xf]
    %v3125 = vld [vmem:[#allocation2 + $0x14c] sm:$0xf]
    %v3126 = vld [vmem:[#allocation2 + $0x150] sm:$0xf]
    %v3127 = vld [vmem:[#allocation2 + $0x154] sm:$0xf]
    %v3128 = vld [vmem:[#allocation5 + $0x4b] sm:$0x1]
    %v3129 = vpack.c.bf16 %v3113, %v3113
    %v3130 = vlaneseq
    %v3131 = vshrl.u32 %v3130, 7
    %v3132 = vsub.s32 0, %v3131
    %v3133 = vrot.slane %v3118, %v3132
    %v3138 = vunpack.c.l.b16 %v3114
    %v3139 = vunpack.c.l.b16 %v3115
    %v3140 = vunpack.c.l.b16 %v3116
    %v3141 = vunpack.c.l.b16 %v3117
    %v3142 = vpack.c.b16 %v3139, %v3138
    %v3143 = vpack.c.b16 %v3141, %v3140
    %v3147 = vsel %vm154, %v3129, 0
    %3149 = vmatprep.subr.bf16.mxu0 0
    %3150 = vmatpush1.bf16.msra.mxu0 %v3142
    %3151 = vmatprep.subr.bf16.mxu0 0
    %3152 = vmatpush1.bf16.msra.mxu0 %v3143
    %3153 = vmatprep.subr.bf16.mxu0 0
    %3154 = vmatpush1.bf16.msra.mxu0 0
    %3155 = vmatprep.subr.bf16.mxu0 0
    %3156 = vmatpush1.bf16.msra.mxu0 0
    %3157 = vmatprep.subr.bf16.mxu0 0
    %3158 = vmatpush1.bf16.msra.mxu0 0
    %3159 = vmatprep.subr.bf16.mxu0 0
    %3160 = vmatpush1.bf16.msra.mxu0 0
    %3161 = vmatprep.subr.bf16.mxu0 0
    %3162 = vmatpush1.bf16.msra.mxu0 0
    %3163 = vmatprep.subr.bf16.mxu0 0
    %3164 = vmatpush1.bf16.msra.mxu0 0
    %3165 = vmatprep.subr.bf16.mxu0 0
    %3166 = vmatpush1.bf16.msra.mxu0 0
    %3167 = vmatprep.subr.bf16.mxu0 0
    %3168 = vmatpush1.bf16.msra.mxu0 0
    %3169 = vmatprep.subr.bf16.mxu0 0
    %3170 = vmatpush1.bf16.msra.mxu0 0
    %3171 = vmatprep.subr.bf16.mxu0 0
    %3172 = vmatpush1.bf16.msra.mxu0 0
    %3173 = vmatprep.subr.bf16.mxu0 0
    %3174 = vmatpush1.bf16.msra.mxu0 0
    %3175 = vmatprep.subr.bf16.mxu0 0
    %3176 = vmatpush1.bf16.msra.mxu0 0
    %3177 = vmatprep.subr.bf16.mxu0 0
    %3178 = vmatpush1.bf16.msra.mxu0 0
    %3179 = vmatprep.subr.bf16.mxu0 0
    %3180 = vmatpush1.bf16.msra.mxu0 0
    %3181 = vmatprep.mubr.bf16.mxu0 0
    %3182 = vmatmul.mubr.bf16.gmra.mrb[0].mxu0 %v3147
    %v3183 = vpop.f32.mrb[0].mxu0
    %v3184 = vadd.f32 %v3133, %v3183
    %v3185 = vpop.f32.mrb[0].mxu0
    %v3186 = vpop.f32.mrb[0].mxu0
    %v3187 = vpop.f32.mrb[0].mxu0
    %3188 = vdwg.mxu0
    %v3189 = vpack.c.bf16 %v2506, %v2506
    %v3190 = vlaneseq
    %v3191 = vshrl.u32 %v3190, 7
    %v3192 = vsub.s32 0, %v3191
    %v3193 = vrot.slane %v3123, %v3192
    %v3198 = vunpack.c.l.b16 %v3119
    %v3199 = vunpack.c.l.b16 %v3120
    %v3200 = vunpack.c.l.b16 %v3121
    %v3201 = vunpack.c.l.b16 %v3122
    %v3202 = vpack.c.b16 %v3199, %v3198
    %v3203 = vpack.c.b16 %v3201, %v3200
    %v3207 = vsel %vm154, %v3189, 0
    %3209 = vmatprep.subr.bf16.mxu0 0
    %3210 = vmatpush1.bf16.msra.mxu0 %v3202
    %3211 = vmatprep.subr.bf16.mxu0 0
    %3212 = vmatpush1.bf16.msra.mxu0 %v3203
    %3213 = vmatprep.subr.bf16.mxu0 0
    %3214 = vmatpush1.bf16.msra.mxu0 0
    %3215 = vmatprep.subr.bf16.mxu0 0
    %3216 = vmatpush1.bf16.msra.mxu0 0
    %3217 = vmatprep.subr.bf16.mxu0 0
    %3218 = vmatpush1.bf16.msra.mxu0 0
    %3219 = vmatprep.subr.bf16.mxu0 0
    %3220 = vmatpush1.bf16.msra.mxu0 0
    %3221 = vmatprep.subr.bf16.mxu0 0
    %3222 = vmatpush1.bf16.msra.mxu0 0
    %3223 = vmatprep.subr.bf16.mxu0 0
    %3224 = vmatpush1.bf16.msra.mxu0 0
    %3225 = vmatprep.subr.bf16.mxu0 0
    %3226 = vmatpush1.bf16.msra.mxu0 0
    %3227 = vmatprep.subr.bf16.mxu0 0
    %3228 = vmatpush1.bf16.msra.mxu0 0
    %3229 = vmatprep.subr.bf16.mxu0 0
    %3230 = vmatpush1.bf16.msra.mxu0 0
    %3231 = vmatprep.subr.bf16.mxu0 0
    %3232 = vmatpush1.bf16.msra.mxu0 0
    %3233 = vmatprep.subr.bf16.mxu0 0
    %3234 = vmatpush1.bf16.msra.mxu0 0
    %3235 = vmatprep.subr.bf16.mxu0 0
    %3236 = vmatpush1.bf16.msra.mxu0 0
    %3237 = vmatprep.subr.bf16.mxu0 0
    %3238 = vmatpush1.bf16.msra.mxu0 0
    %3239 = vmatprep.subr.bf16.mxu0 0
    %3240 = vmatpush1.bf16.msra.mxu0 0
    %3241 = vmatprep.mubr.bf16.mxu0 0
    %3242 = vmatmul.mubr.bf16.gmra.mrb[0].mxu0 %v3207
    %v3243 = vpop.f32.mrb[0].mxu0
    %v3244 = vadd.f32 %v3193, %v3243
    %v3245 = vpop.f32.mrb[0].mxu0
    %v3246 = vpop.f32.mrb[0].mxu0
    %v3247 = vpop.f32.mrb[0].mxu0
    %3248 = vdwg.mxu0
    %v3249 = vpack.c.bf16 %v3244, %v3244
    %v3250 = vmul.f32 %v3184, %v53
    %v3251 = vpack.c.bf16 %v3250, %v3250
    %3252 = vrot.lane.b32.xlu0 %v53, 32
    %v3253 = vpop.permute.xlu0 %3252
    %v3255 = vmul.f32 %v3244, %v3253
    %v3256 = vpack.c.bf16 %v3255, %v3255
    %v3258 = vsel %vm154, %v3251, 0
    %v3261 = vsel %vm154, %v3249, 0
    %3263 = vmatprep.subr.bf16.mxu0 0
    %3264 = vmatpush1.bf16.xpose.msra.mxu0 %v3261
    %3265 = vmatprep.subr.bf16.mxu0 0
    %3266 = vmatpush1.bf16.xpose.msra.mxu0 0
    %3267 = vmatprep.subr.bf16.mxu0 0
    %3268 = vmatpush1.bf16.xpose.msra.mxu0 0
    %3269 = vmatprep.subr.bf16.mxu0 0
    %3270 = vmatpush1.bf16.xpose.msra.mxu0 0
    %3271 = vmatprep.subr.bf16.mxu0 0
    %3272 = vmatpush1.bf16.xpose.msra.mxu0 0
    %3273 = vmatprep.subr.bf16.mxu0 0
    %3274 = vmatpush1.bf16.xpose.msra.mxu0 0
    %3275 = vmatprep.subr.bf16.mxu0 0
    %3276 = vmatpush1.bf16.xpose.msra.mxu0 0
    %3277 = vmatprep.subr.bf16.mxu0 0
    %3278 = vmatpush1.bf16.xpose.msra.mxu0 0
    %3279 = vmatprep.subr.bf16.mxu0 0
    %3280 = vmatpush1.bf16.xpose.msra.mxu0 0
    %3281 = vmatprep.subr.bf16.mxu0 0
    %3282 = vmatpush1.bf16.xpose.msra.mxu0 0
    %3283 = vmatprep.subr.bf16.mxu0 0
    %3284 = vmatpush1.bf16.xpose.msra.mxu0 0
    %3285 = vmatprep.subr.bf16.mxu0 0
    %3286 = vmatpush1.bf16.xpose.msra.mxu0 0
    %3287 = vmatprep.subr.bf16.mxu0 0
    %3288 = vmatpush1.bf16.xpose.msra.mxu0 0
    %3289 = vmatprep.subr.bf16.mxu0 0
    %3290 = vmatpush1.bf16.xpose.msra.mxu0 0
    %3291 = vmatprep.subr.bf16.mxu0 0
    %3292 = vmatpush1.bf16.xpose.msra.mxu0 0
    %3293 = vmatprep.subr.bf16.mxu0 0
    %3294 = vmatpush1.bf16.xpose.msra.mxu0 0
    %3295 = vmatprep.mubr.bf16.mxu0 0
    %3296 = vmatmul.mubr.bf16.gmra.mrb[0].mxu0 %v3258
    %v3297 = vpop.f32.mrb[0].mxu0
    %v3298 = vadd.f32 0.0, %v3297
    %v3299 = vpop.f32.mrb[0].mxu0
    %v3300 = vpop.f32.mrb[0].mxu0
    %v3301 = vpop.f32.mrb[0].mxu0
    %3302 = vdwg.mxu0
    %v3303 = vmul.f32 %v3298, 0.35355338
    %v3304 = vadd.f32 %v3303, %v2508
    %v3305 = vsel %vm258, %v3304, -inf
    %3306 = vmax.xlane.f32.xlu0 %v3305
    %v3307 = vpop.xlane.xlu0 %3306
    %v3308 = vsub.f32 %v3304, %v3307
    %v3309 = vmul.f32 %v3308, 1.442695
    %v3310 = vpow.pop %v3309
    %v3311 = vsel %vm258, %v3310, 0.0
    %3312 = vadd.xlane.f32.xlu0 %v3311
    %v3313 = vpop.xlane.xlu0 %3312
    %v3314 = vrcp.pop %v3313
    %v3315 = vmul.f32 %v3310, %v3314
    %v3316 = vpack.c.bf16 %v3315, %v3315
    %v3317 = vmul.f32 %v3184, %v58
    %v3318 = vpack.c.bf16 %v3317, %v3317
    %3319 = vrot.lane.b32.xlu0 %v58, 32
    %v3320 = vpop.permute.xlu0 %3319
    %v3322 = vmul.f32 %v3244, %v3320
    %v3323 = vpack.c.bf16 %v3322, %v3322
    %v3325 = vsel %vm154, %v3318, 0
    %3327 = vmatprep.subr.bf16.mxu0 0
    %3328 = vmatpush1.bf16.xpose.msra.mxu0 %v3261
    %3329 = vmatprep.subr.bf16.mxu0 0
    %3330 = vmatpush1.bf16.xpose.msra.mxu0 0
    %3331 = vmatprep.subr.bf16.mxu0 0
    %3332 = vmatpush1.bf16.xpose.msra.mxu0 0
    %3333 = vmatprep.subr.bf16.mxu0 0
    %3334 = vmatpush1.bf16.xpose.msra.mxu0 0
    %3335 = vmatprep.subr.bf16.mxu0 0
    %3336 = vmatpush1.bf16.xpose.msra.mxu0 0
    %3337 = vmatprep.subr.bf16.mxu0 0
    %3338 = vmatpush1.bf16.xpose.msra.mxu0 0
    %3339 = vmatprep.subr.bf16.mxu0 0
    %3340 = vmatpush1.bf16.xpose.msra.mxu0 0
    %3341 = vmatprep.subr.bf16.mxu0 0
    %3342 = vmatpush1.bf16.xpose.msra.mxu0 0
    %3343 = vmatprep.subr.bf16.mxu0 0
    %3344 = vmatpush1.bf16.xpose.msra.mxu0 0
    %3345 = vmatprep.subr.bf16.mxu0 0
    %3346 = vmatpush1.bf16.xpose.msra.mxu0 0
    %3347 = vmatprep.subr.bf16.mxu0 0
    %3348 = vmatpush1.bf16.xpose.msra.mxu0 0
    %3349 = vmatprep.subr.bf16.mxu0 0
    %3350 = vmatpush1.bf16.xpose.msra.mxu0 0
    %3351 = vmatprep.subr.bf16.mxu0 0
    %3352 = vmatpush1.bf16.xpose.msra.mxu0 0
    %3353 = vmatprep.subr.bf16.mxu0 0
    %3354 = vmatpush1.bf16.xpose.msra.mxu0 0
    %3355 = vmatprep.subr.bf16.mxu0 0
    %3356 = vmatpush1.bf16.xpose.msra.mxu0 0
    %3357 = vmatprep.subr.bf16.mxu0 0
    %3358 = vmatpush1.bf16.xpose.msra.mxu0 0
    %3359 = vmatprep.mubr.bf16.mxu0 0
    %3360 = vmatmul.mubr.bf16.gmra.mrb[0].mxu0 %v3325
    %v3361 = vpop.f32.mrb[0].mxu0
    %v3362 = vadd.f32 0.0, %v3361
    %v3363 = vpop.f32.mrb[0].mxu0
    %v3364 = vpop.f32.mrb[0].mxu0
    %v3365 = vpop.f32.mrb[0].mxu0
    %3366 = vdwg.mxu0
    %v3367 = vmul.f32 %v3362, 0.35355338
    %v3368 = vadd.f32 %v3367, %v2508
    %v3369 = vsel %vm258, %v3368, -inf
    %3370 = vmax.xlane.f32.xlu0 %v3369
    %v3371 = vpop.xlane.xlu0 %3370
    %v3372 = vsub.f32 %v3368, %v3371
    %v3373 = vmul.f32 %v3372, 1.442695
    %v3374 = vpow.pop %v3373
    %v3375 = vsel %vm258, %v3374, 0.0
    %3376 = vadd.xlane.f32.xlu0 %v3375
    %v3377 = vpop.xlane.xlu0 %3376
    %v3378 = vrcp.pop %v3377
    %v3379 = vmul.f32 %v3374, %v3378
    %v3380 = vpack.c.bf16 %v3379, %v3379
    %3382 = vrot.lane.b32.xlu0 %v3323, 96
    %v3383 = vpop.permute.xlu0 %3382
    %v3385 = vsel %vm258, %v3380, 0
    %v3388 = vsel %vm342, %v3383, 0
    %3390 = vmatprep.subr.bf16.mxu0 0
    %3391 = vmatpush1.bf16.msra.mxu0 %v3388
    %3392 = vmatprep.subr.bf16.mxu0 0
    %3393 = vmatpush1.bf16.msra.mxu0 0
    %3394 = vmatprep.subr.bf16.mxu0 0
    %3395 = vmatpush1.bf16.msra.mxu0 0
    %3396 = vmatprep.subr.bf16.mxu0 0
    %3397 = vmatpush1.bf16.msra.mxu0 0
    %3398 = vmatprep.subr.bf16.mxu0 0
    %3399 = vmatpush1.bf16.msra.mxu0 0
    %3400 = vmatprep.subr.bf16.mxu0 0
    %3401 = vmatpush1.bf16.msra.mxu0 0
    %3402 = vmatprep.subr.bf16.mxu0 0
    %3403 = vmatpush1.bf16.msra.mxu0 0
    %3404 = vmatprep.subr.bf16.mxu0 0
    %3405 = vmatpush1.bf16.msra.mxu0 0
    %3406 = vmatprep.subr.bf16.mxu0 0
    %3407 = vmatpush1.bf16.msra.mxu0 0
    %3408 = vmatprep.subr.bf16.mxu0 0
    %3409 = vmatpush1.bf16.msra.mxu0 0
    %3410 = vmatprep.subr.bf16.mxu0 0
    %3411 = vmatpush1.bf16.msra.mxu0 0
    %3412 = vmatprep.subr.bf16.mxu0 0
    %3413 = vmatpush1.bf16.msra.mxu0 0
    %3414 = vmatprep.subr.bf16.mxu0 0
    %3415 = vmatpush1.bf16.msra.mxu0 0
    %3416 = vmatprep.subr.bf16.mxu0 0
    %3417 = vmatpush1.bf16.msra.mxu0 0
    %3418 = vmatprep.subr.bf16.mxu0 0
    %3419 = vmatpush1.bf16.msra.mxu0 0
    %3420 = vmatprep.subr.bf16.mxu0 0
    %3421 = vmatpush1.bf16.msra.mxu0 0
    %3422 = vmatprep.mubr.bf16.mxu0 0
    %3423 = vmatmul.mubr.bf16.gmra.mrb[0].mxu0 %v3385
    %v3424 = vpop.f32.mrb[0].mxu0
    %v3425 = vadd.f32 0.0, %v3424
    %v3426 = vpop.f32.mrb[0].mxu0
    %v3427 = vpop.f32.mrb[0].mxu0
    %v3428 = vpop.f32.mrb[0].mxu0
    %3429 = vdwg.mxu0
    %3431 = vrot.lane.b32.xlu0 %v3256, 96
    %v3432 = vpop.permute.xlu0 %3431
    %v3434 = vsel %vm258, %v3316, 0
    %v3437 = vsel %vm342, %v3432, 0
    %3439 = vmatprep.subr.bf16.mxu0 0
    %3440 = vmatpush1.bf16.msra.mxu0 %v3437
    %3441 = vmatprep.subr.bf16.mxu0 0
    %3442 = vmatpush1.bf16.msra.mxu0 0
    %3443 = vmatprep.subr.bf16.mxu0 0
    %3444 = vmatpush1.bf16.msra.mxu0 0
    %3445 = vmatprep.subr.bf16.mxu0 0
    %3446 = vmatpush1.bf16.msra.mxu0 0
    %3447 = vmatprep.subr.bf16.mxu0 0
    %3448 = vmatpush1.bf16.msra.mxu0 0
    %3449 = vmatprep.subr.bf16.mxu0 0
    %3450 = vmatpush1.bf16.msra.mxu0 0
    %3451 = vmatprep.subr.bf16.mxu0 0
    %3452 = vmatpush1.bf16.msra.mxu0 0
    %3453 = vmatprep.subr.bf16.mxu0 0
    %3454 = vmatpush1.bf16.msra.mxu0 0
    %3455 = vmatprep.subr.bf16.mxu0 0
    %3456 = vmatpush1.bf16.msra.mxu0 0
    %3457 = vmatprep.subr.bf16.mxu0 0
    %3458 = vmatpush1.bf16.msra.mxu0 0
    %3459 = vmatprep.subr.bf16.mxu0 0
    %3460 = vmatpush1.bf16.msra.mxu0 0
    %3461 = vmatprep.subr.bf16.mxu0 0
    %3462 = vmatpush1.bf16.msra.mxu0 0
    %3463 = vmatprep.subr.bf16.mxu0 0
    %3464 = vmatpush1.bf16.msra.mxu0 0
    %3465 = vmatprep.subr.bf16.mxu0 0
    %3466 = vmatpush1.bf16.msra.mxu0 0
    %3467 = vmatprep.subr.bf16.mxu0 0
    %3468 = vmatpush1.bf16.msra.mxu0 0
    %3469 = vmatprep.subr.bf16.mxu0 0
    %3470 = vmatpush1.bf16.msra.mxu0 0
    %3471 = vmatprep.mubr.bf16.mxu0 0
    %3472 = vmatmul.mubr.bf16.gmra.mrb[0].mxu0 %v3434
    %v3473 = vpop.f32.mrb[0].mxu0
    %v3474 = vadd.f32 %v3425, %v3473
    %v3475 = vpop.f32.mrb[0].mxu0
    %v3476 = vpop.f32.mrb[0].mxu0
    %v3477 = vpop.f32.mrb[0].mxu0
    %3478 = vdwg.mxu0
    %v3479 = vmul.f32 %v3184, %v63
    %v3480 = vpack.c.bf16 %v3479, %v3479
    %3481 = vrot.lane.b32.xlu0 %v63, 32
    %v3482 = vpop.permute.xlu0 %3481
    %v3484 = vmul.f32 %v3244, %v3482
    %v3485 = vpack.c.bf16 %v3484, %v3484
    %v3487 = vsel %vm154, %v3480, 0
    %3489 = vmatprep.subr.bf16.mxu0 0
    %3490 = vmatpush1.bf16.xpose.msra.mxu0 %v3261
    %3491 = vmatprep.subr.bf16.mxu0 0
    %3492 = vmatpush1.bf16.xpose.msra.mxu0 0
    %3493 = vmatprep.subr.bf16.mxu0 0
    %3494 = vmatpush1.bf16.xpose.msra.mxu0 0
    %3495 = vmatprep.subr.bf16.mxu0 0
    %3496 = vmatpush1.bf16.xpose.msra.mxu0 0
    %3497 = vmatprep.subr.bf16.mxu0 0
    %3498 = vmatpush1.bf16.xpose.msra.mxu0 0
    %3499 = vmatprep.subr.bf16.mxu0 0
    %3500 = vmatpush1.bf16.xpose.msra.mxu0 0
    %3501 = vmatprep.subr.bf16.mxu0 0
    %3502 = vmatpush1.bf16.xpose.msra.mxu0 0
    %3503 = vmatprep.subr.bf16.mxu0 0
    %3504 = vmatpush1.bf16.xpose.msra.mxu0 0
    %3505 = vmatprep.subr.bf16.mxu0 0
    %3506 = vmatpush1.bf16.xpose.msra.mxu0 0
    %3507 = vmatprep.subr.bf16.mxu0 0
    %3508 = vmatpush1.bf16.xpose.msra.mxu0 0
    %3509 = vmatprep.subr.bf16.mxu0 0
    %3510 = vmatpush1.bf16.xpose.msra.mxu0 0
    %3511 = vmatprep.subr.bf16.mxu0 0
    %3512 = vmatpush1.bf16.xpose.msra.mxu0 0
    %3513 = vmatprep.subr.bf16.mxu0 0
    %3514 = vmatpush1.bf16.xpose.msra.mxu0 0
    %3515 = vmatprep.subr.bf16.mxu0 0
    %3516 = vmatpush1.bf16.xpose.msra.mxu0 0
    %3517 = vmatprep.subr.bf16.mxu0 0
    %3518 = vmatpush1.bf16.xpose.msra.mxu0 0
    %3519 = vmatprep.subr.bf16.mxu0 0
    %3520 = vmatpush1.bf16.xpose.msra.mxu0 0
    %3521 = vmatprep.mubr.bf16.mxu0 0
    %3522 = vmatmul.mubr.bf16.gmra.mrb[0].mxu0 %v3487
    %v3523 = vpop.f32.mrb[0].mxu0
    %v3524 = vadd.f32 0.0, %v3523
    %v3525 = vpop.f32.mrb[0].mxu0
    %v3526 = vpop.f32.mrb[0].mxu0
    %v3527 = vpop.f32.mrb[0].mxu0
    %3528 = vdwg.mxu0
    %v3529 = vmul.f32 %v3524, 0.35355338
    %v3530 = vadd.f32 %v3529, %v2508
    %v3531 = vsel %vm258, %v3530, -inf
    %3532 = vmax.xlane.f32.xlu0 %v3531
    %v3533 = vpop.xlane.xlu0 %3532
    %v3534 = vsub.f32 %v3530, %v3533
    %v3535 = vmul.f32 %v3534, 1.442695
    %v3536 = vpow.pop %v3535
    %v3537 = vsel %vm258, %v3536, 0.0
    %3538 = vadd.xlane.f32.xlu0 %v3537
    %v3539 = vpop.xlane.xlu0 %3538
    %v3540 = vrcp.pop %v3539
    %v3541 = vmul.f32 %v3536, %v3540
    %v3542 = vpack.c.bf16 %v3541, %v3541
    %3544 = vrot.lane.b32.xlu0 %v3485, 96
    %v3545 = vpop.permute.xlu0 %3544
    %v3547 = vsel %vm258, %v3542, 0
    %v3550 = vsel %vm342, %v3545, 0
    %3552 = vmatprep.subr.bf16.mxu0 0
    %3553 = vmatpush1.bf16.msra.mxu0 %v3550
    %3554 = vmatprep.subr.bf16.mxu0 0
    %3555 = vmatpush1.bf16.msra.mxu0 0
    %3556 = vmatprep.subr.bf16.mxu0 0
    %3557 = vmatpush1.bf16.msra.mxu0 0
    %3558 = vmatprep.subr.bf16.mxu0 0
    %3559 = vmatpush1.bf16.msra.mxu0 0
    %3560 = vmatprep.subr.bf16.mxu0 0
    %3561 = vmatpush1.bf16.msra.mxu0 0
    %3562 = vmatprep.subr.bf16.mxu0 0
    %3563 = vmatpush1.bf16.msra.mxu0 0
    %3564 = vmatprep.subr.bf16.mxu0 0
    %3565 = vmatpush1.bf16.msra.mxu0 0
    %3566 = vmatprep.subr.bf16.mxu0 0
    %3567 = vmatpush1.bf16.msra.mxu0 0
    %3568 = vmatprep.subr.bf16.mxu0 0
    %3569 = vmatpush1.bf16.msra.mxu0 0
    %3570 = vmatprep.subr.bf16.mxu0 0
    %3571 = vmatpush1.bf16.msra.mxu0 0
    %3572 = vmatprep.subr.bf16.mxu0 0
    %3573 = vmatpush1.bf16.msra.mxu0 0
    %3574 = vmatprep.subr.bf16.mxu0 0
    %3575 = vmatpush1.bf16.msra.mxu0 0
    %3576 = vmatprep.subr.bf16.mxu0 0
    %3577 = vmatpush1.bf16.msra.mxu0 0
    %3578 = vmatprep.subr.bf16.mxu0 0
    %3579 = vmatpush1.bf16.msra.mxu0 0
    %3580 = vmatprep.subr.bf16.mxu0 0
    %3581 = vmatpush1.bf16.msra.mxu0 0
    %3582 = vmatprep.subr.bf16.mxu0 0
    %3583 = vmatpush1.bf16.msra.mxu0 0
    %3584 = vmatprep.mubr.bf16.mxu0 0
    %3585 = vmatmul.mubr.bf16.gmra.mrb[0].mxu0 %v3547
    %v3586 = vpop.f32.mrb[0].mxu0
    %v3587 = vadd.f32 0.0, %v3586
    %v3588 = vpop.f32.mrb[0].mxu0
    %v3589 = vpop.f32.mrb[0].mxu0
    %v3590 = vpop.f32.mrb[0].mxu0
    %3591 = vdwg.mxu0
    %v3592 = vadd.f32 %v3474, %v3587
    %v3593 = vmul.f32 %v3184, %v68
    %v3594 = vpack.c.bf16 %v3593, %v3593
    %3595 = vrot.lane.b32.xlu0 %v68, 32
    %v3596 = vpop.permute.xlu0 %3595
    %v3598 = vmul.f32 %v3244, %v3596
    %v3599 = vpack.c.bf16 %v3598, %v3598
    %v3601 = vsel %vm154, %v3594, 0
    %3603 = vmatprep.subr.bf16.mxu0 0
    %3604 = vmatpush1.bf16.xpose.msra.mxu0 %v3261
    %3605 = vmatprep.subr.bf16.mxu0 0
    %3606 = vmatpush1.bf16.xpose.msra.mxu0 0
    %3607 = vmatprep.subr.bf16.mxu0 0
    %3608 = vmatpush1.bf16.xpose.msra.mxu0 0
    %3609 = vmatprep.subr.bf16.mxu0 0
    %3610 = vmatpush1.bf16.xpose.msra.mxu0 0
    %3611 = vmatprep.subr.bf16.mxu0 0
    %3612 = vmatpush1.bf16.xpose.msra.mxu0 0
    %3613 = vmatprep.subr.bf16.mxu0 0
    %3614 = vmatpush1.bf16.xpose.msra.mxu0 0
    %3615 = vmatprep.subr.bf16.mxu0 0
    %3616 = vmatpush1.bf16.xpose.msra.mxu0 0
    %3617 = vmatprep.subr.bf16.mxu0 0
    %3618 = vmatpush1.bf16.xpose.msra.mxu0 0
    %3619 = vmatprep.subr.bf16.mxu0 0
    %3620 = vmatpush1.bf16.xpose.msra.mxu0 0
    %3621 = vmatprep.subr.bf16.mxu0 0
    %3622 = vmatpush1.bf16.xpose.msra.mxu0 0
    %3623 = vmatprep.subr.bf16.mxu0 0
    %3624 = vmatpush1.bf16.xpose.msra.mxu0 0
    %3625 = vmatprep.subr.bf16.mxu0 0
    %3626 = vmatpush1.bf16.xpose.msra.mxu0 0
    %3627 = vmatprep.subr.bf16.mxu0 0
    %3628 = vmatpush1.bf16.xpose.msra.mxu0 0
    %3629 = vmatprep.subr.bf16.mxu0 0
    %3630 = vmatpush1.bf16.xpose.msra.mxu0 0
    %3631 = vmatprep.subr.bf16.mxu0 0
    %3632 = vmatpush1.bf16.xpose.msra.mxu0 0
    %3633 = vmatprep.subr.bf16.mxu0 0
    %3634 = vmatpush1.bf16.xpose.msra.mxu0 0
    %3635 = vmatprep.mubr.bf16.mxu0 0
    %3636 = vmatmul.mubr.bf16.gmra.mrb[0].mxu0 %v3601
    %v3637 = vpop.f32.mrb[0].mxu0
    %v3638 = vadd.f32 0.0, %v3637
    %v3639 = vpop.f32.mrb[0].mxu0
    %v3640 = vpop.f32.mrb[0].mxu0
    %v3641 = vpop.f32.mrb[0].mxu0
    %3642 = vdwg.mxu0
    %v3643 = vmul.f32 %v3638, 0.35355338
    %v3644 = vadd.f32 %v3643, %v2508
    %v3645 = vsel %vm258, %v3644, -inf
    %3646 = vmax.xlane.f32.xlu0 %v3645
    %v3647 = vpop.xlane.xlu0 %3646
    %v3648 = vsub.f32 %v3644, %v3647
    %v3649 = vmul.f32 %v3648, 1.442695
    %v3650 = vpow.pop %v3649
    %v3651 = vsel %vm258, %v3650, 0.0
    %3652 = vadd.xlane.f32.xlu0 %v3651
    %v3653 = vpop.xlane.xlu0 %3652
    %v3654 = vrcp.pop %v3653
    %v3655 = vmul.f32 %v3650, %v3654
    %v3656 = vpack.c.bf16 %v3655, %v3655
    %3658 = vrot.lane.b32.xlu0 %v3599, 96
    %v3659 = vpop.permute.xlu0 %3658
    %v3661 = vsel %vm258, %v3656, 0
    %v3664 = vsel %vm342, %v3659, 0
    %3666 = vmatprep.subr.bf16.mxu0 0
    %3667 = vmatpush1.bf16.msra.mxu0 %v3664
    %3668 = vmatprep.subr.bf16.mxu0 0
    %3669 = vmatpush1.bf16.msra.mxu0 0
    %3670 = vmatprep.subr.bf16.mxu0 0
    %3671 = vmatpush1.bf16.msra.mxu0 0
    %3672 = vmatprep.subr.bf16.mxu0 0
    %3673 = vmatpush1.bf16.msra.mxu0 0
    %3674 = vmatprep.subr.bf16.mxu0 0
    %3675 = vmatpush1.bf16.msra.mxu0 0
    %3676 = vmatprep.subr.bf16.mxu0 0
    %3677 = vmatpush1.bf16.msra.mxu0 0
    %3678 = vmatprep.subr.bf16.mxu0 0
    %3679 = vmatpush1.bf16.msra.mxu0 0
    %3680 = vmatprep.subr.bf16.mxu0 0
    %3681 = vmatpush1.bf16.msra.mxu0 0
    %3682 = vmatprep.subr.bf16.mxu0 0
    %3683 = vmatpush1.bf16.msra.mxu0 0
    %3684 = vmatprep.subr.bf16.mxu0 0
    %3685 = vmatpush1.bf16.msra.mxu0 0
    %3686 = vmatprep.subr.bf16.mxu0 0
    %3687 = vmatpush1.bf16.msra.mxu0 0
    %3688 = vmatprep.subr.bf16.mxu0 0
    %3689 = vmatpush1.bf16.msra.mxu0 0
    %3690 = vmatprep.subr.bf16.mxu0 0
    %3691 = vmatpush1.bf16.msra.mxu0 0
    %3692 = vmatprep.subr.bf16.mxu0 0
    %3693 = vmatpush1.bf16.msra.mxu0 0
    %3694 = vmatprep.subr.bf16.mxu0 0
    %3695 = vmatpush1.bf16.msra.mxu0 0
    %3696 = vmatprep.subr.bf16.mxu0 0
    %3697 = vmatpush1.bf16.msra.mxu0 0
    %3698 = vmatprep.mubr.bf16.mxu0 0
    %3699 = vmatmul.mubr.bf16.gmra.mrb[0].mxu0 %v3661
    %v3700 = vpop.f32.mrb[0].mxu0
    %v3701 = vadd.f32 0.0, %v3700
    %v3702 = vpop.f32.mrb[0].mxu0
    %v3703 = vpop.f32.mrb[0].mxu0
    %v3704 = vpop.f32.mrb[0].mxu0
    %3705 = vdwg.mxu0
    %v3706 = vadd.f32 %v3592, %v3701
    %v3707 = vpack.c.bf16 %v3706, %v3706
    %v3708 = vlaneseq
    %v3709 = vshrl.u32 %v3708, 7
    %v3710 = vsub.s32 0, %v3709
    %v3711 = vrot.slane %v3128, %v3710
    %v3716 = vunpack.c.l.b16 %v3124
    %v3717 = vunpack.c.l.b16 %v3125
    %v3718 = vunpack.c.l.b16 %v3126
    %v3719 = vunpack.c.l.b16 %v3127
    %v3720 = vpack.c.b16 %v3717, %v3716
    %v3721 = vpack.c.b16 %v3719, %v3718
    %v3725 = vsel %vm154, %v3707, 0
    %3727 = vmatprep.subr.bf16.mxu0 0
    %3728 = vmatpush1.bf16.msra.mxu0 %v3720
    %3729 = vmatprep.subr.bf16.mxu0 0
    %3730 = vmatpush1.bf16.msra.mxu0 %v3721
    %3731 = vmatprep.subr.bf16.mxu0 0
    %3732 = vmatpush1.bf16.msra.mxu0 0
    %3733 = vmatprep.subr.bf16.mxu0 0
    %3734 = vmatpush1.bf16.msra.mxu0 0
    %3735 = vmatprep.subr.bf16.mxu0 0
    %3736 = vmatpush1.bf16.msra.mxu0 0
    %3737 = vmatprep.subr.bf16.mxu0 0
    %3738 = vmatpush1.bf16.msra.mxu0 0
    %3739 = vmatprep.subr.bf16.mxu0 0
    %3740 = vmatpush1.bf16.msra.mxu0 0
    %3741 = vmatprep.subr.bf16.mxu0 0
    %3742 = vmatpush1.bf16.msra.mxu0 0
    %3743 = vmatprep.subr.bf16.mxu0 0
    %3744 = vmatpush1.bf16.msra.mxu0 0
    %3745 = vmatprep.subr.bf16.mxu0 0
    %3746 = vmatpush1.bf16.msra.mxu0 0
    %3747 = vmatprep.subr.bf16.mxu0 0
    %3748 = vmatpush1.bf16.msra.mxu0 0
    %3749 = vmatprep.subr.bf16.mxu0 0
    %3750 = vmatpush1.bf16.msra.mxu0 0
    %3751 = vmatprep.subr.bf16.mxu0 0
    %3752 = vmatpush1.bf16.msra.mxu0 0
    %3753 = vmatprep.subr.bf16.mxu0 0
    %3754 = vmatpush1.bf16.msra.mxu0 0
    %3755 = vmatprep.subr.bf16.mxu0 0
    %3756 = vmatpush1.bf16.msra.mxu0 0
    %3757 = vmatprep.subr.bf16.mxu0 0
    %3758 = vmatpush1.bf16.msra.mxu0 0
    %3759 = vmatprep.mubr.bf16.mxu0 0
    %3760 = vmatmul.mubr.bf16.gmra.mrb[0].mxu0 %v3725
    %v3761 = vpop.f32.mrb[0].mxu0
    %v3762 = vadd.f32 %v3711, %v3761
    %v3763 = vpop.f32.mrb[0].mxu0
    %v3764 = vpop.f32.mrb[0].mxu0
    %v3765 = vpop.f32.mrb[0].mxu0
    %3766 = vdwg.mxu0
    %v3767 = vadd.f32 %v3113, %v3762
    %v3768 = vld [vmem:[#allocation5 + $0x4c] sm:$0x1]
    %v3769 = vld [vmem:[#allocation5 + $0x4d] sm:$0x1]
    %v3770 = vsel %vm154, %v3767, 0.0
    %3771 = vadd.xlane.f32.xlu0 %v3770
    %v3772 = vpop.xlane.xlu0 %3771
    %v3773 = vmul.f32 %v3772, %v731
    %v3774 = vsub.f32 %v3767, %v3773
    %v3775 = vmul.f32 %v3774, %v3774
    %v3776 = vsel %vm154, %v3775, 0.0
    %3777 = vadd.xlane.f32.xlu0 %v3776
    %v3778 = vpop.xlane.xlu0 %3777
    %v3779 = vmul.f32 %v3778, %v731
    %v3780 = vadd.f32 %v3779, 1e-05
    %v3781 = vrsqrt.pop %v3780
    %v3782 = vmul.f32 %v3774, %v3781
    %v3783 = vlaneseq
    %v3784 = vshrl.u32 %v3783, 7
    %v3785 = vsub.s32 0, %v3784
    %v3786 = vrot.slane %v3768, %v3785
    %v3787 = vmul.f32 %v3782, %v3786
    %v3788 = vlaneseq
    %v3789 = vshrl.u32 %v3788, 7
    %v3790 = vsub.s32 0, %v3789
    %v3791 = vrot.slane %v3769, %v3790
    %v3792 = vadd.f32 %v3787, %v3791
    %v3793 = vld [vmem:[#allocation2 + $0x158] sm:$0xf]
    %v3794 = vld [vmem:[#allocation2 + $0x15c] sm:$0xf]
    %v3795 = vld [vmem:[#allocation2 + $0x160] sm:$0xf]
    %v3796 = vld [vmem:[#allocation2 + $0x164] sm:$0xf]
    %v3797 = vld [vmem:[#allocation5 + $0x4e] sm:$0x1]
    %v3798 = vld [vmem:[#allocation2 + $0x168] sm:$0xf]
    %v3799 = vld [vmem:[#allocation2 + $0x16c] sm:$0xf]
    %v3800 = vld [vmem:[#allocation2 + $0x170] sm:$0xf]
    %v3801 = vld [vmem:[#allocation2 + $0x174] sm:$0xf]
    %v3802 = vld [vmem:[#allocation2 + $0x178] sm:$0xf]
    %v3803 = vld [vmem:[#allocation2 + $0x17c] sm:$0xf]
    %v3804 = vld [vmem:[#allocation2 + $0x180] sm:$0xf]
    %v3805 = vld [vmem:[#allocation2 + $0x184] sm:$0xf]
    %v3806 = vld [vmem:[#allocation5 + $0x4f] sm:$0x1]
    %v3807 = vpack.c.bf16 %v3792, %v3792
    %v3808 = vlaneseq
    %v3809 = vshrl.u32 %v3808, 7
    %v3810 = vsub.s32 0, %v3809
    %v3811 = vrot.slane %v3797, %v3810
    %v3816 = vunpack.c.l.b16 %v3793
    %v3817 = vunpack.c.l.b16 %v3794
    %v3818 = vunpack.c.l.b16 %v3795
    %v3819 = vunpack.c.l.b16 %v3796
    %v3820 = vpack.c.b16 %v3817, %v3816
    %v3821 = vpack.c.b16 %v3819, %v3818
    %v3825 = vsel %vm154, %v3807, 0
    %3827 = vmatprep.subr.bf16.mxu0 0
    %3828 = vmatpush1.bf16.msra.mxu0 %v3820
    %3829 = vmatprep.subr.bf16.mxu0 0
    %3830 = vmatpush1.bf16.msra.mxu0 %v3821
    %3831 = vmatprep.subr.bf16.mxu0 0
    %3832 = vmatpush1.bf16.msra.mxu0 0
    %3833 = vmatprep.subr.bf16.mxu0 0
    %3834 = vmatpush1.bf16.msra.mxu0 0
    %3835 = vmatprep.subr.bf16.mxu0 0
    %3836 = vmatpush1.bf16.msra.mxu0 0
    %3837 = vmatprep.subr.bf16.mxu0 0
    %3838 = vmatpush1.bf16.msra.mxu0 0
    %3839 = vmatprep.subr.bf16.mxu0 0
    %3840 = vmatpush1.bf16.msra.mxu0 0
    %3841 = vmatprep.subr.bf16.mxu0 0
    %3842 = vmatpush1.bf16.msra.mxu0 0
    %3843 = vmatprep.subr.bf16.mxu0 0
    %3844 = vmatpush1.bf16.msra.mxu0 0
    %3845 = vmatprep.subr.bf16.mxu0 0
    %3846 = vmatpush1.bf16.msra.mxu0 0
    %3847 = vmatprep.subr.bf16.mxu0 0
    %3848 = vmatpush1.bf16.msra.mxu0 0
    %3849 = vmatprep.subr.bf16.mxu0 0
    %3850 = vmatpush1.bf16.msra.mxu0 0
    %3851 = vmatprep.subr.bf16.mxu0 0
    %3852 = vmatpush1.bf16.msra.mxu0 0
    %3853 = vmatprep.subr.bf16.mxu0 0
    %3854 = vmatpush1.bf16.msra.mxu0 0
    %3855 = vmatprep.subr.bf16.mxu0 0
    %3856 = vmatpush1.bf16.msra.mxu0 0
    %3857 = vmatprep.subr.bf16.mxu0 0
    %3858 = vmatpush1.bf16.msra.mxu0 0
    %3859 = vmatprep.mubr.bf16.mxu0 0
    %3860 = vmatmul.mubr.bf16.gmra.mrb[0].mxu0 %v3825
    %v3861 = vpop.f32.mrb[0].mxu0
    %v3862 = vadd.f32 %v3811, %v3861
    %v3863 = vpop.f32.mrb[0].mxu0
    %v3864 = vpop.f32.mrb[0].mxu0
    %v3865 = vpop.f32.mrb[0].mxu0
    %3866 = vdwg.mxu0
    %v3867 = vmax.f32 %v3862, 0.0
    %v3868 = vpack.c.bf16 %v3867, %v3867
    %v3869 = vlaneseq
    %v3870 = vshrl.u32 %v3869, 7
    %v3871 = vsub.s32 0, %v3870
    %v3872 = vrot.slane %v3806, %v3871
    %v3881 = vunpack.c.l.b16 %v3798
    %v3882 = vunpack.c.l.b16 %v3799
    %v3883 = vunpack.c.l.b16 %v3800
    %v3884 = vunpack.c.l.b16 %v3801
    %v3885 = vunpack.c.l.b16 %v3802
    %v3886 = vunpack.c.l.b16 %v3803
    %v3887 = vunpack.c.l.b16 %v3804
    %v3888 = vunpack.c.l.b16 %v3805
    %v3889 = vpack.c.b16 %v3882, %v3881
    %v3890 = vpack.c.b16 %v3884, %v3883
    %v3891 = vpack.c.b16 %v3886, %v3885
    %v3892 = vpack.c.b16 %v3888, %v3887
    %v3898 = vsel %vm856, %v3868, 0
    %3900 = vmatprep.subr.bf16.mxu0 0
    %3901 = vmatpush1.bf16.msra.mxu0 %v3889
    %3902 = vmatprep.subr.bf16.mxu0 0
    %3903 = vmatpush1.bf16.msra.mxu0 %v3890
    %3904 = vmatprep.subr.bf16.mxu0 0
    %3905 = vmatpush1.bf16.msra.mxu0 %v3891
    %3906 = vmatprep.subr.bf16.mxu0 0
    %3907 = vmatpush1.bf16.msra.mxu0 %v3892
    %3908 = vmatprep.subr.bf16.mxu0 0
    %3909 = vmatpush1.bf16.msra.mxu0 0
    %3910 = vmatprep.subr.bf16.mxu0 0
    %3911 = vmatpush1.bf16.msra.mxu0 0
    %3912 = vmatprep.subr.bf16.mxu0 0
    %3913 = vmatpush1.bf16.msra.mxu0 0
    %3914 = vmatprep.subr.bf16.mxu0 0
    %3915 = vmatpush1.bf16.msra.mxu0 0
    %3916 = vmatprep.subr.bf16.mxu0 0
    %3917 = vmatpush1.bf16.msra.mxu0 0
    %3918 = vmatprep.subr.bf16.mxu0 0
    %3919 = vmatpush1.bf16.msra.mxu0 0
    %3920 = vmatprep.subr.bf16.mxu0 0
    %3921 = vmatpush1.bf16.msra.mxu0 0
    %3922 = vmatprep.subr.bf16.mxu0 0
    %3923 = vmatpush1.bf16.msra.mxu0 0
    %3924 = vmatprep.subr.bf16.mxu0 0
    %3925 = vmatpush1.bf16.msra.mxu0 0
    %3926 = vmatprep.subr.bf16.mxu0 0
    %3927 = vmatpush1.bf16.msra.mxu0 0
    %3928 = vmatprep.subr.bf16.mxu0 0
    %3929 = vmatpush1.bf16.msra.mxu0 0
    %3930 = vmatprep.subr.bf16.mxu0 0
    %3931 = vmatpush1.bf16.msra.mxu0 0
    %3932 = vmatprep.mubr.bf16.mxu0 0
    %3933 = vmatmul.mubr.bf16.gmra.mrb[0].mxu0 %v3898
    %v3934 = vpop.f32.mrb[0].mxu0
    %v3935 = vadd.f32 %v3872, %v3934
    %v3936 = vpop.f32.mrb[0].mxu0
    %v3937 = vpop.f32.mrb[0].mxu0
    %v3938 = vpop.f32.mrb[0].mxu0
    %3939 = vdwg.mxu0
    %v3940 = vadd.f32 %v3792, %v3935
    %v3941 = vld [vmem:[#allocation5 + $0x50] sm:$0x1]
    %v3942 = vld [vmem:[#allocation5 + $0x51] sm:$0x1]
    %v3943 = vsel %vm154, %v3940, 0.0
    %3944 = vadd.xlane.f32.xlu0 %v3943
    %v3945 = vpop.xlane.xlu0 %3944
    %v3946 = vmul.f32 %v3945, %v731
    %v3947 = vsub.f32 %v3940, %v3946
    %v3948 = vmul.f32 %v3947, %v3947
    %v3949 = vsel %vm154, %v3948, 0.0
    %3950 = vadd.xlane.f32.xlu0 %v3949
    %v3951 = vpop.xlane.xlu0 %3950
    %v3952 = vmul.f32 %v3951, %v731
    %v3953 = vadd.f32 %v3952, 1e-05
    %v3954 = vrsqrt.pop %v3953
    %v3955 = vmul.f32 %v3947, %v3954
    %v3956 = vlaneseq
    %v3957 = vshrl.u32 %v3956, 7
    %v3958 = vsub.s32 0, %v3957
    %v3959 = vrot.slane %v3941, %v3958
    %v3960 = vmul.f32 %v3955, %v3959
    %v3961 = vlaneseq
    %v3962 = vshrl.u32 %v3961, 7
    %v3963 = vsub.s32 0, %v3962
    %v3964 = vrot.slane %v3942, %v3963
    %v3965 = vadd.f32 %v3960, %v3964
    %v3966 = vld [vmem:[#allocation2 + $0x188] sm:$0xf]
    %v3967 = vld [vmem:[#allocation2 + $0x18c] sm:$0xf]
    %v3968 = vld [vmem:[#allocation2 + $0x190] sm:$0xf]
    %v3969 = vld [vmem:[#allocation2 + $0x194] sm:$0xf]
    %v3970 = vld [vmem:[#allocation5 + $0x52] sm:$0x1]
    %v3971 = vld [vmem:[#allocation2 + $0x198] sm:$0xf]
    %v3972 = vld [vmem:[#allocation2 + $0x19c] sm:$0xf]
    %v3973 = vld [vmem:[#allocation2 + $0x1a0] sm:$0xf]
    %v3974 = vld [vmem:[#allocation2 + $0x1a4] sm:$0xf]
    %v3975 = vld [vmem:[#allocation5 + $0x53] sm:$0x1]
    %v3976 = vpack.c.bf16 %v3965, %v3965
    %v3977 = vlaneseq
    %v3978 = vshrl.u32 %v3977, 7
    %v3979 = vsub.s32 0, %v3978
    %v3980 = vrot.slane %v3970, %v3979
    %v3985 = vunpack.c.l.b16 %v3966
    %v3986 = vunpack.c.l.b16 %v3967
    %v3987 = vunpack.c.l.b16 %v3968
    %v3988 = vunpack.c.l.b16 %v3969
    %v3989 = vpack.c.b16 %v3986, %v3985
    %v3990 = vpack.c.b16 %v3988, %v3987
    %v3994 = vsel %vm154, %v3976, 0
    %3996 = vmatprep.subr.bf16.mxu0 0
    %3997 = vmatpush1.bf16.msra.mxu0 %v3989
    %3998 = vmatprep.subr.bf16.mxu0 0
    %3999 = vmatpush1.bf16.msra.mxu0 %v3990
    %4000 = vmatprep.subr.bf16.mxu0 0
    %4001 = vmatpush1.bf16.msra.mxu0 0
    %4002 = vmatprep.subr.bf16.mxu0 0
    %4003 = vmatpush1.bf16.msra.mxu0 0
    %4004 = vmatprep.subr.bf16.mxu0 0
    %4005 = vmatpush1.bf16.msra.mxu0 0
    %4006 = vmatprep.subr.bf16.mxu0 0
    %4007 = vmatpush1.bf16.msra.mxu0 0
    %4008 = vmatprep.subr.bf16.mxu0 0
    %4009 = vmatpush1.bf16.msra.mxu0 0
    %4010 = vmatprep.subr.bf16.mxu0 0
    %4011 = vmatpush1.bf16.msra.mxu0 0
    %4012 = vmatprep.subr.bf16.mxu0 0
    %4013 = vmatpush1.bf16.msra.mxu0 0
    %4014 = vmatprep.subr.bf16.mxu0 0
    %4015 = vmatpush1.bf16.msra.mxu0 0
    %4016 = vmatprep.subr.bf16.mxu0 0
    %4017 = vmatpush1.bf16.msra.mxu0 0
    %4018 = vmatprep.subr.bf16.mxu0 0
    %4019 = vmatpush1.bf16.msra.mxu0 0
    %4020 = vmatprep.subr.bf16.mxu0 0
    %4021 = vmatpush1.bf16.msra.mxu0 0
    %4022 = vmatprep.subr.bf16.mxu0 0
    %4023 = vmatpush1.bf16.msra.mxu0 0
    %4024 = vmatprep.subr.bf16.mxu0 0
    %4025 = vmatpush1.bf16.msra.mxu0 0
    %4026 = vmatprep.subr.bf16.mxu0 0
    %4027 = vmatpush1.bf16.msra.mxu0 0
    %4028 = vmatprep.mubr.bf16.mxu0 0
    %4029 = vmatmul.mubr.bf16.gmra.mrb[0].mxu0 %v3994
    %v4030 = vpop.f32.mrb[0].mxu0
    %v4031 = vadd.f32 %v3980, %v4030
    %v4032 = vpop.f32.mrb[0].mxu0
    %v4033 = vpop.f32.mrb[0].mxu0
    %v4034 = vpop.f32.mrb[0].mxu0
    %4035 = vdwg.mxu0
    %v4036 = vpack.c.bf16 %v4031, %v4031
    %v4037 = vmul.f32 %v4031, %v53
    %v4038 = vpack.c.bf16 %v4037, %v4037
    %v4039 = vmul.f32 %v4031, %v203
    %v4040 = vpack.c.bf16 %v4039, %v4039
    %4042 = vrot.lane.b32.xlu0 %v4036, 96
    %v4043 = vpop.permute.xlu0 %4042
    %v4045 = vsel %vm154, %v4038, 0
    %v4048 = vsel %vm154, %v4043, 0
    %4050 = vmatprep.subr.bf16.mxu0 0
    %4051 = vmatpush1.bf16.xpose.msra.mxu0 %v4048
    %4052 = vmatprep.subr.bf16.mxu0 0
    %4053 = vmatpush1.bf16.xpose.msra.mxu0 0
    %4054 = vmatprep.subr.bf16.mxu0 0
    %4055 = vmatpush1.bf16.xpose.msra.mxu0 0
    %4056 = vmatprep.subr.bf16.mxu0 0
    %4057 = vmatpush1.bf16.xpose.msra.mxu0 0
    %4058 = vmatprep.subr.bf16.mxu0 0
    %4059 = vmatpush1.bf16.xpose.msra.mxu0 0
    %4060 = vmatprep.subr.bf16.mxu0 0
    %4061 = vmatpush1.bf16.xpose.msra.mxu0 0
    %4062 = vmatprep.subr.bf16.mxu0 0
    %4063 = vmatpush1.bf16.xpose.msra.mxu0 0
    %4064 = vmatprep.subr.bf16.mxu0 0
    %4065 = vmatpush1.bf16.xpose.msra.mxu0 0
    %4066 = vmatprep.subr.bf16.mxu0 0
    %4067 = vmatpush1.bf16.xpose.msra.mxu0 0
    %4068 = vmatprep.subr.bf16.mxu0 0
    %4069 = vmatpush1.bf16.xpose.msra.mxu0 0
    %4070 = vmatprep.subr.bf16.mxu0 0
    %4071 = vmatpush1.bf16.xpose.msra.mxu0 0
    %4072 = vmatprep.subr.bf16.mxu0 0
    %4073 = vmatpush1.bf16.xpose.msra.mxu0 0
    %4074 = vmatprep.subr.bf16.mxu0 0
    %4075 = vmatpush1.bf16.xpose.msra.mxu0 0
    %4076 = vmatprep.subr.bf16.mxu0 0
    %4077 = vmatpush1.bf16.xpose.msra.mxu0 0
    %4078 = vmatprep.subr.bf16.mxu0 0
    %4079 = vmatpush1.bf16.xpose.msra.mxu0 0
    %4080 = vmatprep.subr.bf16.mxu0 0
    %4081 = vmatpush1.bf16.xpose.msra.mxu0 0
    %4082 = vmatprep.mubr.bf16.mxu0 0
    %4083 = vmatmul.mubr.bf16.gmra.mrb[0].mxu0 %v4045
    %v4084 = vpop.f32.mrb[0].mxu0
    %v4085 = vadd.f32 0.0, %v4084
    %v4086 = vpop.f32.mrb[0].mxu0
    %v4087 = vpop.f32.mrb[0].mxu0
    %v4088 = vpop.f32.mrb[0].mxu0
    %4089 = vdwg.mxu0
    %v4090 = vmul.f32 %v4085, 0.35355338
    %v4091 = vadd.f32 %v4090, %v2507
    %v4092 = vsel %vm258, %v4091, -inf
    %4093 = vmax.xlane.f32.xlu0 %v4092
    %v4094 = vpop.xlane.xlu0 %4093
    %v4095 = vsub.f32 %v4091, %v4094
    %v4096 = vmul.f32 %v4095, 1.442695
    %v4097 = vpow.pop %v4096
    %v4098 = vsel %vm258, %v4097, 0.0
    %4099 = vadd.xlane.f32.xlu0 %v4098
    %v4100 = vpop.xlane.xlu0 %4099
    %v4101 = vrcp.pop %v4100
    %v4102 = vmul.f32 %v4097, %v4101
    %v4103 = vpack.c.bf16 %v4102, %v4102
    %v4104 = vmul.f32 %v4031, %v58
    %v4105 = vpack.c.bf16 %v4104, %v4104
    %v4106 = vmul.f32 %v4031, %v275
    %v4107 = vpack.c.bf16 %v4106, %v4106
    %v4109 = vsel %vm154, %v4105, 0
    %4111 = vmatprep.subr.bf16.mxu0 0
    %4112 = vmatpush1.bf16.xpose.msra.mxu0 %v4048
    %4113 = vmatprep.subr.bf16.mxu0 0
    %4114 = vmatpush1.bf16.xpose.msra.mxu0 0
    %4115 = vmatprep.subr.bf16.mxu0 0
    %4116 = vmatpush1.bf16.xpose.msra.mxu0 0
    %4117 = vmatprep.subr.bf16.mxu0 0
    %4118 = vmatpush1.bf16.xpose.msra.mxu0 0
    %4119 = vmatprep.subr.bf16.mxu0 0
    %4120 = vmatpush1.bf16.xpose.msra.mxu0 0
    %4121 = vmatprep.subr.bf16.mxu0 0
    %4122 = vmatpush1.bf16.xpose.msra.mxu0 0
    %4123 = vmatprep.subr.bf16.mxu0 0
    %4124 = vmatpush1.bf16.xpose.msra.mxu0 0
    %4125 = vmatprep.subr.bf16.mxu0 0
    %4126 = vmatpush1.bf16.xpose.msra.mxu0 0
    %4127 = vmatprep.subr.bf16.mxu0 0
    %4128 = vmatpush1.bf16.xpose.msra.mxu0 0
    %4129 = vmatprep.subr.bf16.mxu0 0
    %4130 = vmatpush1.bf16.xpose.msra.mxu0 0
    %4131 = vmatprep.subr.bf16.mxu0 0
    %4132 = vmatpush1.bf16.xpose.msra.mxu0 0
    %4133 = vmatprep.subr.bf16.mxu0 0
    %4134 = vmatpush1.bf16.xpose.msra.mxu0 0
    %4135 = vmatprep.subr.bf16.mxu0 0
    %4136 = vmatpush1.bf16.xpose.msra.mxu0 0
    %4137 = vmatprep.subr.bf16.mxu0 0
    %4138 = vmatpush1.bf16.xpose.msra.mxu0 0
    %4139 = vmatprep.subr.bf16.mxu0 0
    %4140 = vmatpush1.bf16.xpose.msra.mxu0 0
    %4141 = vmatprep.subr.bf16.mxu0 0
    %4142 = vmatpush1.bf16.xpose.msra.mxu0 0
    %4143 = vmatprep.mubr.bf16.mxu0 0
    %4144 = vmatmul.mubr.bf16.gmra.mrb[0].mxu0 %v4109
    %v4145 = vpop.f32.mrb[0].mxu0
    %v4146 = vadd.f32 0.0, %v4145
    %v4147 = vpop.f32.mrb[0].mxu0
    %v4148 = vpop.f32.mrb[0].mxu0
    %v4149 = vpop.f32.mrb[0].mxu0
    %4150 = vdwg.mxu0
    %v4151 = vmul.f32 %v4146, 0.35355338
    %v4152 = vadd.f32 %v4151, %v2507
    %v4153 = vsel %vm258, %v4152, -inf
    %4154 = vmax.xlane.f32.xlu0 %v4153
    %v4155 = vpop.xlane.xlu0 %4154
    %v4156 = vsub.f32 %v4152, %v4155
    %v4157 = vmul.f32 %v4156, 1.442695
    %v4158 = vpow.pop %v4157
    %v4159 = vsel %vm258, %v4158, 0.0
    %4160 = vadd.xlane.f32.xlu0 %v4159
    %v4161 = vpop.xlane.xlu0 %4160
    %v4162 = vrcp.pop %v4161
    %v4163 = vmul.f32 %v4158, %v4162
    %v4164 = vpack.c.bf16 %v4163, %v4163
    %4166 = vrot.lane.b32.xlu0 %v4107, 64
    %v4167 = vpop.permute.xlu0 %4166
    %v4169 = vsel %vm258, %v4164, 0
    %v4172 = vsel %vm342, %v4167, 0
    %4174 = vmatprep.subr.bf16.mxu0 0
    %4175 = vmatpush1.bf16.msra.mxu0 %v4172
    %4176 = vmatprep.subr.bf16.mxu0 0
    %4177 = vmatpush1.bf16.msra.mxu0 0
    %4178 = vmatprep.subr.bf16.mxu0 0
    %4179 = vmatpush1.bf16.msra.mxu0 0
    %4180 = vmatprep.subr.bf16.mxu0 0
    %4181 = vmatpush1.bf16.msra.mxu0 0
    %4182 = vmatprep.subr.bf16.mxu0 0
    %4183 = vmatpush1.bf16.msra.mxu0 0
    %4184 = vmatprep.subr.bf16.mxu0 0
    %4185 = vmatpush1.bf16.msra.mxu0 0
    %4186 = vmatprep.subr.bf16.mxu0 0
    %4187 = vmatpush1.bf16.msra.mxu0 0
    %4188 = vmatprep.subr.bf16.mxu0 0
    %4189 = vmatpush1.bf16.msra.mxu0 0
    %4190 = vmatprep.subr.bf16.mxu0 0
    %4191 = vmatpush1.bf16.msra.mxu0 0
    %4192 = vmatprep.subr.bf16.mxu0 0
    %4193 = vmatpush1.bf16.msra.mxu0 0
    %4194 = vmatprep.subr.bf16.mxu0 0
    %4195 = vmatpush1.bf16.msra.mxu0 0
    %4196 = vmatprep.subr.bf16.mxu0 0
    %4197 = vmatpush1.bf16.msra.mxu0 0
    %4198 = vmatprep.subr.bf16.mxu0 0
    %4199 = vmatpush1.bf16.msra.mxu0 0
    %4200 = vmatprep.subr.bf16.mxu0 0
    %4201 = vmatpush1.bf16.msra.mxu0 0
    %4202 = vmatprep.subr.bf16.mxu0 0
    %4203 = vmatpush1.bf16.msra.mxu0 0
    %4204 = vmatprep.subr.bf16.mxu0 0
    %4205 = vmatpush1.bf16.msra.mxu0 0
    %4206 = vmatprep.mubr.bf16.mxu0 0
    %4207 = vmatmul.mubr.bf16.gmra.mrb[0].mxu0 %v4169
    %v4208 = vpop.f32.mrb[0].mxu0
    %v4209 = vadd.f32 0.0, %v4208
    %v4210 = vpop.f32.mrb[0].mxu0
    %v4211 = vpop.f32.mrb[0].mxu0
    %v4212 = vpop.f32.mrb[0].mxu0
    %4213 = vdwg.mxu0
    %4215 = vrot.lane.b32.xlu0 %v4040, 64
    %v4216 = vpop.permute.xlu0 %4215
    %v4218 = vsel %vm258, %v4103, 0
    %v4221 = vsel %vm342, %v4216, 0
    %4223 = vmatprep.subr.bf16.mxu0 0
    %4224 = vmatpush1.bf16.msra.mxu0 %v4221
    %4225 = vmatprep.subr.bf16.mxu0 0
    %4226 = vmatpush1.bf16.msra.mxu0 0
    %4227 = vmatprep.subr.bf16.mxu0 0
    %4228 = vmatpush1.bf16.msra.mxu0 0
    %4229 = vmatprep.subr.bf16.mxu0 0
    %4230 = vmatpush1.bf16.msra.mxu0 0
    %4231 = vmatprep.subr.bf16.mxu0 0
    %4232 = vmatpush1.bf16.msra.mxu0 0
    %4233 = vmatprep.subr.bf16.mxu0 0
    %4234 = vmatpush1.bf16.msra.mxu0 0
    %4235 = vmatprep.subr.bf16.mxu0 0
    %4236 = vmatpush1.bf16.msra.mxu0 0
    %4237 = vmatprep.subr.bf16.mxu0 0
    %4238 = vmatpush1.bf16.msra.mxu0 0
    %4239 = vmatprep.subr.bf16.mxu0 0
    %4240 = vmatpush1.bf16.msra.mxu0 0
    %4241 = vmatprep.subr.bf16.mxu0 0
    %4242 = vmatpush1.bf16.msra.mxu0 0
    %4243 = vmatprep.subr.bf16.mxu0 0
    %4244 = vmatpush1.bf16.msra.mxu0 0
    %4245 = vmatprep.subr.bf16.mxu0 0
    %4246 = vmatpush1.bf16.msra.mxu0 0
    %4247 = vmatprep.subr.bf16.mxu0 0
    %4248 = vmatpush1.bf16.msra.mxu0 0
    %4249 = vmatprep.subr.bf16.mxu0 0
    %4250 = vmatpush1.bf16.msra.mxu0 0
    %4251 = vmatprep.subr.bf16.mxu0 0
    %4252 = vmatpush1.bf16.msra.mxu0 0
    %4253 = vmatprep.subr.bf16.mxu0 0
    %4254 = vmatpush1.bf16.msra.mxu0 0
    %4255 = vmatprep.mubr.bf16.mxu0 0
    %4256 = vmatmul.mubr.bf16.gmra.mrb[0].mxu0 %v4218
    %v4257 = vpop.f32.mrb[0].mxu0
    %v4258 = vadd.f32 %v4209, %v4257
    %v4259 = vpop.f32.mrb[0].mxu0
    %v4260 = vpop.f32.mrb[0].mxu0
    %v4261 = vpop.f32.mrb[0].mxu0
    %4262 = vdwg.mxu0
    %v4263 = vmul.f32 %v4031, %v63
    %v4264 = vpack.c.bf16 %v4263, %v4263
    %v4265 = vmul.f32 %v4031, %v439
    %v4266 = vpack.c.bf16 %v4265, %v4265
    %v4268 = vsel %vm154, %v4264, 0
    %4270 = vmatprep.subr.bf16.mxu0 0
    %4271 = vmatpush1.bf16.xpose.msra.mxu0 %v4048
    %4272 = vmatprep.subr.bf16.mxu0 0
    %4273 = vmatpush1.bf16.xpose.msra.mxu0 0
    %4274 = vmatprep.subr.bf16.mxu0 0
    %4275 = vmatpush1.bf16.xpose.msra.mxu0 0
    %4276 = vmatprep.subr.bf16.mxu0 0
    %4277 = vmatpush1.bf16.xpose.msra.mxu0 0
    %4278 = vmatprep.subr.bf16.mxu0 0
    %4279 = vmatpush1.bf16.xpose.msra.mxu0 0
    %4280 = vmatprep.subr.bf16.mxu0 0
    %4281 = vmatpush1.bf16.xpose.msra.mxu0 0
    %4282 = vmatprep.subr.bf16.mxu0 0
    %4283 = vmatpush1.bf16.xpose.msra.mxu0 0
    %4284 = vmatprep.subr.bf16.mxu0 0
    %4285 = vmatpush1.bf16.xpose.msra.mxu0 0
    %4286 = vmatprep.subr.bf16.mxu0 0
    %4287 = vmatpush1.bf16.xpose.msra.mxu0 0
    %4288 = vmatprep.subr.bf16.mxu0 0
    %4289 = vmatpush1.bf16.xpose.msra.mxu0 0
    %4290 = vmatprep.subr.bf16.mxu0 0
    %4291 = vmatpush1.bf16.xpose.msra.mxu0 0
    %4292 = vmatprep.subr.bf16.mxu0 0
    %4293 = vmatpush1.bf16.xpose.msra.mxu0 0
    %4294 = vmatprep.subr.bf16.mxu0 0
    %4295 = vmatpush1.bf16.xpose.msra.mxu0 0
    %4296 = vmatprep.subr.bf16.mxu0 0
    %4297 = vmatpush1.bf16.xpose.msra.mxu0 0
    %4298 = vmatprep.subr.bf16.mxu0 0
    %4299 = vmatpush1.bf16.xpose.msra.mxu0 0
    %4300 = vmatprep.subr.bf16.mxu0 0
    %4301 = vmatpush1.bf16.xpose.msra.mxu0 0
    %4302 = vmatprep.mubr.bf16.mxu0 0
    %4303 = vmatmul.mubr.bf16.gmra.mrb[0].mxu0 %v4268
    %v4304 = vpop.f32.mrb[0].mxu0
    %v4305 = vadd.f32 0.0, %v4304
    %v4306 = vpop.f32.mrb[0].mxu0
    %v4307 = vpop.f32.mrb[0].mxu0
    %v4308 = vpop.f32.mrb[0].mxu0
    %4309 = vdwg.mxu0
    %v4310 = vmul.f32 %v4305, 0.35355338
    %v4311 = vadd.f32 %v4310, %v2507
    %v4312 = vsel %vm258, %v4311, -inf
    %4313 = vmax.xlane.f32.xlu0 %v4312
    %v4314 = vpop.xlane.xlu0 %4313
    %v4315 = vsub.f32 %v4311, %v4314
    %v4316 = vmul.f32 %v4315, 1.442695
    %v4317 = vpow.pop %v4316
    %v4318 = vsel %vm258, %v4317, 0.0
    %4319 = vadd.xlane.f32.xlu0 %v4318
    %v4320 = vpop.xlane.xlu0 %4319
    %v4321 = vrcp.pop %v4320
    %v4322 = vmul.f32 %v4317, %v4321
    %v4323 = vpack.c.bf16 %v4322, %v4322
    %4325 = vrot.lane.b32.xlu0 %v4266, 64
    %v4326 = vpop.permute.xlu0 %4325
    %v4328 = vsel %vm258, %v4323, 0
    %v4331 = vsel %vm342, %v4326, 0
    %4333 = vmatprep.subr.bf16.mxu0 0
    %4334 = vmatpush1.bf16.msra.mxu0 %v4331
    %4335 = vmatprep.subr.bf16.mxu0 0
    %4336 = vmatpush1.bf16.msra.mxu0 0
    %4337 = vmatprep.subr.bf16.mxu0 0
    %4338 = vmatpush1.bf16.msra.mxu0 0
    %4339 = vmatprep.subr.bf16.mxu0 0
    %4340 = vmatpush1.bf16.msra.mxu0 0
    %4341 = vmatprep.subr.bf16.mxu0 0
    %4342 = vmatpush1.bf16.msra.mxu0 0
    %4343 = vmatprep.subr.bf16.mxu0 0
    %4344 = vmatpush1.bf16.msra.mxu0 0
    %4345 = vmatprep.subr.bf16.mxu0 0
    %4346 = vmatpush1.bf16.msra.mxu0 0
    %4347 = vmatprep.subr.bf16.mxu0 0
    %4348 = vmatpush1.bf16.msra.mxu0 0
    %4349 = vmatprep.subr.bf16.mxu0 0
    %4350 = vmatpush1.bf16.msra.mxu0 0
    %4351 = vmatprep.subr.bf16.mxu0 0
    %4352 = vmatpush1.bf16.msra.mxu0 0
    %4353 = vmatprep.subr.bf16.mxu0 0
    %4354 = vmatpush1.bf16.msra.mxu0 0
    %4355 = vmatprep.subr.bf16.mxu0 0
    %4356 = vmatpush1.bf16.msra.mxu0 0
    %4357 = vmatprep.subr.bf16.mxu0 0
    %4358 = vmatpush1.bf16.msra.mxu0 0
    %4359 = vmatprep.subr.bf16.mxu0 0
    %4360 = vmatpush1.bf16.msra.mxu0 0
    %4361 = vmatprep.subr.bf16.mxu0 0
    %4362 = vmatpush1.bf16.msra.mxu0 0
    %4363 = vmatprep.subr.bf16.mxu0 0
    %4364 = vmatpush1.bf16.msra.mxu0 0
    %4365 = vmatprep.mubr.bf16.mxu0 0
    %4366 = vmatmul.mubr.bf16.gmra.mrb[0].mxu0 %v4328
    %v4367 = vpop.f32.mrb[0].mxu0
    %v4368 = vadd.f32 0.0, %v4367
    %v4369 = vpop.f32.mrb[0].mxu0
    %v4370 = vpop.f32.mrb[0].mxu0
    %v4371 = vpop.f32.mrb[0].mxu0
    %4372 = vdwg.mxu0
    %v4373 = vadd.f32 %v4258, %v4368
    %v4374 = vmul.f32 %v4031, %v68
    %v4375 = vpack.c.bf16 %v4374, %v4374
    %v4376 = vmul.f32 %v4031, %v554
    %v4377 = vpack.c.bf16 %v4376, %v4376
    %v4379 = vsel %vm154, %v4375, 0
    %4381 = vmatprep.subr.bf16.mxu0 0
    %4382 = vmatpush1.bf16.xpose.msra.mxu0 %v4048
    %4383 = vmatprep.subr.bf16.mxu0 0
    %4384 = vmatpush1.bf16.xpose.msra.mxu0 0
    %4385 = vmatprep.subr.bf16.mxu0 0
    %4386 = vmatpush1.bf16.xpose.msra.mxu0 0
    %4387 = vmatprep.subr.bf16.mxu0 0
    %4388 = vmatpush1.bf16.xpose.msra.mxu0 0
    %4389 = vmatprep.subr.bf16.mxu0 0
    %4390 = vmatpush1.bf16.xpose.msra.mxu0 0
    %4391 = vmatprep.subr.bf16.mxu0 0
    %4392 = vmatpush1.bf16.xpose.msra.mxu0 0
    %4393 = vmatprep.subr.bf16.mxu0 0
    %4394 = vmatpush1.bf16.xpose.msra.mxu0 0
    %4395 = vmatprep.subr.bf16.mxu0 0
    %4396 = vmatpush1.bf16.xpose.msra.mxu0 0
    %4397 = vmatprep.subr.bf16.mxu0 0
    %4398 = vmatpush1.bf16.xpose.msra.mxu0 0
    %4399 = vmatprep.subr.bf16.mxu0 0
    %4400 = vmatpush1.bf16.xpose.msra.mxu0 0
    %4401 = vmatprep.subr.bf16.mxu0 0
    %4402 = vmatpush1.bf16.xpose.msra.mxu0 0
    %4403 = vmatprep.subr.bf16.mxu0 0
    %4404 = vmatpush1.bf16.xpose.msra.mxu0 0
    %4405 = vmatprep.subr.bf16.mxu0 0
    %4406 = vmatpush1.bf16.xpose.msra.mxu0 0
    %4407 = vmatprep.subr.bf16.mxu0 0
    %4408 = vmatpush1.bf16.xpose.msra.mxu0 0
    %4409 = vmatprep.subr.bf16.mxu0 0
    %4410 = vmatpush1.bf16.xpose.msra.mxu0 0
    %4411 = vmatprep.subr.bf16.mxu0 0
    %4412 = vmatpush1.bf16.xpose.msra.mxu0 0
    %4413 = vmatprep.mubr.bf16.mxu0 0
    %4414 = vmatmul.mubr.bf16.gmra.mrb[0].mxu0 %v4379
    %v4415 = vpop.f32.mrb[0].mxu0
    %v4416 = vadd.f32 0.0, %v4415
    %v4417 = vpop.f32.mrb[0].mxu0
    %v4418 = vpop.f32.mrb[0].mxu0
    %v4419 = vpop.f32.mrb[0].mxu0
    %4420 = vdwg.mxu0
    %v4421 = vmul.f32 %v4416, 0.35355338
    %v4422 = vadd.f32 %v4421, %v2507
    %v4423 = vsel %vm258, %v4422, -inf
    %4424 = vmax.xlane.f32.xlu0 %v4423
    %v4425 = vpop.xlane.xlu0 %4424
    %v4426 = vsub.f32 %v4422, %v4425
    %v4427 = vmul.f32 %v4426, 1.442695
    %v4428 = vpow.pop %v4427
    %v4429 = vsel %vm258, %v4428, 0.0
    %4430 = vadd.xlane.f32.xlu0 %v4429
    %v4431 = vpop.xlane.xlu0 %4430
    %v4432 = vrcp.pop %v4431
    %v4433 = vmul.f32 %v4428, %v4432
    %v4434 = vpack.c.bf16 %v4433, %v4433
    %4436 = vrot.lane.b32.xlu0 %v4377, 64
    %v4437 = vpop.permute.xlu0 %4436
    %v4439 = vsel %vm258, %v4434, 0
    %v4442 = vsel %vm342, %v4437, 0
    %4444 = vmatprep.subr.bf16.mxu0 0
    %4445 = vmatpush1.bf16.msra.mxu0 %v4442
    %4446 = vmatprep.subr.bf16.mxu0 0
    %4447 = vmatpush1.bf16.msra.mxu0 0
    %4448 = vmatprep.subr.bf16.mxu0 0
    %4449 = vmatpush1.bf16.msra.mxu0 0
    %4450 = vmatprep.subr.bf16.mxu0 0
    %4451 = vmatpush1.bf16.msra.mxu0 0
    %4452 = vmatprep.subr.bf16.mxu0 0
    %4453 = vmatpush1.bf16.msra.mxu0 0
    %4454 = vmatprep.subr.bf16.mxu0 0
    %4455 = vmatpush1.bf16.msra.mxu0 0
    %4456 = vmatprep.subr.bf16.mxu0 0
    %4457 = vmatpush1.bf16.msra.mxu0 0
    %4458 = vmatprep.subr.bf16.mxu0 0
    %4459 = vmatpush1.bf16.msra.mxu0 0
    %4460 = vmatprep.subr.bf16.mxu0 0
    %4461 = vmatpush1.bf16.msra.mxu0 0
    %4462 = vmatprep.subr.bf16.mxu0 0
    %4463 = vmatpush1.bf16.msra.mxu0 0
    %4464 = vmatprep.subr.bf16.mxu0 0
    %4465 = vmatpush1.bf16.msra.mxu0 0
    %4466 = vmatprep.subr.bf16.mxu0 0
    %4467 = vmatpush1.bf16.msra.mxu0 0
    %4468 = vmatprep.subr.bf16.mxu0 0
    %4469 = vmatpush1.bf16.msra.mxu0 0
    %4470 = vmatprep.subr.bf16.mxu0 0
    %4471 = vmatpush1.bf16.msra.mxu0 0
    %4472 = vmatprep.subr.bf16.mxu0 0
    %4473 = vmatpush1.bf16.msra.mxu0 0
    %4474 = vmatprep.subr.bf16.mxu0 0
    %4475 = vmatpush1.bf16.msra.mxu0 0
    %4476 = vmatprep.mubr.bf16.mxu0 0
    %4477 = vmatmul.mubr.bf16.gmra.mrb[0].mxu0 %v4439
    %v4478 = vpop.f32.mrb[0].mxu0
    %v4479 = vadd.f32 0.0, %v4478
    %v4480 = vpop.f32.mrb[0].mxu0
    %v4481 = vpop.f32.mrb[0].mxu0
    %v4482 = vpop.f32.mrb[0].mxu0
    %4483 = vdwg.mxu0
    %v4484 = vadd.f32 %v4373, %v4479
    %v4485 = vpack.c.bf16 %v4484, %v4484
    %v4486 = vlaneseq
    %v4487 = vshrl.u32 %v4486, 7
    %v4488 = vsub.s32 0, %v4487
    %v4489 = vrot.slane %v3975, %v4488
    %v4494 = vunpack.c.l.b16 %v3971
    %v4495 = vunpack.c.l.b16 %v3972
    %v4496 = vunpack.c.l.b16 %v3973
    %v4497 = vunpack.c.l.b16 %v3974
    %v4498 = vpack.c.b16 %v4495, %v4494
    %v4499 = vpack.c.b16 %v4497, %v4496
    %v4503 = vsel %vm154, %v4485, 0
    %4505 = vmatprep.subr.bf16.mxu0 0
    %4506 = vmatpush1.bf16.msra.mxu0 %v4498
    %4507 = vmatprep.subr.bf16.mxu0 0
    %4508 = vmatpush1.bf16.msra.mxu0 %v4499
    %4509 = vmatprep.subr.bf16.mxu0 0
    %4510 = vmatpush1.bf16.msra.mxu0 0
    %4511 = vmatprep.subr.bf16.mxu0 0
    %4512 = vmatpush1.bf16.msra.mxu0 0
    %4513 = vmatprep.subr.bf16.mxu0 0
    %4514 = vmatpush1.bf16.msra.mxu0 0
    %4515 = vmatprep.subr.bf16.mxu0 0
    %4516 = vmatpush1.bf16.msra.mxu0 0
    %4517 = vmatprep.subr.bf16.mxu0 0
    %4518 = vmatpush1.bf16.msra.mxu0 0
    %4519 = vmatprep.subr.bf16.mxu0 0
    %4520 = vmatpush1.bf16.msra.mxu0 0
    %4521 = vmatprep.subr.bf16.mxu0 0
    %4522 = vmatpush1.bf16.msra.mxu0 0
    %4523 = vmatprep.subr.bf16.mxu0 0
    %4524 = vmatpush1.bf16.msra.mxu0 0
    %4525 = vmatprep.subr.bf16.mxu0 0
    %4526 = vmatpush1.bf16.msra.mxu0 0
    %4527 = vmatprep.subr.bf16.mxu0 0
    %4528 = vmatpush1.bf16.msra.mxu0 0
    %4529 = vmatprep.subr.bf16.mxu0 0
    %4530 = vmatpush1.bf16.msra.mxu0 0
    %4531 = vmatprep.subr.bf16.mxu0 0
    %4532 = vmatpush1.bf16.msra.mxu0 0
    %4533 = vmatprep.subr.bf16.mxu0 0
    %4534 = vmatpush1.bf16.msra.mxu0 0
    %4535 = vmatprep.subr.bf16.mxu0 0
    %4536 = vmatpush1.bf16.msra.mxu0 0
    %4537 = vmatprep.mubr.bf16.mxu0 0
    %4538 = vmatmul.mubr.bf16.gmra.mrb[0].mxu0 %v4503
    %v4539 = vpop.f32.mrb[0].mxu0
    %v4540 = vadd.f32 %v4489, %v4539
    %v4541 = vpop.f32.mrb[0].mxu0
    %v4542 = vpop.f32.mrb[0].mxu0
    %v4543 = vpop.f32.mrb[0].mxu0
    %4544 = vdwg.mxu0
    %v4545 = vadd.f32 %v3965, %v4540
    %v4546 = vld [vmem:[#allocation5 + $0x54] sm:$0x1]
    %v4547 = vld [vmem:[#allocation5 + $0x55] sm:$0x1]
    %v4548 = vsel %vm154, %v4545, 0.0
    %4549 = vadd.xlane.f32.xlu0 %v4548
    %v4550 = vpop.xlane.xlu0 %4549
    %v4551 = vmul.f32 %v4550, %v731
    %v4552 = vsub.f32 %v4545, %v4551
    %v4553 = vmul.f32 %v4552, %v4552
    %v4554 = vsel %vm154, %v4553, 0.0
    %4555 = vadd.xlane.f32.xlu0 %v4554
    %v4556 = vpop.xlane.xlu0 %4555
    %v4557 = vmul.f32 %v4556, %v731
    %v4558 = vadd.f32 %v4557, 1e-05
    %v4559 = vrsqrt.pop %v4558
    %v4560 = vmul.f32 %v4552, %v4559
    %v4561 = vlaneseq
    %v4562 = vshrl.u32 %v4561, 7
    %v4563 = vsub.s32 0, %v4562
    %v4564 = vrot.slane %v4546, %v4563
    %v4565 = vmul.f32 %v4560, %v4564
    %v4566 = vlaneseq
    %v4567 = vshrl.u32 %v4566, 7
    %v4568 = vsub.s32 0, %v4567
    %v4569 = vrot.slane %v4547, %v4568
    %v4570 = vadd.f32 %v4565, %v4569
    %v4571 = vld [vmem:[#allocation2 + $0x1a8] sm:$0xf]
    %v4572 = vld [vmem:[#allocation2 + $0x1ac] sm:$0xf]
    %v4573 = vld [vmem:[#allocation2 + $0x1b0] sm:$0xf]
    %v4574 = vld [vmem:[#allocation2 + $0x1b4] sm:$0xf]
    %v4575 = vld [vmem:[#allocation5 + $0x56] sm:$0x1]
    %v4576 = vld [vmem:[#allocation2 + $0x1b8] sm:$0xf]
    %v4577 = vld [vmem:[#allocation2 + $0x1bc] sm:$0xf]
    %v4578 = vld [vmem:[#allocation2 + $0x1c0] sm:$0xf]
    %v4579 = vld [vmem:[#allocation2 + $0x1c4] sm:$0xf]
    %v4580 = vld [vmem:[#allocation5 + $0x57] sm:$0x1]
    %v4581 = vld [vmem:[#allocation2 + $0x1c8] sm:$0xf]
    %v4582 = vld [vmem:[#allocation2 + $0x1cc] sm:$0xf]
    %v4583 = vld [vmem:[#allocation2 + $0x1d0] sm:$0xf]
    %v4584 = vld [vmem:[#allocation2 + $0x1d4] sm:$0xf]
    %v4585 = vld [vmem:[#allocation5 + $0x58] sm:$0x1]
    %v4586 = vpack.c.bf16 %v4570, %v4570
    %v4587 = vlaneseq
    %v4588 = vshrl.u32 %v4587, 7
    %v4589 = vsub.s32 0, %v4588
    %v4590 = vrot.slane %v4575, %v4589
    %v4595 = vunpack.c.l.b16 %v4571
    %v4596 = vunpack.c.l.b16 %v4572
    %v4597 = vunpack.c.l.b16 %v4573
    %v4598 = vunpack.c.l.b16 %v4574
    %v4599 = vpack.c.b16 %v4596, %v4595
    %v4600 = vpack.c.b16 %v4598, %v4597
    %v4604 = vsel %vm154, %v4586, 0
    %4606 = vmatprep.subr.bf16.mxu0 0
    %4607 = vmatpush1.bf16.msra.mxu0 %v4599
    %4608 = vmatprep.subr.bf16.mxu0 0
    %4609 = vmatpush1.bf16.msra.mxu0 %v4600
    %4610 = vmatprep.subr.bf16.mxu0 0
    %4611 = vmatpush1.bf16.msra.mxu0 0
    %4612 = vmatprep.subr.bf16.mxu0 0
    %4613 = vmatpush1.bf16.msra.mxu0 0
    %4614 = vmatprep.subr.bf16.mxu0 0
    %4615 = vmatpush1.bf16.msra.mxu0 0
    %4616 = vmatprep.subr.bf16.mxu0 0
    %4617 = vmatpush1.bf16.msra.mxu0 0
    %4618 = vmatprep.subr.bf16.mxu0 0
    %4619 = vmatpush1.bf16.msra.mxu0 0
    %4620 = vmatprep.subr.bf16.mxu0 0
    %4621 = vmatpush1.bf16.msra.mxu0 0
    %4622 = vmatprep.subr.bf16.mxu0 0
    %4623 = vmatpush1.bf16.msra.mxu0 0
    %4624 = vmatprep.subr.bf16.mxu0 0
    %4625 = vmatpush1.bf16.msra.mxu0 0
    %4626 = vmatprep.subr.bf16.mxu0 0
    %4627 = vmatpush1.bf16.msra.mxu0 0
    %4628 = vmatprep.subr.bf16.mxu0 0
    %4629 = vmatpush1.bf16.msra.mxu0 0
    %4630 = vmatprep.subr.bf16.mxu0 0
    %4631 = vmatpush1.bf16.msra.mxu0 0
    %4632 = vmatprep.subr.bf16.mxu0 0
    %4633 = vmatpush1.bf16.msra.mxu0 0
    %4634 = vmatprep.subr.bf16.mxu0 0
    %4635 = vmatpush1.bf16.msra.mxu0 0
    %4636 = vmatprep.subr.bf16.mxu0 0
    %4637 = vmatpush1.bf16.msra.mxu0 0
    %4638 = vmatprep.mubr.bf16.mxu0 0
    %4639 = vmatmul.mubr.bf16.gmra.mrb[0].mxu0 %v4604
    %v4640 = vpop.f32.mrb[0].mxu0
    %v4641 = vadd.f32 %v4590, %v4640
    %v4642 = vpop.f32.mrb[0].mxu0
    %v4643 = vpop.f32.mrb[0].mxu0
    %v4644 = vpop.f32.mrb[0].mxu0
    %4645 = vdwg.mxu0
    %v4646 = vlaneseq
    %v4647 = vshrl.u32 %v4646, 7
    %v4648 = vsub.s32 0, %v4647
    %v4649 = vrot.slane %v4580, %v4648
    %v4654 = vunpack.c.l.b16 %v4576
    %v4655 = vunpack.c.l.b16 %v4577
    %v4656 = vunpack.c.l.b16 %v4578
    %v4657 = vunpack.c.l.b16 %v4579
    %v4658 = vpack.c.b16 %v4655, %v4654
    %v4659 = vpack.c.b16 %v4657, %v4656
    %4662 = vmatprep.subr.bf16.mxu0 0
    %4663 = vmatpush1.bf16.msra.mxu0 %v4658
    %4664 = vmatprep.subr.bf16.mxu0 0
    %4665 = vmatpush1.bf16.msra.mxu0 %v4659
    %4666 = vmatprep.subr.bf16.mxu0 0
    %4667 = vmatpush1.bf16.msra.mxu0 0
    %4668 = vmatprep.subr.bf16.mxu0 0
    %4669 = vmatpush1.bf16.msra.mxu0 0
    %4670 = vmatprep.subr.bf16.mxu0 0
    %4671 = vmatpush1.bf16.msra.mxu0 0
    %4672 = vmatprep.subr.bf16.mxu0 0
    %4673 = vmatpush1.bf16.msra.mxu0 0
    %4674 = vmatprep.subr.bf16.mxu0 0
    %4675 = vmatpush1.bf16.msra.mxu0 0
    %4676 = vmatprep.subr.bf16.mxu0 0
    %4677 = vmatpush1.bf16.msra.mxu0 0
    %4678 = vmatprep.subr.bf16.mxu0 0
    %4679 = vmatpush1.bf16.msra.mxu0 0
    %4680 = vmatprep.subr.bf16.mxu0 0
    %4681 = vmatpush1.bf16.msra.mxu0 0
    %4682 = vmatprep.subr.bf16.mxu0 0
    %4683 = vmatpush1.bf16.msra.mxu0 0
    %4684 = vmatprep.subr.bf16.mxu0 0
    %4685 = vmatpush1.bf16.msra.mxu0 0
    %4686 = vmatprep.subr.bf16.mxu0 0
    %4687 = vmatpush1.bf16.msra.mxu0 0
    %4688 = vmatprep.subr.bf16.mxu0 0
    %4689 = vmatpush1.bf16.msra.mxu0 0
    %4690 = vmatprep.subr.bf16.mxu0 0
    %4691 = vmatpush1.bf16.msra.mxu0 0
    %4692 = vmatprep.subr.bf16.mxu0 0
    %4693 = vmatpush1.bf16.msra.mxu0 0
    %4694 = vmatprep.mubr.bf16.mxu0 0
    %4695 = vmatmul.mubr.bf16.gmra.mrb[0].mxu0 %v3207
    %v4696 = vpop.f32.mrb[0].mxu0
    %v4697 = vadd.f32 %v4649, %v4696
    %v4698 = vpop.f32.mrb[0].mxu0
    %v4699 = vpop.f32.mrb[0].mxu0
    %v4700 = vpop.f32.mrb[0].mxu0
    %4701 = vdwg.mxu0
    %v4702 = vpack.c.bf16 %v4697, %v4697
    %v4703 = vmul.f32 %v4641, %v53
    %v4704 = vpack.c.bf16 %v4703, %v4703
    %v4705 = vmul.f32 %v4697, %v3253
    %v4706 = vpack.c.bf16 %v4705, %v4705
    %v4708 = vsel %vm154, %v4704, 0
    %v4711 = vsel %vm154, %v4702, 0
    %4713 = vmatprep.subr.bf16.mxu0 0
    %4714 = vmatpush1.bf16.xpose.msra.mxu0 %v4711
    %4715 = vmatprep.subr.bf16.mxu0 0
    %4716 = vmatpush1.bf16.xpose.msra.mxu0 0
    %4717 = vmatprep.subr.bf16.mxu0 0
    %4718 = vmatpush1.bf16.xpose.msra.mxu0 0
    %4719 = vmatprep.subr.bf16.mxu0 0
    %4720 = vmatpush1.bf16.xpose.msra.mxu0 0
    %4721 = vmatprep.subr.bf16.mxu0 0
    %4722 = vmatpush1.bf16.xpose.msra.mxu0 0
    %4723 = vmatprep.subr.bf16.mxu0 0
    %4724 = vmatpush1.bf16.xpose.msra.mxu0 0
    %4725 = vmatprep.subr.bf16.mxu0 0
    %4726 = vmatpush1.bf16.xpose.msra.mxu0 0
    %4727 = vmatprep.subr.bf16.mxu0 0
    %4728 = vmatpush1.bf16.xpose.msra.mxu0 0
    %4729 = vmatprep.subr.bf16.mxu0 0
    %4730 = vmatpush1.bf16.xpose.msra.mxu0 0
    %4731 = vmatprep.subr.bf16.mxu0 0
    %4732 = vmatpush1.bf16.xpose.msra.mxu0 0
    %4733 = vmatprep.subr.bf16.mxu0 0
    %4734 = vmatpush1.bf16.xpose.msra.mxu0 0
    %4735 = vmatprep.subr.bf16.mxu0 0
    %4736 = vmatpush1.bf16.xpose.msra.mxu0 0
    %4737 = vmatprep.subr.bf16.mxu0 0
    %4738 = vmatpush1.bf16.xpose.msra.mxu0 0
    %4739 = vmatprep.subr.bf16.mxu0 0
    %4740 = vmatpush1.bf16.xpose.msra.mxu0 0
    %4741 = vmatprep.subr.bf16.mxu0 0
    %4742 = vmatpush1.bf16.xpose.msra.mxu0 0
    %4743 = vmatprep.subr.bf16.mxu0 0
    %4744 = vmatpush1.bf16.xpose.msra.mxu0 0
    %4745 = vmatprep.mubr.bf16.mxu0 0
    %4746 = vmatmul.mubr.bf16.gmra.mrb[0].mxu0 %v4708
    %v4747 = vpop.f32.mrb[0].mxu0
    %v4748 = vadd.f32 0.0, %v4747
    %v4749 = vpop.f32.mrb[0].mxu0
    %v4750 = vpop.f32.mrb[0].mxu0
    %v4751 = vpop.f32.mrb[0].mxu0
    %4752 = vdwg.mxu0
    %v4753 = vmul.f32 %v4748, 0.35355338
    %v4754 = vadd.f32 %v4753, %v2508
    %v4755 = vsel %vm258, %v4754, -inf
    %4756 = vmax.xlane.f32.xlu0 %v4755
    %v4757 = vpop.xlane.xlu0 %4756
    %v4758 = vsub.f32 %v4754, %v4757
    %v4759 = vmul.f32 %v4758, 1.442695
    %v4760 = vpow.pop %v4759
    %v4761 = vsel %vm258, %v4760, 0.0
    %4762 = vadd.xlane.f32.xlu0 %v4761
    %v4763 = vpop.xlane.xlu0 %4762
    %v4764 = vrcp.pop %v4763
    %v4765 = vmul.f32 %v4760, %v4764
    %v4766 = vpack.c.bf16 %v4765, %v4765
    %v4767 = vmul.f32 %v4641, %v58
    %v4768 = vpack.c.bf16 %v4767, %v4767
    %v4769 = vmul.f32 %v4697, %v3320
    %v4770 = vpack.c.bf16 %v4769, %v4769
    %v4772 = vsel %vm154, %v4768, 0
    %4774 = vmatprep.subr.bf16.mxu0 0
    %4775 = vmatpush1.bf16.xpose.msra.mxu0 %v4711
    %4776 = vmatprep.subr.bf16.mxu0 0
    %4777 = vmatpush1.bf16.xpose.msra.mxu0 0
    %4778 = vmatprep.subr.bf16.mxu0 0
    %4779 = vmatpush1.bf16.xpose.msra.mxu0 0
    %4780 = vmatprep.subr.bf16.mxu0 0
    %4781 = vmatpush1.bf16.xpose.msra.mxu0 0
    %4782 = vmatprep.subr.bf16.mxu0 0
    %4783 = vmatpush1.bf16.xpose.msra.mxu0 0
    %4784 = vmatprep.subr.bf16.mxu0 0
    %4785 = vmatpush1.bf16.xpose.msra.mxu0 0
    %4786 = vmatprep.subr.bf16.mxu0 0
    %4787 = vmatpush1.bf16.xpose.msra.mxu0 0
    %4788 = vmatprep.subr.bf16.mxu0 0
    %4789 = vmatpush1.bf16.xpose.msra.mxu0 0
    %4790 = vmatprep.subr.bf16.mxu0 0
    %4791 = vmatpush1.bf16.xpose.msra.mxu0 0
    %4792 = vmatprep.subr.bf16.mxu0 0
    %4793 = vmatpush1.bf16.xpose.msra.mxu0 0
    %4794 = vmatprep.subr.bf16.mxu0 0
    %4795 = vmatpush1.bf16.xpose.msra.mxu0 0
    %4796 = vmatprep.subr.bf16.mxu0 0
    %4797 = vmatpush1.bf16.xpose.msra.mxu0 0
    %4798 = vmatprep.subr.bf16.mxu0 0
    %4799 = vmatpush1.bf16.xpose.msra.mxu0 0
    %4800 = vmatprep.subr.bf16.mxu0 0
    %4801 = vmatpush1.bf16.xpose.msra.mxu0 0
    %4802 = vmatprep.subr.bf16.mxu0 0
    %4803 = vmatpush1.bf16.xpose.msra.mxu0 0
    %4804 = vmatprep.subr.bf16.mxu0 0
    %4805 = vmatpush1.bf16.xpose.msra.mxu0 0
    %4806 = vmatprep.mubr.bf16.mxu0 0
    %4807 = vmatmul.mubr.bf16.gmra.mrb[0].mxu0 %v4772
    %v4808 = vpop.f32.mrb[0].mxu0
    %v4809 = vadd.f32 0.0, %v4808
    %v4810 = vpop.f32.mrb[0].mxu0
    %v4811 = vpop.f32.mrb[0].mxu0
    %v4812 = vpop.f32.mrb[0].mxu0
    %4813 = vdwg.mxu0
    %v4814 = vmul.f32 %v4809, 0.35355338
    %v4815 = vadd.f32 %v4814, %v2508
    %v4816 = vsel %vm258, %v4815, -inf
    %4817 = vmax.xlane.f32.xlu0 %v4816
    %v4818 = vpop.xlane.xlu0 %4817
    %v4819 = vsub.f32 %v4815, %v4818
    %v4820 = vmul.f32 %v4819, 1.442695
    %v4821 = vpow.pop %v4820
    %v4822 = vsel %vm258, %v4821, 0.0
    %4823 = vadd.xlane.f32.xlu0 %v4822
    %v4824 = vpop.xlane.xlu0 %4823
    %v4825 = vrcp.pop %v4824
    %v4826 = vmul.f32 %v4821, %v4825
    %v4827 = vpack.c.bf16 %v4826, %v4826
    %4829 = vrot.lane.b32.xlu0 %v4770, 96
    %v4830 = vpop.permute.xlu0 %4829
    %v4832 = vsel %vm258, %v4827, 0
    %v4835 = vsel %vm342, %v4830, 0
    %4837 = vmatprep.subr.bf16.mxu0 0
    %4838 = vmatpush1.bf16.msra.mxu0 %v4835
    %4839 = vmatprep.subr.bf16.mxu0 0
    %4840 = vmatpush1.bf16.msra.mxu0 0
    %4841 = vmatprep.subr.bf16.mxu0 0
    %4842 = vmatpush1.bf16.msra.mxu0 0
    %4843 = vmatprep.subr.bf16.mxu0 0
    %4844 = vmatpush1.bf16.msra.mxu0 0
    %4845 = vmatprep.subr.bf16.mxu0 0
    %4846 = vmatpush1.bf16.msra.mxu0 0
    %4847 = vmatprep.subr.bf16.mxu0 0
    %4848 = vmatpush1.bf16.msra.mxu0 0
    %4849 = vmatprep.subr.bf16.mxu0 0
    %4850 = vmatpush1.bf16.msra.mxu0 0
    %4851 = vmatprep.subr.bf16.mxu0 0
    %4852 = vmatpush1.bf16.msra.mxu0 0
    %4853 = vmatprep.subr.bf16.mxu0 0
    %4854 = vmatpush1.bf16.msra.mxu0 0
    %4855 = vmatprep.subr.bf16.mxu0 0
    %4856 = vmatpush1.bf16.msra.mxu0 0
    %4857 = vmatprep.subr.bf16.mxu0 0
    %4858 = vmatpush1.bf16.msra.mxu0 0
    %4859 = vmatprep.subr.bf16.mxu0 0
    %4860 = vmatpush1.bf16.msra.mxu0 0
    %4861 = vmatprep.subr.bf16.mxu0 0
    %4862 = vmatpush1.bf16.msra.mxu0 0
    %4863 = vmatprep.subr.bf16.mxu0 0
    %4864 = vmatpush1.bf16.msra.mxu0 0
    %4865 = vmatprep.subr.bf16.mxu0 0
    %4866 = vmatpush1.bf16.msra.mxu0 0
    %4867 = vmatprep.subr.bf16.mxu0 0
    %4868 = vmatpush1.bf16.msra.mxu0 0
    %4869 = vmatprep.mubr.bf16.mxu0 0
    %4870 = vmatmul.mubr.bf16.gmra.mrb[0].mxu0 %v4832
    %v4871 = vpop.f32.mrb[0].mxu0
    %v4872 = vadd.f32 0.0, %v4871
    %v4873 = vpop.f32.mrb[0].mxu0
    %v4874 = vpop.f32.mrb[0].mxu0
    %v4875 = vpop.f32.mrb[0].mxu0
    %4876 = vdwg.mxu0
    %4878 = vrot.lane.b32.xlu0 %v4706, 96
    %v4879 = vpop.permute.xlu0 %4878
    %v4881 = vsel %vm258, %v4766, 0
    %v4884 = vsel %vm342, %v4879, 0
    %4886 = vmatprep.subr.bf16.mxu0 0
    %4887 = vmatpush1.bf16.msra.mxu0 %v4884
    %4888 = vmatprep.subr.bf16.mxu0 0
    %4889 = vmatpush1.bf16.msra.mxu0 0
    %4890 = vmatprep.subr.bf16.mxu0 0
    %4891 = vmatpush1.bf16.msra.mxu0 0
    %4892 = vmatprep.subr.bf16.mxu0 0
    %4893 = vmatpush1.bf16.msra.mxu0 0
    %4894 = vmatprep.subr.bf16.mxu0 0
    %4895 = vmatpush1.bf16.msra.mxu0 0
    %4896 = vmatprep.subr.bf16.mxu0 0
    %4897 = vmatpush1.bf16.msra.mxu0 0
    %4898 = vmatprep.subr.bf16.mxu0 0
    %4899 = vmatpush1.bf16.msra.mxu0 0
    %4900 = vmatprep.subr.bf16.mxu0 0
    %4901 = vmatpush1.bf16.msra.mxu0 0
    %4902 = vmatprep.subr.bf16.mxu0 0
    %4903 = vmatpush1.bf16.msra.mxu0 0
    %4904 = vmatprep.subr.bf16.mxu0 0
    %4905 = vmatpush1.bf16.msra.mxu0 0
    %4906 = vmatprep.subr.bf16.mxu0 0
    %4907 = vmatpush1.bf16.msra.mxu0 0
    %4908 = vmatprep.subr.bf16.mxu0 0
    %4909 = vmatpush1.bf16.msra.mxu0 0
    %4910 = vmatprep.subr.bf16.mxu0 0
    %4911 = vmatpush1.bf16.msra.mxu0 0
    %4912 = vmatprep.subr.bf16.mxu0 0
    %4913 = vmatpush1.bf16.msra.mxu0 0
    %4914 = vmatprep.subr.bf16.mxu0 0
    %4915 = vmatpush1.bf16.msra.mxu0 0
    %4916 = vmatprep.subr.bf16.mxu0 0
    %4917 = vmatpush1.bf16.msra.mxu0 0
    %4918 = vmatprep.mubr.bf16.mxu0 0
    %4919 = vmatmul.mubr.bf16.gmra.mrb[0].mxu0 %v4881
    %v4920 = vpop.f32.mrb[0].mxu0
    %v4921 = vadd.f32 %v4872, %v4920
    %v4922 = vpop.f32.mrb[0].mxu0
    %v4923 = vpop.f32.mrb[0].mxu0
    %v4924 = vpop.f32.mrb[0].mxu0
    %4925 = vdwg.mxu0
    %v4926 = vmul.f32 %v4641, %v63
    %v4927 = vpack.c.bf16 %v4926, %v4926
    %v4928 = vmul.f32 %v4697, %v3482
    %v4929 = vpack.c.bf16 %v4928, %v4928
    %v4931 = vsel %vm154, %v4927, 0
    %4933 = vmatprep.subr.bf16.mxu0 0
    %4934 = vmatpush1.bf16.xpose.msra.mxu0 %v4711
    %4935 = vmatprep.subr.bf16.mxu0 0
    %4936 = vmatpush1.bf16.xpose.msra.mxu0 0
    %4937 = vmatprep.subr.bf16.mxu0 0
    %4938 = vmatpush1.bf16.xpose.msra.mxu0 0
    %4939 = vmatprep.subr.bf16.mxu0 0
    %4940 = vmatpush1.bf16.xpose.msra.mxu0 0
    %4941 = vmatprep.subr.bf16.mxu0 0
    %4942 = vmatpush1.bf16.xpose.msra.mxu0 0
    %4943 = vmatprep.subr.bf16.mxu0 0
    %4944 = vmatpush1.bf16.xpose.msra.mxu0 0
    %4945 = vmatprep.subr.bf16.mxu0 0
    %4946 = vmatpush1.bf16.xpose.msra.mxu0 0
    %4947 = vmatprep.subr.bf16.mxu0 0
    %4948 = vmatpush1.bf16.xpose.msra.mxu0 0
    %4949 = vmatprep.subr.bf16.mxu0 0
    %4950 = vmatpush1.bf16.xpose.msra.mxu0 0
    %4951 = vmatprep.subr.bf16.mxu0 0
    %4952 = vmatpush1.bf16.xpose.msra.mxu0 0
    %4953 = vmatprep.subr.bf16.mxu0 0
    %4954 = vmatpush1.bf16.xpose.msra.mxu0 0
    %4955 = vmatprep.subr.bf16.mxu0 0
    %4956 = vmatpush1.bf16.xpose.msra.mxu0 0
    %4957 = vmatprep.subr.bf16.mxu0 0
    %4958 = vmatpush1.bf16.xpose.msra.mxu0 0
    %4959 = vmatprep.subr.bf16.mxu0 0
    %4960 = vmatpush1.bf16.xpose.msra.mxu0 0
    %4961 = vmatprep.subr.bf16.mxu0 0
    %4962 = vmatpush1.bf16.xpose.msra.mxu0 0
    %4963 = vmatprep.subr.bf16.mxu0 0
    %4964 = vmatpush1.bf16.xpose.msra.mxu0 0
    %4965 = vmatprep.mubr.bf16.mxu0 0
    %4966 = vmatmul.mubr.bf16.gmra.mrb[0].mxu0 %v4931
    %v4967 = vpop.f32.mrb[0].mxu0
    %v4968 = vadd.f32 0.0, %v4967
    %v4969 = vpop.f32.mrb[0].mxu0
    %v4970 = vpop.f32.mrb[0].mxu0
    %v4971 = vpop.f32.mrb[0].mxu0
    %4972 = vdwg.mxu0
    %v4973 = vmul.f32 %v4968, 0.35355338
    %v4974 = vadd.f32 %v4973, %v2508
    %v4975 = vsel %vm258, %v4974, -inf
    %4976 = vmax.xlane.f32.xlu0 %v4975
    %v4977 = vpop.xlane.xlu0 %4976
    %v4978 = vsub.f32 %v4974, %v4977
    %v4979 = vmul.f32 %v4978, 1.442695
    %v4980 = vpow.pop %v4979
    %v4981 = vsel %vm258, %v4980, 0.0
    %4982 = vadd.xlane.f32.xlu0 %v4981
    %v4983 = vpop.xlane.xlu0 %4982
    %v4984 = vrcp.pop %v4983
    %v4985 = vmul.f32 %v4980, %v4984
    %v4986 = vpack.c.bf16 %v4985, %v4985
    %4988 = vrot.lane.b32.xlu0 %v4929, 96
    %v4989 = vpop.permute.xlu0 %4988
    %v4991 = vsel %vm258, %v4986, 0
    %v4994 = vsel %vm342, %v4989, 0
    %4996 = vmatprep.subr.bf16.mxu0 0
    %4997 = vmatpush1.bf16.msra.mxu0 %v4994
    %4998 = vmatprep.subr.bf16.mxu0 0
    %4999 = vmatpush1.bf16.msra.mxu0 0
    %5000 = vmatprep.subr.bf16.mxu0 0
    %5001 = vmatpush1.bf16.msra.mxu0 0
    %5002 = vmatprep.subr.bf16.mxu0 0
    %5003 = vmatpush1.bf16.msra.mxu0 0
    %5004 = vmatprep.subr.bf16.mxu0 0
    %5005 = vmatpush1.bf16.msra.mxu0 0
    %5006 = vmatprep.subr.bf16.mxu0 0
    %5007 = vmatpush1.bf16.msra.mxu0 0
    %5008 = vmatprep.subr.bf16.mxu0 0
    %5009 = vmatpush1.bf16.msra.mxu0 0
    %5010 = vmatprep.subr.bf16.mxu0 0
    %5011 = vmatpush1.bf16.msra.mxu0 0
    %5012 = vmatprep.subr.bf16.mxu0 0
    %5013 = vmatpush1.bf16.msra.mxu0 0
    %5014 = vmatprep.subr.bf16.mxu0 0
    %5015 = vmatpush1.bf16.msra.mxu0 0
    %5016 = vmatprep.subr.bf16.mxu0 0
    %5017 = vmatpush1.bf16.msra.mxu0 0
    %5018 = vmatprep.subr.bf16.mxu0 0
    %5019 = vmatpush1.bf16.msra.mxu0 0
    %5020 = vmatprep.subr.bf16.mxu0 0
    %5021 = vmatpush1.bf16.msra.mxu0 0
    %5022 = vmatprep.subr.bf16.mxu0 0
    %5023 = vmatpush1.bf16.msra.mxu0 0
    %5024 = vmatprep.subr.bf16.mxu0 0
    %5025 = vmatpush1.bf16.msra.mxu0 0
    %5026 = vmatprep.subr.bf16.mxu0 0
    %5027 = vmatpush1.bf16.msra.mxu0 0
    %5028 = vmatprep.mubr.bf16.mxu0 0
    %5029 = vmatmul.mubr.bf16.gmra.mrb[0].mxu0 %v4991
    %v5030 = vpop.f32.mrb[0].mxu0
    %v5031 = vadd.f32 0.0, %v5030
    %v5032 = vpop.f32.mrb[0].mxu0
    %v5033 = vpop.f32.mrb[0].mxu0
    %v5034 = vpop.f32.mrb[0].mxu0
    %5035 = vdwg.mxu0
    %v5036 = vadd.f32 %v4921, %v5031
    %v5037 = vmul.f32 %v4641, %v68
    %v5038 = vpack.c.bf16 %v5037, %v5037
    %v5039 = vmul.f32 %v4697, %v3596
    %v5040 = vpack.c.bf16 %v5039, %v5039
    %v5042 = vsel %vm154, %v5038, 0
    %5044 = vmatprep.subr.bf16.mxu0 0
    %5045 = vmatpush1.bf16.xpose.msra.mxu0 %v4711
    %5046 = vmatprep.subr.bf16.mxu0 0
    %5047 = vmatpush1.bf16.xpose.msra.mxu0 0
    %5048 = vmatprep.subr.bf16.mxu0 0
    %5049 = vmatpush1.bf16.xpose.msra.mxu0 0
    %5050 = vmatprep.subr.bf16.mxu0 0
    %5051 = vmatpush1.bf16.xpose.msra.mxu0 0
    %5052 = vmatprep.subr.bf16.mxu0 0
    %5053 = vmatpush1.bf16.xpose.msra.mxu0 0
    %5054 = vmatprep.subr.bf16.mxu0 0
    %5055 = vmatpush1.bf16.xpose.msra.mxu0 0
    %5056 = vmatprep.subr.bf16.mxu0 0
    %5057 = vmatpush1.bf16.xpose.msra.mxu0 0
    %5058 = vmatprep.subr.bf16.mxu0 0
    %5059 = vmatpush1.bf16.xpose.msra.mxu0 0
    %5060 = vmatprep.subr.bf16.mxu0 0
    %5061 = vmatpush1.bf16.xpose.msra.mxu0 0
    %5062 = vmatprep.subr.bf16.mxu0 0
    %5063 = vmatpush1.bf16.xpose.msra.mxu0 0
    %5064 = vmatprep.subr.bf16.mxu0 0
    %5065 = vmatpush1.bf16.xpose.msra.mxu0 0
    %5066 = vmatprep.subr.bf16.mxu0 0
    %5067 = vmatpush1.bf16.xpose.msra.mxu0 0
    %5068 = vmatprep.subr.bf16.mxu0 0
    %5069 = vmatpush1.bf16.xpose.msra.mxu0 0
    %5070 = vmatprep.subr.bf16.mxu0 0
    %5071 = vmatpush1.bf16.xpose.msra.mxu0 0
    %5072 = vmatprep.subr.bf16.mxu0 0
    %5073 = vmatpush1.bf16.xpose.msra.mxu0 0
    %5074 = vmatprep.subr.bf16.mxu0 0
    %5075 = vmatpush1.bf16.xpose.msra.mxu0 0
    %5076 = vmatprep.mubr.bf16.mxu0 0
    %5077 = vmatmul.mubr.bf16.gmra.mrb[0].mxu0 %v5042
    %v5078 = vpop.f32.mrb[0].mxu0
    %v5079 = vadd.f32 0.0, %v5078
    %v5080 = vpop.f32.mrb[0].mxu0
    %v5081 = vpop.f32.mrb[0].mxu0
    %v5082 = vpop.f32.mrb[0].mxu0
    %5083 = vdwg.mxu0
    %v5084 = vmul.f32 %v5079, 0.35355338
    %v5085 = vadd.f32 %v5084, %v2508
    %v5086 = vsel %vm258, %v5085, -inf
    %5087 = vmax.xlane.f32.xlu0 %v5086
    %v5088 = vpop.xlane.xlu0 %5087
    %v5089 = vsub.f32 %v5085, %v5088
    %v5090 = vmul.f32 %v5089, 1.442695
    %v5091 = vpow.pop %v5090
    %v5092 = vsel %vm258, %v5091, 0.0
    %5093 = vadd.xlane.f32.xlu0 %v5092
    %v5094 = vpop.xlane.xlu0 %5093
    %v5095 = vrcp.pop %v5094
    %v5096 = vmul.f32 %v5091, %v5095
    %v5097 = vpack.c.bf16 %v5096, %v5096
    %5099 = vrot.lane.b32.xlu0 %v5040, 96
    %v5100 = vpop.permute.xlu0 %5099
    %v5102 = vsel %vm258, %v5097, 0
    %v5105 = vsel %vm342, %v5100, 0
    %5107 = vmatprep.subr.bf16.mxu0 0
    %5108 = vmatpush1.bf16.msra.mxu0 %v5105
    %5109 = vmatprep.subr.bf16.mxu0 0
    %5110 = vmatpush1.bf16.msra.mxu0 0
    %5111 = vmatprep.subr.bf16.mxu0 0
    %5112 = vmatpush1.bf16.msra.mxu0 0
    %5113 = vmatprep.subr.bf16.mxu0 0
    %5114 = vmatpush1.bf16.msra.mxu0 0
    %5115 = vmatprep.subr.bf16.mxu0 0
    %5116 = vmatpush1.bf16.msra.mxu0 0
    %5117 = vmatprep.subr.bf16.mxu0 0
    %5118 = vmatpush1.bf16.msra.mxu0 0
    %5119 = vmatprep.subr.bf16.mxu0 0
    %5120 = vmatpush1.bf16.msra.mxu0 0
    %5121 = vmatprep.subr.bf16.mxu0 0
    %5122 = vmatpush1.bf16.msra.mxu0 0
    %5123 = vmatprep.subr.bf16.mxu0 0
    %5124 = vmatpush1.bf16.msra.mxu0 0
    %5125 = vmatprep.subr.bf16.mxu0 0
    %5126 = vmatpush1.bf16.msra.mxu0 0
    %5127 = vmatprep.subr.bf16.mxu0 0
    %5128 = vmatpush1.bf16.msra.mxu0 0
    %5129 = vmatprep.subr.bf16.mxu0 0
    %5130 = vmatpush1.bf16.msra.mxu0 0
    %5131 = vmatprep.subr.bf16.mxu0 0
    %5132 = vmatpush1.bf16.msra.mxu0 0
    %5133 = vmatprep.subr.bf16.mxu0 0
    %5134 = vmatpush1.bf16.msra.mxu0 0
    %5135 = vmatprep.subr.bf16.mxu0 0
    %5136 = vmatpush1.bf16.msra.mxu0 0
    %5137 = vmatprep.subr.bf16.mxu0 0
    %5138 = vmatpush1.bf16.msra.mxu0 0
    %5139 = vmatprep.mubr.bf16.mxu0 0
    %5140 = vmatmul.mubr.bf16.gmra.mrb[0].mxu0 %v5102
    %v5141 = vpop.f32.mrb[0].mxu0
    %v5142 = vadd.f32 0.0, %v5141
    %v5143 = vpop.f32.mrb[0].mxu0
    %v5144 = vpop.f32.mrb[0].mxu0
    %v5145 = vpop.f32.mrb[0].mxu0
    %5146 = vdwg.mxu0
    %v5147 = vadd.f32 %v5036, %v5142
    %v5148 = vpack.c.bf16 %v5147, %v5147
    %v5149 = vlaneseq
    %v5150 = vshrl.u32 %v5149, 7
    %v5151 = vsub.s32 0, %v5150
    %v5152 = vrot.slane %v4585, %v5151
    %v5157 = vunpack.c.l.b16 %v4581
    %v5158 = vunpack.c.l.b16 %v4582
    %v5159 = vunpack.c.l.b16 %v4583
    %v5160 = vunpack.c.l.b16 %v4584
    %v5161 = vpack.c.b16 %v5158, %v5157
    %v5162 = vpack.c.b16 %v5160, %v5159
    %v5166 = vsel %vm154, %v5148, 0
    %5168 = vmatprep.subr.bf16.mxu0 0
    %5169 = vmatpush1.bf16.msra.mxu0 %v5161
    %5170 = vmatprep.subr.bf16.mxu0 0
    %5171 = vmatpush1.bf16.msra.mxu0 %v5162
    %5172 = vmatprep.subr.bf16.mxu0 0
    %5173 = vmatpush1.bf16.msra.mxu0 0
    %5174 = vmatprep.subr.bf16.mxu0 0
    %5175 = vmatpush1.bf16.msra.mxu0 0
    %5176 = vmatprep.subr.bf16.mxu0 0
    %5177 = vmatpush1.bf16.msra.mxu0 0
    %5178 = vmatprep.subr.bf16.mxu0 0
    %5179 = vmatpush1.bf16.msra.mxu0 0
    %5180 = vmatprep.subr.bf16.mxu0 0
    %5181 = vmatpush1.bf16.msra.mxu0 0
    %5182 = vmatprep.subr.bf16.mxu0 0
    %5183 = vmatpush1.bf16.msra.mxu0 0
    %5184 = vmatprep.subr.bf16.mxu0 0
    %5185 = vmatpush1.bf16.msra.mxu0 0
    %5186 = vmatprep.subr.bf16.mxu0 0
    %5187 = vmatpush1.bf16.msra.mxu0 0
    %5188 = vmatprep.subr.bf16.mxu0 0
    %5189 = vmatpush1.bf16.msra.mxu0 0
    %5190 = vmatprep.subr.bf16.mxu0 0
    %5191 = vmatpush1.bf16.msra.mxu0 0
    %5192 = vmatprep.subr.bf16.mxu0 0
    %5193 = vmatpush1.bf16.msra.mxu0 0
    %5194 = vmatprep.subr.bf16.mxu0 0
    %5195 = vmatpush1.bf16.msra.mxu0 0
    %5196 = vmatprep.subr.bf16.mxu0 0
    %5197 = vmatpush1.bf16.msra.mxu0 0
    %5198 = vmatprep.subr.bf16.mxu0 0
    %5199 = vmatpush1.bf16.msra.mxu0 0
    %5200 = vmatprep.mubr.bf16.mxu0 0
    %5201 = vmatmul.mubr.bf16.gmra.mrb[0].mxu0 %v5166
    %v5202 = vpop.f32.mrb[0].mxu0
    %v5203 = vadd.f32 %v5152, %v5202
    %v5204 = vpop.f32.mrb[0].mxu0
    %v5205 = vpop.f32.mrb[0].mxu0
    %v5206 = vpop.f32.mrb[0].mxu0
    %5207 = vdwg.mxu0
    %v5208 = vadd.f32 %v4570, %v5203
    %v5209 = vld [vmem:[#allocation5 + $0x59] sm:$0x1]
    %v5210 = vld [vmem:[#allocation5 + $0x5a] sm:$0x1]
    %v5211 = vsel %vm154, %v5208, 0.0
    %5212 = vadd.xlane.f32.xlu0 %v5211
    %v5213 = vpop.xlane.xlu0 %5212
    %v5214 = vmul.f32 %v5213, %v731
    %v5215 = vsub.f32 %v5208, %v5214
    %v5216 = vmul.f32 %v5215, %v5215
    %v5217 = vsel %vm154, %v5216, 0.0
    %5218 = vadd.xlane.f32.xlu0 %v5217
    %v5219 = vpop.xlane.xlu0 %5218
    %v5220 = vmul.f32 %v5219, %v731
    %v5221 = vadd.f32 %v5220, 1e-05
    %v5222 = vrsqrt.pop %v5221
    %v5223 = vmul.f32 %v5215, %v5222
    %v5224 = vlaneseq
    %v5225 = vshrl.u32 %v5224, 7
    %v5226 = vsub.s32 0, %v5225
    %v5227 = vrot.slane %v5209, %v5226
    %v5228 = vmul.f32 %v5223, %v5227
    %v5229 = vlaneseq
    %v5230 = vshrl.u32 %v5229, 7
    %v5231 = vsub.s32 0, %v5230
    %v5232 = vrot.slane %v5210, %v5231
    %v5233 = vadd.f32 %v5228, %v5232
    %v5234 = vld [vmem:[#allocation2 + $0x1d8] sm:$0xf]
    %v5235 = vld [vmem:[#allocation2 + $0x1dc] sm:$0xf]
    %v5236 = vld [vmem:[#allocation2 + $0x1e0] sm:$0xf]
    %v5237 = vld [vmem:[#allocation2 + $0x1e4] sm:$0xf]
    %v5238 = vld [vmem:[#allocation5 + $0x5b] sm:$0x1]
    %v5239 = vld [vmem:[#allocation2 + $0x1e8] sm:$0xf]
    %v5240 = vld [vmem:[#allocation2 + $0x1ec] sm:$0xf]
    %v5241 = vld [vmem:[#allocation2 + $0x1f0] sm:$0xf]
    %v5242 = vld [vmem:[#allocation2 + $0x1f4] sm:$0xf]
    %v5243 = vld [vmem:[#allocation2 + $0x1f8] sm:$0xf]
    %v5244 = vld [vmem:[#allocation2 + $0x1fc] sm:$0xf]
    %v5245 = vld [vmem:[#allocation2 + $0x200] sm:$0xf]
    %v5246 = vld [vmem:[#allocation2 + $0x204] sm:$0xf]
    %v5247 = vld [vmem:[#allocation5 + $0x5c] sm:$0x1]
    %v5248 = vpack.c.bf16 %v5233, %v5233
    %v5249 = vlaneseq
    %v5250 = vshrl.u32 %v5249, 7
    %v5251 = vsub.s32 0, %v5250
    %v5252 = vrot.slane %v5238, %v5251
    %v5257 = vunpack.c.l.b16 %v5234
    %v5258 = vunpack.c.l.b16 %v5235
    %v5259 = vunpack.c.l.b16 %v5236
    %v5260 = vunpack.c.l.b16 %v5237
    %v5261 = vpack.c.b16 %v5258, %v5257
    %v5262 = vpack.c.b16 %v5260, %v5259
    %v5266 = vsel %vm154, %v5248, 0
    %5268 = vmatprep.subr.bf16.mxu0 0
    %5269 = vmatpush1.bf16.msra.mxu0 %v5261
    %5270 = vmatprep.subr.bf16.mxu0 0
    %5271 = vmatpush1.bf16.msra.mxu0 %v5262
    %5272 = vmatprep.subr.bf16.mxu0 0
    %5273 = vmatpush1.bf16.msra.mxu0 0
    %5274 = vmatprep.subr.bf16.mxu0 0
    %5275 = vmatpush1.bf16.msra.mxu0 0
    %5276 = vmatprep.subr.bf16.mxu0 0
    %5277 = vmatpush1.bf16.msra.mxu0 0
    %5278 = vmatprep.subr.bf16.mxu0 0
    %5279 = vmatpush1.bf16.msra.mxu0 0
    %5280 = vmatprep.subr.bf16.mxu0 0
    %5281 = vmatpush1.bf16.msra.mxu0 0
    %5282 = vmatprep.subr.bf16.mxu0 0
    %5283 = vmatpush1.bf16.msra.mxu0 0
    %5284 = vmatprep.subr.bf16.mxu0 0
    %5285 = vmatpush1.bf16.msra.mxu0 0
    %5286 = vmatprep.subr.bf16.mxu0 0
    %5287 = vmatpush1.bf16.msra.mxu0 0
    %5288 = vmatprep.subr.bf16.mxu0 0
    %5289 = vmatpush1.bf16.msra.mxu0 0
    %5290 = vmatprep.subr.bf16.mxu0 0
    %5291 = vmatpush1.bf16.msra.mxu0 0
    %5292 = vmatprep.subr.bf16.mxu0 0
    %5293 = vmatpush1.bf16.msra.mxu0 0
    %5294 = vmatprep.subr.bf16.mxu0 0
    %5295 = vmatpush1.bf16.msra.mxu0 0
    %5296 = vmatprep.subr.bf16.mxu0 0
    %5297 = vmatpush1.bf16.msra.mxu0 0
    %5298 = vmatprep.subr.bf16.mxu0 0
    %5299 = vmatpush1.bf16.msra.mxu0 0
    %5300 = vmatprep.mubr.bf16.mxu0 0
    %5301 = vmatmul.mubr.bf16.gmra.mrb[0].mxu0 %v5266
    %v5302 = vpop.f32.mrb[0].mxu0
    %v5303 = vadd.f32 %v5252, %v5302
    %v5304 = vpop.f32.mrb[0].mxu0
    %v5305 = vpop.f32.mrb[0].mxu0
    %v5306 = vpop.f32.mrb[0].mxu0
    %5307 = vdwg.mxu0
    %v5308 = vmax.f32 %v5303, 0.0
    %v5309 = vpack.c.bf16 %v5308, %v5308
    %v5310 = vlaneseq
    %v5311 = vshrl.u32 %v5310, 7
    %v5312 = vsub.s32 0, %v5311
    %v5313 = vrot.slane %v5247, %v5312
    %v5322 = vunpack.c.l.b16 %v5239
    %v5323 = vunpack.c.l.b16 %v5240
    %v5324 = vunpack.c.l.b16 %v5241
    %v5325 = vunpack.c.l.b16 %v5242
    %v5326 = vunpack.c.l.b16 %v5243
    %v5327 = vunpack.c.l.b16 %v5244
    %v5328 = vunpack.c.l.b16 %v5245
    %v5329 = vunpack.c.l.b16 %v5246
    %v5330 = vpack.c.b16 %v5323, %v5322
    %v5331 = vpack.c.b16 %v5325, %v5324
    %v5332 = vpack.c.b16 %v5327, %v5326
    %v5333 = vpack.c.b16 %v5329, %v5328
    %v5339 = vsel %vm856, %v5309, 0
    %5341 = vmatprep.subr.bf16.mxu0 0
    %5342 = vmatpush1.bf16.msra.mxu0 %v5330
    %5343 = vmatprep.subr.bf16.mxu0 0
    %5344 = vmatpush1.bf16.msra.mxu0 %v5331
    %5345 = vmatprep.subr.bf16.mxu0 0
    %5346 = vmatpush1.bf16.msra.mxu0 %v5332
    %5347 = vmatprep.subr.bf16.mxu0 0
    %5348 = vmatpush1.bf16.msra.mxu0 %v5333
    %5349 = vmatprep.subr.bf16.mxu0 0
    %5350 = vmatpush1.bf16.msra.mxu0 0
    %5351 = vmatprep.subr.bf16.mxu0 0
    %5352 = vmatpush1.bf16.msra.mxu0 0
    %5353 = vmatprep.subr.bf16.mxu0 0
    %5354 = vmatpush1.bf16.msra.mxu0 0
    %5355 = vmatprep.subr.bf16.mxu0 0
    %5356 = vmatpush1.bf16.msra.mxu0 0
    %5357 = vmatprep.subr.bf16.mxu0 0
    %5358 = vmatpush1.bf16.msra.mxu0 0
    %5359 = vmatprep.subr.bf16.mxu0 0
    %5360 = vmatpush1.bf16.msra.mxu0 0
    %5361 = vmatprep.subr.bf16.mxu0 0
    %5362 = vmatpush1.bf16.msra.mxu0 0
    %5363 = vmatprep.subr.bf16.mxu0 0
    %5364 = vmatpush1.bf16.msra.mxu0 0
    %5365 = vmatprep.subr.bf16.mxu0 0
    %5366 = vmatpush1.bf16.msra.mxu0 0
    %5367 = vmatprep.subr.bf16.mxu0 0
    %5368 = vmatpush1.bf16.msra.mxu0 0
    %5369 = vmatprep.subr.bf16.mxu0 0
    %5370 = vmatpush1.bf16.msra.mxu0 0
    %5371 = vmatprep.subr.bf16.mxu0 0
    %5372 = vmatpush1.bf16.msra.mxu0 0
    %5373 = vmatprep.mubr.bf16.mxu0 0
    %5374 = vmatmul.mubr.bf16.gmra.mrb[0].mxu0 %v5339
    %v5375 = vpop.f32.mrb[0].mxu0
    %v5376 = vadd.f32 %v5313, %v5375
    %v5377 = vpop.f32.mrb[0].mxu0
    %v5378 = vpop.f32.mrb[0].mxu0
    %v5379 = vpop.f32.mrb[0].mxu0
    %5380 = vdwg.mxu0
    %v5381 = vadd.f32 %v5233, %v5376
    %v5382 = vld [vmem:[#allocation5 + $0x5d] sm:$0x1]
    %v5383 = vld [vmem:[#allocation5 + $0x5e] sm:$0x1]
    %v5384 = vsel %vm154, %v5381, 0.0
    %5385 = vadd.xlane.f32.xlu0 %v5384
    %v5386 = vpop.xlane.xlu0 %5385
    %v5387 = vmul.f32 %v5386, %v731
    %v5388 = vsub.f32 %v5381, %v5387
    %v5389 = vmul.f32 %v5388, %v5388
    %v5390 = vsel %vm154, %v5389, 0.0
    %5391 = vadd.xlane.f32.xlu0 %v5390
    %v5392 = vpop.xlane.xlu0 %5391
    %v5393 = vmul.f32 %v5392, %v731
    %v5394 = vadd.f32 %v5393, 1e-05
    %v5395 = vrsqrt.pop %v5394
    %v5396 = vmul.f32 %v5388, %v5395
    %v5397 = vlaneseq
    %v5398 = vshrl.u32 %v5397, 7
    %v5399 = vsub.s32 0, %v5398
    %v5400 = vrot.slane %v5382, %v5399
    %v5401 = vmul.f32 %v5396, %v5400
    %v5402 = vlaneseq
    %v5403 = vshrl.u32 %v5402, 7
    %v5404 = vsub.s32 0, %v5403
    %v5405 = vrot.slane %v5383, %v5404
    %v5406 = vadd.f32 %v5401, %v5405
    %v5407 = vld [vmem:[#allocation2 + $0x208] sm:$0xf]
    %v5408 = vld [vmem:[#allocation2 + $0x20c] sm:$0xf]
    %v5409 = vld [vmem:[#allocation2 + $0x210] sm:$0xf]
    %v5410 = vld [vmem:[#allocation2 + $0x214] sm:$0xf]
    %v5411 = vld [vmem:[#allocation5 + $0x5f] sm:$0x1]
    %v5412 = vld [vmem:[#allocation2 + $0x218] sm:$0xf]
    %v5413 = vld [vmem:[#allocation2 + $0x21c] sm:$0xf]
    %v5414 = vld [vmem:[#allocation2 + $0x220] sm:$0xf]
    %v5415 = vld [vmem:[#allocation2 + $0x224] sm:$0xf]
    %v5416 = vld [vmem:[#allocation5 + $0x60] sm:$0x1]
    %v5417 = vpack.c.bf16 %v5406, %v5406
    %v5418 = vlaneseq
    %v5419 = vshrl.u32 %v5418, 7
    %v5420 = vsub.s32 0, %v5419
    %v5421 = vrot.slane %v5411, %v5420
    %v5426 = vunpack.c.l.b16 %v5407
    %v5427 = vunpack.c.l.b16 %v5408
    %v5428 = vunpack.c.l.b16 %v5409
    %v5429 = vunpack.c.l.b16 %v5410
    %v5430 = vpack.c.b16 %v5427, %v5426
    %v5431 = vpack.c.b16 %v5429, %v5428
    %v5435 = vsel %vm154, %v5417, 0
    %5437 = vmatprep.subr.bf16.mxu0 0
    %5438 = vmatpush1.bf16.msra.mxu0 %v5430
    %5439 = vmatprep.subr.bf16.mxu0 0
    %5440 = vmatpush1.bf16.msra.mxu0 %v5431
    %5441 = vmatprep.subr.bf16.mxu0 0
    %5442 = vmatpush1.bf16.msra.mxu0 0
    %5443 = vmatprep.subr.bf16.mxu0 0
    %5444 = vmatpush1.bf16.msra.mxu0 0
    %5445 = vmatprep.subr.bf16.mxu0 0
    %5446 = vmatpush1.bf16.msra.mxu0 0
    %5447 = vmatprep.subr.bf16.mxu0 0
    %5448 = vmatpush1.bf16.msra.mxu0 0
    %5449 = vmatprep.subr.bf16.mxu0 0
    %5450 = vmatpush1.bf16.msra.mxu0 0
    %5451 = vmatprep.subr.bf16.mxu0 0
    %5452 = vmatpush1.bf16.msra.mxu0 0
    %5453 = vmatprep.subr.bf16.mxu0 0
    %5454 = vmatpush1.bf16.msra.mxu0 0
    %5455 = vmatprep.subr.bf16.mxu0 0
    %5456 = vmatpush1.bf16.msra.mxu0 0
    %5457 = vmatprep.subr.bf16.mxu0 0
    %5458 = vmatpush1.bf16.msra.mxu0 0
    %5459 = vmatprep.subr.bf16.mxu0 0
    %5460 = vmatpush1.bf16.msra.mxu0 0
    %5461 = vmatprep.subr.bf16.mxu0 0
    %5462 = vmatpush1.bf16.msra.mxu0 0
    %5463 = vmatprep.subr.bf16.mxu0 0
    %5464 = vmatpush1.bf16.msra.mxu0 0
    %5465 = vmatprep.subr.bf16.mxu0 0
    %5466 = vmatpush1.bf16.msra.mxu0 0
    %5467 = vmatprep.subr.bf16.mxu0 0
    %5468 = vmatpush1.bf16.msra.mxu0 0
    %5469 = vmatprep.mubr.bf16.mxu0 0
    %5470 = vmatmul.mubr.bf16.gmra.mrb[0].mxu0 %v5435
    %v5471 = vpop.f32.mrb[0].mxu0
    %v5472 = vadd.f32 %v5421, %v5471
    %v5473 = vpop.f32.mrb[0].mxu0
    %v5474 = vpop.f32.mrb[0].mxu0
    %v5475 = vpop.f32.mrb[0].mxu0
    %5476 = vdwg.mxu0
    %v5477 = vpack.c.bf16 %v5472, %v5472
    %v5478 = vmul.f32 %v5472, %v53
    %v5479 = vpack.c.bf16 %v5478, %v5478
    %v5480 = vmul.f32 %v5472, %v203
    %v5481 = vpack.c.bf16 %v5480, %v5480
    %5483 = vrot.lane.b32.xlu0 %v5477, 96
    %v5484 = vpop.permute.xlu0 %5483
    %v5486 = vsel %vm154, %v5479, 0
    %v5489 = vsel %vm154, %v5484, 0
    %5491 = vmatprep.subr.bf16.mxu0 0
    %5492 = vmatpush1.bf16.xpose.msra.mxu0 %v5489
    %5493 = vmatprep.subr.bf16.mxu0 0
    %5494 = vmatpush1.bf16.xpose.msra.mxu0 0
    %5495 = vmatprep.subr.bf16.mxu0 0
    %5496 = vmatpush1.bf16.xpose.msra.mxu0 0
    %5497 = vmatprep.subr.bf16.mxu0 0
    %5498 = vmatpush1.bf16.xpose.msra.mxu0 0
    %5499 = vmatprep.subr.bf16.mxu0 0
    %5500 = vmatpush1.bf16.xpose.msra.mxu0 0
    %5501 = vmatprep.subr.bf16.mxu0 0
    %5502 = vmatpush1.bf16.xpose.msra.mxu0 0
    %5503 = vmatprep.subr.bf16.mxu0 0
    %5504 = vmatpush1.bf16.xpose.msra.mxu0 0
    %5505 = vmatprep.subr.bf16.mxu0 0
    %5506 = vmatpush1.bf16.xpose.msra.mxu0 0
    %5507 = vmatprep.subr.bf16.mxu0 0
    %5508 = vmatpush1.bf16.xpose.msra.mxu0 0
    %5509 = vmatprep.subr.bf16.mxu0 0
    %5510 = vmatpush1.bf16.xpose.msra.mxu0 0
    %5511 = vmatprep.subr.bf16.mxu0 0
    %5512 = vmatpush1.bf16.xpose.msra.mxu0 0
    %5513 = vmatprep.subr.bf16.mxu0 0
    %5514 = vmatpush1.bf16.xpose.msra.mxu0 0
    %5515 = vmatprep.subr.bf16.mxu0 0
    %5516 = vmatpush1.bf16.xpose.msra.mxu0 0
    %5517 = vmatprep.subr.bf16.mxu0 0
    %5518 = vmatpush1.bf16.xpose.msra.mxu0 0
    %5519 = vmatprep.subr.bf16.mxu0 0
    %5520 = vmatpush1.bf16.xpose.msra.mxu0 0
    %5521 = vmatprep.subr.bf16.mxu0 0
    %5522 = vmatpush1.bf16.xpose.msra.mxu0 0
    %5523 = vmatprep.mubr.bf16.mxu0 0
    %5524 = vmatmul.mubr.bf16.gmra.mrb[0].mxu0 %v5486
    %v5525 = vpop.f32.mrb[0].mxu0
    %v5526 = vadd.f32 0.0, %v5525
    %v5527 = vpop.f32.mrb[0].mxu0
    %v5528 = vpop.f32.mrb[0].mxu0
    %v5529 = vpop.f32.mrb[0].mxu0
    %5530 = vdwg.mxu0
    %v5531 = vmul.f32 %v5526, 0.35355338
    %v5532 = vadd.f32 %v5531, %v2507
    %v5533 = vsel %vm258, %v5532, -inf
    %5534 = vmax.xlane.f32.xlu0 %v5533
    %v5535 = vpop.xlane.xlu0 %5534
    %v5536 = vsub.f32 %v5532, %v5535
    %v5537 = vmul.f32 %v5536, 1.442695
    %v5538 = vpow.pop %v5537
    %v5539 = vsel %vm258, %v5538, 0.0
    %5540 = vadd.xlane.f32.xlu0 %v5539
    %v5541 = vpop.xlane.xlu0 %5540
    %v5542 = vrcp.pop %v5541
    %v5543 = vmul.f32 %v5538, %v5542
    %v5544 = vpack.c.bf16 %v5543, %v5543
    %v5545 = vmul.f32 %v5472, %v58
    %v5546 = vpack.c.bf16 %v5545, %v5545
    %v5547 = vmul.f32 %v5472, %v275
    %v5548 = vpack.c.bf16 %v5547, %v5547
    %v5550 = vsel %vm154, %v5546, 0
    %5552 = vmatprep.subr.bf16.mxu0 0
    %5553 = vmatpush1.bf16.xpose.msra.mxu0 %v5489
    %5554 = vmatprep.subr.bf16.mxu0 0
    %5555 = vmatpush1.bf16.xpose.msra.mxu0 0
    %5556 = vmatprep.subr.bf16.mxu0 0
    %5557 = vmatpush1.bf16.xpose.msra.mxu0 0
    %5558 = vmatprep.subr.bf16.mxu0 0
    %5559 = vmatpush1.bf16.xpose.msra.mxu0 0
    %5560 = vmatprep.subr.bf16.mxu0 0
    %5561 = vmatpush1.bf16.xpose.msra.mxu0 0
    %5562 = vmatprep.subr.bf16.mxu0 0
    %5563 = vmatpush1.bf16.xpose.msra.mxu0 0
    %5564 = vmatprep.subr.bf16.mxu0 0
    %5565 = vmatpush1.bf16.xpose.msra.mxu0 0
    %5566 = vmatprep.subr.bf16.mxu0 0
    %5567 = vmatpush1.bf16.xpose.msra.mxu0 0
    %5568 = vmatprep.subr.bf16.mxu0 0
    %5569 = vmatpush1.bf16.xpose.msra.mxu0 0
    %5570 = vmatprep.subr.bf16.mxu0 0
    %5571 = vmatpush1.bf16.xpose.msra.mxu0 0
    %5572 = vmatprep.subr.bf16.mxu0 0
    %5573 = vmatpush1.bf16.xpose.msra.mxu0 0
    %5574 = vmatprep.subr.bf16.mxu0 0
    %5575 = vmatpush1.bf16.xpose.msra.mxu0 0
    %5576 = vmatprep.subr.bf16.mxu0 0
    %5577 = vmatpush1.bf16.xpose.msra.mxu0 0
    %5578 = vmatprep.subr.bf16.mxu0 0
    %5579 = vmatpush1.bf16.xpose.msra.mxu0 0
    %5580 = vmatprep.subr.bf16.mxu0 0
    %5581 = vmatpush1.bf16.xpose.msra.mxu0 0
    %5582 = vmatprep.subr.bf16.mxu0 0
    %5583 = vmatpush1.bf16.xpose.msra.mxu0 0
    %5584 = vmatprep.mubr.bf16.mxu0 0
    %5585 = vmatmul.mubr.bf16.gmra.mrb[0].mxu0 %v5550
    %v5586 = vpop.f32.mrb[0].mxu0
    %v5587 = vadd.f32 0.0, %v5586
    %v5588 = vpop.f32.mrb[0].mxu0
    %v5589 = vpop.f32.mrb[0].mxu0
    %v5590 = vpop.f32.mrb[0].mxu0
    %5591 = vdwg.mxu0
    %v5592 = vmul.f32 %v5587, 0.35355338
    %v5593 = vadd.f32 %v5592, %v2507
    %v5594 = vsel %vm258, %v5593, -inf
    %5595 = vmax.xlane.f32.xlu0 %v5594
    %v5596 = vpop.xlane.xlu0 %5595
    %v5597 = vsub.f32 %v5593, %v5596
    %v5598 = vmul.f32 %v5597, 1.442695
    %v5599 = vpow.pop %v5598
    %v5600 = vsel %vm258, %v5599, 0.0
    %5601 = vadd.xlane.f32.xlu0 %v5600
    %v5602 = vpop.xlane.xlu0 %5601
    %v5603 = vrcp.pop %v5602
    %v5604 = vmul.f32 %v5599, %v5603
    %v5605 = vpack.c.bf16 %v5604, %v5604
    %5607 = vrot.lane.b32.xlu0 %v5548, 64
    %v5608 = vpop.permute.xlu0 %5607
    %v5610 = vsel %vm258, %v5605, 0
    %v5613 = vsel %vm342, %v5608, 0
    %5615 = vmatprep.subr.bf16.mxu0 0
    %5616 = vmatpush1.bf16.msra.mxu0 %v5613
    %5617 = vmatprep.subr.bf16.mxu0 0
    %5618 = vmatpush1.bf16.msra.mxu0 0
    %5619 = vmatprep.subr.bf16.mxu0 0
    %5620 = vmatpush1.bf16.msra.mxu0 0
    %5621 = vmatprep.subr.bf16.mxu0 0
    %5622 = vmatpush1.bf16.msra.mxu0 0
    %5623 = vmatprep.subr.bf16.mxu0 0
    %5624 = vmatpush1.bf16.msra.mxu0 0
    %5625 = vmatprep.subr.bf16.mxu0 0
    %5626 = vmatpush1.bf16.msra.mxu0 0
    %5627 = vmatprep.subr.bf16.mxu0 0
    %5628 = vmatpush1.bf16.msra.mxu0 0
    %5629 = vmatprep.subr.bf16.mxu0 0
    %5630 = vmatpush1.bf16.msra.mxu0 0
    %5631 = vmatprep.subr.bf16.mxu0 0
    %5632 = vmatpush1.bf16.msra.mxu0 0
    %5633 = vmatprep.subr.bf16.mxu0 0
    %5634 = vmatpush1.bf16.msra.mxu0 0
    %5635 = vmatprep.subr.bf16.mxu0 0
    %5636 = vmatpush1.bf16.msra.mxu0 0
    %5637 = vmatprep.subr.bf16.mxu0 0
    %5638 = vmatpush1.bf16.msra.mxu0 0
    %5639 = vmatprep.subr.bf16.mxu0 0
    %5640 = vmatpush1.bf16.msra.mxu0 0
    %5641 = vmatprep.subr.bf16.mxu0 0
    %5642 = vmatpush1.bf16.msra.mxu0 0
    %5643 = vmatprep.subr.bf16.mxu0 0
    %5644 = vmatpush1.bf16.msra.mxu0 0
    %5645 = vmatprep.subr.bf16.mxu0 0
    %5646 = vmatpush1.bf16.msra.mxu0 0
    %5647 = vmatprep.mubr.bf16.mxu0 0
    %5648 = vmatmul.mubr.bf16.gmra.mrb[0].mxu0 %v5610
    %v5649 = vpop.f32.mrb[0].mxu0
    %v5650 = vadd.f32 0.0, %v5649
    %v5651 = vpop.f32.mrb[0].mxu0
    %v5652 = vpop.f32.mrb[0].mxu0
    %v5653 = vpop.f32.mrb[0].mxu0
    %5654 = vdwg.mxu0
    %5656 = vrot.lane.b32.xlu0 %v5481, 64
    %v5657 = vpop.permute.xlu0 %5656
    %v5659 = vsel %vm258, %v5544, 0
    %v5662 = vsel %vm342, %v5657, 0
    %5664 = vmatprep.subr.bf16.mxu0 0
    %5665 = vmatpush1.bf16.msra.mxu0 %v5662
    %5666 = vmatprep.subr.bf16.mxu0 0
    %5667 = vmatpush1.bf16.msra.mxu0 0
    %5668 = vmatprep.subr.bf16.mxu0 0
    %5669 = vmatpush1.bf16.msra.mxu0 0
    %5670 = vmatprep.subr.bf16.mxu0 0
    %5671 = vmatpush1.bf16.msra.mxu0 0
    %5672 = vmatprep.subr.bf16.mxu0 0
    %5673 = vmatpush1.bf16.msra.mxu0 0
    %5674 = vmatprep.subr.bf16.mxu0 0
    %5675 = vmatpush1.bf16.msra.mxu0 0
    %5676 = vmatprep.subr.bf16.mxu0 0
    %5677 = vmatpush1.bf16.msra.mxu0 0
    %5678 = vmatprep.subr.bf16.mxu0 0
    %5679 = vmatpush1.bf16.msra.mxu0 0
    %5680 = vmatprep.subr.bf16.mxu0 0
    %5681 = vmatpush1.bf16.msra.mxu0 0
    %5682 = vmatprep.subr.bf16.mxu0 0
    %5683 = vmatpush1.bf16.msra.mxu0 0
    %5684 = vmatprep.subr.bf16.mxu0 0
    %5685 = vmatpush1.bf16.msra.mxu0 0
    %5686 = vmatprep.subr.bf16.mxu0 0
    %5687 = vmatpush1.bf16.msra.mxu0 0
    %5688 = vmatprep.subr.bf16.mxu0 0
    %5689 = vmatpush1.bf16.msra.mxu0 0
    %5690 = vmatprep.subr.bf16.mxu0 0
    %5691 = vmatpush1.bf16.msra.mxu0 0
    %5692 = vmatprep.subr.bf16.mxu0 0
    %5693 = vmatpush1.bf16.msra.mxu0 0
    %5694 = vmatprep.subr.bf16.mxu0 0
    %5695 = vmatpush1.bf16.msra.mxu0 0
    %5696 = vmatprep.mubr.bf16.mxu0 0
    %5697 = vmatmul.mubr.bf16.gmra.mrb[0].mxu0 %v5659
    %v5698 = vpop.f32.mrb[0].mxu0
    %v5699 = vadd.f32 %v5650, %v5698
    %v5700 = vpop.f32.mrb[0].mxu0
    %v5701 = vpop.f32.mrb[0].mxu0
    %v5702 = vpop.f32.mrb[0].mxu0
    %5703 = vdwg.mxu0
    %v5704 = vmul.f32 %v5472, %v63
    %v5705 = vpack.c.bf16 %v5704, %v5704
    %v5706 = vmul.f32 %v5472, %v439
    %v5707 = vpack.c.bf16 %v5706, %v5706
    %v5709 = vsel %vm154, %v5705, 0
    %5711 = vmatprep.subr.bf16.mxu0 0
    %5712 = vmatpush1.bf16.xpose.msra.mxu0 %v5489
    %5713 = vmatprep.subr.bf16.mxu0 0
    %5714 = vmatpush1.bf16.xpose.msra.mxu0 0
    %5715 = vmatprep.subr.bf16.mxu0 0
    %5716 = vmatpush1.bf16.xpose.msra.mxu0 0
    %5717 = vmatprep.subr.bf16.mxu0 0
    %5718 = vmatpush1.bf16.xpose.msra.mxu0 0
    %5719 = vmatprep.subr.bf16.mxu0 0
    %5720 = vmatpush1.bf16.xpose.msra.mxu0 0
    %5721 = vmatprep.subr.bf16.mxu0 0
    %5722 = vmatpush1.bf16.xpose.msra.mxu0 0
    %5723 = vmatprep.subr.bf16.mxu0 0
    %5724 = vmatpush1.bf16.xpose.msra.mxu0 0
    %5725 = vmatprep.subr.bf16.mxu0 0
    %5726 = vmatpush1.bf16.xpose.msra.mxu0 0
    %5727 = vmatprep.subr.bf16.mxu0 0
    %5728 = vmatpush1.bf16.xpose.msra.mxu0 0
    %5729 = vmatprep.subr.bf16.mxu0 0
    %5730 = vmatpush1.bf16.xpose.msra.mxu0 0
    %5731 = vmatprep.subr.bf16.mxu0 0
    %5732 = vmatpush1.bf16.xpose.msra.mxu0 0
    %5733 = vmatprep.subr.bf16.mxu0 0
    %5734 = vmatpush1.bf16.xpose.msra.mxu0 0
    %5735 = vmatprep.subr.bf16.mxu0 0
    %5736 = vmatpush1.bf16.xpose.msra.mxu0 0
    %5737 = vmatprep.subr.bf16.mxu0 0
    %5738 = vmatpush1.bf16.xpose.msra.mxu0 0
    %5739 = vmatprep.subr.bf16.mxu0 0
    %5740 = vmatpush1.bf16.xpose.msra.mxu0 0
    %5741 = vmatprep.subr.bf16.mxu0 0
    %5742 = vmatpush1.bf16.xpose.msra.mxu0 0
    %5743 = vmatprep.mubr.bf16.mxu0 0
    %5744 = vmatmul.mubr.bf16.gmra.mrb[0].mxu0 %v5709
    %v5745 = vpop.f32.mrb[0].mxu0
    %v5746 = vadd.f32 0.0, %v5745
    %v5747 = vpop.f32.mrb[0].mxu0
    %v5748 = vpop.f32.mrb[0].mxu0
    %v5749 = vpop.f32.mrb[0].mxu0
    %5750 = vdwg.mxu0
    %v5751 = vmul.f32 %v5746, 0.35355338
    %v5752 = vadd.f32 %v5751, %v2507
    %v5753 = vsel %vm258, %v5752, -inf
    %5754 = vmax.xlane.f32.xlu0 %v5753
    %v5755 = vpop.xlane.xlu0 %5754
    %v5756 = vsub.f32 %v5752, %v5755
    %v5757 = vmul.f32 %v5756, 1.442695
    %v5758 = vpow.pop %v5757
    %v5759 = vsel %vm258, %v5758, 0.0
    %5760 = vadd.xlane.f32.xlu0 %v5759
    %v5761 = vpop.xlane.xlu0 %5760
    %v5762 = vrcp.pop %v5761
    %v5763 = vmul.f32 %v5758, %v5762
    %v5764 = vpack.c.bf16 %v5763, %v5763
    %5766 = vrot.lane.b32.xlu0 %v5707, 64
    %v5767 = vpop.permute.xlu0 %5766
    %v5769 = vsel %vm258, %v5764, 0
    %v5772 = vsel %vm342, %v5767, 0
    %5774 = vmatprep.subr.bf16.mxu0 0
    %5775 = vmatpush1.bf16.msra.mxu0 %v5772
    %5776 = vmatprep.subr.bf16.mxu0 0
    %5777 = vmatpush1.bf16.msra.mxu0 0
    %5778 = vmatprep.subr.bf16.mxu0 0
    %5779 = vmatpush1.bf16.msra.mxu0 0
    %5780 = vmatprep.subr.bf16.mxu0 0
    %5781 = vmatpush1.bf16.msra.mxu0 0
    %5782 = vmatprep.subr.bf16.mxu0 0
    %5783 = vmatpush1.bf16.msra.mxu0 0
    %5784 = vmatprep.subr.bf16.mxu0 0
    %5785 = vmatpush1.bf16.msra.mxu0 0
    %5786 = vmatprep.subr.bf16.mxu0 0
    %5787 = vmatpush1.bf16.msra.mxu0 0
    %5788 = vmatprep.subr.bf16.mxu0 0
    %5789 = vmatpush1.bf16.msra.mxu0 0
    %5790 = vmatprep.subr.bf16.mxu0 0
    %5791 = vmatpush1.bf16.msra.mxu0 0
    %5792 = vmatprep.subr.bf16.mxu0 0
    %5793 = vmatpush1.bf16.msra.mxu0 0
    %5794 = vmatprep.subr.bf16.mxu0 0
    %5795 = vmatpush1.bf16.msra.mxu0 0
    %5796 = vmatprep.subr.bf16.mxu0 0
    %5797 = vmatpush1.bf16.msra.mxu0 0
    %5798 = vmatprep.subr.bf16.mxu0 0
    %5799 = vmatpush1.bf16.msra.mxu0 0
    %5800 = vmatprep.subr.bf16.mxu0 0
    %5801 = vmatpush1.bf16.msra.mxu0 0
    %5802 = vmatprep.subr.bf16.mxu0 0
    %5803 = vmatpush1.bf16.msra.mxu0 0
    %5804 = vmatprep.subr.bf16.mxu0 0
    %5805 = vmatpush1.bf16.msra.mxu0 0
    %5806 = vmatprep.mubr.bf16.mxu0 0
    %5807 = vmatmul.mubr.bf16.gmra.mrb[0].mxu0 %v5769
    %v5808 = vpop.f32.mrb[0].mxu0
    %v5809 = vadd.f32 0.0, %v5808
    %v5810 = vpop.f32.mrb[0].mxu0
    %v5811 = vpop.f32.mrb[0].mxu0
    %v5812 = vpop.f32.mrb[0].mxu0
    %5813 = vdwg.mxu0
    %v5814 = vadd.f32 %v5699, %v5809
    %v5815 = vmul.f32 %v5472, %v68
    %v5816 = vpack.c.bf16 %v5815, %v5815
    %v5817 = vmul.f32 %v5472, %v554
    %v5818 = vpack.c.bf16 %v5817, %v5817
    %v5820 = vsel %vm154, %v5816, 0
    %5822 = vmatprep.subr.bf16.mxu0 0
    %5823 = vmatpush1.bf16.xpose.msra.mxu0 %v5489
    %5824 = vmatprep.subr.bf16.mxu0 0
    %5825 = vmatpush1.bf16.xpose.msra.mxu0 0
    %5826 = vmatprep.subr.bf16.mxu0 0
    %5827 = vmatpush1.bf16.xpose.msra.mxu0 0
    %5828 = vmatprep.subr.bf16.mxu0 0
    %5829 = vmatpush1.bf16.xpose.msra.mxu0 0
    %5830 = vmatprep.subr.bf16.mxu0 0
    %5831 = vmatpush1.bf16.xpose.msra.mxu0 0
    %5832 = vmatprep.subr.bf16.mxu0 0
    %5833 = vmatpush1.bf16.xpose.msra.mxu0 0
    %5834 = vmatprep.subr.bf16.mxu0 0
    %5835 = vmatpush1.bf16.xpose.msra.mxu0 0
    %5836 = vmatprep.subr.bf16.mxu0 0
    %5837 = vmatpush1.bf16.xpose.msra.mxu0 0
    %5838 = vmatprep.subr.bf16.mxu0 0
    %5839 = vmatpush1.bf16.xpose.msra.mxu0 0
    %5840 = vmatprep.subr.bf16.mxu0 0
    %5841 = vmatpush1.bf16.xpose.msra.mxu0 0
    %5842 = vmatprep.subr.bf16.mxu0 0
    %5843 = vmatpush1.bf16.xpose.msra.mxu0 0
    %5844 = vmatprep.subr.bf16.mxu0 0
    %5845 = vmatpush1.bf16.xpose.msra.mxu0 0
    %5846 = vmatprep.subr.bf16.mxu0 0
    %5847 = vmatpush1.bf16.xpose.msra.mxu0 0
    %5848 = vmatprep.subr.bf16.mxu0 0
    %5849 = vmatpush1.bf16.xpose.msra.mxu0 0
    %5850 = vmatprep.subr.bf16.mxu0 0
    %5851 = vmatpush1.bf16.xpose.msra.mxu0 0
    %5852 = vmatprep.subr.bf16.mxu0 0
    %5853 = vmatpush1.bf16.xpose.msra.mxu0 0
    %5854 = vmatprep.mubr.bf16.mxu0 0
    %5855 = vmatmul.mubr.bf16.gmra.mrb[0].mxu0 %v5820
    %v5856 = vpop.f32.mrb[0].mxu0
    %v5857 = vadd.f32 0.0, %v5856
    %v5858 = vpop.f32.mrb[0].mxu0
    %v5859 = vpop.f32.mrb[0].mxu0
    %v5860 = vpop.f32.mrb[0].mxu0
    %5861 = vdwg.mxu0
    %v5862 = vmul.f32 %v5857, 0.35355338
    %v5863 = vadd.f32 %v5862, %v2507
    %v5864 = vsel %vm258, %v5863, -inf
    %5865 = vmax.xlane.f32.xlu0 %v5864
    %v5866 = vpop.xlane.xlu0 %5865
    %v5867 = vsub.f32 %v5863, %v5866
    %v5868 = vmul.f32 %v5867, 1.442695
    %v5869 = vpow.pop %v5868
    %v5870 = vsel %vm258, %v5869, 0.0
    %5871 = vadd.xlane.f32.xlu0 %v5870
    %v5872 = vpop.xlane.xlu0 %5871
    %v5873 = vrcp.pop %v5872
    %v5874 = vmul.f32 %v5869, %v5873
    %v5875 = vpack.c.bf16 %v5874, %v5874
    %5877 = vrot.lane.b32.xlu0 %v5818, 64
    %v5878 = vpop.permute.xlu0 %5877
    %v5880 = vsel %vm258, %v5875, 0
    %v5883 = vsel %vm342, %v5878, 0
    %5885 = vmatprep.subr.bf16.mxu0 0
    %5886 = vmatpush1.bf16.msra.mxu0 %v5883
    %5887 = vmatprep.subr.bf16.mxu0 0
    %5888 = vmatpush1.bf16.msra.mxu0 0
    %5889 = vmatprep.subr.bf16.mxu0 0
    %5890 = vmatpush1.bf16.msra.mxu0 0
    %5891 = vmatprep.subr.bf16.mxu0 0
    %5892 = vmatpush1.bf16.msra.mxu0 0
    %5893 = vmatprep.subr.bf16.mxu0 0
    %5894 = vmatpush1.bf16.msra.mxu0 0
    %5895 = vmatprep.subr.bf16.mxu0 0
    %5896 = vmatpush1.bf16.msra.mxu0 0
    %5897 = vmatprep.subr.bf16.mxu0 0
    %5898 = vmatpush1.bf16.msra.mxu0 0
    %5899 = vmatprep.subr.bf16.mxu0 0
    %5900 = vmatpush1.bf16.msra.mxu0 0
    %5901 = vmatprep.subr.bf16.mxu0 0
    %5902 = vmatpush1.bf16.msra.mxu0 0
    %5903 = vmatprep.subr.bf16.mxu0 0
    %5904 = vmatpush1.bf16.msra.mxu0 0
    %5905 = vmatprep.subr.bf16.mxu0 0
    %5906 = vmatpush1.bf16.msra.mxu0 0
    %5907 = vmatprep.subr.bf16.mxu0 0
    %5908 = vmatpush1.bf16.msra.mxu0 0
    %5909 = vmatprep.subr.bf16.mxu0 0
    %5910 = vmatpush1.bf16.msra.mxu0 0
    %5911 = vmatprep.subr.bf16.mxu0 0
    %5912 = vmatpush1.bf16.msra.mxu0 0
    %5913 = vmatprep.subr.bf16.mxu0 0
    %5914 = vmatpush1.bf16.msra.mxu0 0
    %5915 = vmatprep.subr.bf16.mxu0 0
    %5916 = vmatpush1.bf16.msra.mxu0 0
    %5917 = vmatprep.mubr.bf16.mxu0 0
    %5918 = vmatmul.mubr.bf16.gmra.mrb[0].mxu0 %v5880
    %v5919 = vpop.f32.mrb[0].mxu0
    %v5920 = vadd.f32 0.0, %v5919
    %v5921 = vpop.f32.mrb[0].mxu0
    %v5922 = vpop.f32.mrb[0].mxu0
    %v5923 = vpop.f32.mrb[0].mxu0
    %5924 = vdwg.mxu0
    %v5925 = vadd.f32 %v5814, %v5920
    %v5926 = vpack.c.bf16 %v5925, %v5925
    %v5927 = vlaneseq
    %v5928 = vshrl.u32 %v5927, 7
    %v5929 = vsub.s32 0, %v5928
    %v5930 = vrot.slane %v5416, %v5929
    %v5935 = vunpack.c.l.b16 %v5412
    %v5936 = vunpack.c.l.b16 %v5413
    %v5937 = vunpack.c.l.b16 %v5414
    %v5938 = vunpack.c.l.b16 %v5415
    %v5939 = vpack.c.b16 %v5936, %v5935
    %v5940 = vpack.c.b16 %v5938, %v5937
    %v5944 = vsel %vm154, %v5926, 0
    %5946 = vmatprep.subr.bf16.mxu0 0
    %5947 = vmatpush1.bf16.msra.mxu0 %v5939
    %5948 = vmatprep.subr.bf16.mxu0 0
    %5949 = vmatpush1.bf16.msra.mxu0 %v5940
    %5950 = vmatprep.subr.bf16.mxu0 0
    %5951 = vmatpush1.bf16.msra.mxu0 0
    %5952 = vmatprep.subr.bf16.mxu0 0
    %5953 = vmatpush1.bf16.msra.mxu0 0
    %5954 = vmatprep.subr.bf16.mxu0 0
    %5955 = vmatpush1.bf16.msra.mxu0 0
    %5956 = vmatprep.subr.bf16.mxu0 0
    %5957 = vmatpush1.bf16.msra.mxu0 0
    %5958 = vmatprep.subr.bf16.mxu0 0
    %5959 = vmatpush1.bf16.msra.mxu0 0
    %5960 = vmatprep.subr.bf16.mxu0 0
    %5961 = vmatpush1.bf16.msra.mxu0 0
    %5962 = vmatprep.subr.bf16.mxu0 0
    %5963 = vmatpush1.bf16.msra.mxu0 0
    %5964 = vmatprep.subr.bf16.mxu0 0
    %5965 = vmatpush1.bf16.msra.mxu0 0
    %5966 = vmatprep.subr.bf16.mxu0 0
    %5967 = vmatpush1.bf16.msra.mxu0 0
    %5968 = vmatprep.subr.bf16.mxu0 0
    %5969 = vmatpush1.bf16.msra.mxu0 0
    %5970 = vmatprep.subr.bf16.mxu0 0
    %5971 = vmatpush1.bf16.msra.mxu0 0
    %5972 = vmatprep.subr.bf16.mxu0 0
    %5973 = vmatpush1.bf16.msra.mxu0 0
    %5974 = vmatprep.subr.bf16.mxu0 0
    %5975 = vmatpush1.bf16.msra.mxu0 0
    %5976 = vmatprep.subr.bf16.mxu0 0
    %5977 = vmatpush1.bf16.msra.mxu0 0
    %5978 = vmatprep.mubr.bf16.mxu0 0
    %5979 = vmatmul.mubr.bf16.gmra.mrb[0].mxu0 %v5944
    %v5980 = vpop.f32.mrb[0].mxu0
    %v5981 = vadd.f32 %v5930, %v5980
    %v5982 = vpop.f32.mrb[0].mxu0
    %v5983 = vpop.f32.mrb[0].mxu0
    %v5984 = vpop.f32.mrb[0].mxu0
    %5985 = vdwg.mxu0
    %v5986 = vadd.f32 %v5406, %v5981
    %v5987 = vld [vmem:[#allocation5 + $0x61] sm:$0x1]
    %v5988 = vld [vmem:[#allocation5 + $0x62] sm:$0x1]
    %v5989 = vsel %vm154, %v5986, 0.0
    %5990 = vadd.xlane.f32.xlu0 %v5989
    %v5991 = vpop.xlane.xlu0 %5990
    %v5992 = vmul.f32 %v5991, %v731
    %v5993 = vsub.f32 %v5986, %v5992
    %v5994 = vmul.f32 %v5993, %v5993
    %v5995 = vsel %vm154, %v5994, 0.0
    %5996 = vadd.xlane.f32.xlu0 %v5995
    %v5997 = vpop.xlane.xlu0 %5996
    %v5998 = vmul.f32 %v5997, %v731
    %v5999 = vadd.f32 %v5998, 1e-05
    %v6000 = vrsqrt.pop %v5999
    %v6001 = vmul.f32 %v5993, %v6000
    %v6002 = vlaneseq
    %v6003 = vshrl.u32 %v6002, 7
    %v6004 = vsub.s32 0, %v6003
    %v6005 = vrot.slane %v5987, %v6004
    %v6006 = vmul.f32 %v6001, %v6005
    %v6007 = vlaneseq
    %v6008 = vshrl.u32 %v6007, 7
    %v6009 = vsub.s32 0, %v6008
    %v6010 = vrot.slane %v5988, %v6009
    %v6011 = vadd.f32 %v6006, %v6010
    %v6012 = vld [vmem:[#allocation2 + $0x228] sm:$0xf]
    %v6013 = vld [vmem:[#allocation2 + $0x22c] sm:$0xf]
    %v6014 = vld [vmem:[#allocation2 + $0x230] sm:$0xf]
    %v6015 = vld [vmem:[#allocation2 + $0x234] sm:$0xf]
    %v6016 = vld [vmem:[#allocation5 + $0x63] sm:$0x1]
    %v6017 = vld [vmem:[#allocation2 + $0x238] sm:$0xf]
    %v6018 = vld [vmem:[#allocation2 + $0x23c] sm:$0xf]
    %v6019 = vld [vmem:[#allocation2 + $0x240] sm:$0xf]
    %v6020 = vld [vmem:[#allocation2 + $0x244] sm:$0xf]
    %v6021 = vld [vmem:[#allocation5 + $0x64] sm:$0x1]
    %v6022 = vld [vmem:[#allocation2 + $0x248] sm:$0xf]
    %v6023 = vld [vmem:[#allocation2 + $0x24c] sm:$0xf]
    %v6024 = vld [vmem:[#allocation2 + $0x250] sm:$0xf]
    %v6025 = vld [vmem:[#allocation2 + $0x254] sm:$0xf]
    %v6026 = vld [vmem:[#allocation5 + $0x65] sm:$0x1]
    %v6027 = vpack.c.bf16 %v6011, %v6011
    %v6028 = vlaneseq
    %v6029 = vshrl.u32 %v6028, 7
    %v6030 = vsub.s32 0, %v6029
    %v6031 = vrot.slane %v6016, %v6030
    %v6036 = vunpack.c.l.b16 %v6012
    %v6037 = vunpack.c.l.b16 %v6013
    %v6038 = vunpack.c.l.b16 %v6014
    %v6039 = vunpack.c.l.b16 %v6015
    %v6040 = vpack.c.b16 %v6037, %v6036
    %v6041 = vpack.c.b16 %v6039, %v6038
    %v6045 = vsel %vm154, %v6027, 0
    %6047 = vmatprep.subr.bf16.mxu0 0
    %6048 = vmatpush1.bf16.msra.mxu0 %v6040
    %6049 = vmatprep.subr.bf16.mxu0 0
    %6050 = vmatpush1.bf16.msra.mxu0 %v6041
    %6051 = vmatprep.subr.bf16.mxu0 0
    %6052 = vmatpush1.bf16.msra.mxu0 0
    %6053 = vmatprep.subr.bf16.mxu0 0
    %6054 = vmatpush1.bf16.msra.mxu0 0
    %6055 = vmatprep.subr.bf16.mxu0 0
    %6056 = vmatpush1.bf16.msra.mxu0 0
    %6057 = vmatprep.subr.bf16.mxu0 0
    %6058 = vmatpush1.bf16.msra.mxu0 0
    %6059 = vmatprep.subr.bf16.mxu0 0
    %6060 = vmatpush1.bf16.msra.mxu0 0
    %6061 = vmatprep.subr.bf16.mxu0 0
    %6062 = vmatpush1.bf16.msra.mxu0 0
    %6063 = vmatprep.subr.bf16.mxu0 0
    %6064 = vmatpush1.bf16.msra.mxu0 0
    %6065 = vmatprep.subr.bf16.mxu0 0
    %6066 = vmatpush1.bf16.msra.mxu0 0
    %6067 = vmatprep.subr.bf16.mxu0 0
    %6068 = vmatpush1.bf16.msra.mxu0 0
    %6069 = vmatprep.subr.bf16.mxu0 0
    %6070 = vmatpush1.bf16.msra.mxu0 0
    %6071 = vmatprep.subr.bf16.mxu0 0
    %6072 = vmatpush1.bf16.msra.mxu0 0
    %6073 = vmatprep.subr.bf16.mxu0 0
    %6074 = vmatpush1.bf16.msra.mxu0 0
    %6075 = vmatprep.subr.bf16.mxu0 0
    %6076 = vmatpush1.bf16.msra.mxu0 0
    %6077 = vmatprep.subr.bf16.mxu0 0
    %6078 = vmatpush1.bf16.msra.mxu0 0
    %6079 = vmatprep.mubr.bf16.mxu0 0
    %6080 = vmatmul.mubr.bf16.gmra.mrb[0].mxu0 %v6045
    %v6081 = vpop.f32.mrb[0].mxu0
    %v6082 = vadd.f32 %v6031, %v6081
    %v6083 = vpop.f32.mrb[0].mxu0
    %v6084 = vpop.f32.mrb[0].mxu0
    %v6085 = vpop.f32.mrb[0].mxu0
    %6086 = vdwg.mxu0
    %v6087 = vlaneseq
    %v6088 = vshrl.u32 %v6087, 7
    %v6089 = vsub.s32 0, %v6088
    %v6090 = vrot.slane %v6021, %v6089
    %v6095 = vunpack.c.l.b16 %v6017
    %v6096 = vunpack.c.l.b16 %v6018
    %v6097 = vunpack.c.l.b16 %v6019
    %v6098 = vunpack.c.l.b16 %v6020
    %v6099 = vpack.c.b16 %v6096, %v6095
    %v6100 = vpack.c.b16 %v6098, %v6097
    %6103 = vmatprep.subr.bf16.mxu0 0
    %6104 = vmatpush1.bf16.msra.mxu0 %v6099
    %6105 = vmatprep.subr.bf16.mxu0 0
    %6106 = vmatpush1.bf16.msra.mxu0 %v6100
    %6107 = vmatprep.subr.bf16.mxu0 0
    %6108 = vmatpush1.bf16.msra.mxu0 0
    %6109 = vmatprep.subr.bf16.mxu0 0
    %6110 = vmatpush1.bf16.msra.mxu0 0
    %6111 = vmatprep.subr.bf16.mxu0 0
    %6112 = vmatpush1.bf16.msra.mxu0 0
    %6113 = vmatprep.subr.bf16.mxu0 0
    %6114 = vmatpush1.bf16.msra.mxu0 0
    %6115 = vmatprep.subr.bf16.mxu0 0
    %6116 = vmatpush1.bf16.msra.mxu0 0
    %6117 = vmatprep.subr.bf16.mxu0 0
    %6118 = vmatpush1.bf16.msra.mxu0 0
    %6119 = vmatprep.subr.bf16.mxu0 0
    %6120 = vmatpush1.bf16.msra.mxu0 0
    %6121 = vmatprep.subr.bf16.mxu0 0
    %6122 = vmatpush1.bf16.msra.mxu0 0
    %6123 = vmatprep.subr.bf16.mxu0 0
    %6124 = vmatpush1.bf16.msra.mxu0 0
    %6125 = vmatprep.subr.bf16.mxu0 0
    %6126 = vmatpush1.bf16.msra.mxu0 0
    %6127 = vmatprep.subr.bf16.mxu0 0
    %6128 = vmatpush1.bf16.msra.mxu0 0
    %6129 = vmatprep.subr.bf16.mxu0 0
    %6130 = vmatpush1.bf16.msra.mxu0 0
    %6131 = vmatprep.subr.bf16.mxu0 0
    %6132 = vmatpush1.bf16.msra.mxu0 0
    %6133 = vmatprep.subr.bf16.mxu0 0
    %6134 = vmatpush1.bf16.msra.mxu0 0
    %6135 = vmatprep.mubr.bf16.mxu0 0
    %6136 = vmatmul.mubr.bf16.gmra.mrb[0].mxu0 %v3207
    %v6137 = vpop.f32.mrb[0].mxu0
    %v6138 = vadd.f32 %v6090, %v6137
    %v6139 = vpop.f32.mrb[0].mxu0
    %v6140 = vpop.f32.mrb[0].mxu0
    %v6141 = vpop.f32.mrb[0].mxu0
    %6142 = vdwg.mxu0
    %v6143 = vpack.c.bf16 %v6138, %v6138
    %v6144 = vmul.f32 %v6082, %v53
    %v6145 = vpack.c.bf16 %v6144, %v6144
    %v6146 = vmul.f32 %v6138, %v3253
    %v6147 = vpack.c.bf16 %v6146, %v6146
    %v6149 = vsel %vm154, %v6145, 0
    %v6152 = vsel %vm154, %v6143, 0
    %6154 = vmatprep.subr.bf16.mxu0 0
    %6155 = vmatpush1.bf16.xpose.msra.mxu0 %v6152
    %6156 = vmatprep.subr.bf16.mxu0 0
    %6157 = vmatpush1.bf16.xpose.msra.mxu0 0
    %6158 = vmatprep.subr.bf16.mxu0 0
    %6159 = vmatpush1.bf16.xpose.msra.mxu0 0
    %6160 = vmatprep.subr.bf16.mxu0 0
    %6161 = vmatpush1.bf16.xpose.msra.mxu0 0
    %6162 = vmatprep.subr.bf16.mxu0 0
    %6163 = vmatpush1.bf16.xpose.msra.mxu0 0
    %6164 = vmatprep.subr.bf16.mxu0 0
    %6165 = vmatpush1.bf16.xpose.msra.mxu0 0
    %6166 = vmatprep.subr.bf16.mxu0 0
    %6167 = vmatpush1.bf16.xpose.msra.mxu0 0
    %6168 = vmatprep.subr.bf16.mxu0 0
    %6169 = vmatpush1.bf16.xpose.msra.mxu0 0
    %6170 = vmatprep.subr.bf16.mxu0 0
    %6171 = vmatpush1.bf16.xpose.msra.mxu0 0
    %6172 = vmatprep.subr.bf16.mxu0 0
    %6173 = vmatpush1.bf16.xpose.msra.mxu0 0
    %6174 = vmatprep.subr.bf16.mxu0 0
    %6175 = vmatpush1.bf16.xpose.msra.mxu0 0
    %6176 = vmatprep.subr.bf16.mxu0 0
    %6177 = vmatpush1.bf16.xpose.msra.mxu0 0
    %6178 = vmatprep.subr.bf16.mxu0 0
    %6179 = vmatpush1.bf16.xpose.msra.mxu0 0
    %6180 = vmatprep.subr.bf16.mxu0 0
    %6181 = vmatpush1.bf16.xpose.msra.mxu0 0
    %6182 = vmatprep.subr.bf16.mxu0 0
    %6183 = vmatpush1.bf16.xpose.msra.mxu0 0
    %6184 = vmatprep.subr.bf16.mxu0 0
    %6185 = vmatpush1.bf16.xpose.msra.mxu0 0
    %6186 = vmatprep.mubr.bf16.mxu0 0
    %6187 = vmatmul.mubr.bf16.gmra.mrb[0].mxu0 %v6149
    %v6188 = vpop.f32.mrb[0].mxu0
    %v6189 = vadd.f32 0.0, %v6188
    %v6190 = vpop.f32.mrb[0].mxu0
    %v6191 = vpop.f32.mrb[0].mxu0
    %v6192 = vpop.f32.mrb[0].mxu0
    %6193 = vdwg.mxu0
    %v6194 = vmul.f32 %v6189, 0.35355338
    %v6195 = vadd.f32 %v6194, %v2508
    %v6196 = vsel %vm258, %v6195, -inf
    %6197 = vmax.xlane.f32.xlu0 %v6196
    %v6198 = vpop.xlane.xlu0 %6197
    %v6199 = vsub.f32 %v6195, %v6198
    %v6200 = vmul.f32 %v6199, 1.442695
    %v6201 = vpow.pop %v6200
    %v6202 = vsel %vm258, %v6201, 0.0
    %6203 = vadd.xlane.f32.xlu0 %v6202
    %v6204 = vpop.xlane.xlu0 %6203
    %v6205 = vrcp.pop %v6204
    %v6206 = vmul.f32 %v6201, %v6205
    %v6207 = vpack.c.bf16 %v6206, %v6206
    %v6208 = vmul.f32 %v6082, %v58
    %v6209 = vpack.c.bf16 %v6208, %v6208
    %v6210 = vmul.f32 %v6138, %v3320
    %v6211 = vpack.c.bf16 %v6210, %v6210
    %v6213 = vsel %vm154, %v6209, 0
    %6215 = vmatprep.subr.bf16.mxu0 0
    %6216 = vmatpush1.bf16.xpose.msra.mxu0 %v6152
    %6217 = vmatprep.subr.bf16.mxu0 0
    %6218 = vmatpush1.bf16.xpose.msra.mxu0 0
    %6219 = vmatprep.subr.bf16.mxu0 0
    %6220 = vmatpush1.bf16.xpose.msra.mxu0 0
    %6221 = vmatprep.subr.bf16.mxu0 0
    %6222 = vmatpush1.bf16.xpose.msra.mxu0 0
    %6223 = vmatprep.subr.bf16.mxu0 0
    %6224 = vmatpush1.bf16.xpose.msra.mxu0 0
    %6225 = vmatprep.subr.bf16.mxu0 0
    %6226 = vmatpush1.bf16.xpose.msra.mxu0 0
    %6227 = vmatprep.subr.bf16.mxu0 0
    %6228 = vmatpush1.bf16.xpose.msra.mxu0 0
    %6229 = vmatprep.subr.bf16.mxu0 0
    %6230 = vmatpush1.bf16.xpose.msra.mxu0 0
    %6231 = vmatprep.subr.bf16.mxu0 0
    %6232 = vmatpush1.bf16.xpose.msra.mxu0 0
    %6233 = vmatprep.subr.bf16.mxu0 0
    %6234 = vmatpush1.bf16.xpose.msra.mxu0 0
    %6235 = vmatprep.subr.bf16.mxu0 0
    %6236 = vmatpush1.bf16.xpose.msra.mxu0 0
    %6237 = vmatprep.subr.bf16.mxu0 0
    %6238 = vmatpush1.bf16.xpose.msra.mxu0 0
    %6239 = vmatprep.subr.bf16.mxu0 0
    %6240 = vmatpush1.bf16.xpose.msra.mxu0 0
    %6241 = vmatprep.subr.bf16.mxu0 0
    %6242 = vmatpush1.bf16.xpose.msra.mxu0 0
    %6243 = vmatprep.subr.bf16.mxu0 0
    %6244 = vmatpush1.bf16.xpose.msra.mxu0 0
    %6245 = vmatprep.subr.bf16.mxu0 0
    %6246 = vmatpush1.bf16.xpose.msra.mxu0 0
    %6247 = vmatprep.mubr.bf16.mxu0 0
    %6248 = vmatmul.mubr.bf16.gmra.mrb[0].mxu0 %v6213
    %v6249 = vpop.f32.mrb[0].mxu0
    %v6250 = vadd.f32 0.0, %v6249
    %v6251 = vpop.f32.mrb[0].mxu0
    %v6252 = vpop.f32.mrb[0].mxu0
    %v6253 = vpop.f32.mrb[0].mxu0
    %6254 = vdwg.mxu0
    %v6255 = vmul.f32 %v6250, 0.35355338
    %v6256 = vadd.f32 %v6255, %v2508
    %v6257 = vsel %vm258, %v6256, -inf
    %6258 = vmax.xlane.f32.xlu0 %v6257
    %v6259 = vpop.xlane.xlu0 %6258
    %v6260 = vsub.f32 %v6256, %v6259
    %v6261 = vmul.f32 %v6260, 1.442695
    %v6262 = vpow.pop %v6261
    %v6263 = vsel %vm258, %v6262, 0.0
    %6264 = vadd.xlane.f32.xlu0 %v6263
    %v6265 = vpop.xlane.xlu0 %6264
    %v6266 = vrcp.pop %v6265
    %v6267 = vmul.f32 %v6262, %v6266
    %v6268 = vpack.c.bf16 %v6267, %v6267
    %6270 = vrot.lane.b32.xlu0 %v6211, 96
    %v6271 = vpop.permute.xlu0 %6270
    %v6273 = vsel %vm258, %v6268, 0
    %v6276 = vsel %vm342, %v6271, 0
    %6278 = vmatprep.subr.bf16.mxu0 0
    %6279 = vmatpush1.bf16.msra.mxu0 %v6276
    %6280 = vmatprep.subr.bf16.mxu0 0
    %6281 = vmatpush1.bf16.msra.mxu0 0
    %6282 = vmatprep.subr.bf16.mxu0 0
    %6283 = vmatpush1.bf16.msra.mxu0 0
    %6284 = vmatprep.subr.bf16.mxu0 0
    %6285 = vmatpush1.bf16.msra.mxu0 0
    %6286 = vmatprep.subr.bf16.mxu0 0
    %6287 = vmatpush1.bf16.msra.mxu0 0
    %6288 = vmatprep.subr.bf16.mxu0 0
    %6289 = vmatpush1.bf16.msra.mxu0 0
    %6290 = vmatprep.subr.bf16.mxu0 0
    %6291 = vmatpush1.bf16.msra.mxu0 0
    %6292 = vmatprep.subr.bf16.mxu0 0
    %6293 = vmatpush1.bf16.msra.mxu0 0
    %6294 = vmatprep.subr.bf16.mxu0 0
    %6295 = vmatpush1.bf16.msra.mxu0 0
    %6296 = vmatprep.subr.bf16.mxu0 0
    %6297 = vmatpush1.bf16.msra.mxu0 0
    %6298 = vmatprep.subr.bf16.mxu0 0
    %6299 = vmatpush1.bf16.msra.mxu0 0
    %6300 = vmatprep.subr.bf16.mxu0 0
    %6301 = vmatpush1.bf16.msra.mxu0 0
    %6302 = vmatprep.subr.bf16.mxu0 0
    %6303 = vmatpush1.bf16.msra.mxu0 0
    %6304 = vmatprep.subr.bf16.mxu0 0
    %6305 = vmatpush1.bf16.msra.mxu0 0
    %6306 = vmatprep.subr.bf16.mxu0 0
    %6307 = vmatpush1.bf16.msra.mxu0 0
    %6308 = vmatprep.subr.bf16.mxu0 0
    %6309 = vmatpush1.bf16.msra.mxu0 0
    %6310 = vmatprep.mubr.bf16.mxu0 0
    %6311 = vmatmul.mubr.bf16.gmra.mrb[0].mxu0 %v6273
    %v6312 = vpop.f32.mrb[0].mxu0
    %v6313 = vadd.f32 0.0, %v6312
    %v6314 = vpop.f32.mrb[0].mxu0
    %v6315 = vpop.f32.mrb[0].mxu0
    %v6316 = vpop.f32.mrb[0].mxu0
    %6317 = vdwg.mxu0
    %6319 = vrot.lane.b32.xlu0 %v6147, 96
    %v6320 = vpop.permute.xlu0 %6319
    %v6322 = vsel %vm258, %v6207, 0
    %v6325 = vsel %vm342, %v6320, 0
    %6327 = vmatprep.subr.bf16.mxu0 0
    %6328 = vmatpush1.bf16.msra.mxu0 %v6325
    %6329 = vmatprep.subr.bf16.mxu0 0
    %6330 = vmatpush1.bf16.msra.mxu0 0
    %6331 = vmatprep.subr.bf16.mxu0 0
    %6332 = vmatpush1.bf16.msra.mxu0 0
    %6333 = vmatprep.subr.bf16.mxu0 0
    %6334 = vmatpush1.bf16.msra.mxu0 0
    %6335 = vmatprep.subr.bf16.mxu0 0
    %6336 = vmatpush1.bf16.msra.mxu0 0
    %6337 = vmatprep.subr.bf16.mxu0 0
    %6338 = vmatpush1.bf16.msra.mxu0 0
    %6339 = vmatprep.subr.bf16.mxu0 0
    %6340 = vmatpush1.bf16.msra.mxu0 0
    %6341 = vmatprep.subr.bf16.mxu0 0
    %6342 = vmatpush1.bf16.msra.mxu0 0
    %6343 = vmatprep.subr.bf16.mxu0 0
    %6344 = vmatpush1.bf16.msra.mxu0 0
    %6345 = vmatprep.subr.bf16.mxu0 0
    %6346 = vmatpush1.bf16.msra.mxu0 0
    %6347 = vmatprep.subr.bf16.mxu0 0
    %6348 = vmatpush1.bf16.msra.mxu0 0
    %6349 = vmatprep.subr.bf16.mxu0 0
    %6350 = vmatpush1.bf16.msra.mxu0 0
    %6351 = vmatprep.subr.bf16.mxu0 0
    %6352 = vmatpush1.bf16.msra.mxu0 0
    %6353 = vmatprep.subr.bf16.mxu0 0
    %6354 = vmatpush1.bf16.msra.mxu0 0
    %6355 = vmatprep.subr.bf16.mxu0 0
    %6356 = vmatpush1.bf16.msra.mxu0 0
    %6357 = vmatprep.subr.bf16.mxu0 0
    %6358 = vmatpush1.bf16.msra.mxu0 0
    %6359 = vmatprep.mubr.bf16.mxu0 0
    %6360 = vmatmul.mubr.bf16.gmra.mrb[0].mxu0 %v6322
    %v6361 = vpop.f32.mrb[0].mxu0
    %v6362 = vadd.f32 %v6313, %v6361
    %v6363 = vpop.f32.mrb[0].mxu0
    %v6364 = vpop.f32.mrb[0].mxu0
    %v6365 = vpop.f32.mrb[0].mxu0
    %6366 = vdwg.mxu0
    %v6367 = vmul.f32 %v6082, %v63
    %v6368 = vpack.c.bf16 %v6367, %v6367
    %v6369 = vmul.f32 %v6138, %v3482
    %v6370 = vpack.c.bf16 %v6369, %v6369
    %v6372 = vsel %vm154, %v6368, 0
    %6374 = vmatprep.subr.bf16.mxu0 0
    %6375 = vmatpush1.bf16.xpose.msra.mxu0 %v6152
    %6376 = vmatprep.subr.bf16.mxu0 0
    %6377 = vmatpush1.bf16.xpose.msra.mxu0 0
    %6378 = vmatprep.subr.bf16.mxu0 0
    %6379 = vmatpush1.bf16.xpose.msra.mxu0 0
    %6380 = vmatprep.subr.bf16.mxu0 0
    %6381 = vmatpush1.bf16.xpose.msra.mxu0 0
    %6382 = vmatprep.subr.bf16.mxu0 0
    %6383 = vmatpush1.bf16.xpose.msra.mxu0 0
    %6384 = vmatprep.subr.bf16.mxu0 0
    %6385 = vmatpush1.bf16.xpose.msra.mxu0 0
    %6386 = vmatprep.subr.bf16.mxu0 0
    %6387 = vmatpush1.bf16.xpose.msra.mxu0 0
    %6388 = vmatprep.subr.bf16.mxu0 0
    %6389 = vmatpush1.bf16.xpose.msra.mxu0 0
    %6390 = vmatprep.subr.bf16.mxu0 0
    %6391 = vmatpush1.bf16.xpose.msra.mxu0 0
    %6392 = vmatprep.subr.bf16.mxu0 0
    %6393 = vmatpush1.bf16.xpose.msra.mxu0 0
    %6394 = vmatprep.subr.bf16.mxu0 0
    %6395 = vmatpush1.bf16.xpose.msra.mxu0 0
    %6396 = vmatprep.subr.bf16.mxu0 0
    %6397 = vmatpush1.bf16.xpose.msra.mxu0 0
    %6398 = vmatprep.subr.bf16.mxu0 0
    %6399 = vmatpush1.bf16.xpose.msra.mxu0 0
    %6400 = vmatprep.subr.bf16.mxu0 0
    %6401 = vmatpush1.bf16.xpose.msra.mxu0 0
    %6402 = vmatprep.subr.bf16.mxu0 0
    %6403 = vmatpush1.bf16.xpose.msra.mxu0 0
    %6404 = vmatprep.subr.bf16.mxu0 0
    %6405 = vmatpush1.bf16.xpose.msra.mxu0 0
    %6406 = vmatprep.mubr.bf16.mxu0 0
    %6407 = vmatmul.mubr.bf16.gmra.mrb[0].mxu0 %v6372
    %v6408 = vpop.f32.mrb[0].mxu0
    %v6409 = vadd.f32 0.0, %v6408
    %v6410 = vpop.f32.mrb[0].mxu0
    %v6411 = vpop.f32.mrb[0].mxu0
    %v6412 = vpop.f32.mrb[0].mxu0
    %6413 = vdwg.mxu0
    %v6414 = vmul.f32 %v6409, 0.35355338
    %v6415 = vadd.f32 %v6414, %v2508
    %v6416 = vsel %vm258, %v6415, -inf
    %6417 = vmax.xlane.f32.xlu0 %v6416
    %v6418 = vpop.xlane.xlu0 %6417
    %v6419 = vsub.f32 %v6415, %v6418
    %v6420 = vmul.f32 %v6419, 1.442695
    %v6421 = vpow.pop %v6420
    %v6422 = vsel %vm258, %v6421, 0.0
    %6423 = vadd.xlane.f32.xlu0 %v6422
    %v6424 = vpop.xlane.xlu0 %6423
    %v6425 = vrcp.pop %v6424
    %v6426 = vmul.f32 %v6421, %v6425
    %v6427 = vpack.c.bf16 %v6426, %v6426
    %6429 = vrot.lane.b32.xlu0 %v6370, 96
    %v6430 = vpop.permute.xlu0 %6429
    %v6432 = vsel %vm258, %v6427, 0
    %v6435 = vsel %vm342, %v6430, 0
    %6437 = vmatprep.subr.bf16.mxu0 0
    %6438 = vmatpush1.bf16.msra.mxu0 %v6435
    %6439 = vmatprep.subr.bf16.mxu0 0
    %6440 = vmatpush1.bf16.msra.mxu0 0
    %6441 = vmatprep.subr.bf16.mxu0 0
    %6442 = vmatpush1.bf16.msra.mxu0 0
    %6443 = vmatprep.subr.bf16.mxu0 0
    %6444 = vmatpush1.bf16.msra.mxu0 0
    %6445 = vmatprep.subr.bf16.mxu0 0
    %6446 = vmatpush1.bf16.msra.mxu0 0
    %6447 = vmatprep.subr.bf16.mxu0 0
    %6448 = vmatpush1.bf16.msra.mxu0 0
    %6449 = vmatprep.subr.bf16.mxu0 0
    %6450 = vmatpush1.bf16.msra.mxu0 0
    %6451 = vmatprep.subr.bf16.mxu0 0
    %6452 = vmatpush1.bf16.msra.mxu0 0
    %6453 = vmatprep.subr.bf16.mxu0 0
    %6454 = vmatpush1.bf16.msra.mxu0 0
    %6455 = vmatprep.subr.bf16.mxu0 0
    %6456 = vmatpush1.bf16.msra.mxu0 0
    %6457 = vmatprep.subr.bf16.mxu0 0
    %6458 = vmatpush1.bf16.msra.mxu0 0
    %6459 = vmatprep.subr.bf16.mxu0 0
    %6460 = vmatpush1.bf16.msra.mxu0 0
    %6461 = vmatprep.subr.bf16.mxu0 0
    %6462 = vmatpush1.bf16.msra.mxu0 0
    %6463 = vmatprep.subr.bf16.mxu0 0
    %6464 = vmatpush1.bf16.msra.mxu0 0
    %6465 = vmatprep.subr.bf16.mxu0 0
    %6466 = vmatpush1.bf16.msra.mxu0 0
    %6467 = vmatprep.subr.bf16.mxu0 0
    %6468 = vmatpush1.bf16.msra.mxu0 0
    %6469 = vmatprep.mubr.bf16.mxu0 0
    %6470 = vmatmul.mubr.bf16.gmra.mrb[0].mxu0 %v6432
    %v6471 = vpop.f32.mrb[0].mxu0
    %v6472 = vadd.f32 0.0, %v6471
    %v6473 = vpop.f32.mrb[0].mxu0
    %v6474 = vpop.f32.mrb[0].mxu0
    %v6475 = vpop.f32.mrb[0].mxu0
    %6476 = vdwg.mxu0
    %v6477 = vadd.f32 %v6362, %v6472
    %v6478 = vmul.f32 %v6082, %v68
    %v6479 = vpack.c.bf16 %v6478, %v6478
    %v6480 = vmul.f32 %v6138, %v3596
    %v6481 = vpack.c.bf16 %v6480, %v6480
    %v6483 = vsel %vm154, %v6479, 0
    %6485 = vmatprep.subr.bf16.mxu0 0
    %6486 = vmatpush1.bf16.xpose.msra.mxu0 %v6152
    %6487 = vmatprep.subr.bf16.mxu0 0
    %6488 = vmatpush1.bf16.xpose.msra.mxu0 0
    %6489 = vmatprep.subr.bf16.mxu0 0
    %6490 = vmatpush1.bf16.xpose.msra.mxu0 0
    %6491 = vmatprep.subr.bf16.mxu0 0
    %6492 = vmatpush1.bf16.xpose.msra.mxu0 0
    %6493 = vmatprep.subr.bf16.mxu0 0
    %6494 = vmatpush1.bf16.xpose.msra.mxu0 0
    %6495 = vmatprep.subr.bf16.mxu0 0
    %6496 = vmatpush1.bf16.xpose.msra.mxu0 0
    %6497 = vmatprep.subr.bf16.mxu0 0
    %6498 = vmatpush1.bf16.xpose.msra.mxu0 0
    %6499 = vmatprep.subr.bf16.mxu0 0
    %6500 = vmatpush1.bf16.xpose.msra.mxu0 0
    %6501 = vmatprep.subr.bf16.mxu0 0
    %6502 = vmatpush1.bf16.xpose.msra.mxu0 0
    %6503 = vmatprep.subr.bf16.mxu0 0
    %6504 = vmatpush1.bf16.xpose.msra.mxu0 0
    %6505 = vmatprep.subr.bf16.mxu0 0
    %6506 = vmatpush1.bf16.xpose.msra.mxu0 0
    %6507 = vmatprep.subr.bf16.mxu0 0
    %6508 = vmatpush1.bf16.xpose.msra.mxu0 0
    %6509 = vmatprep.subr.bf16.mxu0 0
    %6510 = vmatpush1.bf16.xpose.msra.mxu0 0
    %6511 = vmatprep.subr.bf16.mxu0 0
    %6512 = vmatpush1.bf16.xpose.msra.mxu0 0
    %6513 = vmatprep.subr.bf16.mxu0 0
    %6514 = vmatpush1.bf16.xpose.msra.mxu0 0
    %6515 = vmatprep.subr.bf16.mxu0 0
    %6516 = vmatpush1.bf16.xpose.msra.mxu0 0
    %6517 = vmatprep.mubr.bf16.mxu0 0
    %6518 = vmatmul.mubr.bf16.gmra.mrb[0].mxu0 %v6483
    %v6519 = vpop.f32.mrb[0].mxu0
    %v6520 = vadd.f32 0.0, %v6519
    %v6521 = vpop.f32.mrb[0].mxu0
    %v6522 = vpop.f32.mrb[0].mxu0
    %v6523 = vpop.f32.mrb[0].mxu0
    %6524 = vdwg.mxu0
    %v6525 = vmul.f32 %v6520, 0.35355338
    %v6526 = vadd.f32 %v6525, %v2508
    %v6527 = vsel %vm258, %v6526, -inf
    %6528 = vmax.xlane.f32.xlu0 %v6527
    %v6529 = vpop.xlane.xlu0 %6528
    %v6530 = vsub.f32 %v6526, %v6529
    %v6531 = vmul.f32 %v6530, 1.442695
    %v6532 = vpow.pop %v6531
    %v6533 = vsel %vm258, %v6532, 0.0
    %6534 = vadd.xlane.f32.xlu0 %v6533
    %v6535 = vpop.xlane.xlu0 %6534
    %v6536 = vrcp.pop %v6535
    %v6537 = vmul.f32 %v6532, %v6536
    %v6538 = vpack.c.bf16 %v6537, %v6537
    %6540 = vrot.lane.b32.xlu0 %v6481, 96
    %v6541 = vpop.permute.xlu0 %6540
    %v6543 = vsel %vm258, %v6538, 0
    %v6546 = vsel %vm342, %v6541, 0
    %6548 = vmatprep.subr.bf16.mxu0 0
    %6549 = vmatpush1.bf16.msra.mxu0 %v6546
    %6550 = vmatprep.subr.bf16.mxu0 0
    %6551 = vmatpush1.bf16.msra.mxu0 0
    %6552 = vmatprep.subr.bf16.mxu0 0
    %6553 = vmatpush1.bf16.msra.mxu0 0
    %6554 = vmatprep.subr.bf16.mxu0 0
    %6555 = vmatpush1.bf16.msra.mxu0 0
    %6556 = vmatprep.subr.bf16.mxu0 0
    %6557 = vmatpush1.bf16.msra.mxu0 0
    %6558 = vmatprep.subr.bf16.mxu0 0
    %6559 = vmatpush1.bf16.msra.mxu0 0
    %6560 = vmatprep.subr.bf16.mxu0 0
    %6561 = vmatpush1.bf16.msra.mxu0 0
    %6562 = vmatprep.subr.bf16.mxu0 0
    %6563 = vmatpush1.bf16.msra.mxu0 0
    %6564 = vmatprep.subr.bf16.mxu0 0
    %6565 = vmatpush1.bf16.msra.mxu0 0
    %6566 = vmatprep.subr.bf16.mxu0 0
    %6567 = vmatpush1.bf16.msra.mxu0 0
    %6568 = vmatprep.subr.bf16.mxu0 0
    %6569 = vmatpush1.bf16.msra.mxu0 0
    %6570 = vmatprep.subr.bf16.mxu0 0
    %6571 = vmatpush1.bf16.msra.mxu0 0
    %6572 = vmatprep.subr.bf16.mxu0 0
    %6573 = vmatpush1.bf16.msra.mxu0 0
    %6574 = vmatprep.subr.bf16.mxu0 0
    %6575 = vmatpush1.bf16.msra.mxu0 0
    %6576 = vmatprep.subr.bf16.mxu0 0
    %6577 = vmatpush1.bf16.msra.mxu0 0
    %6578 = vmatprep.subr.bf16.mxu0 0
    %6579 = vmatpush1.bf16.msra.mxu0 0
    %6580 = vmatprep.mubr.bf16.mxu0 0
    %6581 = vmatmul.mubr.bf16.gmra.mrb[0].mxu0 %v6543
    %v6582 = vpop.f32.mrb[0].mxu0
    %v6583 = vadd.f32 0.0, %v6582
    %v6584 = vpop.f32.mrb[0].mxu0
    %v6585 = vpop.f32.mrb[0].mxu0
    %v6586 = vpop.f32.mrb[0].mxu0
    %6587 = vdwg.mxu0
    %v6588 = vadd.f32 %v6477, %v6583
    %v6589 = vpack.c.bf16 %v6588, %v6588
    %v6590 = vlaneseq
    %v6591 = vshrl.u32 %v6590, 7
    %v6592 = vsub.s32 0, %v6591
    %v6593 = vrot.slane %v6026, %v6592
    %v6598 = vunpack.c.l.b16 %v6022
    %v6599 = vunpack.c.l.b16 %v6023
    %v6600 = vunpack.c.l.b16 %v6024
    %v6601 = vunpack.c.l.b16 %v6025
    %v6602 = vpack.c.b16 %v6599, %v6598
    %v6603 = vpack.c.b16 %v6601, %v6600
    %v6607 = vsel %vm154, %v6589, 0
    %6609 = vmatprep.subr.bf16.mxu0 0
    %6610 = vmatpush1.bf16.msra.mxu0 %v6602
    %6611 = vmatprep.subr.bf16.mxu0 0
    %6612 = vmatpush1.bf16.msra.mxu0 %v6603
    %6613 = vmatprep.subr.bf16.mxu0 0
    %6614 = vmatpush1.bf16.msra.mxu0 0
    %6615 = vmatprep.subr.bf16.mxu0 0
    %6616 = vmatpush1.bf16.msra.mxu0 0
    %6617 = vmatprep.subr.bf16.mxu0 0
    %6618 = vmatpush1.bf16.msra.mxu0 0
    %6619 = vmatprep.subr.bf16.mxu0 0
    %6620 = vmatpush1.bf16.msra.mxu0 0
    %6621 = vmatprep.subr.bf16.mxu0 0
    %6622 = vmatpush1.bf16.msra.mxu0 0
    %6623 = vmatprep.subr.bf16.mxu0 0
    %6624 = vmatpush1.bf16.msra.mxu0 0
    %6625 = vmatprep.subr.bf16.mxu0 0
    %6626 = vmatpush1.bf16.msra.mxu0 0
    %6627 = vmatprep.subr.bf16.mxu0 0
    %6628 = vmatpush1.bf16.msra.mxu0 0
    %6629 = vmatprep.subr.bf16.mxu0 0
    %6630 = vmatpush1.bf16.msra.mxu0 0
    %6631 = vmatprep.subr.bf16.mxu0 0
    %6632 = vmatpush1.bf16.msra.mxu0 0
    %6633 = vmatprep.subr.bf16.mxu0 0
    %6634 = vmatpush1.bf16.msra.mxu0 0
    %6635 = vmatprep.subr.bf16.mxu0 0
    %6636 = vmatpush1.bf16.msra.mxu0 0
    %6637 = vmatprep.subr.bf16.mxu0 0
    %6638 = vmatpush1.bf16.msra.mxu0 0
    %6639 = vmatprep.subr.bf16.mxu0 0
    %6640 = vmatpush1.bf16.msra.mxu0 0
    %6641 = vmatprep.mubr.bf16.mxu0 0
    %6642 = vmatmul.mubr.bf16.gmra.mrb[0].mxu0 %v6607
    %v6643 = vpop.f32.mrb[0].mxu0
    %v6644 = vadd.f32 %v6593, %v6643
    %v6645 = vpop.f32.mrb[0].mxu0
    %v6646 = vpop.f32.mrb[0].mxu0
    %v6647 = vpop.f32.mrb[0].mxu0
    %6648 = vdwg.mxu0
    %v6649 = vadd.f32 %v6011, %v6644
    %v6650 = vld [vmem:[#allocation5 + $0x66] sm:$0x1]
    %v6651 = vld [vmem:[#allocation5 + $0x67] sm:$0x1]
    %v6652 = vsel %vm154, %v6649, 0.0
    %6653 = vadd.xlane.f32.xlu0 %v6652
    %v6654 = vpop.xlane.xlu0 %6653
    %v6655 = vmul.f32 %v6654, %v731
    %v6656 = vsub.f32 %v6649, %v6655
    %v6657 = vmul.f32 %v6656, %v6656
    %v6658 = vsel %vm154, %v6657, 0.0
    %6659 = vadd.xlane.f32.xlu0 %v6658
    %v6660 = vpop.xlane.xlu0 %6659
    %v6661 = vmul.f32 %v6660, %v731
    %v6662 = vadd.f32 %v6661, 1e-05
    %v6663 = vrsqrt.pop %v6662
    %v6664 = vmul.f32 %v6656, %v6663
    %v6665 = vlaneseq
    %v6666 = vshrl.u32 %v6665, 7
    %v6667 = vsub.s32 0, %v6666
    %v6668 = vrot.slane %v6650, %v6667
    %v6669 = vmul.f32 %v6664, %v6668
    %v6670 = vlaneseq
    %v6671 = vshrl.u32 %v6670, 7
    %v6672 = vsub.s32 0, %v6671
    %v6673 = vrot.slane %v6651, %v6672
    %v6674 = vadd.f32 %v6669, %v6673
    %v6675 = vld [vmem:[#allocation2 + $0x258] sm:$0xf]
    %v6676 = vld [vmem:[#allocation2 + $0x25c] sm:$0xf]
    %v6677 = vld [vmem:[#allocation2 + $0x260] sm:$0xf]
    %v6678 = vld [vmem:[#allocation2 + $0x264] sm:$0xf]
    %v6679 = vld [vmem:[#allocation5 + $0x68] sm:$0x1]
    %v6680 = vld [vmem:[#allocation2 + $0x268] sm:$0xf]
    %v6681 = vld [vmem:[#allocation2 + $0x26c] sm:$0xf]
    %v6682 = vld [vmem:[#allocation2 + $0x270] sm:$0xf]
    %v6683 = vld [vmem:[#allocation2 + $0x274] sm:$0xf]
    %v6684 = vld [vmem:[#allocation2 + $0x278] sm:$0xf]
    %v6685 = vld [vmem:[#allocation2 + $0x27c] sm:$0xf]
    %v6686 = vld [vmem:[#allocation2 + $0x280] sm:$0xf]
    %v6687 = vld [vmem:[#allocation2 + $0x284] sm:$0xf]
    %v6688 = vld [vmem:[#allocation5 + $0x69] sm:$0x1]
    %v6689 = vpack.c.bf16 %v6674, %v6674
    %v6690 = vlaneseq
    %v6691 = vshrl.u32 %v6690, 7
    %v6692 = vsub.s32 0, %v6691
    %v6693 = vrot.slane %v6679, %v6692
    %v6698 = vunpack.c.l.b16 %v6675
    %v6699 = vunpack.c.l.b16 %v6676
    %v6700 = vunpack.c.l.b16 %v6677
    %v6701 = vunpack.c.l.b16 %v6678
    %v6702 = vpack.c.b16 %v6699, %v6698
    %v6703 = vpack.c.b16 %v6701, %v6700
    %v6707 = vsel %vm154, %v6689, 0
    %6709 = vmatprep.subr.bf16.mxu0 0
    %6710 = vmatpush1.bf16.msra.mxu0 %v6702
    %6711 = vmatprep.subr.bf16.mxu0 0
    %6712 = vmatpush1.bf16.msra.mxu0 %v6703
    %6713 = vmatprep.subr.bf16.mxu0 0
    %6714 = vmatpush1.bf16.msra.mxu0 0
    %6715 = vmatprep.subr.bf16.mxu0 0
    %6716 = vmatpush1.bf16.msra.mxu0 0
    %6717 = vmatprep.subr.bf16.mxu0 0
    %6718 = vmatpush1.bf16.msra.mxu0 0
    %6719 = vmatprep.subr.bf16.mxu0 0
    %6720 = vmatpush1.bf16.msra.mxu0 0
    %6721 = vmatprep.subr.bf16.mxu0 0
    %6722 = vmatpush1.bf16.msra.mxu0 0
    %6723 = vmatprep.subr.bf16.mxu0 0
    %6724 = vmatpush1.bf16.msra.mxu0 0
    %6725 = vmatprep.subr.bf16.mxu0 0
    %6726 = vmatpush1.bf16.msra.mxu0 0
    %6727 = vmatprep.subr.bf16.mxu0 0
    %6728 = vmatpush1.bf16.msra.mxu0 0
    %6729 = vmatprep.subr.bf16.mxu0 0
    %6730 = vmatpush1.bf16.msra.mxu0 0
    %6731 = vmatprep.subr.bf16.mxu0 0
    %6732 = vmatpush1.bf16.msra.mxu0 0
    %6733 = vmatprep.subr.bf16.mxu0 0
    %6734 = vmatpush1.bf16.msra.mxu0 0
    %6735 = vmatprep.subr.bf16.mxu0 0
    %6736 = vmatpush1.bf16.msra.mxu0 0
    %6737 = vmatprep.subr.bf16.mxu0 0
    %6738 = vmatpush1.bf16.msra.mxu0 0
    %6739 = vmatprep.subr.bf16.mxu0 0
    %6740 = vmatpush1.bf16.msra.mxu0 0
    %6741 = vmatprep.mubr.bf16.mxu0 0
    %6742 = vmatmul.mubr.bf16.gmra.mrb[0].mxu0 %v6707
    %v6743 = vpop.f32.mrb[0].mxu0
    %v6744 = vadd.f32 %v6693, %v6743
    %v6745 = vpop.f32.mrb[0].mxu0
    %v6746 = vpop.f32.mrb[0].mxu0
    %v6747 = vpop.f32.mrb[0].mxu0
    %6748 = vdwg.mxu0
    %v6749 = vmax.f32 %v6744, 0.0
    %v6750 = vpack.c.bf16 %v6749, %v6749
    %v6751 = vlaneseq
    %v6752 = vshrl.u32 %v6751, 7
    %v6753 = vsub.s32 0, %v6752
    %v6754 = vrot.slane %v6688, %v6753
    %v6763 = vunpack.c.l.b16 %v6680
    %v6764 = vunpack.c.l.b16 %v6681
    %v6765 = vunpack.c.l.b16 %v6682
    %v6766 = vunpack.c.l.b16 %v6683
    %v6767 = vunpack.c.l.b16 %v6684
    %v6768 = vunpack.c.l.b16 %v6685
    %v6769 = vunpack.c.l.b16 %v6686
    %v6770 = vunpack.c.l.b16 %v6687
    %v6771 = vpack.c.b16 %v6764, %v6763
    %v6772 = vpack.c.b16 %v6766, %v6765
    %v6773 = vpack.c.b16 %v6768, %v6767
    %v6774 = vpack.c.b16 %v6770, %v6769
    %v6780 = vsel %vm856, %v6750, 0
    %6782 = vmatprep.subr.bf16.mxu0 0
    %6783 = vmatpush1.bf16.msra.mxu0 %v6771
    %6784 = vmatprep.subr.bf16.mxu0 0
    %6785 = vmatpush1.bf16.msra.mxu0 %v6772
    %6786 = vmatprep.subr.bf16.mxu0 0
    %6787 = vmatpush1.bf16.msra.mxu0 %v6773
    %6788 = vmatprep.subr.bf16.mxu0 0
    %6789 = vmatpush1.bf16.msra.mxu0 %v6774
    %6790 = vmatprep.subr.bf16.mxu0 0
    %6791 = vmatpush1.bf16.msra.mxu0 0
    %6792 = vmatprep.subr.bf16.mxu0 0
    %6793 = vmatpush1.bf16.msra.mxu0 0
    %6794 = vmatprep.subr.bf16.mxu0 0
    %6795 = vmatpush1.bf16.msra.mxu0 0
    %6796 = vmatprep.subr.bf16.mxu0 0
    %6797 = vmatpush1.bf16.msra.mxu0 0
    %6798 = vmatprep.subr.bf16.mxu0 0
    %6799 = vmatpush1.bf16.msra.mxu0 0
    %6800 = vmatprep.subr.bf16.mxu0 0
    %6801 = vmatpush1.bf16.msra.mxu0 0
    %6802 = vmatprep.subr.bf16.mxu0 0
    %6803 = vmatpush1.bf16.msra.mxu0 0
    %6804 = vmatprep.subr.bf16.mxu0 0
    %6805 = vmatpush1.bf16.msra.mxu0 0
    %6806 = vmatprep.subr.bf16.mxu0 0
    %6807 = vmatpush1.bf16.msra.mxu0 0
    %6808 = vmatprep.subr.bf16.mxu0 0
    %6809 = vmatpush1.bf16.msra.mxu0 0
    %6810 = vmatprep.subr.bf16.mxu0 0
    %6811 = vmatpush1.bf16.msra.mxu0 0
    %6812 = vmatprep.subr.bf16.mxu0 0
    %6813 = vmatpush1.bf16.msra.mxu0 0
    %6814 = vmatprep.mubr.bf16.mxu0 0
    %6815 = vmatmul.mubr.bf16.gmra.mrb[0].mxu0 %v6780
    %v6816 = vpop.f32.mrb[0].mxu0
    %v6817 = vadd.f32 %v6754, %v6816
    %v6818 = vpop.f32.mrb[0].mxu0
    %v6819 = vpop.f32.mrb[0].mxu0
    %v6820 = vpop.f32.mrb[0].mxu0
    %6821 = vdwg.mxu0
    %v6822 = vadd.f32 %v6674, %v6817
    %v6823 = vld [vmem:[#allocation5 + $0x6a] sm:$0x1]
    %v6824 = vld [vmem:[#allocation5 + $0x6b] sm:$0x1]
    %v6825 = vsel %vm154, %v6822, 0.0
    %6826 = vadd.xlane.f32.xlu0 %v6825
    %v6827 = vpop.xlane.xlu0 %6826
    %v6828 = vmul.f32 %v6827, %v731
    %v6829 = vsub.f32 %v6822, %v6828
    %v6830 = vmul.f32 %v6829, %v6829
    %v6831 = vsel %vm154, %v6830, 0.0
    %6832 = vadd.xlane.f32.xlu0 %v6831
    %v6833 = vpop.xlane.xlu0 %6832
    %v6834 = vmul.f32 %v6833, %v731
    %v6835 = vadd.f32 %v6834, 1e-05
    %v6836 = vrsqrt.pop %v6835
    %v6837 = vmul.f32 %v6829, %v6836
    %v6838 = vlaneseq
    %v6839 = vshrl.u32 %v6838, 7
    %v6840 = vsub.s32 0, %v6839
    %v6841 = vrot.slane %v6823, %v6840
    %v6842 = vmul.f32 %v6837, %v6841
    %v6843 = vlaneseq
    %v6844 = vshrl.u32 %v6843, 7
    %v6845 = vsub.s32 0, %v6844
    %v6846 = vrot.slane %v6824, %v6845
    %v6847 = vadd.f32 %v6842, %v6846
    %v6848 = vld [vmem:[#allocation5 + $0x2b] sm:$0x1]
    %v6849 = vld [vmem:[#allocation5 + $0x2c] sm:$0x1]
    %v6850 = vsel %vm154, %v6847, 0.0
    %6851 = vadd.xlane.f32.xlu0 %v6850
    %v6852 = vpop.xlane.xlu0 %6851
    %v6853 = vmul.f32 %v6852, %v731
    %v6854 = vsub.f32 %v6847, %v6853
    %v6855 = vmul.f32 %v6854, %v6854
    %v6856 = vsel %vm154, %v6855, 0.0
    %6857 = vadd.xlane.f32.xlu0 %v6856
    %v6858 = vpop.xlane.xlu0 %6857
    %v6859 = vmul.f32 %v6858, %v731
    %v6860 = vadd.f32 %v6859, 1e-05
    %v6861 = vrsqrt.pop %v6860
    %v6862 = vmul.f32 %v6854, %v6861
    %v6863 = vlaneseq
    %v6864 = vshrl.u32 %v6863, 7
    %v6865 = vsub.s32 0, %v6864
    %v6866 = vrot.slane %v6848, %v6865
    %v6867 = vmul.f32 %v6862, %v6866
    %v6868 = vlaneseq
    %v6869 = vshrl.u32 %v6868, 7
    %v6870 = vsub.s32 0, %v6869
    %v6871 = vrot.slane %v6849, %v6870
    %v6872 = vadd.f32 %v6867, %v6871
    %v6873 = vpack.c.bf16 %v6872, %v6872
    %v6874 = vld [vmem:[#allocation2 + $0x8] sm:$0xf]
    %v6875 = vld [vmem:[#allocation2 + $0xc] sm:$0xf]
    %v6876 = vld [vmem:[#allocation2 + $0x10] sm:$0xf]
    %v6877 = vld [vmem:[#allocation2 + $0x14] sm:$0xf]
    %v6878 = vld [vmem:[#allocation5 + $0x28] sm:$0x1]
    %v6879 = vlaneseq
    %v6880 = vshrl.u32 %v6879, 7
    %v6881 = vsub.s32 0, %v6880
    %v6882 = vrot.slane %v6878, %v6881
    %v6887 = vunpack.c.l.b16 %v6874
    %v6888 = vunpack.c.l.b16 %v6875
    %v6889 = vunpack.c.l.b16 %v6876
    %v6890 = vunpack.c.l.b16 %v6877
    %v6891 = vpack.c.b16 %v6888, %v6887
    %v6892 = vpack.c.b16 %v6890, %v6889
    %v6896 = vsel %vm154, %v6873, 0
    %6898 = vmatprep.subr.bf16.mxu0 0
    %6899 = vmatpush1.bf16.msra.mxu0 %v6891
    %6900 = vmatprep.subr.bf16.mxu0 0
    %6901 = vmatpush1.bf16.msra.mxu0 %v6892
    %6902 = vmatprep.subr.bf16.mxu0 0
    %6903 = vmatpush1.bf16.msra.mxu0 0
    %6904 = vmatprep.subr.bf16.mxu0 0
    %6905 = vmatpush1.bf16.msra.mxu0 0
    %6906 = vmatprep.subr.bf16.mxu0 0
    %6907 = vmatpush1.bf16.msra.mxu0 0
    %6908 = vmatprep.subr.bf16.mxu0 0
    %6909 = vmatpush1.bf16.msra.mxu0 0
    %6910 = vmatprep.subr.bf16.mxu0 0
    %6911 = vmatpush1.bf16.msra.mxu0 0
    %6912 = vmatprep.subr.bf16.mxu0 0
    %6913 = vmatpush1.bf16.msra.mxu0 0
    %6914 = vmatprep.subr.bf16.mxu0 0
    %6915 = vmatpush1.bf16.msra.mxu0 0
    %6916 = vmatprep.subr.bf16.mxu0 0
    %6917 = vmatpush1.bf16.msra.mxu0 0
    %6918 = vmatprep.subr.bf16.mxu0 0
    %6919 = vmatpush1.bf16.msra.mxu0 0
    %6920 = vmatprep.subr.bf16.mxu0 0
    %6921 = vmatpush1.bf16.msra.mxu0 0
    %6922 = vmatprep.subr.bf16.mxu0 0
    %6923 = vmatpush1.bf16.msra.mxu0 0
    %6924 = vmatprep.subr.bf16.mxu0 0
    %6925 = vmatpush1.bf16.msra.mxu0 0
    %6926 = vmatprep.subr.bf16.mxu0 0
    %6927 = vmatpush1.bf16.msra.mxu0 0
    %6928 = vmatprep.subr.bf16.mxu0 0
    %6929 = vmatpush1.bf16.msra.mxu0 0
    %6930 = vmatprep.mubr.bf16.mxu0 0
    %6931 = vmatmul.mubr.bf16.gmra.mrb[0].mxu0 %v6896
    %v6932 = vpop.f32.mrb[0].mxu0
    %v6933 = vadd.f32 %v6882, %v6932
    %v6934 = vpop.f32.mrb[0].mxu0
    %v6935 = vpop.f32.mrb[0].mxu0
    %v6936 = vpop.f32.mrb[0].mxu0
    %6937 = vdwg.mxu0
    %6938 = vst [vmem:[#allocation7] sm:$0xff] %v6933
    // Predicated region
    $region22: #{tpu_custom_call.1} parent=1 // pred_check
      _
    $region23: #{tpu_custom_call.1} parent=1 // pred_check_branch
      %6940 = sbr.rel (0) target = $region25
    $region24: #{tpu_custom_call.1} parent=1 // pred_region
      %s6942 = ssub.s32 128, 128
      %6943 = vsyncadd [#allocation4], %s6942
      %s6945 = sshll.u32 [#allocation7], 4
      %s6946 = int_to_ptr.vmem [resolvable:$true] %s6945
      %6948 = dma.vmem_to_hbm [thread:$0]  %s6946, 128, %s3, [#allocation4]
    $region25: #{tpu_custom_call.1} parent=1 // pred_fallthru
      _
    // Predicated region
    $region26: #{tpu_custom_call.1} parent=1 // pred_check
      _
    $region27: #{tpu_custom_call.1} parent=1 // pred_check_branch
      %6950 = sbr.rel (0) target = $region29
    $region28: #{tpu_custom_call.1} parent=1 // pred_region
      %s6952 = ssub.s32 256, 256
      %6953 = vsyncadd [#allocation9], %s6952
      %s6954 = sshll.u32 [#allocation8], 4
      %s6955 = int_to_ptr.vmem [resolvable:$true] %s6954
      %6960 = dma.vmem_to_hbm [thread:$0]  %s6955, 256, %s4, [#allocation9], 128, 128, 8
    $region29: #{tpu_custom_call.1} parent=1 // pred_fallthru
      _
    // Predicated region
    $region30: #{tpu_custom_call.1} parent=1 // pred_check
      _
    $region31: #{tpu_custom_call.1} parent=1 // pred_check_branch
      %6962 = sbr.rel (0) target = $region33
    $region32: #{tpu_custom_call.1} parent=1 // pred_region
      %6963 = dma.done [#allocation4], 128
    $region33: #{tpu_custom_call.1} parent=1 // pred_fallthru
      _
    // Predicated region
    $region34: #{tpu_custom_call.1} parent=1 // pred_check
      _
    $region35: #{tpu_custom_call.1} parent=1 // pred_check_branch
      %6965 = sbr.rel (0) target = $region37
    $region36: #{tpu_custom_call.1} parent=1 // pred_region
      %6966 = dma.done [#allocation9], 256
    $region37: #{tpu_custom_call.1} parent=1 // pred_fallthru
      _
    %6967 = vsyncpa [#allocation3], 1
    %6968 = vsyncpa [#allocation6], 1
    %6969 = vsyncpa [#allocation4], 1
    %6970 = vsyncpa [#allocation9], 1

</llo_original>
